<compile_context>
chip_gen: v7x
topology: tpu7x:2x2x1
jax: 0.10.0
libtpu: 0.0.40
codegen_flags: <defaults>
</compile_context>

<pallas_src>
import math
import numpy as np
import jax
import jax.numpy as jnp
from jax.experimental import pallas as pl
from jax.experimental.pallas import tpu as pltpu

# ----------------------------- hyper-parameters ------------------------------
B        = 2     # batch
T        = 8     # time sequence length
S        = 4     # number of sensors
D_IN     = 6     # input feature dim (!= d_model -> TimeEncoder.linear_in active)
D_MODEL  = 32
NHEADT   = 4
NHEADS   = 4
D_HID    = 64
NLAYERST = 2
NLAYERSS = 2
D_OUT    = 1
LN_EPS   = 1e-5


# ----------------------------- positional encoding ---------------------------
def positional_encoding(maxlen, emb):
    den = jnp.exp(-jnp.arange(0, emb, 2, dtype=jnp.float32) * (math.log(10000.0) / emb))
    pos = jnp.arange(maxlen, dtype=jnp.float32)[:, None]
    pe = jnp.zeros((maxlen, emb), jnp.float32)
    pe = pe.at[:, 0::2].set(jnp.sin(pos * den))
    pe = pe.at[:, 1::2].set(jnp.cos(pos * den))
    return pe


# ----------------------------- parameter init --------------------------------
def init_layer_params(key, d, d_hid):
    ks = jax.random.split(key, 8)
    n = lambda k, s, std=0.1: std * jax.random.normal(k, s, jnp.float32)
    return dict(
        Wqkv=n(ks[0], (3 * d, d)), bqkv=n(ks[1], (3 * d,), 0.02),
        Wo=n(ks[2], (d, d)),       bo=jnp.zeros((d,), jnp.float32),
        g1=1.0 + n(ks[3], (d,), 0.05), be1=n(ks[4], (d,), 0.02),
        W1=n(ks[5], (d_hid, d)),   bf1=jnp.zeros((d_hid,), jnp.float32),
        W2=n(ks[6], (d, d_hid)),   bf2=jnp.zeros((d,), jnp.float32),
        g2=1.0 + n(ks[7], (d,), 0.05), be2=jnp.zeros((d,), jnp.float32),
    )


def init_params(key):
    ks = jax.random.split(key, 16)
    n = lambda k, s, std=0.1: std * jax.random.normal(k, s, jnp.float32)
    p = {}
    p['t_Win'] = n(ks[0], (D_MODEL, D_IN))
    p['t_bin'] = jnp.zeros((D_MODEL,), jnp.float32)
    p['t_layers'] = [init_layer_params(ks[1 + i], D_MODEL, D_HID) for i in range(NLAYERST)]
    p['s_Wsc'] = n(ks[5], (D_MODEL, 2))
    p['s_bsc'] = n(ks[6], (D_MODEL,), 0.02)
    p['s_layers'] = [init_layer_params(ks[7 + i], D_MODEL, D_HID) for i in range(NLAYERSS)]
    p['s_Wproj'] = n(ks[11], (D_MODEL, D_MODEL))
    p['s_bproj'] = jnp.zeros((D_MODEL,), jnp.float32)
    p['c_W'] = n(ks[12], (D_OUT, D_MODEL))
    p['c_b'] = jnp.zeros((D_OUT,), jnp.float32)
    return p


# ----------------------------- parameter packing -----------------------------
class _Packer:
    """Packs many tiny 1D/2D f32 tensors into one lane-dense (rows,128) blob.

    Every chunk is 8-row aligned so in-kernel slices never cross a sublane tile
    at odd offsets.  (Co-packing the one-row biases would shave ~100 KB off the
    one-time blob DMA — minor, skipped to keep slices trivially aligned.)
    """

    def __init__(self, ncols=128):
        self.ncols = ncols
        self.chunks = []
        self.offsets = {}     # name -> (row_offset, nrows, ncols_actual)
        self.row = 0

    def add(self, name, arr):
        arr = jnp.asarray(arr, jnp.float32)
        if arr.ndim == 1:
            arr = arr[None, :]
        r, c = arr.shape
        assert c <= self.ncols, (name, arr.shape)
        r_pad = ((r + 7) // 8) * 8
        chunk = jnp.zeros((r_pad, self.ncols), jnp.float32).at[:r, :c].set(arr)
        self.chunks.append(chunk)
        self.offsets[name] = (self.row, r, c)
        self.row += r_pad

    def finalize(self):
        return jnp.concatenate(self.chunks, axis=0), self.offsets


def pack_params(p, pos_t, pos_s, bsz):
    """Pack weights (pre-transposed / pre-folded), positional tables, attention
    masks, head masks and pooling matrices into one (rows, 128) f32 blob."""
    pk = _Packer(128)
    L_t = bsz * S * T            # time-encoder rows   (b, s, t)
    L_s = bsz * S                # sensor-encoder rows (b, s)
    lane = jnp.arange(D_MODEL)

    def add_layer(prefix, lp, nhead):
        d = D_MODEL
        hd = d // nhead
        inv = 1.0 / math.sqrt(hd)
        Wq, Wk, Wv = lp['Wqkv'][0:d], lp['Wqkv'][d:2 * d], lp['Wqkv'][2 * d:3 * d]
        bq, bk, bv = lp['bqkv'][0:d], lp['bqkv'][d:2 * d], lp['bqkv'][2 * d:3 * d]
        pk.add(prefix + 'WqT', Wq.T * inv)        # 1/sqrt(head_dim) folded in
        pk.add(prefix + 'bq', bq * inv)
        pk.add(prefix + 'WkT', Wk.T)
        pk.add(prefix + 'bk', bk)
        pk.add(prefix + 'WvT', Wv.T)
        pk.add(prefix + 'bv', bv)
        pk.add(prefix + 'WoT', lp['Wo'].T)
        pk.add(prefix + 'bo', lp['bo'])
        pk.add(prefix + 'g1', lp['g1'])
        pk.add(prefix + 'be1', lp['be1'])
        pk.add(prefix + 'W1T', lp['W1'].T)
        pk.add(prefix + 'bf1', lp['bf1'])
        pk.add(prefix + 'W2T', lp['W2'].T)
        pk.add(prefix + 'bf2', lp['bf2'])
        pk.add(prefix + 'g2', lp['g2'])
        pk.add(prefix + 'be2', lp['be2'])

    # ---------------- TimeEncoder constants ----------------
    pk.add('t_WinT', p['t_Win'].T)                              # (d_in, d_model)
    pk.add('t_bin', p['t_bin'])
    pk.add('pos_te', jnp.tile(pos_t[:T], (bsz * S, 1)))         # row (b*S+s)*T+t -> pos_t[t]
    blk_t = jnp.arange(L_t) // T                                # (b, s) group id per row
    mask_t = jnp.where(blk_t[:, None] == blk_t[None, :], 0.0, -1e9)
    pk.add('attn_t', jnp.tile(mask_t, (NHEADT, 1)))             # (H*L_t, L_t) block-diag, tiled over heads
    hd_t = D_MODEL // NHEADT
    rows_t = jnp.arange(NHEADT * L_t)
    pk.add('hmask_t', (lane[None, :] // hd_t == rows_t[:, None] // L_t).astype(jnp.float32))
    pk.add('P_time', jnp.where(jnp.arange(L_s)[:, None] == blk_t[None, :], 1.0 / T, 0.0))

    for i, lp in enumerate(p['t_layers']):
        add_layer('t%d_' % i, lp, NHEADT)

    # ---------------- SensorEncoder constants ----------------
    pk.add('s_WscT', p['s_Wsc'].T)                              # (2, d_model)
    pk.add('s_bsc', p['s_bsc'])
    pk.add('pos_se', jnp.tile(pos_s[:S], (bsz, 1)))             # row b*S+s -> pos_s[s]
    blk_s = jnp.arange(L_s) // S
    mask_s = jnp.where(blk_s[:, None] == blk_s[None, :], 0.0, -1e9)
    pk.add('attn_s', jnp.tile(mask_s, (NHEADS, 1)))             # (H*L_s, L_s) per-sample block mask
    hd_s = D_MODEL // NHEADS
    rows_s = jnp.arange(NHEADS * L_s)
    pk.add('hmask_s', (lane[None, :] // hd_s == rows_s[:, None] // L_s).astype(jnp.float32))

    for i, lp in enumerate(p['s_layers']):
        add_layer('s%d_' % i, lp, NHEADS)

    # sensor mean + proj + classifier folded:  out = (P_sens @ y) @ W_fold + b_fold
    pk.add('P_sens', jnp.where(jnp.arange(bsz)[:, None] == blk_s[None, :], 1.0 / S, 0.0))
    pk.add('W_fold', p['s_Wproj'].T @ p['c_W'].T)               # (d_model, d_out)
    pk.add('b_fold', p['s_bproj'] @ p['c_W'].T + p['c_b'])      # (d_out,)
    return pk.finalize()


# ------------------------------- Pallas kernel -------------------------------
def make_kernel(offsets, bsz):
    f32 = jnp.float32

    def get(ref, name):
        off, r, c = offsets[name]
        return ref[off:off + r, 0:c]

    def layer_norm(x, g, b):
        mu = jnp.mean(x, axis=-1, keepdims=True)
        xc = x - mu
        var = jnp.mean(xc * xc, axis=-1, keepdims=True)
        return xc * jax.lax.rsqrt(var + LN_EPS) * g + b

    def tx_layer(h, p_ref, prefix, nhead, attn_mask, head_mask):
        """Post-norm transformer encoder layer; heads stacked along sublanes."""
        L = h.shape[0]
        q = jnp.dot(h, get(p_ref, prefix + 'WqT'), preferred_element_type=f32) + get(p_ref, prefix + 'bq')
        k = jnp.dot(h, get(p_ref, prefix + 'WkT'), preferred_element_type=f32) + get(p_ref, prefix + 'bk')
        v = jnp.dot(h, get(p_ref, prefix + 'WvT'), preferred_element_type=f32) + get(p_ref, prefix + 'bv')
        # Row block hh of q_stack keeps only head-hh lanes of q (0/1 mask from the blob).
        q_stack = jnp.concatenate([q] * nhead, axis=0) * head_mask          # (H*L, d)
        # scores[h*L+i, j] = Q_h[i] . K_h[j]  -- K consumed untransposed by the MXU.
        scores = jax.lax.dot_general(q_stack, k, (((1,), (1,)), ((), ())),
                                     preferred_element_type=f32)            # (H*L, L)
        scores = scores + attn_mask
        m = jnp.max(scores, axis=-1, keepdims=True)
        e = jnp.exp(scores - m)
        recip = pl.reciprocal(jnp.sum(e, axis=-1, keepdims=True), approx=True)
        pv = jnp.dot(e, v, preferred_element_type=f32)                      # (H*L, d)
        pv = pv * recip * head_mask                                         # normalize + keep own head's lanes
        attn = pv[0:L]
        for hh in range(1, nhead):                                          # recombine heads: sublane-block sum
            attn = attn + pv[hh * L:(hh + 1) * L]                           # (L, d)
        attn = jnp.dot(attn, get(p_ref, prefix + 'WoT'), preferred_element_type=f32) + get(p_ref, prefix + 'bo')
        h = layer_norm(h + attn, get(p_ref, prefix + 'g1'), get(p_ref, prefix + 'be1'))
        ff = jnp.dot(h, get(p_ref, prefix + 'W1T'), preferred_element_type=f32) + get(p_ref, prefix + 'bf1')
        ff = jnp.maximum(ff, 0.0)                                           # ReLU
        ff = jnp.dot(ff, get(p_ref, prefix + 'W2T'), preferred_element_type=f32) + get(p_ref, prefix + 'bf2')
        # Dropout inside the encoder layer is identity in eval mode.
        return layer_norm(h + ff, get(p_ref, prefix + 'g2'), get(p_ref, prefix + 'be2'))

    def kernel(x_ref, scale_ref, p_ref, o_ref):
        # ---------- TimeEncoder over ALL B*S sensor sequences at once --------
        x = x_ref[...]                                                       # (B*S*T, d_in)
        h = jnp.dot(x, get(p_ref, 't_WinT'), preferred_element_type=f32) + get(p_ref, 't_bin')
        pos_te = get(p_ref, 'pos_te')
        h = h + pos_te                                                       # pos_encoder (pre)
        attn_t = get(p_ref, 'attn_t')                                        # hoisted: reused by both layers
        hmask_t = get(p_ref, 'hmask_t')
        for li in range(NLAYERST):
            h = tx_layer(h, p_ref, 't%d_' % li, NHEADT, attn_t, hmask_t)
        h = h + pos_te                                                       # pos_encoder (post)
        y = jnp.dot(get(p_ref, 'P_time'), h, preferred_element_type=f32)     # (B*S, d) mean over T
        # ---------- SensorEncoder --------------------------------------------
        sc = scale_ref[...]                                                  # (B*S, 2)
        y = y + jnp.dot(sc, get(p_ref, 's_WscT'), preferred_element_type=f32) + get(p_ref, 's_bsc')
        y = y + get(p_ref, 'pos_se')
        attn_s = get(p_ref, 'attn_s')
        hmask_s = get(p_ref, 'hmask_s')
        for li in range(NLAYERSS):
            y = tx_layer(y, p_ref, 's%d_' % li, NHEADS, attn_s, hmask_s)
        # mean over sensors + proj + classifier, folded into pool + one matmul
        z = jnp.dot(get(p_ref, 'P_sens'), y, preferred_element_type=f32)     # (B, d)
        out = jnp.dot(z, get(p_ref, 'W_fold'), preferred_element_type=f32) + get(p_ref, 'b_fold')
        o_ref[...] = out                                                     # (B, d_out)

    return kernel


def build_forward(params, pos_t, pos_s, bsz):
    """Packs parameters ONCE and returns a jitted forward fn (x, scale) -> (B, d_out)."""
    blob, offsets = pack_params(params, pos_t, pos_s, bsz)
    kernel = make_kernel(offsets, bsz)
    vmem = pltpu.MemorySpace.VMEM
    # TODO(synk): for large B, tile samples-per-step (8 on v6e/v7x, 4 on v5e) with a
    # "parallel" grid axis; and optionally cast blob/activations to bf16 on v6e/v7x.

    @jax.jit
    def fwd(x, scale):
        # rows ordered (b, s, t): row (b*S+s)*T + t
        x_rows = jnp.transpose(x, (0, 2, 1, 3)).reshape(bsz * S * T, D_IN)
        sc_rows = scale.reshape(bsz * S, 2)
        return pl.pallas_call(
            kernel,
            out_shape=jax.ShapeDtypeStruct((bsz, D_OUT), jnp.float32),
            in_specs=[pl.BlockSpec(memory_space=vmem)] * 3,   # whole arrays, single invocation
            out_specs=pl.BlockSpec(memory_space=vmem),
        )(x_rows, sc_rows, blob)

    return fwd


# ------------------------------ pure-JAX reference ---------------------------
def _ref_layer_norm(x, g, b):
    mu = x.mean(-1, keepdims=True)
    var = ((x - mu) ** 2).mean(-1, keepdims=True)
    return (x - mu) / jnp.sqrt(var + LN_EPS) * g + b


def _ref_mha(h, Wqkv, bqkv, Wo, bo, nhead):
    L, N, d = h.shape
    hd = d // nhead
    qkv = jnp.einsum('lnd,ed->lne', h, Wqkv) + bqkv
    q, k, v = qkv[..., :d], qkv[..., d:2 * d], qkv[..., 2 * d:]
    split = lambda t: t.reshape(L, N, nhead, hd).transpose(1, 2, 0, 3)
    q, k, v = split(q), split(k), split(v)
    scores = jnp.einsum('nhqd,nhkd->nhqk', q, k) / np.sqrt(hd)
    p = jax.nn.softmax(scores, axis=-1)
    o = jnp.einsum('nhqk,nhkd->nhqd', p, v)
    o = o.transpose(2, 0, 1, 3).reshape(L, N, d)
    return jnp.einsum('lnd,ed->lne', o, Wo) + bo


def _ref_tx_layer(h, lp, nhead):
    a = _ref_mha(h, lp['Wqkv'], lp['bqkv'], lp['Wo'], lp['bo'], nhead)
    h = _ref_layer_norm(h + a, lp['g1'], lp['be1'])
    f = jax.nn.relu(jnp.einsum('lnd,hd->lnh', h, lp['W1']) + lp['bf1'])
    f = jnp.einsum('lnh,dh->lnd', f, lp['W2']) + lp['bf2']
    return _ref_layer_norm(h + f, lp['g2'], lp['be2'])


def reference_forward(x, scale, p, pos_t, pos_s):
    bsz, tt, ss, d_in = x.shape
    xt = jnp.transpose(x, (1, 0, 2, 3)).reshape(tt, bsz * ss, d_in)   # (T, B*S, d_in)
    # TimeEncoder
    h = jnp.einsum('tnd,md->tnm', xt, p['t_Win']) + p['t_bin']
    h = h + pos_t[:tt][:, None, :]
    for lp in p['t_layers']:
        h = _ref_tx_layer(h, lp, NHEADT)
    h = h + pos_t[:tt][:, None, :]
    y = h.mean(axis=0)                                                # (B*S, d_model)
    # SensorEncoder
    y = y.reshape(bsz, ss, -1).transpose(1, 0, 2)                     # (S, B, d_model)
    sc = jnp.transpose(scale, (1, 0, 2))                              # (S, B, 2)
    y = y + jnp.einsum('sbk,dk->sbd', sc, p['s_Wsc']) + p['s_bsc']
    y = y + pos_s[:ss][:, None, :]
    for lp in p['s_layers']:
        y = _ref_tx_layer(y, lp, NHEADS)
    z = y.transpose(1, 0, 2).mean(axis=1)                             # (B, d_model)
    z = z @ p['s_Wproj'].T + p['s_bproj']
    return z @ p['c_W'].T + p['c_b']                                  # (B, d_out)


# -------------------------------------- main ---------------------------------
if __name__ == "__main__":
    key = jax.random.PRNGKey(0)
    kx, ksc, kp = jax.random.split(key, 3)
    x = jax.random.normal(kx, (B, T, S, D_IN), jnp.float32)
    scale = jax.random.normal(ksc, (B, S, 2), jnp.float32)

    params = init_params(kp)
    pos_tab = positional_encoding(max(T, S) + 2, D_MODEL)
    pos_t = pos_tab[:T]
    pos_s = pos_tab[:S]

    fwd = build_forward(params, pos_t, pos_s, B)      # packs params once, jitted call path
    out = jax.block_until_ready(fwd(x, scale))
    assert out.shape == (B, D_OUT)

    ref = np.asarray(reference_forward(x, scale, params, pos_t, pos_s))
    if not np.allclose(np.asarray(out), ref, rtol=2e-2, atol=2e-2):
        raise AssertionError(
            "Pallas output mismatch: max abs err = %g"
            % float(np.max(np.abs(np.asarray(out) - ref))))

    print("KERNEL_OK")
</pallas_src>

<mosaic_0001>
module attributes {stable_mosaic.version = 11 : i64} {
  func.func @kernel(%arg0: memref<64x6xf32, #tpu.memory_space<vmem>>, %arg1: memref<8x2xf32, #tpu.memory_space<vmem>>, %arg2: memref<1952x128xf32, #tpu.memory_space<vmem>>, %arg3: memref<2x1xf32, #tpu.memory_space<vmem>>) attributes {dimension_semantics = [], scalar_prefetch = 0 : i64, scratch_operands = 0 : i64, tpu.core_type = #tpu.core_type<tc>} {
    %c0 = arith.constant 0 : index
    %c0_0 = arith.constant 0 : index
    %0 = vector.load %arg0[%c0, %c0_0] : memref<64x6xf32, #tpu.memory_space<vmem>>, vector<64x6xf32>
    %c0_1 = arith.constant 0 : index
    %c0_2 = arith.constant 0 : index
    %1 = vector.load %arg2[%c0_1, %c0_2] : memref<1952x128xf32, #tpu.memory_space<vmem>>, vector<6x32xf32>
    %cst = arith.constant dense<0.000000e+00> : vector<64x32xf32>
    %2 = tpu.matmul %0, %1, %cst {dimension_numbers = #tpu.dot_dimension_numbers<[1], [0], [0], [1], [0, 0, 1, 1], [], []>} : vector<64x6xf32>, vector<6x32xf32>, vector<64x32xf32> -> vector<64x32xf32>
    %c8 = arith.constant 8 : index
    %c0_3 = arith.constant 0 : index
    %3 = vector.load %arg2[%c8, %c0_3] : memref<1952x128xf32, #tpu.memory_space<vmem>>, vector<1x32xf32>
    %4 = vector.broadcast %3 : vector<1x32xf32> to vector<64x32xf32>
    %5 = arith.addf %2, %4 : vector<64x32xf32>
    %c16 = arith.constant 16 : index
    %c0_4 = arith.constant 0 : index
    %6 = vector.load %arg2[%c16, %c0_4] : memref<1952x128xf32, #tpu.memory_space<vmem>>, vector<64x32xf32>
    %7 = arith.addf %5, %6 : vector<64x32xf32>
    %c80 = arith.constant 80 : index
    %c0_5 = arith.constant 0 : index
    %8 = vector.load %arg2[%c80, %c0_5] : memref<1952x128xf32, #tpu.memory_space<vmem>>, vector<256x64xf32>
    %c336 = arith.constant 336 : index
    %c0_6 = arith.constant 0 : index
    %9 = vector.load %arg2[%c336, %c0_6] : memref<1952x128xf32, #tpu.memory_space<vmem>>, vector<256x32xf32>
    %c600 = arith.constant 600 : index
    %c0_7 = arith.constant 0 : index
    %10 = vector.load %arg2[%c600, %c0_7] : memref<1952x128xf32, #tpu.memory_space<vmem>>, vector<32x32xf32>
    %cst_8 = arith.constant dense<0.000000e+00> : vector<64x32xf32>
    %11 = tpu.matmul %7, %10, %cst_8 {dimension_numbers = #tpu.dot_dimension_numbers<[1], [0], [0], [1], [0, 0, 1, 1], [], []>} : vector<64x32xf32>, vector<32x32xf32>, vector<64x32xf32> -> vector<64x32xf32>
    %c632 = arith.constant 632 : index
    %c0_9 = arith.constant 0 : index
    %12 = vector.load %arg2[%c632, %c0_9] : memref<1952x128xf32, #tpu.memory_space<vmem>>, vector<1x32xf32>
    %13 = vector.broadcast %12 : vector<1x32xf32> to vector<64x32xf32>
    %14 = arith.addf %11, %13 : vector<64x32xf32>
    %c640 = arith.constant 640 : index
    %c0_10 = arith.constant 0 : index
    %15 = vector.load %arg2[%c640, %c0_10] : memref<1952x128xf32, #tpu.memory_space<vmem>>, vector<32x32xf32>
    %cst_11 = arith.constant dense<0.000000e+00> : vector<64x32xf32>
    %16 = tpu.matmul %7, %15, %cst_11 {dimension_numbers = #tpu.dot_dimension_numbers<[1], [0], [0], [1], [0, 0, 1, 1], [], []>} : vector<64x32xf32>, vector<32x32xf32>, vector<64x32xf32> -> vector<64x32xf32>
    %c672 = arith.constant 672 : index
    %c0_12 = arith.constant 0 : index
    %17 = vector.load %arg2[%c672, %c0_12] : memref<1952x128xf32, #tpu.memory_space<vmem>>, vector<1x32xf32>
    %18 = vector.broadcast %17 : vector<1x32xf32> to vector<64x32xf32>
    %19 = arith.addf %16, %18 : vector<64x32xf32>
    %c680 = arith.constant 680 : index
    %c0_13 = arith.constant 0 : index
    %20 = vector.load %arg2[%c680, %c0_13] : memref<1952x128xf32, #tpu.memory_space<vmem>>, vector<32x32xf32>
    %cst_14 = arith.constant dense<0.000000e+00> : vector<64x32xf32>
    %21 = tpu.matmul %7, %20, %cst_14 {dimension_numbers = #tpu.dot_dimension_numbers<[1], [0], [0], [1], [0, 0, 1, 1], [], []>} : vector<64x32xf32>, vector<32x32xf32>, vector<64x32xf32> -> vector<64x32xf32>
    %c712 = arith.constant 712 : index
    %c0_15 = arith.constant 0 : index
    %22 = vector.load %arg2[%c712, %c0_15] : memref<1952x128xf32, #tpu.memory_space<vmem>>, vector<1x32xf32>
    %23 = vector.broadcast %22 : vector<1x32xf32> to vector<64x32xf32>
    %24 = arith.addf %21, %23 : vector<64x32xf32>
    %25 = tpu.concatenate %14, %14, %14, %14 in 0 : vector<64x32xf32>, vector<64x32xf32>, vector<64x32xf32>, vector<64x32xf32> -> vector<256x32xf32>
    %26 = arith.mulf %25, %9 : vector<256x32xf32>
    %cst_16 = arith.constant dense<0.000000e+00> : vector<256x64xf32>
    %27 = tpu.matmul %26, %19, %cst_16 {dimension_numbers = #tpu.dot_dimension_numbers<[1], [1], [0], [0], [0, 0, 1, 0], [], []>} : vector<256x32xf32>, vector<64x32xf32>, vector<256x64xf32> -> vector<256x64xf32>
    %28 = arith.addf %27, %8 : vector<256x64xf32>
    %cst_17 = arith.constant dense<0xFF800000> : vector<256xf32>
    %29 = vector.multi_reduction <maximumf>, %28, %cst_17 [1] : vector<256x64xf32> to vector<256xf32>
    %30 = vector.shape_cast %29 : vector<256xf32> to vector<256x1xf32>
    %31 = vector.broadcast %30 : vector<256x1xf32> to vector<256x64xf32>
    %32 = arith.subf %28, %31 : vector<256x64xf32>
    %33 = math.exp %32 : vector<256x64xf32>
    %cst_18 = arith.constant dense<0.000000e+00> : vector<256xf32>
    %34 = vector.multi_reduction <add>, %33, %cst_18 [1] : vector<256x64xf32> to vector<256xf32>
    %35 = vector.shape_cast %34 : vector<256xf32> to vector<256x1xf32>
    %36 = tpu.reciprocal %35 {approx = true} : vector<256x1xf32> -> vector<256x1xf32>
    %cst_19 = arith.constant dense<0.000000e+00> : vector<256x32xf32>
    %37 = tpu.matmul %33, %24, %cst_19 {dimension_numbers = #tpu.dot_dimension_numbers<[1], [0], [0], [1], [0, 0, 1, 1], [], []>} : vector<256x64xf32>, vector<64x32xf32>, vector<256x32xf32> -> vector<256x32xf32>
    %38 = vector.broadcast %36 : vector<256x1xf32> to vector<256x32xf32>
    %39 = arith.mulf %37, %38 : vector<256x32xf32>
    %40 = arith.mulf %39, %9 : vector<256x32xf32>
    %41 = vector.extract_strided_slice %40 {offsets = [0, 0], sizes = [64, 32], strides = [1, 1]} : vector<256x32xf32> to vector<64x32xf32>
    %42 = vector.extract_strided_slice %40 {offsets = [64, 0], sizes = [64, 32], strides = [1, 1]} : vector<256x32xf32> to vector<64x32xf32>
    %43 = arith.addf %41, %42 : vector<64x32xf32>
    %44 = vector.extract_strided_slice %40 {offsets = [128, 0], sizes = [64, 32], strides = [1, 1]} : vector<256x32xf32> to vector<64x32xf32>
    %45 = arith.addf %43, %44 : vector<64x32xf32>
    %46 = vector.extract_strided_slice %40 {offsets = [192, 0], sizes = [64, 32], strides = [1, 1]} : vector<256x32xf32> to vector<64x32xf32>
    %47 = arith.addf %45, %46 : vector<64x32xf32>
    %c720 = arith.constant 720 : index
    %c0_20 = arith.constant 0 : index
    %48 = vector.load %arg2[%c720, %c0_20] : memref<1952x128xf32, #tpu.memory_space<vmem>>, vector<32x32xf32>
    %cst_21 = arith.constant dense<0.000000e+00> : vector<64x32xf32>
    %49 = tpu.matmul %47, %48, %cst_21 {dimension_numbers = #tpu.dot_dimension_numbers<[1], [0], [0], [1], [0, 0, 1, 1], [], []>} : vector<64x32xf32>, vector<32x32xf32>, vector<64x32xf32> -> vector<64x32xf32>
    %c752 = arith.constant 752 : index
    %c0_22 = arith.constant 0 : index
    %50 = vector.load %arg2[%c752, %c0_22] : memref<1952x128xf32, #tpu.memory_space<vmem>>, vector<1x32xf32>
    %51 = vector.broadcast %50 : vector<1x32xf32> to vector<64x32xf32>
    %52 = arith.addf %49, %51 : vector<64x32xf32>
    %53 = arith.addf %7, %52 : vector<64x32xf32>
    %c760 = arith.constant 760 : index
    %c0_23 = arith.constant 0 : index
    %54 = vector.load %arg2[%c760, %c0_23] : memref<1952x128xf32, #tpu.memory_space<vmem>>, vector<1x32xf32>
    %c768 = arith.constant 768 : index
    %c0_24 = arith.constant 0 : index
    %55 = vector.load %arg2[%c768, %c0_24] : memref<1952x128xf32, #tpu.memory_space<vmem>>, vector<1x32xf32>
    %cst_25 = arith.constant dense<0.000000e+00> : vector<64xf32>
    %56 = vector.multi_reduction <add>, %53, %cst_25 [1] : vector<64x32xf32> to vector<64xf32>
    %57 = vector.shape_cast %56 : vector<64xf32> to vector<64x1xf32>
    %cst_26 = arith.constant 3.200000e+01 : f32
    %58 = vector.broadcast %cst_26 : f32 to vector<64x1xf32>
    %59 = arith.divf %57, %58 : vector<64x1xf32>
    %60 = vector.broadcast %59 : vector<64x1xf32> to vector<64x32xf32>
    %61 = arith.subf %53, %60 : vector<64x32xf32>
    %62 = arith.mulf %61, %61 : vector<64x32xf32>
    %cst_27 = arith.constant dense<0.000000e+00> : vector<64xf32>
    %63 = vector.multi_reduction <add>, %62, %cst_27 [1] : vector<64x32xf32> to vector<64xf32>
    %64 = vector.shape_cast %63 : vector<64xf32> to vector<64x1xf32>
    %cst_28 = arith.constant 3.200000e+01 : f32
    %65 = vector.broadcast %cst_28 : f32 to vector<64x1xf32>
    %66 = arith.divf %64, %65 : vector<64x1xf32>
    %cst_29 = arith.constant 9.99999974E-6 : f32
    %67 = vector.broadcast %cst_29 : f32 to vector<64x1xf32>
    %68 = arith.addf %66, %67 : vector<64x1xf32>
    %69 = math.rsqrt %68 : vector<64x1xf32>
    %70 = vector.broadcast %69 : vector<64x1xf32> to vector<64x32xf32>
    %71 = arith.mulf %61, %70 : vector<64x32xf32>
    %72 = vector.broadcast %54 : vector<1x32xf32> to vector<64x32xf32>
    %73 = arith.mulf %71, %72 : vector<64x32xf32>
    %74 = vector.broadcast %55 : vector<1x32xf32> to vector<64x32xf32>
    %75 = arith.addf %73, %74 : vector<64x32xf32>
    %c776 = arith.constant 776 : index
    %c0_30 = arith.constant 0 : index
    %76 = vector.load %arg2[%c776, %c0_30] : memref<1952x128xf32, #tpu.memory_space<vmem>>, vector<32x64xf32>
    %cst_31 = arith.constant dense<0.000000e+00> : vector<64x64xf32>
    %77 = tpu.matmul %75, %76, %cst_31 {dimension_numbers = #tpu.dot_dimension_numbers<[1], [0], [0], [1], [0, 0, 1, 1], [], []>} : vector<64x32xf32>, vector<32x64xf32>, vector<64x64xf32> -> vector<64x64xf32>
    %c808 = arith.constant 808 : index
    %c0_32 = arith.constant 0 : index
    %78 = vector.load %arg2[%c808, %c0_32] : memref<1952x128xf32, #tpu.memory_space<vmem>>, vector<1x64xf32>
    %79 = vector.broadcast %78 : vector<1x64xf32> to vector<64x64xf32>
    %80 = arith.addf %77, %79 : vector<64x64xf32>
    %cst_33 = arith.constant 0.000000e+00 : f32
    %81 = vector.broadcast %cst_33 : f32 to vector<64x64xf32>
    %82 = arith.maximumf %80, %81 : vector<64x64xf32>
    %c816 = arith.constant 816 : index
    %c0_34 = arith.constant 0 : index
    %83 = vector.load %arg2[%c816, %c0_34] : memref<1952x128xf32, #tpu.memory_space<vmem>>, vector<64x32xf32>
    %cst_35 = arith.constant dense<0.000000e+00> : vector<64x32xf32>
    %84 = tpu.matmul %82, %83, %cst_35 {dimension_numbers = #tpu.dot_dimension_numbers<[1], [0], [0], [1], [0, 0, 1, 1], [], []>} : vector<64x64xf32>, vector<64x32xf32>, vector<64x32xf32> -> vector<64x32xf32>
    %c880 = arith.constant 880 : index
    %c0_36 = arith.constant 0 : index
    %85 = vector.load %arg2[%c880, %c0_36] : memref<1952x128xf32, #tpu.memory_space<vmem>>, vector<1x32xf32>
    %86 = vector.broadcast %85 : vector<1x32xf32> to vector<64x32xf32>
    %87 = arith.addf %84, %86 : vector<64x32xf32>
    %88 = arith.addf %75, %87 : vector<64x32xf32>
    %c888 = arith.constant 888 : index
    %c0_37 = arith.constant 0 : index
    %89 = vector.load %arg2[%c888, %c0_37] : memref<1952x128xf32, #tpu.memory_space<vmem>>, vector<1x32xf32>
    %c896 = arith.constant 896 : index
    %c0_38 = arith.constant 0 : index
    %90 = vector.load %arg2[%c896, %c0_38] : memref<1952x128xf32, #tpu.memory_space<vmem>>, vector<1x32xf32>
    %cst_39 = arith.constant dense<0.000000e+00> : vector<64xf32>
    %91 = vector.multi_reduction <add>, %88, %cst_39 [1] : vector<64x32xf32> to vector<64xf32>
    %92 = vector.shape_cast %91 : vector<64xf32> to vector<64x1xf32>
    %cst_40 = arith.constant 3.200000e+01 : f32
    %93 = vector.broadcast %cst_40 : f32 to vector<64x1xf32>
    %94 = arith.divf %92, %93 : vector<64x1xf32>
    %95 = vector.broadcast %94 : vector<64x1xf32> to vector<64x32xf32>
    %96 = arith.subf %88, %95 : vector<64x32xf32>
    %97 = arith.mulf %96, %96 : vector<64x32xf32>
    %cst_41 = arith.constant dense<0.000000e+00> : vector<64xf32>
    %98 = vector.multi_reduction <add>, %97, %cst_41 [1] : vector<64x32xf32> to vector<64xf32>
    %99 = vector.shape_cast %98 : vector<64xf32> to vector<64x1xf32>
    %cst_42 = arith.constant 3.200000e+01 : f32
    %100 = vector.broadcast %cst_42 : f32 to vector<64x1xf32>
    %101 = arith.divf %99, %100 : vector<64x1xf32>
    %cst_43 = arith.constant 9.99999974E-6 : f32
    %102 = vector.broadcast %cst_43 : f32 to vector<64x1xf32>
    %103 = arith.addf %101, %102 : vector<64x1xf32>
    %104 = math.rsqrt %103 : vector<64x1xf32>
    %105 = vector.broadcast %104 : vector<64x1xf32> to vector<64x32xf32>
    %106 = arith.mulf %96, %105 : vector<64x32xf32>
    %107 = vector.broadcast %89 : vector<1x32xf32> to vector<64x32xf32>
    %108 = arith.mulf %106, %107 : vector<64x32xf32>
    %109 = vector.broadcast %90 : vector<1x32xf32> to vector<64x32xf32>
    %110 = arith.addf %108, %109 : vector<64x32xf32>
    %c904 = arith.constant 904 : index
    %c0_44 = arith.constant 0 : index
    %111 = vector.load %arg2[%c904, %c0_44] : memref<1952x128xf32, #tpu.memory_space<vmem>>, vector<32x32xf32>
    %cst_45 = arith.constant dense<0.000000e+00> : vector<64x32xf32>
    %112 = tpu.matmul %110, %111, %cst_45 {dimension_numbers = #tpu.dot_dimension_numbers<[1], [0], [0], [1], [0, 0, 1, 1], [], []>} : vector<64x32xf32>, vector<32x32xf32>, vector<64x32xf32> -> vector<64x32xf32>
    %c936 = arith.constant 936 : index
    %c0_46 = arith.constant 0 : index
    %113 = vector.load %arg2[%c936, %c0_46] : memref<1952x128xf32, #tpu.memory_space<vmem>>, vector<1x32xf32>
    %114 = vector.broadcast %113 : vector<1x32xf32> to vector<64x32xf32>
    %115 = arith.addf %112, %114 : vector<64x32xf32>
    %c944 = arith.constant 944 : index
    %c0_47 = arith.constant 0 : index
    %116 = vector.load %arg2[%c944, %c0_47] : memref<1952x128xf32, #tpu.memory_space<vmem>>, vector<32x32xf32>
    %cst_48 = arith.constant dense<0.000000e+00> : vector<64x32xf32>
    %117 = tpu.matmul %110, %116, %cst_48 {dimension_numbers = #tpu.dot_dimension_numbers<[1], [0], [0], [1], [0, 0, 1, 1], [], []>} : vector<64x32xf32>, vector<32x32xf32>, vector<64x32xf32> -> vector<64x32xf32>
    %c976 = arith.constant 976 : index
    %c0_49 = arith.constant 0 : index
    %118 = vector.load %arg2[%c976, %c0_49] : memref<1952x128xf32, #tpu.memory_space<vmem>>, vector<1x32xf32>
    %119 = vector.broadcast %118 : vector<1x32xf32> to vector<64x32xf32>
    %120 = arith.addf %117, %119 : vector<64x32xf32>
    %c984 = arith.constant 984 : index
    %c0_50 = arith.constant 0 : index
    %121 = vector.load %arg2[%c984, %c0_50] : memref<1952x128xf32, #tpu.memory_space<vmem>>, vector<32x32xf32>
    %cst_51 = arith.constant dense<0.000000e+00> : vector<64x32xf32>
    %122 = tpu.matmul %110, %121, %cst_51 {dimension_numbers = #tpu.dot_dimension_numbers<[1], [0], [0], [1], [0, 0, 1, 1], [], []>} : vector<64x32xf32>, vector<32x32xf32>, vector<64x32xf32> -> vector<64x32xf32>
    %c1016 = arith.constant 1016 : index
    %c0_52 = arith.constant 0 : index
    %123 = vector.load %arg2[%c1016, %c0_52] : memref<1952x128xf32, #tpu.memory_space<vmem>>, vector<1x32xf32>
    %124 = vector.broadcast %123 : vector<1x32xf32> to vector<64x32xf32>
    %125 = arith.addf %122, %124 : vector<64x32xf32>
    %126 = tpu.concatenate %115, %115, %115, %115 in 0 : vector<64x32xf32>, vector<64x32xf32>, vector<64x32xf32>, vector<64x32xf32> -> vector<256x32xf32>
    %127 = arith.mulf %126, %9 : vector<256x32xf32>
    %cst_53 = arith.constant dense<0.000000e+00> : vector<256x64xf32>
    %128 = tpu.matmul %127, %120, %cst_53 {dimension_numbers = #tpu.dot_dimension_numbers<[1], [1], [0], [0], [0, 0, 1, 0], [], []>} : vector<256x32xf32>, vector<64x32xf32>, vector<256x64xf32> -> vector<256x64xf32>
    %129 = arith.addf %128, %8 : vector<256x64xf32>
    %cst_54 = arith.constant dense<0xFF800000> : vector<256xf32>
    %130 = vector.multi_reduction <maximumf>, %129, %cst_54 [1] : vector<256x64xf32> to vector<256xf32>
    %131 = vector.shape_cast %130 : vector<256xf32> to vector<256x1xf32>
    %132 = vector.broadcast %131 : vector<256x1xf32> to vector<256x64xf32>
    %133 = arith.subf %129, %132 : vector<256x64xf32>
    %134 = math.exp %133 : vector<256x64xf32>
    %cst_55 = arith.constant dense<0.000000e+00> : vector<256xf32>
    %135 = vector.multi_reduction <add>, %134, %cst_55 [1] : vector<256x64xf32> to vector<256xf32>
    %136 = vector.shape_cast %135 : vector<256xf32> to vector<256x1xf32>
    %137 = tpu.reciprocal %136 {approx = true} : vector<256x1xf32> -> vector<256x1xf32>
    %cst_56 = arith.constant dense<0.000000e+00> : vector<256x32xf32>
    %138 = tpu.matmul %134, %125, %cst_56 {dimension_numbers = #tpu.dot_dimension_numbers<[1], [0], [0], [1], [0, 0, 1, 1], [], []>} : vector<256x64xf32>, vector<64x32xf32>, vector<256x32xf32> -> vector<256x32xf32>
    %139 = vector.broadcast %137 : vector<256x1xf32> to vector<256x32xf32>
    %140 = arith.mulf %138, %139 : vector<256x32xf32>
    %141 = arith.mulf %140, %9 : vector<256x32xf32>
    %142 = vector.extract_strided_slice %141 {offsets = [0, 0], sizes = [64, 32], strides = [1, 1]} : vector<256x32xf32> to vector<64x32xf32>
    %143 = vector.extract_strided_slice %141 {offsets = [64, 0], sizes = [64, 32], strides = [1, 1]} : vector<256x32xf32> to vector<64x32xf32>
    %144 = arith.addf %142, %143 : vector<64x32xf32>
    %145 = vector.extract_strided_slice %141 {offsets = [128, 0], sizes = [64, 32], strides = [1, 1]} : vector<256x32xf32> to vector<64x32xf32>
    %146 = arith.addf %144, %145 : vector<64x32xf32>
    %147 = vector.extract_strided_slice %141 {offsets = [192, 0], sizes = [64, 32], strides = [1, 1]} : vector<256x32xf32> to vector<64x32xf32>
    %148 = arith.addf %146, %147 : vector<64x32xf32>
    %c1024 = arith.constant 1024 : index
    %c0_57 = arith.constant 0 : index
    %149 = vector.load %arg2[%c1024, %c0_57] : memref<1952x128xf32, #tpu.memory_space<vmem>>, vector<32x32xf32>
    %cst_58 = arith.constant dense<0.000000e+00> : vector<64x32xf32>
    %150 = tpu.matmul %148, %149, %cst_58 {dimension_numbers = #tpu.dot_dimension_numbers<[1], [0], [0], [1], [0, 0, 1, 1], [], []>} : vector<64x32xf32>, vector<32x32xf32>, vector<64x32xf32> -> vector<64x32xf32>
    %c1056 = arith.constant 1056 : index
    %c0_59 = arith.constant 0 : index
    %151 = vector.load %arg2[%c1056, %c0_59] : memref<1952x128xf32, #tpu.memory_space<vmem>>, vector<1x32xf32>
    %152 = vector.broadcast %151 : vector<1x32xf32> to vector<64x32xf32>
    %153 = arith.addf %150, %152 : vector<64x32xf32>
    %154 = arith.addf %110, %153 : vector<64x32xf32>
    %c1064 = arith.constant 1064 : index
    %c0_60 = arith.constant 0 : index
    %155 = vector.load %arg2[%c1064, %c0_60] : memref<1952x128xf32, #tpu.memory_space<vmem>>, vector<1x32xf32>
    %c1072 = arith.constant 1072 : index
    %c0_61 = arith.constant 0 : index
    %156 = vector.load %arg2[%c1072, %c0_61] : memref<1952x128xf32, #tpu.memory_space<vmem>>, vector<1x32xf32>
    %cst_62 = arith.constant dense<0.000000e+00> : vector<64xf32>
    %157 = vector.multi_reduction <add>, %154, %cst_62 [1] : vector<64x32xf32> to vector<64xf32>
    %158 = vector.shape_cast %157 : vector<64xf32> to vector<64x1xf32>
    %cst_63 = arith.constant 3.200000e+01 : f32
    %159 = vector.broadcast %cst_63 : f32 to vector<64x1xf32>
    %160 = arith.divf %158, %159 : vector<64x1xf32>
    %161 = vector.broadcast %160 : vector<64x1xf32> to vector<64x32xf32>
    %162 = arith.subf %154, %161 : vector<64x32xf32>
    %163 = arith.mulf %162, %162 : vector<64x32xf32>
    %cst_64 = arith.constant dense<0.000000e+00> : vector<64xf32>
    %164 = vector.multi_reduction <add>, %163, %cst_64 [1] : vector<64x32xf32> to vector<64xf32>
    %165 = vector.shape_cast %164 : vector<64xf32> to vector<64x1xf32>
    %cst_65 = arith.constant 3.200000e+01 : f32
    %166 = vector.broadcast %cst_65 : f32 to vector<64x1xf32>
    %167 = arith.divf %165, %166 : vector<64x1xf32>
    %cst_66 = arith.constant 9.99999974E-6 : f32
    %168 = vector.broadcast %cst_66 : f32 to vector<64x1xf32>
    %169 = arith.addf %167, %168 : vector<64x1xf32>
    %170 = math.rsqrt %169 : vector<64x1xf32>
    %171 = vector.broadcast %170 : vector<64x1xf32> to vector<64x32xf32>
    %172 = arith.mulf %162, %171 : vector<64x32xf32>
    %173 = vector.broadcast %155 : vector<1x32xf32> to vector<64x32xf32>
    %174 = arith.mulf %172, %173 : vector<64x32xf32>
    %175 = vector.broadcast %156 : vector<1x32xf32> to vector<64x32xf32>
    %176 = arith.addf %174, %175 : vector<64x32xf32>
    %c1080 = arith.constant 1080 : index
    %c0_67 = arith.constant 0 : index
    %177 = vector.load %arg2[%c1080, %c0_67] : memref<1952x128xf32, #tpu.memory_space<vmem>>, vector<32x64xf32>
    %cst_68 = arith.constant dense<0.000000e+00> : vector<64x64xf32>
    %178 = tpu.matmul %176, %177, %cst_68 {dimension_numbers = #tpu.dot_dimension_numbers<[1], [0], [0], [1], [0, 0, 1, 1], [], []>} : vector<64x32xf32>, vector<32x64xf32>, vector<64x64xf32> -> vector<64x64xf32>
    %c1112 = arith.constant 1112 : index
    %c0_69 = arith.constant 0 : index
    %179 = vector.load %arg2[%c1112, %c0_69] : memref<1952x128xf32, #tpu.memory_space<vmem>>, vector<1x64xf32>
    %180 = vector.broadcast %179 : vector<1x64xf32> to vector<64x64xf32>
    %181 = arith.addf %178, %180 : vector<64x64xf32>
    %cst_70 = arith.constant 0.000000e+00 : f32
    %182 = vector.broadcast %cst_70 : f32 to vector<64x64xf32>
    %183 = arith.maximumf %181, %182 : vector<64x64xf32>
    %c1120 = arith.constant 1120 : index
    %c0_71 = arith.constant 0 : index
    %184 = vector.load %arg2[%c1120, %c0_71] : memref<1952x128xf32, #tpu.memory_space<vmem>>, vector<64x32xf32>
    %cst_72 = arith.constant dense<0.000000e+00> : vector<64x32xf32>
    %185 = tpu.matmul %183, %184, %cst_72 {dimension_numbers = #tpu.dot_dimension_numbers<[1], [0], [0], [1], [0, 0, 1, 1], [], []>} : vector<64x64xf32>, vector<64x32xf32>, vector<64x32xf32> -> vector<64x32xf32>
    %c1184 = arith.constant 1184 : index
    %c0_73 = arith.constant 0 : index
    %186 = vector.load %arg2[%c1184, %c0_73] : memref<1952x128xf32, #tpu.memory_space<vmem>>, vector<1x32xf32>
    %187 = vector.broadcast %186 : vector<1x32xf32> to vector<64x32xf32>
    %188 = arith.addf %185, %187 : vector<64x32xf32>
    %189 = arith.addf %176, %188 : vector<64x32xf32>
    %c1192 = arith.constant 1192 : index
    %c0_74 = arith.constant 0 : index
    %190 = vector.load %arg2[%c1192, %c0_74] : memref<1952x128xf32, #tpu.memory_space<vmem>>, vector<1x32xf32>
    %c1200 = arith.constant 1200 : index
    %c0_75 = arith.constant 0 : index
    %191 = vector.load %arg2[%c1200, %c0_75] : memref<1952x128xf32, #tpu.memory_space<vmem>>, vector<1x32xf32>
    %cst_76 = arith.constant dense<0.000000e+00> : vector<64xf32>
    %192 = vector.multi_reduction <add>, %189, %cst_76 [1] : vector<64x32xf32> to vector<64xf32>
    %193 = vector.shape_cast %192 : vector<64xf32> to vector<64x1xf32>
    %cst_77 = arith.constant 3.200000e+01 : f32
    %194 = vector.broadcast %cst_77 : f32 to vector<64x1xf32>
    %195 = arith.divf %193, %194 : vector<64x1xf32>
    %196 = vector.broadcast %195 : vector<64x1xf32> to vector<64x32xf32>
    %197 = arith.subf %189, %196 : vector<64x32xf32>
    %198 = arith.mulf %197, %197 : vector<64x32xf32>
    %cst_78 = arith.constant dense<0.000000e+00> : vector<64xf32>
    %199 = vector.multi_reduction <add>, %198, %cst_78 [1] : vector<64x32xf32> to vector<64xf32>
    %200 = vector.shape_cast %199 : vector<64xf32> to vector<64x1xf32>
    %cst_79 = arith.constant 3.200000e+01 : f32
    %201 = vector.broadcast %cst_79 : f32 to vector<64x1xf32>
    %202 = arith.divf %200, %201 : vector<64x1xf32>
    %cst_80 = arith.constant 9.99999974E-6 : f32
    %203 = vector.broadcast %cst_80 : f32 to vector<64x1xf32>
    %204 = arith.addf %202, %203 : vector<64x1xf32>
    %205 = math.rsqrt %204 : vector<64x1xf32>
    %206 = vector.broadcast %205 : vector<64x1xf32> to vector<64x32xf32>
    %207 = arith.mulf %197, %206 : vector<64x32xf32>
    %208 = vector.broadcast %190 : vector<1x32xf32> to vector<64x32xf32>
    %209 = arith.mulf %207, %208 : vector<64x32xf32>
    %210 = vector.broadcast %191 : vector<1x32xf32> to vector<64x32xf32>
    %211 = arith.addf %209, %210 : vector<64x32xf32>
    %212 = arith.addf %211, %6 : vector<64x32xf32>
    %c592 = arith.constant 592 : index
    %c0_81 = arith.constant 0 : index
    %213 = vector.load %arg2[%c592, %c0_81] : memref<1952x128xf32, #tpu.memory_space<vmem>>, vector<8x64xf32>
    %cst_82 = arith.constant dense<0.000000e+00> : vector<8x32xf32>
    %214 = tpu.matmul %213, %212, %cst_82 {dimension_numbers = #tpu.dot_dimension_numbers<[1], [0], [0], [1], [0, 0, 1, 1], [], []>} : vector<8x64xf32>, vector<64x32xf32>, vector<8x32xf32> -> vector<8x32xf32>
    %c0_83 = arith.constant 0 : index
    %c0_84 = arith.constant 0 : index
    %215 = vector.load %arg1[%c0_83, %c0_84] : memref<8x2xf32, #tpu.memory_space<vmem>>, vector<8x2xf32>
    %c1208 = arith.constant 1208 : index
    %c0_85 = arith.constant 0 : index
    %216 = vector.load %arg2[%c1208, %c0_85] : memref<1952x128xf32, #tpu.memory_space<vmem>>, vector<2x32xf32>
    %cst_86 = arith.constant dense<0.000000e+00> : vector<8x32xf32>
    %217 = tpu.matmul %215, %216, %cst_86 {dimension_numbers = #tpu.dot_dimension_numbers<[1], [0], [0], [1], [0, 0, 1, 1], [], []>} : vector<8x2xf32>, vector<2x32xf32>, vector<8x32xf32> -> vector<8x32xf32>
    %218 = arith.addf %214, %217 : vector<8x32xf32>
    %c1216 = arith.constant 1216 : index
    %c0_87 = arith.constant 0 : index
    %219 = vector.load %arg2[%c1216, %c0_87] : memref<1952x128xf32, #tpu.memory_space<vmem>>, vector<1x32xf32>
    %220 = vector.broadcast %219 : vector<1x32xf32> to vector<8x32xf32>
    %221 = arith.addf %218, %220 : vector<8x32xf32>
    %c1224 = arith.constant 1224 : index
    %c0_88 = arith.constant 0 : index
    %222 = vector.load %arg2[%c1224, %c0_88] : memref<1952x128xf32, #tpu.memory_space<vmem>>, vector<8x32xf32>
    %223 = arith.addf %221, %222 : vector<8x32xf32>
    %c1232 = arith.constant 1232 : index
    %c0_89 = arith.constant 0 : index
    %224 = vector.load %arg2[%c1232, %c0_89] : memref<1952x128xf32, #tpu.memory_space<vmem>>, vector<32x8xf32>
    %c1264 = arith.constant 1264 : index
    %c0_90 = arith.constant 0 : index
    %225 = vector.load %arg2[%c1264, %c0_90] : memref<1952x128xf32, #tpu.memory_space<vmem>>, vector<32x32xf32>
    %c1296 = arith.constant 1296 : index
    %c0_91 = arith.constant 0 : index
    %226 = vector.load %arg2[%c1296, %c0_91] : memref<1952x128xf32, #tpu.memory_space<vmem>>, vector<32x32xf32>
    %cst_92 = arith.constant dense<0.000000e+00> : vector<8x32xf32>
    %227 = tpu.matmul %223, %226, %cst_92 {dimension_numbers = #tpu.dot_dimension_numbers<[1], [0], [0], [1], [0, 0, 1, 1], [], []>} : vector<8x32xf32>, vector<32x32xf32>, vector<8x32xf32> -> vector<8x32xf32>
    %c1328 = arith.constant 1328 : index
    %c0_93 = arith.constant 0 : index
    %228 = vector.load %arg2[%c1328, %c0_93] : memref<1952x128xf32, #tpu.memory_space<vmem>>, vector<1x32xf32>
    %229 = vector.broadcast %228 : vector<1x32xf32> to vector<8x32xf32>
    %230 = arith.addf %227, %229 : vector<8x32xf32>
    %c1336 = arith.constant 1336 : index
    %c0_94 = arith.constant 0 : index
    %231 = vector.load %arg2[%c1336, %c0_94] : memref<1952x128xf32, #tpu.memory_space<vmem>>, vector<32x32xf32>
    %cst_95 = arith.constant dense<0.000000e+00> : vector<8x32xf32>
    %232 = tpu.matmul %223, %231, %cst_95 {dimension_numbers = #tpu.dot_dimension_numbers<[1], [0], [0], [1], [0, 0, 1, 1], [], []>} : vector<8x32xf32>, vector<32x32xf32>, vector<8x32xf32> -> vector<8x32xf32>
    %c1368 = arith.constant 1368 : index
    %c0_96 = arith.constant 0 : index
    %233 = vector.load %arg2[%c1368, %c0_96] : memref<1952x128xf32, #tpu.memory_space<vmem>>, vector<1x32xf32>
    %234 = vector.broadcast %233 : vector<1x32xf32> to vector<8x32xf32>
    %235 = arith.addf %232, %234 : vector<8x32xf32>
    %c1376 = arith.constant 1376 : index
    %c0_97 = arith.constant 0 : index
    %236 = vector.load %arg2[%c1376, %c0_97] : memref<1952x128xf32, #tpu.memory_space<vmem>>, vector<32x32xf32>
    %cst_98 = arith.constant dense<0.000000e+00> : vector<8x32xf32>
    %237 = tpu.matmul %223, %236, %cst_98 {dimension_numbers = #tpu.dot_dimension_numbers<[1], [0], [0], [1], [0, 0, 1, 1], [], []>} : vector<8x32xf32>, vector<32x32xf32>, vector<8x32xf32> -> vector<8x32xf32>
    %c1408 = arith.constant 1408 : index
    %c0_99 = arith.constant 0 : index
    %238 = vector.load %arg2[%c1408, %c0_99] : memref<1952x128xf32, #tpu.memory_space<vmem>>, vector<1x32xf32>
    %239 = vector.broadcast %238 : vector<1x32xf32> to vector<8x32xf32>
    %240 = arith.addf %237, %239 : vector<8x32xf32>
    %241 = tpu.concatenate %230, %230, %230, %230 in 0 : vector<8x32xf32>, vector<8x32xf32>, vector<8x32xf32>, vector<8x32xf32> -> vector<32x32xf32>
    %242 = arith.mulf %241, %225 : vector<32x32xf32>
    %cst_100 = arith.constant dense<0.000000e+00> : vector<32x8xf32>
    %243 = tpu.matmul %242, %235, %cst_100 {dimension_numbers = #tpu.dot_dimension_numbers<[1], [1], [0], [0], [0, 0, 1, 0], [], []>} : vector<32x32xf32>, vector<8x32xf32>, vector<32x8xf32> -> vector<32x8xf32>
    %244 = arith.addf %243, %224 : vector<32x8xf32>
    %cst_101 = arith.constant dense<0xFF800000> : vector<32xf32>
    %245 = vector.multi_reduction <maximumf>, %244, %cst_101 [1] : vector<32x8xf32> to vector<32xf32>
    %246 = vector.shape_cast %245 : vector<32xf32> to vector<32x1xf32>
    %247 = vector.broadcast %246 : vector<32x1xf32> to vector<32x8xf32>
    %248 = arith.subf %244, %247 : vector<32x8xf32>
    %249 = math.exp %248 : vector<32x8xf32>
    %cst_102 = arith.constant dense<0.000000e+00> : vector<32xf32>
    %250 = vector.multi_reduction <add>, %249, %cst_102 [1] : vector<32x8xf32> to vector<32xf32>
    %251 = vector.shape_cast %250 : vector<32xf32> to vector<32x1xf32>
    %252 = tpu.reciprocal %251 {approx = true} : vector<32x1xf32> -> vector<32x1xf32>
    %cst_103 = arith.constant dense<0.000000e+00> : vector<32x32xf32>
    %253 = tpu.matmul %249, %240, %cst_103 {dimension_numbers = #tpu.dot_dimension_numbers<[1], [0], [0], [1], [0, 0, 1, 1], [], []>} : vector<32x8xf32>, vector<8x32xf32>, vector<32x32xf32> -> vector<32x32xf32>
    %254 = vector.broadcast %252 : vector<32x1xf32> to vector<32x32xf32>
    %255 = arith.mulf %253, %254 : vector<32x32xf32>
    %256 = arith.mulf %255, %225 : vector<32x32xf32>
    %257 = vector.extract_strided_slice %256 {offsets = [0, 0], sizes = [8, 32], strides = [1, 1]} : vector<32x32xf32> to vector<8x32xf32>
    %258 = vector.extract_strided_slice %256 {offsets = [8, 0], sizes = [8, 32], strides = [1, 1]} : vector<32x32xf32> to vector<8x32xf32>
    %259 = arith.addf %257, %258 : vector<8x32xf32>
    %260 = vector.extract_strided_slice %256 {offsets = [16, 0], sizes = [8, 32], strides = [1, 1]} : vector<32x32xf32> to vector<8x32xf32>
    %261 = arith.addf %259, %260 : vector<8x32xf32>
    %262 = vector.extract_strided_slice %256 {offsets = [24, 0], sizes = [8, 32], strides = [1, 1]} : vector<32x32xf32> to vector<8x32xf32>
    %263 = arith.addf %261, %262 : vector<8x32xf32>
    %c1416 = arith.constant 1416 : index
    %c0_104 = arith.constant 0 : index
    %264 = vector.load %arg2[%c1416, %c0_104] : memref<1952x128xf32, #tpu.memory_space<vmem>>, vector<32x32xf32>
    %cst_105 = arith.constant dense<0.000000e+00> : vector<8x32xf32>
    %265 = tpu.matmul %263, %264, %cst_105 {dimension_numbers = #tpu.dot_dimension_numbers<[1], [0], [0], [1], [0, 0, 1, 1], [], []>} : vector<8x32xf32>, vector<32x32xf32>, vector<8x32xf32> -> vector<8x32xf32>
    %c1448 = arith.constant 1448 : index
    %c0_106 = arith.constant 0 : index
    %266 = vector.load %arg2[%c1448, %c0_106] : memref<1952x128xf32, #tpu.memory_space<vmem>>, vector<1x32xf32>
    %267 = vector.broadcast %266 : vector<1x32xf32> to vector<8x32xf32>
    %268 = arith.addf %265, %267 : vector<8x32xf32>
    %269 = arith.addf %223, %268 : vector<8x32xf32>
    %c1456 = arith.constant 1456 : index
    %c0_107 = arith.constant 0 : index
    %270 = vector.load %arg2[%c1456, %c0_107] : memref<1952x128xf32, #tpu.memory_space<vmem>>, vector<1x32xf32>
    %c1464 = arith.constant 1464 : index
    %c0_108 = arith.constant 0 : index
    %271 = vector.load %arg2[%c1464, %c0_108] : memref<1952x128xf32, #tpu.memory_space<vmem>>, vector<1x32xf32>
    %cst_109 = arith.constant dense<0.000000e+00> : vector<8xf32>
    %272 = vector.multi_reduction <add>, %269, %cst_109 [1] : vector<8x32xf32> to vector<8xf32>
    %273 = vector.shape_cast %272 : vector<8xf32> to vector<8x1xf32>
    %cst_110 = arith.constant 3.200000e+01 : f32
    %274 = vector.broadcast %cst_110 : f32 to vector<8x1xf32>
    %275 = arith.divf %273, %274 : vector<8x1xf32>
    %276 = vector.broadcast %275 : vector<8x1xf32> to vector<8x32xf32>
    %277 = arith.subf %269, %276 : vector<8x32xf32>
    %278 = arith.mulf %277, %277 : vector<8x32xf32>
    %cst_111 = arith.constant dense<0.000000e+00> : vector<8xf32>
    %279 = vector.multi_reduction <add>, %278, %cst_111 [1] : vector<8x32xf32> to vector<8xf32>
    %280 = vector.shape_cast %279 : vector<8xf32> to vector<8x1xf32>
    %cst_112 = arith.constant 3.200000e+01 : f32
    %281 = vector.broadcast %cst_112 : f32 to vector<8x1xf32>
    %282 = arith.divf %280, %281 : vector<8x1xf32>
    %cst_113 = arith.constant 9.99999974E-6 : f32
    %283 = vector.broadcast %cst_113 : f32 to vector<8x1xf32>
    %284 = arith.addf %282, %283 : vector<8x1xf32>
    %285 = math.rsqrt %284 : vector<8x1xf32>
    %286 = vector.broadcast %285 : vector<8x1xf32> to vector<8x32xf32>
    %287 = arith.mulf %277, %286 : vector<8x32xf32>
    %288 = vector.broadcast %270 : vector<1x32xf32> to vector<8x32xf32>
    %289 = arith.mulf %287, %288 : vector<8x32xf32>
    %290 = vector.broadcast %271 : vector<1x32xf32> to vector<8x32xf32>
    %291 = arith.addf %289, %290 : vector<8x32xf32>
    %c1472 = arith.constant 1472 : index
    %c0_114 = arith.constant 0 : index
    %292 = vector.load %arg2[%c1472, %c0_114] : memref<1952x128xf32, #tpu.memory_space<vmem>>, vector<32x64xf32>
    %cst_115 = arith.constant dense<0.000000e+00> : vector<8x64xf32>
    %293 = tpu.matmul %291, %292, %cst_115 {dimension_numbers = #tpu.dot_dimension_numbers<[1], [0], [0], [1], [0, 0, 1, 1], [], []>} : vector<8x32xf32>, vector<32x64xf32>, vector<8x64xf32> -> vector<8x64xf32>
    %c1504 = arith.constant 1504 : index
    %c0_116 = arith.constant 0 : index
    %294 = vector.load %arg2[%c1504, %c0_116] : memref<1952x128xf32, #tpu.memory_space<vmem>>, vector<1x64xf32>
    %295 = vector.broadcast %294 : vector<1x64xf32> to vector<8x64xf32>
    %296 = arith.addf %293, %295 : vector<8x64xf32>
    %cst_117 = arith.constant 0.000000e+00 : f32
    %297 = vector.broadcast %cst_117 : f32 to vector<8x64xf32>
    %298 = arith.maximumf %296, %297 : vector<8x64xf32>
    %c1512 = arith.constant 1512 : index
    %c0_118 = arith.constant 0 : index
    %299 = vector.load %arg2[%c1512, %c0_118] : memref<1952x128xf32, #tpu.memory_space<vmem>>, vector<64x32xf32>
    %cst_119 = arith.constant dense<0.000000e+00> : vector<8x32xf32>
    %300 = tpu.matmul %298, %299, %cst_119 {dimension_numbers = #tpu.dot_dimension_numbers<[1], [0], [0], [1], [0, 0, 1, 1], [], []>} : vector<8x64xf32>, vector<64x32xf32>, vector<8x32xf32> -> vector<8x32xf32>
    %c1576 = arith.constant 1576 : index
    %c0_120 = arith.constant 0 : index
    %301 = vector.load %arg2[%c1576, %c0_120] : memref<1952x128xf32, #tpu.memory_space<vmem>>, vector<1x32xf32>
    %302 = vector.broadcast %301 : vector<1x32xf32> to vector<8x32xf32>
    %303 = arith.addf %300, %302 : vector<8x32xf32>
    %304 = arith.addf %291, %303 : vector<8x32xf32>
    %c1584 = arith.constant 1584 : index
    %c0_121 = arith.constant 0 : index
    %305 = vector.load %arg2[%c1584, %c0_121] : memref<1952x128xf32, #tpu.memory_space<vmem>>, vector<1x32xf32>
    %c1592 = arith.constant 1592 : index
    %c0_122 = arith.constant 0 : index
    %306 = vector.load %arg2[%c1592, %c0_122] : memref<1952x128xf32, #tpu.memory_space<vmem>>, vector<1x32xf32>
    %cst_123 = arith.constant dense<0.000000e+00> : vector<8xf32>
    %307 = vector.multi_reduction <add>, %304, %cst_123 [1] : vector<8x32xf32> to vector<8xf32>
    %308 = vector.shape_cast %307 : vector<8xf32> to vector<8x1xf32>
    %cst_124 = arith.constant 3.200000e+01 : f32
    %309 = vector.broadcast %cst_124 : f32 to vector<8x1xf32>
    %310 = arith.divf %308, %309 : vector<8x1xf32>
    %311 = vector.broadcast %310 : vector<8x1xf32> to vector<8x32xf32>
    %312 = arith.subf %304, %311 : vector<8x32xf32>
    %313 = arith.mulf %312, %312 : vector<8x32xf32>
    %cst_125 = arith.constant dense<0.000000e+00> : vector<8xf32>
    %314 = vector.multi_reduction <add>, %313, %cst_125 [1] : vector<8x32xf32> to vector<8xf32>
    %315 = vector.shape_cast %314 : vector<8xf32> to vector<8x1xf32>
    %cst_126 = arith.constant 3.200000e+01 : f32
    %316 = vector.broadcast %cst_126 : f32 to vector<8x1xf32>
    %317 = arith.divf %315, %316 : vector<8x1xf32>
    %cst_127 = arith.constant 9.99999974E-6 : f32
    %318 = vector.broadcast %cst_127 : f32 to vector<8x1xf32>
    %319 = arith.addf %317, %318 : vector<8x1xf32>
    %320 = math.rsqrt %319 : vector<8x1xf32>
    %321 = vector.broadcast %320 : vector<8x1xf32> to vector<8x32xf32>
    %322 = arith.mulf %312, %321 : vector<8x32xf32>
    %323 = vector.broadcast %305 : vector<1x32xf32> to vector<8x32xf32>
    %324 = arith.mulf %322, %323 : vector<8x32xf32>
    %325 = vector.broadcast %306 : vector<1x32xf32> to vector<8x32xf32>
    %326 = arith.addf %324, %325 : vector<8x32xf32>
    %c1600 = arith.constant 1600 : index
    %c0_128 = arith.constant 0 : index
    %327 = vector.load %arg2[%c1600, %c0_128] : memref<1952x128xf32, #tpu.memory_space<vmem>>, vector<32x32xf32>
    %cst_129 = arith.constant dense<0.000000e+00> : vector<8x32xf32>
    %328 = tpu.matmul %326, %327, %cst_129 {dimension_numbers = #tpu.dot_dimension_numbers<[1], [0], [0], [1], [0, 0, 1, 1], [], []>} : vector<8x32xf32>, vector<32x32xf32>, vector<8x32xf32> -> vector<8x32xf32>
    %c1632 = arith.constant 1632 : index
    %c0_130 = arith.constant 0 : index
    %329 = vector.load %arg2[%c1632, %c0_130] : memref<1952x128xf32, #tpu.memory_space<vmem>>, vector<1x32xf32>
    %330 = vector.broadcast %329 : vector<1x32xf32> to vector<8x32xf32>
    %331 = arith.addf %328, %330 : vector<8x32xf32>
    %c1640 = arith.constant 1640 : index
    %c0_131 = arith.constant 0 : index
    %332 = vector.load %arg2[%c1640, %c0_131] : memref<1952x128xf32, #tpu.memory_space<vmem>>, vector<32x32xf32>
    %cst_132 = arith.constant dense<0.000000e+00> : vector<8x32xf32>
    %333 = tpu.matmul %326, %332, %cst_132 {dimension_numbers = #tpu.dot_dimension_numbers<[1], [0], [0], [1], [0, 0, 1, 1], [], []>} : vector<8x32xf32>, vector<32x32xf32>, vector<8x32xf32> -> vector<8x32xf32>
    %c1672 = arith.constant 1672 : index
    %c0_133 = arith.constant 0 : index
    %334 = vector.load %arg2[%c1672, %c0_133] : memref<1952x128xf32, #tpu.memory_space<vmem>>, vector<1x32xf32>
    %335 = vector.broadcast %334 : vector<1x32xf32> to vector<8x32xf32>
    %336 = arith.addf %333, %335 : vector<8x32xf32>
    %c1680 = arith.constant 1680 : index
    %c0_134 = arith.constant 0 : index
    %337 = vector.load %arg2[%c1680, %c0_134] : memref<1952x128xf32, #tpu.memory_space<vmem>>, vector<32x32xf32>
    %cst_135 = arith.constant dense<0.000000e+00> : vector<8x32xf32>
    %338 = tpu.matmul %326, %337, %cst_135 {dimension_numbers = #tpu.dot_dimension_numbers<[1], [0], [0], [1], [0, 0, 1, 1], [], []>} : vector<8x32xf32>, vector<32x32xf32>, vector<8x32xf32> -> vector<8x32xf32>
    %c1712 = arith.constant 1712 : index
    %c0_136 = arith.constant 0 : index
    %339 = vector.load %arg2[%c1712, %c0_136] : memref<1952x128xf32, #tpu.memory_space<vmem>>, vector<1x32xf32>
    %340 = vector.broadcast %339 : vector<1x32xf32> to vector<8x32xf32>
    %341 = arith.addf %338, %340 : vector<8x32xf32>
    %342 = tpu.concatenate %331, %331, %331, %331 in 0 : vector<8x32xf32>, vector<8x32xf32>, vector<8x32xf32>, vector<8x32xf32> -> vector<32x32xf32>
    %343 = arith.mulf %342, %225 : vector<32x32xf32>
    %cst_137 = arith.constant dense<0.000000e+00> : vector<32x8xf32>
    %344 = tpu.matmul %343, %336, %cst_137 {dimension_numbers = #tpu.dot_dimension_numbers<[1], [1], [0], [0], [0, 0, 1, 0], [], []>} : vector<32x32xf32>, vector<8x32xf32>, vector<32x8xf32> -> vector<32x8xf32>
    %345 = arith.addf %344, %224 : vector<32x8xf32>
    %cst_138 = arith.constant dense<0xFF800000> : vector<32xf32>
    %346 = vector.multi_reduction <maximumf>, %345, %cst_138 [1] : vector<32x8xf32> to vector<32xf32>
    %347 = vector.shape_cast %346 : vector<32xf32> to vector<32x1xf32>
    %348 = vector.broadcast %347 : vector<32x1xf32> to vector<32x8xf32>
    %349 = arith.subf %345, %348 : vector<32x8xf32>
    %350 = math.exp %349 : vector<32x8xf32>
    %cst_139 = arith.constant dense<0.000000e+00> : vector<32xf32>
    %351 = vector.multi_reduction <add>, %350, %cst_139 [1] : vector<32x8xf32> to vector<32xf32>
    %352 = vector.shape_cast %351 : vector<32xf32> to vector<32x1xf32>
    %353 = tpu.reciprocal %352 {approx = true} : vector<32x1xf32> -> vector<32x1xf32>
    %cst_140 = arith.constant dense<0.000000e+00> : vector<32x32xf32>
    %354 = tpu.matmul %350, %341, %cst_140 {dimension_numbers = #tpu.dot_dimension_numbers<[1], [0], [0], [1], [0, 0, 1, 1], [], []>} : vector<32x8xf32>, vector<8x32xf32>, vector<32x32xf32> -> vector<32x32xf32>
    %355 = vector.broadcast %353 : vector<32x1xf32> to vector<32x32xf32>
    %356 = arith.mulf %354, %355 : vector<32x32xf32>
    %357 = arith.mulf %356, %225 : vector<32x32xf32>
    %358 = vector.extract_strided_slice %357 {offsets = [0, 0], sizes = [8, 32], strides = [1, 1]} : vector<32x32xf32> to vector<8x32xf32>
    %359 = vector.extract_strided_slice %357 {offsets = [8, 0], sizes = [8, 32], strides = [1, 1]} : vector<32x32xf32> to vector<8x32xf32>
    %360 = arith.addf %358, %359 : vector<8x32xf32>
    %361 = vector.extract_strided_slice %357 {offsets = [16, 0], sizes = [8, 32], strides = [1, 1]} : vector<32x32xf32> to vector<8x32xf32>
    %362 = arith.addf %360, %361 : vector<8x32xf32>
    %363 = vector.extract_strided_slice %357 {offsets = [24, 0], sizes = [8, 32], strides = [1, 1]} : vector<32x32xf32> to vector<8x32xf32>
    %364 = arith.addf %362, %363 : vector<8x32xf32>
    %c1720 = arith.constant 1720 : index
    %c0_141 = arith.constant 0 : index
    %365 = vector.load %arg2[%c1720, %c0_141] : memref<1952x128xf32, #tpu.memory_space<vmem>>, vector<32x32xf32>
    %cst_142 = arith.constant dense<0.000000e+00> : vector<8x32xf32>
    %366 = tpu.matmul %364, %365, %cst_142 {dimension_numbers = #tpu.dot_dimension_numbers<[1], [0], [0], [1], [0, 0, 1, 1], [], []>} : vector<8x32xf32>, vector<32x32xf32>, vector<8x32xf32> -> vector<8x32xf32>
    %c1752 = arith.constant 1752 : index
    %c0_143 = arith.constant 0 : index
    %367 = vector.load %arg2[%c1752, %c0_143] : memref<1952x128xf32, #tpu.memory_space<vmem>>, vector<1x32xf32>
    %368 = vector.broadcast %367 : vector<1x32xf32> to vector<8x32xf32>
    %369 = arith.addf %366, %368 : vector<8x32xf32>
    %370 = arith.addf %326, %369 : vector<8x32xf32>
    %c1760 = arith.constant 1760 : index
    %c0_144 = arith.constant 0 : index
    %371 = vector.load %arg2[%c1760, %c0_144] : memref<1952x128xf32, #tpu.memory_space<vmem>>, vector<1x32xf32>
    %c1768 = arith.constant 1768 : index
    %c0_145 = arith.constant 0 : index
    %372 = vector.load %arg2[%c1768, %c0_145] : memref<1952x128xf32, #tpu.memory_space<vmem>>, vector<1x32xf32>
    %cst_146 = arith.constant dense<0.000000e+00> : vector<8xf32>
    %373 = vector.multi_reduction <add>, %370, %cst_146 [1] : vector<8x32xf32> to vector<8xf32>
    %374 = vector.shape_cast %373 : vector<8xf32> to vector<8x1xf32>
    %cst_147 = arith.constant 3.200000e+01 : f32
    %375 = vector.broadcast %cst_147 : f32 to vector<8x1xf32>
    %376 = arith.divf %374, %375 : vector<8x1xf32>
    %377 = vector.broadcast %376 : vector<8x1xf32> to vector<8x32xf32>
    %378 = arith.subf %370, %377 : vector<8x32xf32>
    %379 = arith.mulf %378, %378 : vector<8x32xf32>
    %cst_148 = arith.constant dense<0.000000e+00> : vector<8xf32>
    %380 = vector.multi_reduction <add>, %379, %cst_148 [1] : vector<8x32xf32> to vector<8xf32>
    %381 = vector.shape_cast %380 : vector<8xf32> to vector<8x1xf32>
    %cst_149 = arith.constant 3.200000e+01 : f32
    %382 = vector.broadcast %cst_149 : f32 to vector<8x1xf32>
    %383 = arith.divf %381, %382 : vector<8x1xf32>
    %cst_150 = arith.constant 9.99999974E-6 : f32
    %384 = vector.broadcast %cst_150 : f32 to vector<8x1xf32>
    %385 = arith.addf %383, %384 : vector<8x1xf32>
    %386 = math.rsqrt %385 : vector<8x1xf32>
    %387 = vector.broadcast %386 : vector<8x1xf32> to vector<8x32xf32>
    %388 = arith.mulf %378, %387 : vector<8x32xf32>
    %389 = vector.broadcast %371 : vector<1x32xf32> to vector<8x32xf32>
    %390 = arith.mulf %388, %389 : vector<8x32xf32>
    %391 = vector.broadcast %372 : vector<1x32xf32> to vector<8x32xf32>
    %392 = arith.addf %390, %391 : vector<8x32xf32>
    %c1776 = arith.constant 1776 : index
    %c0_151 = arith.constant 0 : index
    %393 = vector.load %arg2[%c1776, %c0_151] : memref<1952x128xf32, #tpu.memory_space<vmem>>, vector<32x64xf32>
    %cst_152 = arith.constant dense<0.000000e+00> : vector<8x64xf32>
    %394 = tpu.matmul %392, %393, %cst_152 {dimension_numbers = #tpu.dot_dimension_numbers<[1], [0], [0], [1], [0, 0, 1, 1], [], []>} : vector<8x32xf32>, vector<32x64xf32>, vector<8x64xf32> -> vector<8x64xf32>
    %c1808 = arith.constant 1808 : index
    %c0_153 = arith.constant 0 : index
    %395 = vector.load %arg2[%c1808, %c0_153] : memref<1952x128xf32, #tpu.memory_space<vmem>>, vector<1x64xf32>
    %396 = vector.broadcast %395 : vector<1x64xf32> to vector<8x64xf32>
    %397 = arith.addf %394, %396 : vector<8x64xf32>
    %cst_154 = arith.constant 0.000000e+00 : f32
    %398 = vector.broadcast %cst_154 : f32 to vector<8x64xf32>
    %399 = arith.maximumf %397, %398 : vector<8x64xf32>
    %c1816 = arith.constant 1816 : index
    %c0_155 = arith.constant 0 : index
    %400 = vector.load %arg2[%c1816, %c0_155] : memref<1952x128xf32, #tpu.memory_space<vmem>>, vector<64x32xf32>
    %cst_156 = arith.constant dense<0.000000e+00> : vector<8x32xf32>
    %401 = tpu.matmul %399, %400, %cst_156 {dimension_numbers = #tpu.dot_dimension_numbers<[1], [0], [0], [1], [0, 0, 1, 1], [], []>} : vector<8x64xf32>, vector<64x32xf32>, vector<8x32xf32> -> vector<8x32xf32>
    %c1880 = arith.constant 1880 : index
    %c0_157 = arith.constant 0 : index
    %402 = vector.load %arg2[%c1880, %c0_157] : memref<1952x128xf32, #tpu.memory_space<vmem>>, vector<1x32xf32>
    %403 = vector.broadcast %402 : vector<1x32xf32> to vector<8x32xf32>
    %404 = arith.addf %401, %403 : vector<8x32xf32>
    %405 = arith.addf %392, %404 : vector<8x32xf32>
    %c1888 = arith.constant 1888 : index
    %c0_158 = arith.constant 0 : index
    %406 = vector.load %arg2[%c1888, %c0_158] : memref<1952x128xf32, #tpu.memory_space<vmem>>, vector<1x32xf32>
    %c1896 = arith.constant 1896 : index
    %c0_159 = arith.constant 0 : index
    %407 = vector.load %arg2[%c1896, %c0_159] : memref<1952x128xf32, #tpu.memory_space<vmem>>, vector<1x32xf32>
    %cst_160 = arith.constant dense<0.000000e+00> : vector<8xf32>
    %408 = vector.multi_reduction <add>, %405, %cst_160 [1] : vector<8x32xf32> to vector<8xf32>
    %409 = vector.shape_cast %408 : vector<8xf32> to vector<8x1xf32>
    %cst_161 = arith.constant 3.200000e+01 : f32
    %410 = vector.broadcast %cst_161 : f32 to vector<8x1xf32>
    %411 = arith.divf %409, %410 : vector<8x1xf32>
    %412 = vector.broadcast %411 : vector<8x1xf32> to vector<8x32xf32>
    %413 = arith.subf %405, %412 : vector<8x32xf32>
    %414 = arith.mulf %413, %413 : vector<8x32xf32>
    %cst_162 = arith.constant dense<0.000000e+00> : vector<8xf32>
    %415 = vector.multi_reduction <add>, %414, %cst_162 [1] : vector<8x32xf32> to vector<8xf32>
    %416 = vector.shape_cast %415 : vector<8xf32> to vector<8x1xf32>
    %cst_163 = arith.constant 3.200000e+01 : f32
    %417 = vector.broadcast %cst_163 : f32 to vector<8x1xf32>
    %418 = arith.divf %416, %417 : vector<8x1xf32>
    %cst_164 = arith.constant 9.99999974E-6 : f32
    %419 = vector.broadcast %cst_164 : f32 to vector<8x1xf32>
    %420 = arith.addf %418, %419 : vector<8x1xf32>
    %421 = math.rsqrt %420 : vector<8x1xf32>
    %422 = vector.broadcast %421 : vector<8x1xf32> to vector<8x32xf32>
    %423 = arith.mulf %413, %422 : vector<8x32xf32>
    %424 = vector.broadcast %406 : vector<1x32xf32> to vector<8x32xf32>
    %425 = arith.mulf %423, %424 : vector<8x32xf32>
    %426 = vector.broadcast %407 : vector<1x32xf32> to vector<8x32xf32>
    %427 = arith.addf %425, %426 : vector<8x32xf32>
    %c1904 = arith.constant 1904 : index
    %c0_165 = arith.constant 0 : index
    %428 = vector.load %arg2[%c1904, %c0_165] : memref<1952x128xf32, #tpu.memory_space<vmem>>, vector<2x8xf32>
    %cst_166 = arith.constant dense<0.000000e+00> : vector<2x32xf32>
    %429 = tpu.matmul %428, %427, %cst_166 {dimension_numbers = #tpu.dot_dimension_numbers<[1], [0], [0], [1], [0, 0, 1, 1], [], []>} : vector<2x8xf32>, vector<8x32xf32>, vector<2x32xf32> -> vector<2x32xf32>
    %c1912 = arith.constant 1912 : index
    %c0_167 = arith.constant 0 : index
    %430 = vector.load %arg2[%c1912, %c0_167] : memref<1952x128xf32, #tpu.memory_space<vmem>>, vector<32x1xf32>
    %cst_168 = arith.constant dense<0.000000e+00> : vector<2x1xf32>
    %431 = tpu.matmul %429, %430, %cst_168 {dimension_numbers = #tpu.dot_dimension_numbers<[1], [0], [0], [1], [0, 0, 1, 1], [], []>} : vector<2x32xf32>, vector<32x1xf32>, vector<2x1xf32> -> vector<2x1xf32>
    %c1944 = arith.constant 1944 : index
    %c0_169 = arith.constant 0 : index
    %432 = vector.load %arg2[%c1944, %c0_169] : memref<1952x128xf32, #tpu.memory_space<vmem>>, vector<1x1xf32>
    %433 = vector.broadcast %432 : vector<1x1xf32> to vector<2x1xf32>
    %434 = arith.addf %431, %433 : vector<2x1xf32>
    %c0_170 = arith.constant 0 : index
    %c0_171 = arith.constant 0 : index
    %435 = vector.load %arg3[%c0_170, %c0_171] : memref<2x1xf32, #tpu.memory_space<vmem>>, vector<2x1xf32>
    tpu.vector_store %arg3[%c0_170, %c0_171], %434 {strides = array<i32>} : memref<2x1xf32, #tpu.memory_space<vmem>>, vector<2x1xf32>,
    return
  }
}

</mosaic_0001>

<llo_original>
// kernel: fwd.1
$region0: #{fwd.1}
  #allocation0 [shape = 'u32[]', space=smem, size = 0x4, offset = 0x4, fixed_abs, tag = 'smem constant byte address 0x4 - core index']
  #allocation1 [shape = 'u32[144,128]{1,0:T(1,128)}', space=vmem, size = 0x12000, scoped, tag = 'internal scratch']
  %s0 = inlined_call_operand.vmem [shape: f32[64,6], index: 0, kind: input, shape index: {}]
  %s1 = inlined_call_operand.vmem [shape: f32[8,2], index: 1, kind: input, shape index: {}]
  %s2 = inlined_call_operand.hbm [shape: f32[1952,128], index: 2, kind: input, shape index: {}]
  %s3 = inlined_call_operand.vmem [shape: f32[2,1], index: 3, kind: output, shape index: {}]
  %s4 = sld [smem:[#allocation0]]
  $region26: #{fwd.1} parent=0
    _
  %s6 = ssub.s32 1, %s4
  %s7 = scalar_select 0, %s6, %s4
  $region1: #{fwd.1} parent=0
    #allocation2 [shape = 'u8[999424]{0}', space=vmem, size = 0xf4000, scoped, tag = 'input window, operand 2, single buffered']
    #allocation3 [shape = 's32[1]{0}', space=sflag, size = 0x4, scoped, tag = 'scoped memory for fwd.1']
    %8 = vsyncpa [#allocation3], 0
    // Predicated region
    $region2: #{fwd.1} parent=1 // pred_check
      _
    $region3: #{fwd.1} parent=1 // pred_check_branch
      %10 = sbr.rel (0) target = $region5
    $region4: #{fwd.1} parent=1 // pred_region
      _
    $region5: #{fwd.1} parent=1 // pred_fallthru
      _
    // Predicated region
    $region6: #{fwd.1} parent=1 // pred_check
      _
    $region7: #{fwd.1} parent=1 // pred_check_branch
      %12 = sbr.rel (0) target = $region9
    $region8: #{fwd.1} parent=1 // pred_region
      _
    $region9: #{fwd.1} parent=1 // pred_fallthru
      _
    // Predicated region
    $region10: #{fwd.1} parent=1 // pred_check
      _
    $region11: #{fwd.1} parent=1 // pred_check_branch
      %14 = sbr.rel (0) target = $region13
    $region12: #{fwd.1} parent=1 // pred_region
      %s16 = ssub.s32 31232, 31232
      %17 = vsyncadd [#allocation3], %s16
      %s18 = sshll.u32 [#allocation2], 4
      %s19 = int_to_ptr.vmem [resolvable:$true] %s18
      %24 = dma.hbm_to_vmem [thread:$0]  %s2, 31232, %s19, [#allocation3], 128, 128, 8
    $region13: #{fwd.1} parent=1 // pred_fallthru
      _
    // Predicated region
    $region14: #{fwd.1} parent=1 // pred_check
      _
    $region15: #{fwd.1} parent=1 // pred_check_branch
      %26 = sbr.rel (0) target = $region17
    $region16: #{fwd.1} parent=1 // pred_region
      %27 = dma.done [#allocation3], 31232
    $region17: #{fwd.1} parent=1 // pred_fallthru
      _
    %v28 = vld [vmem:[%s0] sm:$0xff]
    %v29 = vld [vmem:[%s0 + $0x8] sm:$0xff]
    %v30 = vld [vmem:[%s0 + $0x10] sm:$0xff]
    %v31 = vld [vmem:[%s0 + $0x18] sm:$0xff]
    %v32 = vld [vmem:[%s0 + $0x20] sm:$0xff]
    %v33 = vld [vmem:[%s0 + $0x28] sm:$0xff]
    %v34 = vld [vmem:[%s0 + $0x30] sm:$0xff]
    %v35 = vld [vmem:[%s0 + $0x38] sm:$0xff]
    %v36 = vld [vmem:[#allocation2] sm:$0x3f]
    %v37 = vld [vmem:[#allocation2 + $0x8] sm:$0x1]
    %v38 = vlaneseq
    %v39 = vshrl.u32 %v38, 7
    %v40 = vsub.s32 0, %v39
    %v41 = vrot.slane %v37, %v40
    %vm42 = vcmask 48128
    %v44 = vsel %vm42, %v28, 0
    %v47 = vsel %vm42, %v29, 0
    %v50 = vsel %vm42, %v30, 0
    %v53 = vsel %vm42, %v31, 0
    %v56 = vsel %vm42, %v32, 0
    %v59 = vsel %vm42, %v33, 0
    %v62 = vsel %vm42, %v34, 0
    %v65 = vsel %vm42, %v35, 0
    %vm67 = vcmask 1045504
    %v69 = vsel %vm67, %v36, 0
    %71 = vmatprep.subr.mxu0 0.0
    %72 = vmatpush1.msra.mxu0 %v69
    %73 = vmatprep.subr.mxu0 0.0
    %74 = vmatpush1.msra.mxu0 0.0
    %75 = vmatprep.subr.mxu0 0.0
    %76 = vmatpush1.msra.mxu0 0.0
    %77 = vmatprep.subr.mxu0 0.0
    %78 = vmatpush1.msra.mxu0 0.0
    %79 = vmatprep.subr.mxu0 0.0
    %80 = vmatpush1.msra.mxu0 0.0
    %81 = vmatprep.subr.mxu0 0.0
    %82 = vmatpush1.msra.mxu0 0.0
    %83 = vmatprep.subr.mxu0 0.0
    %84 = vmatpush1.msra.mxu0 0.0
    %85 = vmatprep.subr.mxu0 0.0
    %86 = vmatpush1.msra.mxu0 0.0
    %87 = vmatprep.subr.mxu0 0.0
    %88 = vmatpush1.msra.mxu0 0.0
    %89 = vmatprep.subr.mxu0 0.0
    %90 = vmatpush1.msra.mxu0 0.0
    %91 = vmatprep.subr.mxu0 0.0
    %92 = vmatpush1.msra.mxu0 0.0
    %93 = vmatprep.subr.mxu0 0.0
    %94 = vmatpush1.msra.mxu0 0.0
    %95 = vmatprep.subr.mxu0 0.0
    %96 = vmatpush1.msra.mxu0 0.0
    %97 = vmatprep.subr.mxu0 0.0
    %98 = vmatpush1.msra.mxu0 0.0
    %99 = vmatprep.subr.mxu0 0.0
    %100 = vmatpush1.msra.mxu0 0.0
    %101 = vmatprep.subr.mxu0 0.0
    %102 = vmatpush1.msra.mxu0 0.0
    %103 = vmatprep.subr.mxu0 0.0
    %104 = vmatpush1.msra.mxu0 0.0
    %105 = vmatprep.subr.mxu0 0.0
    %106 = vmatpush1.msra.mxu0 0.0
    %107 = vmatprep.subr.mxu0 0.0
    %108 = vmatpush1.msra.mxu0 0.0
    %109 = vmatprep.subr.mxu0 0.0
    %110 = vmatpush1.msra.mxu0 0.0
    %111 = vmatprep.subr.mxu0 0.0
    %112 = vmatpush1.msra.mxu0 0.0
    %113 = vmatprep.subr.mxu0 0.0
    %114 = vmatpush1.msra.mxu0 0.0
    %115 = vmatprep.subr.mxu0 0.0
    %116 = vmatpush1.msra.mxu0 0.0
    %117 = vmatprep.subr.mxu0 0.0
    %118 = vmatpush1.msra.mxu0 0.0
    %119 = vmatprep.subr.mxu0 0.0
    %120 = vmatpush1.msra.mxu0 0.0
    %121 = vmatprep.subr.mxu0 0.0
    %122 = vmatpush1.msra.mxu0 0.0
    %123 = vmatprep.subr.mxu0 0.0
    %124 = vmatpush1.msra.mxu0 0.0
    %125 = vmatprep.subr.mxu0 0.0
    %126 = vmatpush1.msra.mxu0 0.0
    %127 = vmatprep.subr.mxu0 0.0
    %128 = vmatpush1.msra.mxu0 0.0
    %129 = vmatprep.subr.mxu0 0.0
    %130 = vmatpush1.msra.mxu0 0.0
    %131 = vmatprep.subr.mxu0 0.0
    %132 = vmatpush1.msra.mxu0 0.0
    %133 = vmatprep.subr.mxu0 0.0
    %134 = vmatpush1.msra.mxu0 0.0
    %135 = vmatprep.mubr.f32.mxu0 0.0
    %136 = vmatmul.mubr.f32.gmra.mrb[0].mxu0 %v44
    %v137 = vpop.f32.mrb[0].mxu0
    %v138 = vadd.f32 %v41, %v137
    %v139 = vpop.f32.mrb[0].mxu0
    %140 = vmatprep.mubr.f32.mxu0 0.0
    %141 = vmatmul.mubr.f32.gmra.mrb[0].mxu0 %v47
    %v142 = vpop.f32.mrb[0].mxu0
    %v143 = vadd.f32 %v41, %v142
    %v144 = vpop.f32.mrb[0].mxu0
    %145 = vmatprep.mubr.f32.mxu0 0.0
    %146 = vmatmul.mubr.f32.gmra.mrb[0].mxu0 %v50
    %v147 = vpop.f32.mrb[0].mxu0
    %v148 = vadd.f32 %v41, %v147
    %v149 = vpop.f32.mrb[0].mxu0
    %150 = vmatprep.mubr.f32.mxu0 0.0
    %151 = vmatmul.mubr.f32.gmra.mrb[0].mxu0 %v53
    %v152 = vpop.f32.mrb[0].mxu0
    %v153 = vadd.f32 %v41, %v152
    %v154 = vpop.f32.mrb[0].mxu0
    %155 = vmatprep.mubr.f32.mxu0 0.0
    %156 = vmatmul.mubr.f32.gmra.mrb[0].mxu0 %v56
    %v157 = vpop.f32.mrb[0].mxu0
    %v158 = vadd.f32 %v41, %v157
    %v159 = vpop.f32.mrb[0].mxu0
    %160 = vmatprep.mubr.f32.mxu0 0.0
    %161 = vmatmul.mubr.f32.gmra.mrb[0].mxu0 %v59
    %v162 = vpop.f32.mrb[0].mxu0
    %v163 = vadd.f32 %v41, %v162
    %v164 = vpop.f32.mrb[0].mxu0
    %165 = vmatprep.mubr.f32.mxu0 0.0
    %166 = vmatmul.mubr.f32.gmra.mrb[0].mxu0 %v62
    %v167 = vpop.f32.mrb[0].mxu0
    %v168 = vadd.f32 %v41, %v167
    %v169 = vpop.f32.mrb[0].mxu0
    %170 = vmatprep.mubr.f32.mxu0 0.0
    %171 = vmatmul.mubr.f32.gmra.mrb[0].mxu0 %v65
    %v172 = vpop.f32.mrb[0].mxu0
    %v173 = vadd.f32 %v41, %v172
    %v174 = vpop.f32.mrb[0].mxu0
    %175 = vdwg.mxu0
    %v176 = vld [vmem:[#allocation2 + $0x10] sm:$0xff]
    %v177 = vld [vmem:[#allocation2 + $0x18] sm:$0xff]
    %v178 = vld [vmem:[#allocation2 + $0x20] sm:$0xff]
    %v179 = vld [vmem:[#allocation2 + $0x28] sm:$0xff]
    %v180 = vld [vmem:[#allocation2 + $0x30] sm:$0xff]
    %v181 = vld [vmem:[#allocation2 + $0x38] sm:$0xff]
    %v182 = vld [vmem:[#allocation2 + $0x40] sm:$0xff]
    %v183 = vld [vmem:[#allocation2 + $0x48] sm:$0xff]
    %v184 = vadd.f32 %v138, %v176
    %v185 = vadd.f32 %v143, %v177
    %v186 = vadd.f32 %v148, %v178
    %v187 = vadd.f32 %v153, %v179
    %v188 = vadd.f32 %v158, %v180
    %v189 = vadd.f32 %v163, %v181
    %v190 = vadd.f32 %v168, %v182
    %v191 = vadd.f32 %v173, %v183
    %v192 = vld [vmem:[#allocation2 + $0x50] sm:$0xff]
    %v193 = vld [vmem:[#allocation2 + $0x58] sm:$0xff]
    %v194 = vld [vmem:[#allocation2 + $0x60] sm:$0xff]
    %v195 = vld [vmem:[#allocation2 + $0x68] sm:$0xff]
    %v196 = vld [vmem:[#allocation2 + $0x70] sm:$0xff]
    %v197 = vld [vmem:[#allocation2 + $0x78] sm:$0xff]
    %v198 = vld [vmem:[#allocation2 + $0x80] sm:$0xff]
    %v199 = vld [vmem:[#allocation2 + $0x88] sm:$0xff]
    %v200 = vld [vmem:[#allocation2 + $0x90] sm:$0xff]
    %v201 = vld [vmem:[#allocation2 + $0x98] sm:$0xff]
    %v202 = vld [vmem:[#allocation2 + $0xa0] sm:$0xff]
    %v203 = vld [vmem:[#allocation2 + $0xa8] sm:$0xff]
    %v204 = vld [vmem:[#allocation2 + $0xb0] sm:$0xff]
    %v205 = vld [vmem:[#allocation2 + $0xb8] sm:$0xff]
    %v206 = vld [vmem:[#allocation2 + $0xc0] sm:$0xff]
    %v207 = vld [vmem:[#allocation2 + $0xc8] sm:$0xff]
    %v208 = vld [vmem:[#allocation2 + $0xd0] sm:$0xff]
    %v209 = vld [vmem:[#allocation2 + $0xd8] sm:$0xff]
    %v210 = vld [vmem:[#allocation2 + $0xe0] sm:$0xff]
    %v211 = vld [vmem:[#allocation2 + $0xe8] sm:$0xff]
    %v212 = vld [vmem:[#allocation2 + $0xf0] sm:$0xff]
    %v213 = vld [vmem:[#allocation2 + $0xf8] sm:$0xff]
    %v214 = vld [vmem:[#allocation2 + $0x100] sm:$0xff]
    %v215 = vld [vmem:[#allocation2 + $0x108] sm:$0xff]
    %v216 = vld [vmem:[#allocation2 + $0x110] sm:$0xff]
    %v217 = vld [vmem:[#allocation2 + $0x118] sm:$0xff]
    %v218 = vld [vmem:[#allocation2 + $0x120] sm:$0xff]
    %v219 = vld [vmem:[#allocation2 + $0x128] sm:$0xff]
    %v220 = vld [vmem:[#allocation2 + $0x130] sm:$0xff]
    %v221 = vld [vmem:[#allocation2 + $0x138] sm:$0xff]
    %v222 = vld [vmem:[#allocation2 + $0x140] sm:$0xff]
    %v223 = vld [vmem:[#allocation2 + $0x148] sm:$0xff]
    %v224 = vld [vmem:[#allocation2 + $0x150] sm:$0xff]
    %v225 = vld [vmem:[#allocation2 + $0x158] sm:$0xff]
    %v226 = vld [vmem:[#allocation2 + $0x160] sm:$0xff]
    %v227 = vld [vmem:[#allocation2 + $0x168] sm:$0xff]
    %v228 = vld [vmem:[#allocation2 + $0x170] sm:$0xff]
    %v229 = vld [vmem:[#allocation2 + $0x178] sm:$0xff]
    %v230 = vld [vmem:[#allocation2 + $0x180] sm:$0xff]
    %v231 = vld [vmem:[#allocation2 + $0x188] sm:$0xff]
    %v232 = vld [vmem:[#allocation2 + $0x190] sm:$0xff]
    %v233 = vld [vmem:[#allocation2 + $0x198] sm:$0xff]
    %v234 = vld [vmem:[#allocation2 + $0x1a0] sm:$0xff]
    %v235 = vld [vmem:[#allocation2 + $0x1a8] sm:$0xff]
    %v236 = vld [vmem:[#allocation2 + $0x1b0] sm:$0xff]
    %v237 = vld [vmem:[#allocation2 + $0x1b8] sm:$0xff]
    %v238 = vld [vmem:[#allocation2 + $0x1c0] sm:$0xff]
    %v239 = vld [vmem:[#allocation2 + $0x1c8] sm:$0xff]
    %v240 = vld [vmem:[#allocation2 + $0x1d0] sm:$0xff]
    %v241 = vld [vmem:[#allocation2 + $0x1d8] sm:$0xff]
    %v242 = vld [vmem:[#allocation2 + $0x1e0] sm:$0xff]
    %v243 = vld [vmem:[#allocation2 + $0x1e8] sm:$0xff]
    %v244 = vld [vmem:[#allocation2 + $0x1f0] sm:$0xff]
    %v245 = vld [vmem:[#allocation2 + $0x1f8] sm:$0xff]
    %v246 = vld [vmem:[#allocation2 + $0x200] sm:$0xff]
    %v247 = vld [vmem:[#allocation2 + $0x208] sm:$0xff]
    %v248 = vld [vmem:[#allocation2 + $0x210] sm:$0xff]
    %v249 = vld [vmem:[#allocation2 + $0x218] sm:$0xff]
    %v250 = vld [vmem:[#allocation2 + $0x220] sm:$0xff]
    %v251 = vld [vmem:[#allocation2 + $0x228] sm:$0xff]
    %v252 = vld [vmem:[#allocation2 + $0x230] sm:$0xff]
    %v253 = vld [vmem:[#allocation2 + $0x238] sm:$0xff]
    %v254 = vld [vmem:[#allocation2 + $0x240] sm:$0xff]
    %v255 = vld [vmem:[#allocation2 + $0x248] sm:$0xff]
    %v256 = vld [vmem:[#allocation2 + $0x258] sm:$0xff]
    %v257 = vld [vmem:[#allocation2 + $0x260] sm:$0xff]
    %v258 = vld [vmem:[#allocation2 + $0x268] sm:$0xff]
    %v259 = vld [vmem:[#allocation2 + $0x270] sm:$0xff]
    %v260 = vld [vmem:[#allocation2 + $0x278] sm:$0x1]
    %v261 = vlaneseq
    %v262 = vshrl.u32 %v261, 7
    %v263 = vsub.s32 0, %v262
    %v264 = vrot.slane %v260, %v263
    %vm265 = vcmask 261120
    %v267 = vsel %vm265, %v184, 0
    %v270 = vsel %vm265, %v185, 0
    %v273 = vsel %vm265, %v186, 0
    %v276 = vsel %vm265, %v187, 0
    %v279 = vsel %vm265, %v188, 0
    %v282 = vsel %vm265, %v189, 0
    %v285 = vsel %vm265, %v190, 0
    %v288 = vsel %vm265, %v191, 0
    %290 = vmatprep.subr.mxu0 0.0
    %291 = vmatpush1.msra.mxu0 %v256
    %292 = vmatprep.subr.mxu0 0.0
    %293 = vmatpush1.msra.mxu0 %v257
    %294 = vmatprep.subr.mxu0 0.0
    %295 = vmatpush1.msra.mxu0 %v258
    %296 = vmatprep.subr.mxu0 0.0
    %297 = vmatpush1.msra.mxu0 %v259
    %298 = vmatprep.subr.mxu0 0.0
    %299 = vmatpush1.msra.mxu0 0.0
    %300 = vmatprep.subr.mxu0 0.0
    %301 = vmatpush1.msra.mxu0 0.0
    %302 = vmatprep.subr.mxu0 0.0
    %303 = vmatpush1.msra.mxu0 0.0
    %304 = vmatprep.subr.mxu0 0.0
    %305 = vmatpush1.msra.mxu0 0.0
    %306 = vmatprep.subr.mxu0 0.0
    %307 = vmatpush1.msra.mxu0 0.0
    %308 = vmatprep.subr.mxu0 0.0
    %309 = vmatpush1.msra.mxu0 0.0
    %310 = vmatprep.subr.mxu0 0.0
    %311 = vmatpush1.msra.mxu0 0.0
    %312 = vmatprep.subr.mxu0 0.0
    %313 = vmatpush1.msra.mxu0 0.0
    %314 = vmatprep.subr.mxu0 0.0
    %315 = vmatpush1.msra.mxu0 0.0
    %316 = vmatprep.subr.mxu0 0.0
    %317 = vmatpush1.msra.mxu0 0.0
    %318 = vmatprep.subr.mxu0 0.0
    %319 = vmatpush1.msra.mxu0 0.0
    %320 = vmatprep.subr.mxu0 0.0
    %321 = vmatpush1.msra.mxu0 0.0
    %322 = vmatprep.subr.mxu0 0.0
    %323 = vmatpush1.msra.mxu0 0.0
    %324 = vmatprep.subr.mxu0 0.0
    %325 = vmatpush1.msra.mxu0 0.0
    %326 = vmatprep.subr.mxu0 0.0
    %327 = vmatpush1.msra.mxu0 0.0
    %328 = vmatprep.subr.mxu0 0.0
    %329 = vmatpush1.msra.mxu0 0.0
    %330 = vmatprep.subr.mxu0 0.0
    %331 = vmatpush1.msra.mxu0 0.0
    %332 = vmatprep.subr.mxu0 0.0
    %333 = vmatpush1.msra.mxu0 0.0
    %334 = vmatprep.subr.mxu0 0.0
    %335 = vmatpush1.msra.mxu0 0.0
    %336 = vmatprep.subr.mxu0 0.0
    %337 = vmatpush1.msra.mxu0 0.0
    %338 = vmatprep.subr.mxu0 0.0
    %339 = vmatpush1.msra.mxu0 0.0
    %340 = vmatprep.subr.mxu0 0.0
    %341 = vmatpush1.msra.mxu0 0.0
    %342 = vmatprep.subr.mxu0 0.0
    %343 = vmatpush1.msra.mxu0 0.0
    %344 = vmatprep.subr.mxu0 0.0
    %345 = vmatpush1.msra.mxu0 0.0
    %346 = vmatprep.subr.mxu0 0.0
    %347 = vmatpush1.msra.mxu0 0.0
    %348 = vmatprep.subr.mxu0 0.0
    %349 = vmatpush1.msra.mxu0 0.0
    %350 = vmatprep.subr.mxu0 0.0
    %351 = vmatpush1.msra.mxu0 0.0
    %352 = vmatprep.subr.mxu0 0.0
    %353 = vmatpush1.msra.mxu0 0.0
    %354 = vmatprep.mubr.f32.mxu0 0.0
    %355 = vmatmul.mubr.f32.gmra.mrb[0].mxu0 %v267
    %v356 = vpop.f32.mrb[0].mxu0
    %v357 = vadd.f32 %v264, %v356
    %v358 = vpop.f32.mrb[0].mxu0
    %359 = vmatprep.mubr.f32.mxu0 0.0
    %360 = vmatmul.mubr.f32.gmra.mrb[0].mxu0 %v270
    %v361 = vpop.f32.mrb[0].mxu0
    %v362 = vadd.f32 %v264, %v361
    %v363 = vpop.f32.mrb[0].mxu0
    %364 = vmatprep.mubr.f32.mxu0 0.0
    %365 = vmatmul.mubr.f32.gmra.mrb[0].mxu0 %v273
    %v366 = vpop.f32.mrb[0].mxu0
    %v367 = vadd.f32 %v264, %v366
    %v368 = vpop.f32.mrb[0].mxu0
    %369 = vmatprep.mubr.f32.mxu0 0.0
    %370 = vmatmul.mubr.f32.gmra.mrb[0].mxu0 %v276
    %v371 = vpop.f32.mrb[0].mxu0
    %v372 = vadd.f32 %v264, %v371
    %v373 = vpop.f32.mrb[0].mxu0
    %374 = vmatprep.mubr.f32.mxu0 0.0
    %375 = vmatmul.mubr.f32.gmra.mrb[0].mxu0 %v279
    %v376 = vpop.f32.mrb[0].mxu0
    %v377 = vadd.f32 %v264, %v376
    %v378 = vpop.f32.mrb[0].mxu0
    %379 = vmatprep.mubr.f32.mxu0 0.0
    %380 = vmatmul.mubr.f32.gmra.mrb[0].mxu0 %v282
    %v381 = vpop.f32.mrb[0].mxu0
    %v382 = vadd.f32 %v264, %v381
    %v383 = vpop.f32.mrb[0].mxu0
    %384 = vmatprep.mubr.f32.mxu0 0.0
    %385 = vmatmul.mubr.f32.gmra.mrb[0].mxu0 %v285
    %v386 = vpop.f32.mrb[0].mxu0
    %v387 = vadd.f32 %v264, %v386
    %v388 = vpop.f32.mrb[0].mxu0
    %389 = vmatprep.mubr.f32.mxu0 0.0
    %390 = vmatmul.mubr.f32.gmra.mrb[0].mxu0 %v288
    %v391 = vpop.f32.mrb[0].mxu0
    %v392 = vadd.f32 %v264, %v391
    %v393 = vpop.f32.mrb[0].mxu0
    %394 = vdwg.mxu0
    %v395 = vld [vmem:[#allocation2 + $0x280] sm:$0xff]
    %v396 = vld [vmem:[#allocation2 + $0x288] sm:$0xff]
    %v397 = vld [vmem:[#allocation2 + $0x290] sm:$0xff]
    %v398 = vld [vmem:[#allocation2 + $0x298] sm:$0xff]
    %v399 = vld [vmem:[#allocation2 + $0x2a0] sm:$0x1]
    %v400 = vlaneseq
    %v401 = vshrl.u32 %v400, 7
    %v402 = vsub.s32 0, %v401
    %v403 = vrot.slane %v399, %v402
    %404 = vmatprep.subr.mxu0 0.0
    %405 = vmatpush1.msra.mxu0 %v395
    %406 = vmatprep.subr.mxu0 0.0
    %407 = vmatpush1.msra.mxu0 %v396
    %408 = vmatprep.subr.mxu0 0.0
    %409 = vmatpush1.msra.mxu0 %v397
    %410 = vmatprep.subr.mxu0 0.0
    %411 = vmatpush1.msra.mxu0 %v398
    %412 = vmatprep.subr.mxu0 0.0
    %413 = vmatpush1.msra.mxu0 0.0
    %414 = vmatprep.subr.mxu0 0.0
    %415 = vmatpush1.msra.mxu0 0.0
    %416 = vmatprep.subr.mxu0 0.0
    %417 = vmatpush1.msra.mxu0 0.0
    %418 = vmatprep.subr.mxu0 0.0
    %419 = vmatpush1.msra.mxu0 0.0
    %420 = vmatprep.subr.mxu0 0.0
    %421 = vmatpush1.msra.mxu0 0.0
    %422 = vmatprep.subr.mxu0 0.0
    %423 = vmatpush1.msra.mxu0 0.0
    %424 = vmatprep.subr.mxu0 0.0
    %425 = vmatpush1.msra.mxu0 0.0
    %426 = vmatprep.subr.mxu0 0.0
    %427 = vmatpush1.msra.mxu0 0.0
    %428 = vmatprep.subr.mxu0 0.0
    %429 = vmatpush1.msra.mxu0 0.0
    %430 = vmatprep.subr.mxu0 0.0
    %431 = vmatpush1.msra.mxu0 0.0
    %432 = vmatprep.subr.mxu0 0.0
    %433 = vmatpush1.msra.mxu0 0.0
    %434 = vmatprep.subr.mxu0 0.0
    %435 = vmatpush1.msra.mxu0 0.0
    %436 = vmatprep.subr.mxu0 0.0
    %437 = vmatpush1.msra.mxu0 0.0
    %438 = vmatprep.subr.mxu0 0.0
    %439 = vmatpush1.msra.mxu0 0.0
    %440 = vmatprep.subr.mxu0 0.0
    %441 = vmatpush1.msra.mxu0 0.0
    %442 = vmatprep.subr.mxu0 0.0
    %443 = vmatpush1.msra.mxu0 0.0
    %444 = vmatprep.subr.mxu0 0.0
    %445 = vmatpush1.msra.mxu0 0.0
    %446 = vmatprep.subr.mxu0 0.0
    %447 = vmatpush1.msra.mxu0 0.0
    %448 = vmatprep.subr.mxu0 0.0
    %449 = vmatpush1.msra.mxu0 0.0
    %450 = vmatprep.subr.mxu0 0.0
    %451 = vmatpush1.msra.mxu0 0.0
    %452 = vmatprep.subr.mxu0 0.0
    %453 = vmatpush1.msra.mxu0 0.0
    %454 = vmatprep.subr.mxu0 0.0
    %455 = vmatpush1.msra.mxu0 0.0
    %456 = vmatprep.subr.mxu0 0.0
    %457 = vmatpush1.msra.mxu0 0.0
    %458 = vmatprep.subr.mxu0 0.0
    %459 = vmatpush1.msra.mxu0 0.0
    %460 = vmatprep.subr.mxu0 0.0
    %461 = vmatpush1.msra.mxu0 0.0
    %462 = vmatprep.subr.mxu0 0.0
    %463 = vmatpush1.msra.mxu0 0.0
    %464 = vmatprep.subr.mxu0 0.0
    %465 = vmatpush1.msra.mxu0 0.0
    %466 = vmatprep.subr.mxu0 0.0
    %467 = vmatpush1.msra.mxu0 0.0
    %468 = vmatprep.mubr.f32.mxu0 0.0
    %469 = vmatmul.mubr.f32.gmra.mrb[0].mxu0 %v267
    %v470 = vpop.f32.mrb[0].mxu0
    %v471 = vadd.f32 %v403, %v470
    %v472 = vpop.f32.mrb[0].mxu0
    %473 = vmatprep.mubr.f32.mxu0 0.0
    %474 = vmatmul.mubr.f32.gmra.mrb[0].mxu0 %v270
    %v475 = vpop.f32.mrb[0].mxu0
    %v476 = vadd.f32 %v403, %v475
    %v477 = vpop.f32.mrb[0].mxu0
    %478 = vmatprep.mubr.f32.mxu0 0.0
    %479 = vmatmul.mubr.f32.gmra.mrb[0].mxu0 %v273
    %v480 = vpop.f32.mrb[0].mxu0
    %v481 = vadd.f32 %v403, %v480
    %v482 = vpop.f32.mrb[0].mxu0
    %483 = vmatprep.mubr.f32.mxu0 0.0
    %484 = vmatmul.mubr.f32.gmra.mrb[0].mxu0 %v276
    %v485 = vpop.f32.mrb[0].mxu0
    %v486 = vadd.f32 %v403, %v485
    %v487 = vpop.f32.mrb[0].mxu0
    %488 = vmatprep.mubr.f32.mxu0 0.0
    %489 = vmatmul.mubr.f32.gmra.mrb[0].mxu0 %v279
    %v490 = vpop.f32.mrb[0].mxu0
    %v491 = vadd.f32 %v403, %v490
    %v492 = vpop.f32.mrb[0].mxu0
    %493 = vmatprep.mubr.f32.mxu0 0.0
    %494 = vmatmul.mubr.f32.gmra.mrb[0].mxu0 %v282
    %v495 = vpop.f32.mrb[0].mxu0
    %v496 = vadd.f32 %v403, %v495
    %v497 = vpop.f32.mrb[0].mxu0
    %498 = vmatprep.mubr.f32.mxu0 0.0
    %499 = vmatmul.mubr.f32.gmra.mrb[0].mxu0 %v285
    %v500 = vpop.f32.mrb[0].mxu0
    %v501 = vadd.f32 %v403, %v500
    %v502 = vpop.f32.mrb[0].mxu0
    %503 = vmatprep.mubr.f32.mxu0 0.0
    %504 = vmatmul.mubr.f32.gmra.mrb[0].mxu0 %v288
    %v505 = vpop.f32.mrb[0].mxu0
    %v506 = vadd.f32 %v403, %v505
    %v507 = vpop.f32.mrb[0].mxu0
    %508 = vdwg.mxu0
    %v509 = vld [vmem:[#allocation2 + $0x2a8] sm:$0xff]
    %v510 = vld [vmem:[#allocation2 + $0x2b0] sm:$0xff]
    %v511 = vld [vmem:[#allocation2 + $0x2b8] sm:$0xff]
    %v512 = vld [vmem:[#allocation2 + $0x2c0] sm:$0xff]
    %v513 = vld [vmem:[#allocation2 + $0x2c8] sm:$0x1]
    %v514 = vlaneseq
    %v515 = vshrl.u32 %v514, 7
    %v516 = vsub.s32 0, %v515
    %v517 = vrot.slane %v513, %v516
    %518 = vmatprep.subr.mxu0 0.0
    %519 = vmatpush1.msra.mxu0 %v509
    %520 = vmatprep.subr.mxu0 0.0
    %521 = vmatpush1.msra.mxu0 %v510
    %522 = vmatprep.subr.mxu0 0.0
    %523 = vmatpush1.msra.mxu0 %v511
    %524 = vmatprep.subr.mxu0 0.0
    %525 = vmatpush1.msra.mxu0 %v512
    %526 = vmatprep.subr.mxu0 0.0
    %527 = vmatpush1.msra.mxu0 0.0
    %528 = vmatprep.subr.mxu0 0.0
    %529 = vmatpush1.msra.mxu0 0.0
    %530 = vmatprep.subr.mxu0 0.0
    %531 = vmatpush1.msra.mxu0 0.0
    %532 = vmatprep.subr.mxu0 0.0
    %533 = vmatpush1.msra.mxu0 0.0
    %534 = vmatprep.subr.mxu0 0.0
    %535 = vmatpush1.msra.mxu0 0.0
    %536 = vmatprep.subr.mxu0 0.0
    %537 = vmatpush1.msra.mxu0 0.0
    %538 = vmatprep.subr.mxu0 0.0
    %539 = vmatpush1.msra.mxu0 0.0
    %540 = vmatprep.subr.mxu0 0.0
    %541 = vmatpush1.msra.mxu0 0.0
    %542 = vmatprep.subr.mxu0 0.0
    %543 = vmatpush1.msra.mxu0 0.0
    %544 = vmatprep.subr.mxu0 0.0
    %545 = vmatpush1.msra.mxu0 0.0
    %546 = vmatprep.subr.mxu0 0.0
    %547 = vmatpush1.msra.mxu0 0.0
    %548 = vmatprep.subr.mxu0 0.0
    %549 = vmatpush1.msra.mxu0 0.0
    %550 = vmatprep.subr.mxu0 0.0
    %551 = vmatpush1.msra.mxu0 0.0
    %552 = vmatprep.subr.mxu0 0.0
    %553 = vmatpush1.msra.mxu0 0.0
    %554 = vmatprep.subr.mxu0 0.0
    %555 = vmatpush1.msra.mxu0 0.0
    %556 = vmatprep.subr.mxu0 0.0
    %557 = vmatpush1.msra.mxu0 0.0
    %558 = vmatprep.subr.mxu0 0.0
    %559 = vmatpush1.msra.mxu0 0.0
    %560 = vmatprep.subr.mxu0 0.0
    %561 = vmatpush1.msra.mxu0 0.0
    %562 = vmatprep.subr.mxu0 0.0
    %563 = vmatpush1.msra.mxu0 0.0
    %564 = vmatprep.subr.mxu0 0.0
    %565 = vmatpush1.msra.mxu0 0.0
    %566 = vmatprep.subr.mxu0 0.0
    %567 = vmatpush1.msra.mxu0 0.0
    %568 = vmatprep.subr.mxu0 0.0
    %569 = vmatpush1.msra.mxu0 0.0
    %570 = vmatprep.subr.mxu0 0.0
    %571 = vmatpush1.msra.mxu0 0.0
    %572 = vmatprep.subr.mxu0 0.0
    %573 = vmatpush1.msra.mxu0 0.0
    %574 = vmatprep.subr.mxu0 0.0
    %575 = vmatpush1.msra.mxu0 0.0
    %576 = vmatprep.subr.mxu0 0.0
    %577 = vmatpush1.msra.mxu0 0.0
    %578 = vmatprep.subr.mxu0 0.0
    %579 = vmatpush1.msra.mxu0 0.0
    %580 = vmatprep.subr.mxu0 0.0
    %581 = vmatpush1.msra.mxu0 0.0
    %582 = vmatprep.mubr.f32.mxu0 0.0
    %583 = vmatmul.mubr.f32.gmra.mrb[0].mxu0 %v267
    %v584 = vpop.f32.mrb[0].mxu0
    %v585 = vadd.f32 %v517, %v584
    %v586 = vpop.f32.mrb[0].mxu0
    %587 = vmatprep.mubr.f32.mxu0 0.0
    %588 = vmatmul.mubr.f32.gmra.mrb[0].mxu0 %v270
    %v589 = vpop.f32.mrb[0].mxu0
    %v590 = vadd.f32 %v517, %v589
    %v591 = vpop.f32.mrb[0].mxu0
    %592 = vmatprep.mubr.f32.mxu0 0.0
    %593 = vmatmul.mubr.f32.gmra.mrb[0].mxu0 %v273
    %v594 = vpop.f32.mrb[0].mxu0
    %v595 = vadd.f32 %v517, %v594
    %v596 = vpop.f32.mrb[0].mxu0
    %597 = vmatprep.mubr.f32.mxu0 0.0
    %598 = vmatmul.mubr.f32.gmra.mrb[0].mxu0 %v276
    %v599 = vpop.f32.mrb[0].mxu0
    %v600 = vadd.f32 %v517, %v599
    %v601 = vpop.f32.mrb[0].mxu0
    %602 = vmatprep.mubr.f32.mxu0 0.0
    %603 = vmatmul.mubr.f32.gmra.mrb[0].mxu0 %v279
    %v604 = vpop.f32.mrb[0].mxu0
    %v605 = vadd.f32 %v517, %v604
    %v606 = vpop.f32.mrb[0].mxu0
    %607 = vmatprep.mubr.f32.mxu0 0.0
    %608 = vmatmul.mubr.f32.gmra.mrb[0].mxu0 %v282
    %v609 = vpop.f32.mrb[0].mxu0
    %v610 = vadd.f32 %v517, %v609
    %v611 = vpop.f32.mrb[0].mxu0
    %612 = vmatprep.mubr.f32.mxu0 0.0
    %613 = vmatmul.mubr.f32.gmra.mrb[0].mxu0 %v285
    %v614 = vpop.f32.mrb[0].mxu0
    %v615 = vadd.f32 %v517, %v614
    %v616 = vpop.f32.mrb[0].mxu0
    %617 = vmatprep.mubr.f32.mxu0 0.0
    %618 = vmatmul.mubr.f32.gmra.mrb[0].mxu0 %v288
    %v619 = vpop.f32.mrb[0].mxu0
    %v620 = vadd.f32 %v517, %v619
    %v621 = vpop.f32.mrb[0].mxu0
    %622 = vdwg.mxu0
    %v623 = vmul.f32 %v357, %v224
    %v624 = vmul.f32 %v362, %v225
    %v625 = vmul.f32 %v367, %v226
    %v626 = vmul.f32 %v372, %v227
    %v627 = vmul.f32 %v377, %v228
    %v628 = vmul.f32 %v382, %v229
    %v629 = vmul.f32 %v387, %v230
    %v630 = vmul.f32 %v392, %v231
    %v631 = vmul.f32 %v357, %v232
    %v632 = vmul.f32 %v362, %v233
    %v633 = vmul.f32 %v367, %v234
    %v634 = vmul.f32 %v372, %v235
    %v635 = vmul.f32 %v377, %v236
    %v636 = vmul.f32 %v382, %v237
    %v637 = vmul.f32 %v387, %v238
    %v638 = vmul.f32 %v392, %v239
    %v639 = vmul.f32 %v357, %v240
    %v640 = vmul.f32 %v362, %v241
    %v641 = vmul.f32 %v367, %v242
    %v642 = vmul.f32 %v372, %v243
    %v643 = vmul.f32 %v377, %v244
    %v644 = vmul.f32 %v382, %v245
    %v645 = vmul.f32 %v387, %v246
    %v646 = vmul.f32 %v392, %v247
    %v647 = vmul.f32 %v357, %v248
    %v648 = vmul.f32 %v362, %v249
    %v649 = vmul.f32 %v367, %v250
    %v650 = vmul.f32 %v372, %v251
    %v651 = vmul.f32 %v377, %v252
    %v652 = vmul.f32 %v382, %v253
    %v653 = vmul.f32 %v387, %v254
    %v654 = vmul.f32 %v392, %v255
    %v656 = vsel %vm265, %v623, 0
    %v659 = vsel %vm265, %v624, 0
    %v662 = vsel %vm265, %v625, 0
    %v665 = vsel %vm265, %v626, 0
    %v668 = vsel %vm265, %v627, 0
    %v671 = vsel %vm265, %v628, 0
    %v674 = vsel %vm265, %v629, 0
    %v677 = vsel %vm265, %v630, 0
    %v680 = vsel %vm265, %v631, 0
    %v683 = vsel %vm265, %v632, 0
    %v686 = vsel %vm265, %v633, 0
    %v689 = vsel %vm265, %v634, 0
    %v692 = vsel %vm265, %v635, 0
    %v695 = vsel %vm265, %v636, 0
    %v698 = vsel %vm265, %v637, 0
    %v701 = vsel %vm265, %v638, 0
    %v704 = vsel %vm265, %v639, 0
    %v707 = vsel %vm265, %v640, 0
    %v710 = vsel %vm265, %v641, 0
    %v713 = vsel %vm265, %v642, 0
    %v716 = vsel %vm265, %v643, 0
    %v719 = vsel %vm265, %v644, 0
    %v722 = vsel %vm265, %v645, 0
    %v725 = vsel %vm265, %v646, 0
    %v728 = vsel %vm265, %v647, 0
    %v731 = vsel %vm265, %v648, 0
    %v734 = vsel %vm265, %v649, 0
    %v737 = vsel %vm265, %v650, 0
    %v740 = vsel %vm265, %v651, 0
    %v743 = vsel %vm265, %v652, 0
    %v746 = vsel %vm265, %v653, 0
    %v749 = vsel %vm265, %v654, 0
    %v752 = vsel %vm265, %v471, 0
    %v755 = vsel %vm265, %v476, 0
    %v758 = vsel %vm265, %v481, 0
    %v761 = vsel %vm265, %v486, 0
    %v764 = vsel %vm265, %v491, 0
    %v767 = vsel %vm265, %v496, 0
    %v770 = vsel %vm265, %v501, 0
    %v773 = vsel %vm265, %v506, 0
    %775 = vmatprep.subr.mxu0 0.0
    %776 = vmatpush1.xpose.msra.mxu0 %v752
    %777 = vmatprep.subr.mxu0 0.0
    %778 = vmatpush1.xpose.msra.mxu0 %v755
    %779 = vmatprep.subr.mxu0 0.0
    %780 = vmatpush1.xpose.msra.mxu0 %v758
    %781 = vmatprep.subr.mxu0 0.0
    %782 = vmatpush1.xpose.msra.mxu0 %v761
    %783 = vmatprep.subr.mxu0 0.0
    %784 = vmatpush1.xpose.msra.mxu0 %v764
    %785 = vmatprep.subr.mxu0 0.0
    %786 = vmatpush1.xpose.msra.mxu0 %v767
    %787 = vmatprep.subr.mxu0 0.0
    %788 = vmatpush1.xpose.msra.mxu0 %v770
    %789 = vmatprep.subr.mxu0 0.0
    %790 = vmatpush1.xpose.msra.mxu0 %v773
    %791 = vmatprep.subr.mxu0 0.0
    %792 = vmatpush1.xpose.msra.mxu0 0.0
    %793 = vmatprep.subr.mxu0 0.0
    %794 = vmatpush1.xpose.msra.mxu0 0.0
    %795 = vmatprep.subr.mxu0 0.0
    %796 = vmatpush1.xpose.msra.mxu0 0.0
    %797 = vmatprep.subr.mxu0 0.0
    %798 = vmatpush1.xpose.msra.mxu0 0.0
    %799 = vmatprep.subr.mxu0 0.0
    %800 = vmatpush1.xpose.msra.mxu0 0.0
    %801 = vmatprep.subr.mxu0 0.0
    %802 = vmatpush1.xpose.msra.mxu0 0.0
    %803 = vmatprep.subr.mxu0 0.0
    %804 = vmatpush1.xpose.msra.mxu0 0.0
    %805 = vmatprep.subr.mxu0 0.0
    %806 = vmatpush1.xpose.msra.mxu0 0.0
    %807 = vmatprep.subr.mxu0 0.0
    %808 = vmatpush1.xpose.msra.mxu0 0.0
    %809 = vmatprep.subr.mxu0 0.0
    %810 = vmatpush1.xpose.msra.mxu0 0.0
    %811 = vmatprep.subr.mxu0 0.0
    %812 = vmatpush1.xpose.msra.mxu0 0.0
    %813 = vmatprep.subr.mxu0 0.0
    %814 = vmatpush1.xpose.msra.mxu0 0.0
    %815 = vmatprep.subr.mxu0 0.0
    %816 = vmatpush1.xpose.msra.mxu0 0.0
    %817 = vmatprep.subr.mxu0 0.0
    %818 = vmatpush1.xpose.msra.mxu0 0.0
    %819 = vmatprep.subr.mxu0 0.0
    %820 = vmatpush1.xpose.msra.mxu0 0.0
    %821 = vmatprep.subr.mxu0 0.0
    %822 = vmatpush1.xpose.msra.mxu0 0.0
    %823 = vmatprep.subr.mxu0 0.0
    %824 = vmatpush1.xpose.msra.mxu0 0.0
    %825 = vmatprep.subr.mxu0 0.0
    %826 = vmatpush1.xpose.msra.mxu0 0.0
    %827 = vmatprep.subr.mxu0 0.0
    %828 = vmatpush1.xpose.msra.mxu0 0.0
    %829 = vmatprep.subr.mxu0 0.0
    %830 = vmatpush1.xpose.msra.mxu0 0.0
    %831 = vmatprep.subr.mxu0 0.0
    %832 = vmatpush1.xpose.msra.mxu0 0.0
    %833 = vmatprep.subr.mxu0 0.0
    %834 = vmatpush1.xpose.msra.mxu0 0.0
    %835 = vmatprep.subr.mxu0 0.0
    %836 = vmatpush1.xpose.msra.mxu0 0.0
    %837 = vmatprep.subr.mxu0 0.0
    %838 = vmatpush1.xpose.msra.mxu0 0.0
    %839 = vmatprep.mubr.f32.mxu0 0.0
    %840 = vmatmul.mubr.f32.gmra.mrb[0].mxu0 %v656
    %v841 = vpop.f32.mrb[0].mxu0
    %v842 = vadd.f32 %v192, %v841
    %v843 = vpop.f32.mrb[0].mxu0
    %844 = vmatprep.mubr.f32.mxu0 0.0
    %845 = vmatmul.mubr.f32.gmra.mrb[0].mxu0 %v659
    %v846 = vpop.f32.mrb[0].mxu0
    %v847 = vadd.f32 %v193, %v846
    %v848 = vpop.f32.mrb[0].mxu0
    %849 = vmatprep.mubr.f32.mxu0 0.0
    %850 = vmatmul.mubr.f32.gmra.mrb[0].mxu0 %v662
    %v851 = vpop.f32.mrb[0].mxu0
    %v852 = vadd.f32 %v194, %v851
    %v853 = vpop.f32.mrb[0].mxu0
    %854 = vmatprep.mubr.f32.mxu0 0.0
    %855 = vmatmul.mubr.f32.gmra.mrb[0].mxu0 %v665
    %v856 = vpop.f32.mrb[0].mxu0
    %v857 = vadd.f32 %v195, %v856
    %v858 = vpop.f32.mrb[0].mxu0
    %859 = vmatprep.mubr.f32.mxu0 0.0
    %860 = vmatmul.mubr.f32.gmra.mrb[0].mxu0 %v668
    %v861 = vpop.f32.mrb[0].mxu0
    %v862 = vadd.f32 %v196, %v861
    %v863 = vpop.f32.mrb[0].mxu0
    %864 = vmatprep.mubr.f32.mxu0 0.0
    %865 = vmatmul.mubr.f32.gmra.mrb[0].mxu0 %v671
    %v866 = vpop.f32.mrb[0].mxu0
    %v867 = vadd.f32 %v197, %v866
    %v868 = vpop.f32.mrb[0].mxu0
    %869 = vmatprep.mubr.f32.mxu0 0.0
    %870 = vmatmul.mubr.f32.gmra.mrb[0].mxu0 %v674
    %v871 = vpop.f32.mrb[0].mxu0
    %v872 = vadd.f32 %v198, %v871
    %v873 = vpop.f32.mrb[0].mxu0
    %874 = vmatprep.mubr.f32.mxu0 0.0
    %875 = vmatmul.mubr.f32.gmra.mrb[0].mxu0 %v677
    %v876 = vpop.f32.mrb[0].mxu0
    %v877 = vadd.f32 %v199, %v876
    %v878 = vpop.f32.mrb[0].mxu0
    %879 = vmatprep.mubr.f32.mxu0 0.0
    %880 = vmatmul.mubr.f32.gmra.mrb[0].mxu0 %v680
    %v881 = vpop.f32.mrb[0].mxu0
    %v882 = vadd.f32 %v200, %v881
    %v883 = vpop.f32.mrb[0].mxu0
    %884 = vmatprep.mubr.f32.mxu0 0.0
    %885 = vmatmul.mubr.f32.gmra.mrb[0].mxu0 %v683
    %v886 = vpop.f32.mrb[0].mxu0
    %v887 = vadd.f32 %v201, %v886
    %v888 = vpop.f32.mrb[0].mxu0
    %889 = vmatprep.mubr.f32.mxu0 0.0
    %890 = vmatmul.mubr.f32.gmra.mrb[0].mxu0 %v686
    %v891 = vpop.f32.mrb[0].mxu0
    %v892 = vadd.f32 %v202, %v891
    %v893 = vpop.f32.mrb[0].mxu0
    %894 = vmatprep.mubr.f32.mxu0 0.0
    %895 = vmatmul.mubr.f32.gmra.mrb[0].mxu0 %v689
    %v896 = vpop.f32.mrb[0].mxu0
    %v897 = vadd.f32 %v203, %v896
    %v898 = vpop.f32.mrb[0].mxu0
    %899 = vmatprep.mubr.f32.mxu0 0.0
    %900 = vmatmul.mubr.f32.gmra.mrb[0].mxu0 %v692
    %v901 = vpop.f32.mrb[0].mxu0
    %v902 = vadd.f32 %v204, %v901
    %v903 = vpop.f32.mrb[0].mxu0
    %904 = vmatprep.mubr.f32.mxu0 0.0
    %905 = vmatmul.mubr.f32.gmra.mrb[0].mxu0 %v695
    %v906 = vpop.f32.mrb[0].mxu0
    %v907 = vadd.f32 %v205, %v906
    %v908 = vpop.f32.mrb[0].mxu0
    %909 = vmatprep.mubr.f32.mxu0 0.0
    %910 = vmatmul.mubr.f32.gmra.mrb[0].mxu0 %v698
    %v911 = vpop.f32.mrb[0].mxu0
    %v912 = vadd.f32 %v206, %v911
    %v913 = vpop.f32.mrb[0].mxu0
    %914 = vmatprep.mubr.f32.mxu0 0.0
    %915 = vmatmul.mubr.f32.gmra.mrb[0].mxu0 %v701
    %v916 = vpop.f32.mrb[0].mxu0
    %v917 = vadd.f32 %v207, %v916
    %v918 = vpop.f32.mrb[0].mxu0
    %919 = vmatprep.mubr.f32.mxu0 0.0
    %920 = vmatmul.mubr.f32.gmra.mrb[0].mxu0 %v704
    %v921 = vpop.f32.mrb[0].mxu0
    %v922 = vadd.f32 %v208, %v921
    %v923 = vpop.f32.mrb[0].mxu0
    %924 = vmatprep.mubr.f32.mxu0 0.0
    %925 = vmatmul.mubr.f32.gmra.mrb[0].mxu0 %v707
    %v926 = vpop.f32.mrb[0].mxu0
    %v927 = vadd.f32 %v209, %v926
    %v928 = vpop.f32.mrb[0].mxu0
    %929 = vmatprep.mubr.f32.mxu0 0.0
    %930 = vmatmul.mubr.f32.gmra.mrb[0].mxu0 %v710
    %v931 = vpop.f32.mrb[0].mxu0
    %v932 = vadd.f32 %v210, %v931
    %v933 = vpop.f32.mrb[0].mxu0
    %934 = vmatprep.mubr.f32.mxu0 0.0
    %935 = vmatmul.mubr.f32.gmra.mrb[0].mxu0 %v713
    %v936 = vpop.f32.mrb[0].mxu0
    %v937 = vadd.f32 %v211, %v936
    %v938 = vpop.f32.mrb[0].mxu0
    %939 = vmatprep.mubr.f32.mxu0 0.0
    %940 = vmatmul.mubr.f32.gmra.mrb[0].mxu0 %v716
    %v941 = vpop.f32.mrb[0].mxu0
    %v942 = vadd.f32 %v212, %v941
    %v943 = vpop.f32.mrb[0].mxu0
    %944 = vmatprep.mubr.f32.mxu0 0.0
    %945 = vmatmul.mubr.f32.gmra.mrb[0].mxu0 %v719
    %v946 = vpop.f32.mrb[0].mxu0
    %v947 = vadd.f32 %v213, %v946
    %v948 = vpop.f32.mrb[0].mxu0
    %949 = vmatprep.mubr.f32.mxu0 0.0
    %950 = vmatmul.mubr.f32.gmra.mrb[0].mxu0 %v722
    %v951 = vpop.f32.mrb[0].mxu0
    %v952 = vadd.f32 %v214, %v951
    %v953 = vpop.f32.mrb[0].mxu0
    %954 = vmatprep.mubr.f32.mxu0 0.0
    %955 = vmatmul.mubr.f32.gmra.mrb[0].mxu0 %v725
    %v956 = vpop.f32.mrb[0].mxu0
    %v957 = vadd.f32 %v215, %v956
    %v958 = vpop.f32.mrb[0].mxu0
    %959 = vmatprep.mubr.f32.mxu0 0.0
    %960 = vmatmul.mubr.f32.gmra.mrb[0].mxu0 %v728
    %v961 = vpop.f32.mrb[0].mxu0
    %v962 = vadd.f32 %v216, %v961
    %v963 = vpop.f32.mrb[0].mxu0
    %964 = vmatprep.mubr.f32.mxu0 0.0
    %965 = vmatmul.mubr.f32.gmra.mrb[0].mxu0 %v731
    %v966 = vpop.f32.mrb[0].mxu0
    %v967 = vadd.f32 %v217, %v966
    %v968 = vpop.f32.mrb[0].mxu0
    %969 = vmatprep.mubr.f32.mxu0 0.0
    %970 = vmatmul.mubr.f32.gmra.mrb[0].mxu0 %v734
    %v971 = vpop.f32.mrb[0].mxu0
    %v972 = vadd.f32 %v218, %v971
    %v973 = vpop.f32.mrb[0].mxu0
    %974 = vmatprep.mubr.f32.mxu0 0.0
    %975 = vmatmul.mubr.f32.gmra.mrb[0].mxu0 %v737
    %v976 = vpop.f32.mrb[0].mxu0
    %v977 = vadd.f32 %v219, %v976
    %v978 = vpop.f32.mrb[0].mxu0
    %979 = vmatprep.mubr.f32.mxu0 0.0
    %980 = vmatmul.mubr.f32.gmra.mrb[0].mxu0 %v740
    %v981 = vpop.f32.mrb[0].mxu0
    %v982 = vadd.f32 %v220, %v981
    %v983 = vpop.f32.mrb[0].mxu0
    %984 = vmatprep.mubr.f32.mxu0 0.0
    %985 = vmatmul.mubr.f32.gmra.mrb[0].mxu0 %v743
    %v986 = vpop.f32.mrb[0].mxu0
    %v987 = vadd.f32 %v221, %v986
    %v988 = vpop.f32.mrb[0].mxu0
    %989 = vmatprep.mubr.f32.mxu0 0.0
    %990 = vmatmul.mubr.f32.gmra.mrb[0].mxu0 %v746
    %v991 = vpop.f32.mrb[0].mxu0
    %v992 = vadd.f32 %v222, %v991
    %v993 = vpop.f32.mrb[0].mxu0
    %994 = vmatprep.mubr.f32.mxu0 0.0
    %995 = vmatmul.mubr.f32.gmra.mrb[0].mxu0 %v749
    %v996 = vpop.f32.mrb[0].mxu0
    %v997 = vadd.f32 %v223, %v996
    %v998 = vpop.f32.mrb[0].mxu0
    %999 = vdwg.mxu0
    %vm1000 = vcmask 523264
    %v1001 = vsel %vm1000, %v842, -inf
    %1002 = vmax.xlane.f32.xlu0 %v1001
    %v1003 = vpop.xlane.xlu0 %1002
    %v1004 = vsel %vm1000, %v847, -inf
    %1005 = vmax.xlane.f32.xlu0 %v1004
    %v1006 = vpop.xlane.xlu0 %1005
    %v1007 = vsel %vm1000, %v852, -inf
    %1008 = vmax.xlane.f32.xlu0 %v1007
    %v1009 = vpop.xlane.xlu0 %1008
    %v1010 = vsel %vm1000, %v857, -inf
    %1011 = vmax.xlane.f32.xlu0 %v1010
    %v1012 = vpop.xlane.xlu0 %1011
    %v1013 = vsel %vm1000, %v862, -inf
    %1014 = vmax.xlane.f32.xlu0 %v1013
    %v1015 = vpop.xlane.xlu0 %1014
    %v1016 = vsel %vm1000, %v867, -inf
    %1017 = vmax.xlane.f32.xlu0 %v1016
    %v1018 = vpop.xlane.xlu0 %1017
    %v1019 = vsel %vm1000, %v872, -inf
    %1020 = vmax.xlane.f32.xlu0 %v1019
    %v1021 = vpop.xlane.xlu0 %1020
    %v1022 = vsel %vm1000, %v877, -inf
    %1023 = vmax.xlane.f32.xlu0 %v1022
    %v1024 = vpop.xlane.xlu0 %1023
    %v1025 = vsel %vm1000, %v882, -inf
    %1026 = vmax.xlane.f32.xlu0 %v1025
    %v1027 = vpop.xlane.xlu0 %1026
    %v1028 = vsel %vm1000, %v887, -inf
    %1029 = vmax.xlane.f32.xlu0 %v1028
    %v1030 = vpop.xlane.xlu0 %1029
    %v1031 = vsel %vm1000, %v892, -inf
    %1032 = vmax.xlane.f32.xlu0 %v1031
    %v1033 = vpop.xlane.xlu0 %1032
    %v1034 = vsel %vm1000, %v897, -inf
    %1035 = vmax.xlane.f32.xlu0 %v1034
    %v1036 = vpop.xlane.xlu0 %1035
    %v1037 = vsel %vm1000, %v902, -inf
    %1038 = vmax.xlane.f32.xlu0 %v1037
    %v1039 = vpop.xlane.xlu0 %1038
    %v1040 = vsel %vm1000, %v907, -inf
    %1041 = vmax.xlane.f32.xlu0 %v1040
    %v1042 = vpop.xlane.xlu0 %1041
    %v1043 = vsel %vm1000, %v912, -inf
    %1044 = vmax.xlane.f32.xlu0 %v1043
    %v1045 = vpop.xlane.xlu0 %1044
    %v1046 = vsel %vm1000, %v917, -inf
    %1047 = vmax.xlane.f32.xlu0 %v1046
    %v1048 = vpop.xlane.xlu0 %1047
    %v1049 = vsel %vm1000, %v922, -inf
    %1050 = vmax.xlane.f32.xlu0 %v1049
    %v1051 = vpop.xlane.xlu0 %1050
    %v1052 = vsel %vm1000, %v927, -inf
    %1053 = vmax.xlane.f32.xlu0 %v1052
    %v1054 = vpop.xlane.xlu0 %1053
    %v1055 = vsel %vm1000, %v932, -inf
    %1056 = vmax.xlane.f32.xlu0 %v1055
    %v1057 = vpop.xlane.xlu0 %1056
    %v1058 = vsel %vm1000, %v937, -inf
    %1059 = vmax.xlane.f32.xlu0 %v1058
    %v1060 = vpop.xlane.xlu0 %1059
    %v1061 = vsel %vm1000, %v942, -inf
    %1062 = vmax.xlane.f32.xlu0 %v1061
    %v1063 = vpop.xlane.xlu0 %1062
    %v1064 = vsel %vm1000, %v947, -inf
    %1065 = vmax.xlane.f32.xlu0 %v1064
    %v1066 = vpop.xlane.xlu0 %1065
    %v1067 = vsel %vm1000, %v952, -inf
    %1068 = vmax.xlane.f32.xlu0 %v1067
    %v1069 = vpop.xlane.xlu0 %1068
    %v1070 = vsel %vm1000, %v957, -inf
    %1071 = vmax.xlane.f32.xlu0 %v1070
    %v1072 = vpop.xlane.xlu0 %1071
    %v1073 = vsel %vm1000, %v962, -inf
    %1074 = vmax.xlane.f32.xlu0 %v1073
    %v1075 = vpop.xlane.xlu0 %1074
    %v1076 = vsel %vm1000, %v967, -inf
    %1077 = vmax.xlane.f32.xlu0 %v1076
    %v1078 = vpop.xlane.xlu0 %1077
    %v1079 = vsel %vm1000, %v972, -inf
    %1080 = vmax.xlane.f32.xlu0 %v1079
    %v1081 = vpop.xlane.xlu0 %1080
    %v1082 = vsel %vm1000, %v977, -inf
    %1083 = vmax.xlane.f32.xlu0 %v1082
    %v1084 = vpop.xlane.xlu0 %1083
    %v1085 = vsel %vm1000, %v982, -inf
    %1086 = vmax.xlane.f32.xlu0 %v1085
    %v1087 = vpop.xlane.xlu0 %1086
    %v1088 = vsel %vm1000, %v987, -inf
    %1089 = vmax.xlane.f32.xlu0 %v1088
    %v1090 = vpop.xlane.xlu0 %1089
    %v1091 = vsel %vm1000, %v992, -inf
    %1092 = vmax.xlane.f32.xlu0 %v1091
    %v1093 = vpop.xlane.xlu0 %1092
    %v1094 = vsel %vm1000, %v997, -inf
    %1095 = vmax.xlane.f32.xlu0 %v1094
    %v1096 = vpop.xlane.xlu0 %1095
    %v1097 = vsub.f32 %v842, %v1003
    %v1098 = vsub.f32 %v847, %v1006
    %v1099 = vsub.f32 %v852, %v1009
    %v1100 = vsub.f32 %v857, %v1012
    %v1101 = vsub.f32 %v862, %v1015
    %v1102 = vsub.f32 %v867, %v1018
    %v1103 = vsub.f32 %v872, %v1021
    %v1104 = vsub.f32 %v877, %v1024
    %v1105 = vsub.f32 %v882, %v1027
    %v1106 = vsub.f32 %v887, %v1030
    %v1107 = vsub.f32 %v892, %v1033
    %v1108 = vsub.f32 %v897, %v1036
    %v1109 = vsub.f32 %v902, %v1039
    %v1110 = vsub.f32 %v907, %v1042
    %v1111 = vsub.f32 %v912, %v1045
    %v1112 = vsub.f32 %v917, %v1048
    %v1113 = vsub.f32 %v922, %v1051
    %v1114 = vsub.f32 %v927, %v1054
    %v1115 = vsub.f32 %v932, %v1057
    %v1116 = vsub.f32 %v937, %v1060
    %v1117 = vsub.f32 %v942, %v1063
    %v1118 = vsub.f32 %v947, %v1066
    %v1119 = vsub.f32 %v952, %v1069
    %v1120 = vsub.f32 %v957, %v1072
    %v1121 = vsub.f32 %v962, %v1075
    %v1122 = vsub.f32 %v967, %v1078
    %v1123 = vsub.f32 %v972, %v1081
    %v1124 = vsub.f32 %v977, %v1084
    %v1125 = vsub.f32 %v982, %v1087
    %v1126 = vsub.f32 %v987, %v1090
    %v1127 = vsub.f32 %v992, %v1093
    %v1128 = vsub.f32 %v997, %v1096
    %v1129 = vmul.f32 %v1097, 1.442695
    %v1130 = vpow.pop %v1129
    %v1131 = vmul.f32 %v1098, 1.442695
    %v1132 = vpow.pop %v1131
    %v1133 = vmul.f32 %v1099, 1.442695
    %v1134 = vpow.pop %v1133
    %v1135 = vmul.f32 %v1100, 1.442695
    %v1136 = vpow.pop %v1135
    %v1137 = vmul.f32 %v1101, 1.442695
    %v1138 = vpow.pop %v1137
    %v1139 = vmul.f32 %v1102, 1.442695
    %v1140 = vpow.pop %v1139
    %v1141 = vmul.f32 %v1103, 1.442695
    %v1142 = vpow.pop %v1141
    %v1143 = vmul.f32 %v1104, 1.442695
    %v1144 = vpow.pop %v1143
    %v1145 = vmul.f32 %v1105, 1.442695
    %v1146 = vpow.pop %v1145
    %v1147 = vmul.f32 %v1106, 1.442695
    %v1148 = vpow.pop %v1147
    %v1149 = vmul.f32 %v1107, 1.442695
    %v1150 = vpow.pop %v1149
    %v1151 = vmul.f32 %v1108, 1.442695
    %v1152 = vpow.pop %v1151
    %v1153 = vmul.f32 %v1109, 1.442695
    %v1154 = vpow.pop %v1153
    %v1155 = vmul.f32 %v1110, 1.442695
    %v1156 = vpow.pop %v1155
    %v1157 = vmul.f32 %v1111, 1.442695
    %v1158 = vpow.pop %v1157
    %v1159 = vmul.f32 %v1112, 1.442695
    %v1160 = vpow.pop %v1159
    %v1161 = vmul.f32 %v1113, 1.442695
    %v1162 = vpow.pop %v1161
    %v1163 = vmul.f32 %v1114, 1.442695
    %v1164 = vpow.pop %v1163
    %v1165 = vmul.f32 %v1115, 1.442695
    %v1166 = vpow.pop %v1165
    %v1167 = vmul.f32 %v1116, 1.442695
    %v1168 = vpow.pop %v1167
    %v1169 = vmul.f32 %v1117, 1.442695
    %v1170 = vpow.pop %v1169
    %v1171 = vmul.f32 %v1118, 1.442695
    %v1172 = vpow.pop %v1171
    %v1173 = vmul.f32 %v1119, 1.442695
    %v1174 = vpow.pop %v1173
    %v1175 = vmul.f32 %v1120, 1.442695
    %v1176 = vpow.pop %v1175
    %v1177 = vmul.f32 %v1121, 1.442695
    %v1178 = vpow.pop %v1177
    %v1179 = vmul.f32 %v1122, 1.442695
    %v1180 = vpow.pop %v1179
    %v1181 = vmul.f32 %v1123, 1.442695
    %v1182 = vpow.pop %v1181
    %v1183 = vmul.f32 %v1124, 1.442695
    %v1184 = vpow.pop %v1183
    %v1185 = vmul.f32 %v1125, 1.442695
    %v1186 = vpow.pop %v1185
    %v1187 = vmul.f32 %v1126, 1.442695
    %v1188 = vpow.pop %v1187
    %v1189 = vmul.f32 %v1127, 1.442695
    %v1190 = vpow.pop %v1189
    %v1191 = vmul.f32 %v1128, 1.442695
    %v1192 = vpow.pop %v1191
    %v1193 = vsel %vm1000, %v1130, 0.0
    %1194 = vadd.xlane.f32.xlu0 %v1193
    %v1195 = vpop.xlane.xlu0 %1194
    %v1196 = vsel %vm1000, %v1132, 0.0
    %1197 = vadd.xlane.f32.xlu0 %v1196
    %v1198 = vpop.xlane.xlu0 %1197
    %v1199 = vsel %vm1000, %v1134, 0.0
    %1200 = vadd.xlane.f32.xlu0 %v1199
    %v1201 = vpop.xlane.xlu0 %1200
    %v1202 = vsel %vm1000, %v1136, 0.0
    %1203 = vadd.xlane.f32.xlu0 %v1202
    %v1204 = vpop.xlane.xlu0 %1203
    %v1205 = vsel %vm1000, %v1138, 0.0
    %1206 = vadd.xlane.f32.xlu0 %v1205
    %v1207 = vpop.xlane.xlu0 %1206
    %v1208 = vsel %vm1000, %v1140, 0.0
    %1209 = vadd.xlane.f32.xlu0 %v1208
    %v1210 = vpop.xlane.xlu0 %1209
    %v1211 = vsel %vm1000, %v1142, 0.0
    %1212 = vadd.xlane.f32.xlu0 %v1211
    %v1213 = vpop.xlane.xlu0 %1212
    %v1214 = vsel %vm1000, %v1144, 0.0
    %1215 = vadd.xlane.f32.xlu0 %v1214
    %v1216 = vpop.xlane.xlu0 %1215
    %v1217 = vsel %vm1000, %v1146, 0.0
    %1218 = vadd.xlane.f32.xlu0 %v1217
    %v1219 = vpop.xlane.xlu0 %1218
    %v1220 = vsel %vm1000, %v1148, 0.0
    %1221 = vadd.xlane.f32.xlu0 %v1220
    %v1222 = vpop.xlane.xlu0 %1221
    %v1223 = vsel %vm1000, %v1150, 0.0
    %1224 = vadd.xlane.f32.xlu0 %v1223
    %v1225 = vpop.xlane.xlu0 %1224
    %v1226 = vsel %vm1000, %v1152, 0.0
    %1227 = vadd.xlane.f32.xlu0 %v1226
    %v1228 = vpop.xlane.xlu0 %1227
    %v1229 = vsel %vm1000, %v1154, 0.0
    %1230 = vadd.xlane.f32.xlu0 %v1229
    %v1231 = vpop.xlane.xlu0 %1230
    %v1232 = vsel %vm1000, %v1156, 0.0
    %1233 = vadd.xlane.f32.xlu0 %v1232
    %v1234 = vpop.xlane.xlu0 %1233
    %v1235 = vsel %vm1000, %v1158, 0.0
    %1236 = vadd.xlane.f32.xlu0 %v1235
    %v1237 = vpop.xlane.xlu0 %1236
    %v1238 = vsel %vm1000, %v1160, 0.0
    %1239 = vadd.xlane.f32.xlu0 %v1238
    %v1240 = vpop.xlane.xlu0 %1239
    %v1241 = vsel %vm1000, %v1162, 0.0
    %1242 = vadd.xlane.f32.xlu0 %v1241
    %v1243 = vpop.xlane.xlu0 %1242
    %v1244 = vsel %vm1000, %v1164, 0.0
    %1245 = vadd.xlane.f32.xlu0 %v1244
    %v1246 = vpop.xlane.xlu0 %1245
    %v1247 = vsel %vm1000, %v1166, 0.0
    %1248 = vadd.xlane.f32.xlu0 %v1247
    %v1249 = vpop.xlane.xlu0 %1248
    %v1250 = vsel %vm1000, %v1168, 0.0
    %1251 = vadd.xlane.f32.xlu0 %v1250
    %v1252 = vpop.xlane.xlu0 %1251
    %v1253 = vsel %vm1000, %v1170, 0.0
    %1254 = vadd.xlane.f32.xlu0 %v1253
    %v1255 = vpop.xlane.xlu0 %1254
    %v1256 = vsel %vm1000, %v1172, 0.0
    %1257 = vadd.xlane.f32.xlu0 %v1256
    %v1258 = vpop.xlane.xlu0 %1257
    %v1259 = vsel %vm1000, %v1174, 0.0
    %1260 = vadd.xlane.f32.xlu0 %v1259
    %v1261 = vpop.xlane.xlu0 %1260
    %v1262 = vsel %vm1000, %v1176, 0.0
    %1263 = vadd.xlane.f32.xlu0 %v1262
    %v1264 = vpop.xlane.xlu0 %1263
    %v1265 = vsel %vm1000, %v1178, 0.0
    %1266 = vadd.xlane.f32.xlu0 %v1265
    %v1267 = vpop.xlane.xlu0 %1266
    %v1268 = vsel %vm1000, %v1180, 0.0
    %1269 = vadd.xlane.f32.xlu0 %v1268
    %v1270 = vpop.xlane.xlu0 %1269
    %v1271 = vsel %vm1000, %v1182, 0.0
    %1272 = vadd.xlane.f32.xlu0 %v1271
    %v1273 = vpop.xlane.xlu0 %1272
    %v1274 = vsel %vm1000, %v1184, 0.0
    %1275 = vadd.xlane.f32.xlu0 %v1274
    %v1276 = vpop.xlane.xlu0 %1275
    %v1277 = vsel %vm1000, %v1186, 0.0
    %1278 = vadd.xlane.f32.xlu0 %v1277
    %v1279 = vpop.xlane.xlu0 %1278
    %v1280 = vsel %vm1000, %v1188, 0.0
    %1281 = vadd.xlane.f32.xlu0 %v1280
    %v1282 = vpop.xlane.xlu0 %1281
    %v1283 = vsel %vm1000, %v1190, 0.0
    %1284 = vadd.xlane.f32.xlu0 %v1283
    %v1285 = vpop.xlane.xlu0 %1284
    %v1286 = vsel %vm1000, %v1192, 0.0
    %1287 = vadd.xlane.f32.xlu0 %v1286
    %v1288 = vpop.xlane.xlu0 %1287
    %v1289 = vrcp.pop %v1195
    %v1290 = vrcp.pop %v1198
    %v1291 = vrcp.pop %v1201
    %v1292 = vrcp.pop %v1204
    %v1293 = vrcp.pop %v1207
    %v1294 = vrcp.pop %v1210
    %v1295 = vrcp.pop %v1213
    %v1296 = vrcp.pop %v1216
    %v1297 = vrcp.pop %v1219
    %v1298 = vrcp.pop %v1222
    %v1299 = vrcp.pop %v1225
    %v1300 = vrcp.pop %v1228
    %v1301 = vrcp.pop %v1231
    %v1302 = vrcp.pop %v1234
    %v1303 = vrcp.pop %v1237
    %v1304 = vrcp.pop %v1240
    %v1305 = vrcp.pop %v1243
    %v1306 = vrcp.pop %v1246
    %v1307 = vrcp.pop %v1249
    %v1308 = vrcp.pop %v1252
    %v1309 = vrcp.pop %v1255
    %v1310 = vrcp.pop %v1258
    %v1311 = vrcp.pop %v1261
    %v1312 = vrcp.pop %v1264
    %v1313 = vrcp.pop %v1267
    %v1314 = vrcp.pop %v1270
    %v1315 = vrcp.pop %v1273
    %v1316 = vrcp.pop %v1276
    %v1317 = vrcp.pop %v1279
    %v1318 = vrcp.pop %v1282
    %v1319 = vrcp.pop %v1285
    %v1320 = vrcp.pop %v1288
    %v1322 = vsel %vm1000, %v1130, 0
    %v1325 = vsel %vm1000, %v1132, 0
    %v1328 = vsel %vm1000, %v1134, 0
    %v1331 = vsel %vm1000, %v1136, 0
    %v1334 = vsel %vm1000, %v1138, 0
    %v1337 = vsel %vm1000, %v1140, 0
    %v1340 = vsel %vm1000, %v1142, 0
    %v1343 = vsel %vm1000, %v1144, 0
    %v1346 = vsel %vm1000, %v1146, 0
    %v1349 = vsel %vm1000, %v1148, 0
    %v1352 = vsel %vm1000, %v1150, 0
    %v1355 = vsel %vm1000, %v1152, 0
    %v1358 = vsel %vm1000, %v1154, 0
    %v1361 = vsel %vm1000, %v1156, 0
    %v1364 = vsel %vm1000, %v1158, 0
    %v1367 = vsel %vm1000, %v1160, 0
    %v1370 = vsel %vm1000, %v1162, 0
    %v1373 = vsel %vm1000, %v1164, 0
    %v1376 = vsel %vm1000, %v1166, 0
    %v1379 = vsel %vm1000, %v1168, 0
    %v1382 = vsel %vm1000, %v1170, 0
    %v1385 = vsel %vm1000, %v1172, 0
    %v1388 = vsel %vm1000, %v1174, 0
    %v1391 = vsel %vm1000, %v1176, 0
    %v1394 = vsel %vm1000, %v1178, 0
    %v1397 = vsel %vm1000, %v1180, 0
    %v1400 = vsel %vm1000, %v1182, 0
    %v1403 = vsel %vm1000, %v1184, 0
    %v1406 = vsel %vm1000, %v1186, 0
    %v1409 = vsel %vm1000, %v1188, 0
    %v1412 = vsel %vm1000, %v1190, 0
    %v1415 = vsel %vm1000, %v1192, 0
    %1417 = vmatprep.subr.mxu0 0.0
    %1418 = vmatpush1.msra.mxu0 %v585
    %1419 = vmatprep.subr.mxu0 0.0
    %1420 = vmatpush1.msra.mxu0 %v590
    %1421 = vmatprep.subr.mxu0 0.0
    %1422 = vmatpush1.msra.mxu0 %v595
    %1423 = vmatprep.subr.mxu0 0.0
    %1424 = vmatpush1.msra.mxu0 %v600
    %1425 = vmatprep.subr.mxu0 0.0
    %1426 = vmatpush1.msra.mxu0 %v605
    %1427 = vmatprep.subr.mxu0 0.0
    %1428 = vmatpush1.msra.mxu0 %v610
    %1429 = vmatprep.subr.mxu0 0.0
    %1430 = vmatpush1.msra.mxu0 %v615
    %1431 = vmatprep.subr.mxu0 0.0
    %1432 = vmatpush1.msra.mxu0 %v620
    %1433 = vmatprep.subr.mxu0 0.0
    %1434 = vmatpush1.msra.mxu0 0.0
    %1435 = vmatprep.subr.mxu0 0.0
    %1436 = vmatpush1.msra.mxu0 0.0
    %1437 = vmatprep.subr.mxu0 0.0
    %1438 = vmatpush1.msra.mxu0 0.0
    %1439 = vmatprep.subr.mxu0 0.0
    %1440 = vmatpush1.msra.mxu0 0.0
    %1441 = vmatprep.subr.mxu0 0.0
    %1442 = vmatpush1.msra.mxu0 0.0
    %1443 = vmatprep.subr.mxu0 0.0
    %1444 = vmatpush1.msra.mxu0 0.0
    %1445 = vmatprep.subr.mxu0 0.0
    %1446 = vmatpush1.msra.mxu0 0.0
    %1447 = vmatprep.subr.mxu0 0.0
    %1448 = vmatpush1.msra.mxu0 0.0
    %1449 = vmatprep.subr.mxu0 0.0
    %1450 = vmatpush1.msra.mxu0 0.0
    %1451 = vmatprep.subr.mxu0 0.0
    %1452 = vmatpush1.msra.mxu0 0.0
    %1453 = vmatprep.subr.mxu0 0.0
    %1454 = vmatpush1.msra.mxu0 0.0
    %1455 = vmatprep.subr.mxu0 0.0
    %1456 = vmatpush1.msra.mxu0 0.0
    %1457 = vmatprep.subr.mxu0 0.0
    %1458 = vmatpush1.msra.mxu0 0.0
    %1459 = vmatprep.subr.mxu0 0.0
    %1460 = vmatpush1.msra.mxu0 0.0
    %1461 = vmatprep.subr.mxu0 0.0
    %1462 = vmatpush1.msra.mxu0 0.0
    %1463 = vmatprep.subr.mxu0 0.0
    %1464 = vmatpush1.msra.mxu0 0.0
    %1465 = vmatprep.subr.mxu0 0.0
    %1466 = vmatpush1.msra.mxu0 0.0
    %1467 = vmatprep.subr.mxu0 0.0
    %1468 = vmatpush1.msra.mxu0 0.0
    %1469 = vmatprep.subr.mxu0 0.0
    %1470 = vmatpush1.msra.mxu0 0.0
    %1471 = vmatprep.subr.mxu0 0.0
    %1472 = vmatpush1.msra.mxu0 0.0
    %1473 = vmatprep.subr.mxu0 0.0
    %1474 = vmatpush1.msra.mxu0 0.0
    %1475 = vmatprep.subr.mxu0 0.0
    %1476 = vmatpush1.msra.mxu0 0.0
    %1477 = vmatprep.subr.mxu0 0.0
    %1478 = vmatpush1.msra.mxu0 0.0
    %1479 = vmatprep.subr.mxu0 0.0
    %1480 = vmatpush1.msra.mxu0 0.0
    %1481 = vmatprep.mubr.f32.mxu0 0.0
    %1482 = vmatmul.mubr.f32.gmra.mrb[0].mxu0 %v1322
    %v1483 = vpop.f32.mrb[0].mxu0
    %v1484 = vadd.f32 0.0, %v1483
    %v1485 = vpop.f32.mrb[0].mxu0
    %1486 = vmatprep.mubr.f32.mxu0 0.0
    %1487 = vmatmul.mubr.f32.gmra.mrb[0].mxu0 %v1325
    %v1488 = vpop.f32.mrb[0].mxu0
    %v1489 = vadd.f32 0.0, %v1488
    %v1490 = vpop.f32.mrb[0].mxu0
    %1491 = vmatprep.mubr.f32.mxu0 0.0
    %1492 = vmatmul.mubr.f32.gmra.mrb[0].mxu0 %v1328
    %v1493 = vpop.f32.mrb[0].mxu0
    %v1494 = vadd.f32 0.0, %v1493
    %v1495 = vpop.f32.mrb[0].mxu0
    %1496 = vmatprep.mubr.f32.mxu0 0.0
    %1497 = vmatmul.mubr.f32.gmra.mrb[0].mxu0 %v1331
    %v1498 = vpop.f32.mrb[0].mxu0
    %v1499 = vadd.f32 0.0, %v1498
    %v1500 = vpop.f32.mrb[0].mxu0
    %1501 = vmatprep.mubr.f32.mxu0 0.0
    %1502 = vmatmul.mubr.f32.gmra.mrb[0].mxu0 %v1334
    %v1503 = vpop.f32.mrb[0].mxu0
    %v1504 = vadd.f32 0.0, %v1503
    %v1505 = vpop.f32.mrb[0].mxu0
    %1506 = vmatprep.mubr.f32.mxu0 0.0
    %1507 = vmatmul.mubr.f32.gmra.mrb[0].mxu0 %v1337
    %v1508 = vpop.f32.mrb[0].mxu0
    %v1509 = vadd.f32 0.0, %v1508
    %v1510 = vpop.f32.mrb[0].mxu0
    %1511 = vmatprep.mubr.f32.mxu0 0.0
    %1512 = vmatmul.mubr.f32.gmra.mrb[0].mxu0 %v1340
    %v1513 = vpop.f32.mrb[0].mxu0
    %v1514 = vadd.f32 0.0, %v1513
    %v1515 = vpop.f32.mrb[0].mxu0
    %1516 = vmatprep.mubr.f32.mxu0 0.0
    %1517 = vmatmul.mubr.f32.gmra.mrb[0].mxu0 %v1343
    %v1518 = vpop.f32.mrb[0].mxu0
    %v1519 = vadd.f32 0.0, %v1518
    %v1520 = vpop.f32.mrb[0].mxu0
    %1521 = vmatprep.mubr.f32.mxu0 0.0
    %1522 = vmatmul.mubr.f32.gmra.mrb[0].mxu0 %v1346
    %v1523 = vpop.f32.mrb[0].mxu0
    %v1524 = vadd.f32 0.0, %v1523
    %v1525 = vpop.f32.mrb[0].mxu0
    %1526 = vmatprep.mubr.f32.mxu0 0.0
    %1527 = vmatmul.mubr.f32.gmra.mrb[0].mxu0 %v1349
    %v1528 = vpop.f32.mrb[0].mxu0
    %v1529 = vadd.f32 0.0, %v1528
    %v1530 = vpop.f32.mrb[0].mxu0
    %1531 = vmatprep.mubr.f32.mxu0 0.0
    %1532 = vmatmul.mubr.f32.gmra.mrb[0].mxu0 %v1352
    %v1533 = vpop.f32.mrb[0].mxu0
    %v1534 = vadd.f32 0.0, %v1533
    %v1535 = vpop.f32.mrb[0].mxu0
    %1536 = vmatprep.mubr.f32.mxu0 0.0
    %1537 = vmatmul.mubr.f32.gmra.mrb[0].mxu0 %v1355
    %v1538 = vpop.f32.mrb[0].mxu0
    %v1539 = vadd.f32 0.0, %v1538
    %v1540 = vpop.f32.mrb[0].mxu0
    %1541 = vmatprep.mubr.f32.mxu0 0.0
    %1542 = vmatmul.mubr.f32.gmra.mrb[0].mxu0 %v1358
    %v1543 = vpop.f32.mrb[0].mxu0
    %v1544 = vadd.f32 0.0, %v1543
    %v1545 = vpop.f32.mrb[0].mxu0
    %1546 = vmatprep.mubr.f32.mxu0 0.0
    %1547 = vmatmul.mubr.f32.gmra.mrb[0].mxu0 %v1361
    %v1548 = vpop.f32.mrb[0].mxu0
    %v1549 = vadd.f32 0.0, %v1548
    %v1550 = vpop.f32.mrb[0].mxu0
    %1551 = vmatprep.mubr.f32.mxu0 0.0
    %1552 = vmatmul.mubr.f32.gmra.mrb[0].mxu0 %v1364
    %v1553 = vpop.f32.mrb[0].mxu0
    %v1554 = vadd.f32 0.0, %v1553
    %v1555 = vpop.f32.mrb[0].mxu0
    %1556 = vmatprep.mubr.f32.mxu0 0.0
    %1557 = vmatmul.mubr.f32.gmra.mrb[0].mxu0 %v1367
    %v1558 = vpop.f32.mrb[0].mxu0
    %v1559 = vadd.f32 0.0, %v1558
    %v1560 = vpop.f32.mrb[0].mxu0
    %1561 = vmatprep.mubr.f32.mxu0 0.0
    %1562 = vmatmul.mubr.f32.gmra.mrb[0].mxu0 %v1370
    %v1563 = vpop.f32.mrb[0].mxu0
    %v1564 = vadd.f32 0.0, %v1563
    %v1565 = vpop.f32.mrb[0].mxu0
    %1566 = vmatprep.mubr.f32.mxu0 0.0
    %1567 = vmatmul.mubr.f32.gmra.mrb[0].mxu0 %v1373
    %v1568 = vpop.f32.mrb[0].mxu0
    %v1569 = vadd.f32 0.0, %v1568
    %v1570 = vpop.f32.mrb[0].mxu0
    %1571 = vmatprep.mubr.f32.mxu0 0.0
    %1572 = vmatmul.mubr.f32.gmra.mrb[0].mxu0 %v1376
    %v1573 = vpop.f32.mrb[0].mxu0
    %v1574 = vadd.f32 0.0, %v1573
    %v1575 = vpop.f32.mrb[0].mxu0
    %1576 = vmatprep.mubr.f32.mxu0 0.0
    %1577 = vmatmul.mubr.f32.gmra.mrb[0].mxu0 %v1379
    %v1578 = vpop.f32.mrb[0].mxu0
    %v1579 = vadd.f32 0.0, %v1578
    %v1580 = vpop.f32.mrb[0].mxu0
    %1581 = vmatprep.mubr.f32.mxu0 0.0
    %1582 = vmatmul.mubr.f32.gmra.mrb[0].mxu0 %v1382
    %v1583 = vpop.f32.mrb[0].mxu0
    %v1584 = vadd.f32 0.0, %v1583
    %v1585 = vpop.f32.mrb[0].mxu0
    %1586 = vmatprep.mubr.f32.mxu0 0.0
    %1587 = vmatmul.mubr.f32.gmra.mrb[0].mxu0 %v1385
    %v1588 = vpop.f32.mrb[0].mxu0
    %v1589 = vadd.f32 0.0, %v1588
    %v1590 = vpop.f32.mrb[0].mxu0
    %1591 = vmatprep.mubr.f32.mxu0 0.0
    %1592 = vmatmul.mubr.f32.gmra.mrb[0].mxu0 %v1388
    %v1593 = vpop.f32.mrb[0].mxu0
    %v1594 = vadd.f32 0.0, %v1593
    %v1595 = vpop.f32.mrb[0].mxu0
    %1596 = vmatprep.mubr.f32.mxu0 0.0
    %1597 = vmatmul.mubr.f32.gmra.mrb[0].mxu0 %v1391
    %v1598 = vpop.f32.mrb[0].mxu0
    %v1599 = vadd.f32 0.0, %v1598
    %v1600 = vpop.f32.mrb[0].mxu0
    %1601 = vmatprep.mubr.f32.mxu0 0.0
    %1602 = vmatmul.mubr.f32.gmra.mrb[0].mxu0 %v1394
    %v1603 = vpop.f32.mrb[0].mxu0
    %v1604 = vadd.f32 0.0, %v1603
    %v1605 = vpop.f32.mrb[0].mxu0
    %1606 = vmatprep.mubr.f32.mxu0 0.0
    %1607 = vmatmul.mubr.f32.gmra.mrb[0].mxu0 %v1397
    %v1608 = vpop.f32.mrb[0].mxu0
    %v1609 = vadd.f32 0.0, %v1608
    %v1610 = vpop.f32.mrb[0].mxu0
    %1611 = vmatprep.mubr.f32.mxu0 0.0
    %1612 = vmatmul.mubr.f32.gmra.mrb[0].mxu0 %v1400
    %v1613 = vpop.f32.mrb[0].mxu0
    %v1614 = vadd.f32 0.0, %v1613
    %v1615 = vpop.f32.mrb[0].mxu0
    %1616 = vmatprep.mubr.f32.mxu0 0.0
    %1617 = vmatmul.mubr.f32.gmra.mrb[0].mxu0 %v1403
    %v1618 = vpop.f32.mrb[0].mxu0
    %v1619 = vadd.f32 0.0, %v1618
    %v1620 = vpop.f32.mrb[0].mxu0
    %1621 = vmatprep.mubr.f32.mxu0 0.0
    %1622 = vmatmul.mubr.f32.gmra.mrb[0].mxu0 %v1406
    %v1623 = vpop.f32.mrb[0].mxu0
    %v1624 = vadd.f32 0.0, %v1623
    %v1625 = vpop.f32.mrb[0].mxu0
    %1626 = vmatprep.mubr.f32.mxu0 0.0
    %1627 = vmatmul.mubr.f32.gmra.mrb[0].mxu0 %v1409
    %v1628 = vpop.f32.mrb[0].mxu0
    %v1629 = vadd.f32 0.0, %v1628
    %v1630 = vpop.f32.mrb[0].mxu0
    %1631 = vmatprep.mubr.f32.mxu0 0.0
    %1632 = vmatmul.mubr.f32.gmra.mrb[0].mxu0 %v1412
    %v1633 = vpop.f32.mrb[0].mxu0
    %v1634 = vadd.f32 0.0, %v1633
    %v1635 = vpop.f32.mrb[0].mxu0
    %1636 = vmatprep.mubr.f32.mxu0 0.0
    %1637 = vmatmul.mubr.f32.gmra.mrb[0].mxu0 %v1415
    %v1638 = vpop.f32.mrb[0].mxu0
    %v1639 = vadd.f32 0.0, %v1638
    %v1640 = vpop.f32.mrb[0].mxu0
    %1641 = vdwg.mxu0
    %v1642 = vmul.f32 %v1484, %v1289
    %v1643 = vmul.f32 %v1489, %v1290
    %v1644 = vmul.f32 %v1494, %v1291
    %v1645 = vmul.f32 %v1499, %v1292
    %v1646 = vmul.f32 %v1504, %v1293
    %v1647 = vmul.f32 %v1509, %v1294
    %v1648 = vmul.f32 %v1514, %v1295
    %v1649 = vmul.f32 %v1519, %v1296
    %v1650 = vmul.f32 %v1524, %v1297
    %v1651 = vmul.f32 %v1529, %v1298
    %v1652 = vmul.f32 %v1534, %v1299
    %v1653 = vmul.f32 %v1539, %v1300
    %v1654 = vmul.f32 %v1544, %v1301
    %v1655 = vmul.f32 %v1549, %v1302
    %v1656 = vmul.f32 %v1554, %v1303
    %v1657 = vmul.f32 %v1559, %v1304
    %v1658 = vmul.f32 %v1564, %v1305
    %v1659 = vmul.f32 %v1569, %v1306
    %v1660 = vmul.f32 %v1574, %v1307
    %v1661 = vmul.f32 %v1579, %v1308
    %v1662 = vmul.f32 %v1584, %v1309
    %v1663 = vmul.f32 %v1589, %v1310
    %v1664 = vmul.f32 %v1594, %v1311
    %v1665 = vmul.f32 %v1599, %v1312
    %v1666 = vmul.f32 %v1604, %v1313
    %v1667 = vmul.f32 %v1609, %v1314
    %v1668 = vmul.f32 %v1614, %v1315
    %v1669 = vmul.f32 %v1619, %v1316
    %v1670 = vmul.f32 %v1624, %v1317
    %v1671 = vmul.f32 %v1629, %v1318
    %v1672 = vmul.f32 %v1634, %v1319
    %v1673 = vmul.f32 %v1639, %v1320
    %v1674 = vmul.f32 %v1642, %v224
    %v1675 = vmul.f32 %v1643, %v225
    %v1676 = vmul.f32 %v1644, %v226
    %v1677 = vmul.f32 %v1645, %v227
    %v1678 = vmul.f32 %v1646, %v228
    %v1679 = vmul.f32 %v1647, %v229
    %v1680 = vmul.f32 %v1648, %v230
    %v1681 = vmul.f32 %v1649, %v231
    %v1682 = vmul.f32 %v1650, %v232
    %v1683 = vmul.f32 %v1651, %v233
    %v1684 = vmul.f32 %v1652, %v234
    %v1685 = vmul.f32 %v1653, %v235
    %v1686 = vmul.f32 %v1654, %v236
    %v1687 = vmul.f32 %v1655, %v237
    %v1688 = vmul.f32 %v1656, %v238
    %v1689 = vmul.f32 %v1657, %v239
    %v1690 = vmul.f32 %v1658, %v240
    %v1691 = vmul.f32 %v1659, %v241
    %v1692 = vmul.f32 %v1660, %v242
    %v1693 = vmul.f32 %v1661, %v243
    %v1694 = vmul.f32 %v1662, %v244
    %v1695 = vmul.f32 %v1663, %v245
    %v1696 = vmul.f32 %v1664, %v246
    %v1697 = vmul.f32 %v1665, %v247
    %v1698 = vmul.f32 %v1666, %v248
    %v1699 = vmul.f32 %v1667, %v249
    %v1700 = vmul.f32 %v1668, %v250
    %v1701 = vmul.f32 %v1669, %v251
    %v1702 = vmul.f32 %v1670, %v252
    %v1703 = vmul.f32 %v1671, %v253
    %v1704 = vmul.f32 %v1672, %v254
    %v1705 = vmul.f32 %v1673, %v255
    %v1706 = vadd.f32 %v1674, %v1682
    %v1707 = vadd.f32 %v1675, %v1683
    %v1708 = vadd.f32 %v1676, %v1684
    %v1709 = vadd.f32 %v1677, %v1685
    %v1710 = vadd.f32 %v1678, %v1686
    %v1711 = vadd.f32 %v1679, %v1687
    %v1712 = vadd.f32 %v1680, %v1688
    %v1713 = vadd.f32 %v1681, %v1689
    %v1714 = vadd.f32 %v1706, %v1690
    %v1715 = vadd.f32 %v1707, %v1691
    %v1716 = vadd.f32 %v1708, %v1692
    %v1717 = vadd.f32 %v1709, %v1693
    %v1718 = vadd.f32 %v1710, %v1694
    %v1719 = vadd.f32 %v1711, %v1695
    %v1720 = vadd.f32 %v1712, %v1696
    %v1721 = vadd.f32 %v1713, %v1697
    %v1722 = vadd.f32 %v1714, %v1698
    %v1723 = vadd.f32 %v1715, %v1699
    %v1724 = vadd.f32 %v1716, %v1700
    %v1725 = vadd.f32 %v1717, %v1701
    %v1726 = vadd.f32 %v1718, %v1702
    %v1727 = vadd.f32 %v1719, %v1703
    %v1728 = vadd.f32 %v1720, %v1704
    %v1729 = vadd.f32 %v1721, %v1705
    %v1730 = vld [vmem:[#allocation2 + $0x2d0] sm:$0xff]
    %v1731 = vld [vmem:[#allocation2 + $0x2d8] sm:$0xff]
    %v1732 = vld [vmem:[#allocation2 + $0x2e0] sm:$0xff]
    %v1733 = vld [vmem:[#allocation2 + $0x2e8] sm:$0xff]
    %v1734 = vld [vmem:[#allocation2 + $0x2f0] sm:$0x1]
    %v1735 = vlaneseq
    %v1736 = vshrl.u32 %v1735, 7
    %v1737 = vsub.s32 0, %v1736
    %v1738 = vrot.slane %v1734, %v1737
    %v1740 = vsel %vm265, %v1722, 0
    %v1743 = vsel %vm265, %v1723, 0
    %v1746 = vsel %vm265, %v1724, 0
    %v1749 = vsel %vm265, %v1725, 0
    %v1752 = vsel %vm265, %v1726, 0
    %v1755 = vsel %vm265, %v1727, 0
    %v1758 = vsel %vm265, %v1728, 0
    %v1761 = vsel %vm265, %v1729, 0
    %1763 = vmatprep.subr.mxu0 0.0
    %1764 = vmatpush1.msra.mxu0 %v1730
    %1765 = vmatprep.subr.mxu0 0.0
    %1766 = vmatpush1.msra.mxu0 %v1731
    %1767 = vmatprep.subr.mxu0 0.0
    %1768 = vmatpush1.msra.mxu0 %v1732
    %1769 = vmatprep.subr.mxu0 0.0
    %1770 = vmatpush1.msra.mxu0 %v1733
    %1771 = vmatprep.subr.mxu0 0.0
    %1772 = vmatpush1.msra.mxu0 0.0
    %1773 = vmatprep.subr.mxu0 0.0
    %1774 = vmatpush1.msra.mxu0 0.0
    %1775 = vmatprep.subr.mxu0 0.0
    %1776 = vmatpush1.msra.mxu0 0.0
    %1777 = vmatprep.subr.mxu0 0.0
    %1778 = vmatpush1.msra.mxu0 0.0
    %1779 = vmatprep.subr.mxu0 0.0
    %1780 = vmatpush1.msra.mxu0 0.0
    %1781 = vmatprep.subr.mxu0 0.0
    %1782 = vmatpush1.msra.mxu0 0.0
    %1783 = vmatprep.subr.mxu0 0.0
    %1784 = vmatpush1.msra.mxu0 0.0
    %1785 = vmatprep.subr.mxu0 0.0
    %1786 = vmatpush1.msra.mxu0 0.0
    %1787 = vmatprep.subr.mxu0 0.0
    %1788 = vmatpush1.msra.mxu0 0.0
    %1789 = vmatprep.subr.mxu0 0.0
    %1790 = vmatpush1.msra.mxu0 0.0
    %1791 = vmatprep.subr.mxu0 0.0
    %1792 = vmatpush1.msra.mxu0 0.0
    %1793 = vmatprep.subr.mxu0 0.0
    %1794 = vmatpush1.msra.mxu0 0.0
    %1795 = vmatprep.subr.mxu0 0.0
    %1796 = vmatpush1.msra.mxu0 0.0
    %1797 = vmatprep.subr.mxu0 0.0
    %1798 = vmatpush1.msra.mxu0 0.0
    %1799 = vmatprep.subr.mxu0 0.0
    %1800 = vmatpush1.msra.mxu0 0.0
    %1801 = vmatprep.subr.mxu0 0.0
    %1802 = vmatpush1.msra.mxu0 0.0
    %1803 = vmatprep.subr.mxu0 0.0
    %1804 = vmatpush1.msra.mxu0 0.0
    %1805 = vmatprep.subr.mxu0 0.0
    %1806 = vmatpush1.msra.mxu0 0.0
    %1807 = vmatprep.subr.mxu0 0.0
    %1808 = vmatpush1.msra.mxu0 0.0
    %1809 = vmatprep.subr.mxu0 0.0
    %1810 = vmatpush1.msra.mxu0 0.0
    %1811 = vmatprep.subr.mxu0 0.0
    %1812 = vmatpush1.msra.mxu0 0.0
    %1813 = vmatprep.subr.mxu0 0.0
    %1814 = vmatpush1.msra.mxu0 0.0
    %1815 = vmatprep.subr.mxu0 0.0
    %1816 = vmatpush1.msra.mxu0 0.0
    %1817 = vmatprep.subr.mxu0 0.0
    %1818 = vmatpush1.msra.mxu0 0.0
    %1819 = vmatprep.subr.mxu0 0.0
    %1820 = vmatpush1.msra.mxu0 0.0
    %1821 = vmatprep.subr.mxu0 0.0
    %1822 = vmatpush1.msra.mxu0 0.0
    %1823 = vmatprep.subr.mxu0 0.0
    %1824 = vmatpush1.msra.mxu0 0.0
    %1825 = vmatprep.subr.mxu0 0.0
    %1826 = vmatpush1.msra.mxu0 0.0
    %1827 = vmatprep.mubr.f32.mxu0 0.0
    %1828 = vmatmul.mubr.f32.gmra.mrb[0].mxu0 %v1740
    %v1829 = vpop.f32.mrb[0].mxu0
    %v1830 = vadd.f32 %v1738, %v1829
    %v1831 = vpop.f32.mrb[0].mxu0
    %1832 = vmatprep.mubr.f32.mxu0 0.0
    %1833 = vmatmul.mubr.f32.gmra.mrb[0].mxu0 %v1743
    %v1834 = vpop.f32.mrb[0].mxu0
    %v1835 = vadd.f32 %v1738, %v1834
    %v1836 = vpop.f32.mrb[0].mxu0
    %1837 = vmatprep.mubr.f32.mxu0 0.0
    %1838 = vmatmul.mubr.f32.gmra.mrb[0].mxu0 %v1746
    %v1839 = vpop.f32.mrb[0].mxu0
    %v1840 = vadd.f32 %v1738, %v1839
    %v1841 = vpop.f32.mrb[0].mxu0
    %1842 = vmatprep.mubr.f32.mxu0 0.0
    %1843 = vmatmul.mubr.f32.gmra.mrb[0].mxu0 %v1749
    %v1844 = vpop.f32.mrb[0].mxu0
    %v1845 = vadd.f32 %v1738, %v1844
    %v1846 = vpop.f32.mrb[0].mxu0
    %1847 = vmatprep.mubr.f32.mxu0 0.0
    %1848 = vmatmul.mubr.f32.gmra.mrb[0].mxu0 %v1752
    %v1849 = vpop.f32.mrb[0].mxu0
    %v1850 = vadd.f32 %v1738, %v1849
    %v1851 = vpop.f32.mrb[0].mxu0
    %1852 = vmatprep.mubr.f32.mxu0 0.0
    %1853 = vmatmul.mubr.f32.gmra.mrb[0].mxu0 %v1755
    %v1854 = vpop.f32.mrb[0].mxu0
    %v1855 = vadd.f32 %v1738, %v1854
    %v1856 = vpop.f32.mrb[0].mxu0
    %1857 = vmatprep.mubr.f32.mxu0 0.0
    %1858 = vmatmul.mubr.f32.gmra.mrb[0].mxu0 %v1758
    %v1859 = vpop.f32.mrb[0].mxu0
    %v1860 = vadd.f32 %v1738, %v1859
    %v1861 = vpop.f32.mrb[0].mxu0
    %1862 = vmatprep.mubr.f32.mxu0 0.0
    %1863 = vmatmul.mubr.f32.gmra.mrb[0].mxu0 %v1761
    %v1864 = vpop.f32.mrb[0].mxu0
    %v1865 = vadd.f32 %v1738, %v1864
    %v1866 = vpop.f32.mrb[0].mxu0
    %1867 = vdwg.mxu0
    %v1868 = vadd.f32 %v184, %v1830
    %v1869 = vadd.f32 %v185, %v1835
    %v1870 = vadd.f32 %v186, %v1840
    %v1871 = vadd.f32 %v187, %v1845
    %v1872 = vadd.f32 %v188, %v1850
    %v1873 = vadd.f32 %v189, %v1855
    %v1874 = vadd.f32 %v190, %v1860
    %v1875 = vadd.f32 %v191, %v1865
    %v1876 = vld [vmem:[#allocation2 + $0x2f8] sm:$0x1]
    %v1877 = vld [vmem:[#allocation2 + $0x300] sm:$0x1]
    %v1878 = vsel %vm265, %v1868, 0.0
    %1879 = vadd.xlane.f32.xlu0 %v1878
    %v1880 = vpop.xlane.xlu0 %1879
    %v1881 = vsel %vm265, %v1869, 0.0
    %1882 = vadd.xlane.f32.xlu0 %v1881
    %v1883 = vpop.xlane.xlu0 %1882
    %v1884 = vsel %vm265, %v1870, 0.0
    %1885 = vadd.xlane.f32.xlu0 %v1884
    %v1886 = vpop.xlane.xlu0 %1885
    %v1887 = vsel %vm265, %v1871, 0.0
    %1888 = vadd.xlane.f32.xlu0 %v1887
    %v1889 = vpop.xlane.xlu0 %1888
    %v1890 = vsel %vm265, %v1872, 0.0
    %1891 = vadd.xlane.f32.xlu0 %v1890
    %v1892 = vpop.xlane.xlu0 %1891
    %v1893 = vsel %vm265, %v1873, 0.0
    %1894 = vadd.xlane.f32.xlu0 %v1893
    %v1895 = vpop.xlane.xlu0 %1894
    %v1896 = vsel %vm265, %v1874, 0.0
    %1897 = vadd.xlane.f32.xlu0 %v1896
    %v1898 = vpop.xlane.xlu0 %1897
    %v1899 = vsel %vm265, %v1875, 0.0
    %1900 = vadd.xlane.f32.xlu0 %v1899
    %v1901 = vpop.xlane.xlu0 %1900
    %v1902 = vrcp.pop 32.0
    %v1903 = vmul.f32 %v1880, %v1902
    %v1904 = vmul.f32 %v1883, %v1902
    %v1905 = vmul.f32 %v1886, %v1902
    %v1906 = vmul.f32 %v1889, %v1902
    %v1907 = vmul.f32 %v1892, %v1902
    %v1908 = vmul.f32 %v1895, %v1902
    %v1909 = vmul.f32 %v1898, %v1902
    %v1910 = vmul.f32 %v1901, %v1902
    %v1911 = vsub.f32 %v1868, %v1903
    %v1912 = vsub.f32 %v1869, %v1904
    %v1913 = vsub.f32 %v1870, %v1905
    %v1914 = vsub.f32 %v1871, %v1906
    %v1915 = vsub.f32 %v1872, %v1907
    %v1916 = vsub.f32 %v1873, %v1908
    %v1917 = vsub.f32 %v1874, %v1909
    %v1918 = vsub.f32 %v1875, %v1910
    %v1919 = vmul.f32 %v1911, %v1911
    %v1920 = vmul.f32 %v1912, %v1912
    %v1921 = vmul.f32 %v1913, %v1913
    %v1922 = vmul.f32 %v1914, %v1914
    %v1923 = vmul.f32 %v1915, %v1915
    %v1924 = vmul.f32 %v1916, %v1916
    %v1925 = vmul.f32 %v1917, %v1917
    %v1926 = vmul.f32 %v1918, %v1918
    %v1927 = vsel %vm265, %v1919, 0.0
    %1928 = vadd.xlane.f32.xlu0 %v1927
    %v1929 = vpop.xlane.xlu0 %1928
    %v1930 = vsel %vm265, %v1920, 0.0
    %1931 = vadd.xlane.f32.xlu0 %v1930
    %v1932 = vpop.xlane.xlu0 %1931
    %v1933 = vsel %vm265, %v1921, 0.0
    %1934 = vadd.xlane.f32.xlu0 %v1933
    %v1935 = vpop.xlane.xlu0 %1934
    %v1936 = vsel %vm265, %v1922, 0.0
    %1937 = vadd.xlane.f32.xlu0 %v1936
    %v1938 = vpop.xlane.xlu0 %1937
    %v1939 = vsel %vm265, %v1923, 0.0
    %1940 = vadd.xlane.f32.xlu0 %v1939
    %v1941 = vpop.xlane.xlu0 %1940
    %v1942 = vsel %vm265, %v1924, 0.0
    %1943 = vadd.xlane.f32.xlu0 %v1942
    %v1944 = vpop.xlane.xlu0 %1943
    %v1945 = vsel %vm265, %v1925, 0.0
    %1946 = vadd.xlane.f32.xlu0 %v1945
    %v1947 = vpop.xlane.xlu0 %1946
    %v1948 = vsel %vm265, %v1926, 0.0
    %1949 = vadd.xlane.f32.xlu0 %v1948
    %v1950 = vpop.xlane.xlu0 %1949
    %v1951 = vmul.f32 %v1929, %v1902
    %v1952 = vmul.f32 %v1932, %v1902
    %v1953 = vmul.f32 %v1935, %v1902
    %v1954 = vmul.f32 %v1938, %v1902
    %v1955 = vmul.f32 %v1941, %v1902
    %v1956 = vmul.f32 %v1944, %v1902
    %v1957 = vmul.f32 %v1947, %v1902
    %v1958 = vmul.f32 %v1950, %v1902
    %v1959 = vadd.f32 %v1951, 1e-05
    %v1960 = vadd.f32 %v1952, 1e-05
    %v1961 = vadd.f32 %v1953, 1e-05
    %v1962 = vadd.f32 %v1954, 1e-05
    %v1963 = vadd.f32 %v1955, 1e-05
    %v1964 = vadd.f32 %v1956, 1e-05
    %v1965 = vadd.f32 %v1957, 1e-05
    %v1966 = vadd.f32 %v1958, 1e-05
    %v1967 = vrsqrt.pop %v1959
    %v1968 = vrsqrt.pop %v1960
    %v1969 = vrsqrt.pop %v1961
    %v1970 = vrsqrt.pop %v1962
    %v1971 = vrsqrt.pop %v1963
    %v1972 = vrsqrt.pop %v1964
    %v1973 = vrsqrt.pop %v1965
    %v1974 = vrsqrt.pop %v1966
    %v1975 = vmul.f32 %v1911, %v1967
    %v1976 = vmul.f32 %v1912, %v1968
    %v1977 = vmul.f32 %v1913, %v1969
    %v1978 = vmul.f32 %v1914, %v1970
    %v1979 = vmul.f32 %v1915, %v1971
    %v1980 = vmul.f32 %v1916, %v1972
    %v1981 = vmul.f32 %v1917, %v1973
    %v1982 = vmul.f32 %v1918, %v1974
    %v1983 = vlaneseq
    %v1984 = vshrl.u32 %v1983, 7
    %v1985 = vsub.s32 0, %v1984
    %v1986 = vrot.slane %v1876, %v1985
    %v1987 = vmul.f32 %v1975, %v1986
    %v1988 = vmul.f32 %v1976, %v1986
    %v1989 = vmul.f32 %v1977, %v1986
    %v1990 = vmul.f32 %v1978, %v1986
    %v1991 = vmul.f32 %v1979, %v1986
    %v1992 = vmul.f32 %v1980, %v1986
    %v1993 = vmul.f32 %v1981, %v1986
    %v1994 = vmul.f32 %v1982, %v1986
    %v1995 = vlaneseq
    %v1996 = vshrl.u32 %v1995, 7
    %v1997 = vsub.s32 0, %v1996
    %v1998 = vrot.slane %v1877, %v1997
    %v1999 = vadd.f32 %v1987, %v1998
    %v2000 = vadd.f32 %v1988, %v1998
    %v2001 = vadd.f32 %v1989, %v1998
    %v2002 = vadd.f32 %v1990, %v1998
    %v2003 = vadd.f32 %v1991, %v1998
    %v2004 = vadd.f32 %v1992, %v1998
    %v2005 = vadd.f32 %v1993, %v1998
    %v2006 = vadd.f32 %v1994, %v1998
    %v2007 = vld [vmem:[#allocation2 + $0x308] sm:$0xff]
    %v2008 = vld [vmem:[#allocation2 + $0x310] sm:$0xff]
    %v2009 = vld [vmem:[#allocation2 + $0x318] sm:$0xff]
    %v2010 = vld [vmem:[#allocation2 + $0x320] sm:$0xff]
    %v2011 = vld [vmem:[#allocation2 + $0x328] sm:$0x1]
    %v2012 = vlaneseq
    %v2013 = vshrl.u32 %v2012, 7
    %v2014 = vsub.s32 0, %v2013
    %v2015 = vrot.slane %v2011, %v2014
    %v2017 = vsel %vm265, %v1999, 0
    %v2020 = vsel %vm265, %v2000, 0
    %v2023 = vsel %vm265, %v2001, 0
    %v2026 = vsel %vm265, %v2002, 0
    %v2029 = vsel %vm265, %v2003, 0
    %v2032 = vsel %vm265, %v2004, 0
    %v2035 = vsel %vm265, %v2005, 0
    %v2038 = vsel %vm265, %v2006, 0
    %2040 = vmatprep.subr.mxu0 0.0
    %2041 = vmatpush1.msra.mxu0 %v2007
    %2042 = vmatprep.subr.mxu0 0.0
    %2043 = vmatpush1.msra.mxu0 %v2008
    %2044 = vmatprep.subr.mxu0 0.0
    %2045 = vmatpush1.msra.mxu0 %v2009
    %2046 = vmatprep.subr.mxu0 0.0
    %2047 = vmatpush1.msra.mxu0 %v2010
    %2048 = vmatprep.subr.mxu0 0.0
    %2049 = vmatpush1.msra.mxu0 0.0
    %2050 = vmatprep.subr.mxu0 0.0
    %2051 = vmatpush1.msra.mxu0 0.0
    %2052 = vmatprep.subr.mxu0 0.0
    %2053 = vmatpush1.msra.mxu0 0.0
    %2054 = vmatprep.subr.mxu0 0.0
    %2055 = vmatpush1.msra.mxu0 0.0
    %2056 = vmatprep.subr.mxu0 0.0
    %2057 = vmatpush1.msra.mxu0 0.0
    %2058 = vmatprep.subr.mxu0 0.0
    %2059 = vmatpush1.msra.mxu0 0.0
    %2060 = vmatprep.subr.mxu0 0.0
    %2061 = vmatpush1.msra.mxu0 0.0
    %2062 = vmatprep.subr.mxu0 0.0
    %2063 = vmatpush1.msra.mxu0 0.0
    %2064 = vmatprep.subr.mxu0 0.0
    %2065 = vmatpush1.msra.mxu0 0.0
    %2066 = vmatprep.subr.mxu0 0.0
    %2067 = vmatpush1.msra.mxu0 0.0
    %2068 = vmatprep.subr.mxu0 0.0
    %2069 = vmatpush1.msra.mxu0 0.0
    %2070 = vmatprep.subr.mxu0 0.0
    %2071 = vmatpush1.msra.mxu0 0.0
    %2072 = vmatprep.subr.mxu0 0.0
    %2073 = vmatpush1.msra.mxu0 0.0
    %2074 = vmatprep.subr.mxu0 0.0
    %2075 = vmatpush1.msra.mxu0 0.0
    %2076 = vmatprep.subr.mxu0 0.0
    %2077 = vmatpush1.msra.mxu0 0.0
    %2078 = vmatprep.subr.mxu0 0.0
    %2079 = vmatpush1.msra.mxu0 0.0
    %2080 = vmatprep.subr.mxu0 0.0
    %2081 = vmatpush1.msra.mxu0 0.0
    %2082 = vmatprep.subr.mxu0 0.0
    %2083 = vmatpush1.msra.mxu0 0.0
    %2084 = vmatprep.subr.mxu0 0.0
    %2085 = vmatpush1.msra.mxu0 0.0
    %2086 = vmatprep.subr.mxu0 0.0
    %2087 = vmatpush1.msra.mxu0 0.0
    %2088 = vmatprep.subr.mxu0 0.0
    %2089 = vmatpush1.msra.mxu0 0.0
    %2090 = vmatprep.subr.mxu0 0.0
    %2091 = vmatpush1.msra.mxu0 0.0
    %2092 = vmatprep.subr.mxu0 0.0
    %2093 = vmatpush1.msra.mxu0 0.0
    %2094 = vmatprep.subr.mxu0 0.0
    %2095 = vmatpush1.msra.mxu0 0.0
    %2096 = vmatprep.subr.mxu0 0.0
    %2097 = vmatpush1.msra.mxu0 0.0
    %2098 = vmatprep.subr.mxu0 0.0
    %2099 = vmatpush1.msra.mxu0 0.0
    %2100 = vmatprep.subr.mxu0 0.0
    %2101 = vmatpush1.msra.mxu0 0.0
    %2102 = vmatprep.subr.mxu0 0.0
    %2103 = vmatpush1.msra.mxu0 0.0
    %2104 = vmatprep.mubr.f32.mxu0 0.0
    %2105 = vmatmul.mubr.f32.gmra.mrb[0].mxu0 %v2017
    %v2106 = vpop.f32.mrb[0].mxu0
    %v2107 = vadd.f32 %v2015, %v2106
    %v2108 = vpop.f32.mrb[0].mxu0
    %2109 = vmatprep.mubr.f32.mxu0 0.0
    %2110 = vmatmul.mubr.f32.gmra.mrb[0].mxu0 %v2020
    %v2111 = vpop.f32.mrb[0].mxu0
    %v2112 = vadd.f32 %v2015, %v2111
    %v2113 = vpop.f32.mrb[0].mxu0
    %2114 = vmatprep.mubr.f32.mxu0 0.0
    %2115 = vmatmul.mubr.f32.gmra.mrb[0].mxu0 %v2023
    %v2116 = vpop.f32.mrb[0].mxu0
    %v2117 = vadd.f32 %v2015, %v2116
    %v2118 = vpop.f32.mrb[0].mxu0
    %2119 = vmatprep.mubr.f32.mxu0 0.0
    %2120 = vmatmul.mubr.f32.gmra.mrb[0].mxu0 %v2026
    %v2121 = vpop.f32.mrb[0].mxu0
    %v2122 = vadd.f32 %v2015, %v2121
    %v2123 = vpop.f32.mrb[0].mxu0
    %2124 = vmatprep.mubr.f32.mxu0 0.0
    %2125 = vmatmul.mubr.f32.gmra.mrb[0].mxu0 %v2029
    %v2126 = vpop.f32.mrb[0].mxu0
    %v2127 = vadd.f32 %v2015, %v2126
    %v2128 = vpop.f32.mrb[0].mxu0
    %2129 = vmatprep.mubr.f32.mxu0 0.0
    %2130 = vmatmul.mubr.f32.gmra.mrb[0].mxu0 %v2032
    %v2131 = vpop.f32.mrb[0].mxu0
    %v2132 = vadd.f32 %v2015, %v2131
    %v2133 = vpop.f32.mrb[0].mxu0
    %2134 = vmatprep.mubr.f32.mxu0 0.0
    %2135 = vmatmul.mubr.f32.gmra.mrb[0].mxu0 %v2035
    %v2136 = vpop.f32.mrb[0].mxu0
    %v2137 = vadd.f32 %v2015, %v2136
    %v2138 = vpop.f32.mrb[0].mxu0
    %2139 = vmatprep.mubr.f32.mxu0 0.0
    %2140 = vmatmul.mubr.f32.gmra.mrb[0].mxu0 %v2038
    %v2141 = vpop.f32.mrb[0].mxu0
    %v2142 = vadd.f32 %v2015, %v2141
    %v2143 = vpop.f32.mrb[0].mxu0
    %2144 = vdwg.mxu0
    %v2145 = vmax.f32 %v2107, 0.0
    %v2146 = vmax.f32 %v2112, 0.0
    %v2147 = vmax.f32 %v2117, 0.0
    %v2148 = vmax.f32 %v2122, 0.0
    %v2149 = vmax.f32 %v2127, 0.0
    %v2150 = vmax.f32 %v2132, 0.0
    %v2151 = vmax.f32 %v2137, 0.0
    %v2152 = vmax.f32 %v2142, 0.0
    %v2153 = vld [vmem:[#allocation2 + $0x330] sm:$0xff]
    %v2154 = vld [vmem:[#allocation2 + $0x338] sm:$0xff]
    %v2155 = vld [vmem:[#allocation2 + $0x340] sm:$0xff]
    %v2156 = vld [vmem:[#allocation2 + $0x348] sm:$0xff]
    %v2157 = vld [vmem:[#allocation2 + $0x350] sm:$0xff]
    %v2158 = vld [vmem:[#allocation2 + $0x358] sm:$0xff]
    %v2159 = vld [vmem:[#allocation2 + $0x360] sm:$0xff]
    %v2160 = vld [vmem:[#allocation2 + $0x368] sm:$0xff]
    %v2161 = vld [vmem:[#allocation2 + $0x370] sm:$0x1]
    %v2162 = vlaneseq
    %v2163 = vshrl.u32 %v2162, 7
    %v2164 = vsub.s32 0, %v2163
    %v2165 = vrot.slane %v2161, %v2164
    %v2167 = vsel %vm1000, %v2145, 0
    %v2170 = vsel %vm1000, %v2146, 0
    %v2173 = vsel %vm1000, %v2147, 0
    %v2176 = vsel %vm1000, %v2148, 0
    %v2179 = vsel %vm1000, %v2149, 0
    %v2182 = vsel %vm1000, %v2150, 0
    %v2185 = vsel %vm1000, %v2151, 0
    %v2188 = vsel %vm1000, %v2152, 0
    %2190 = vmatprep.subr.mxu0 0.0
    %2191 = vmatpush1.msra.mxu0 %v2153
    %2192 = vmatprep.subr.mxu0 0.0
    %2193 = vmatpush1.msra.mxu0 %v2154
    %2194 = vmatprep.subr.mxu0 0.0
    %2195 = vmatpush1.msra.mxu0 %v2155
    %2196 = vmatprep.subr.mxu0 0.0
    %2197 = vmatpush1.msra.mxu0 %v2156
    %2198 = vmatprep.subr.mxu0 0.0
    %2199 = vmatpush1.msra.mxu0 %v2157
    %2200 = vmatprep.subr.mxu0 0.0
    %2201 = vmatpush1.msra.mxu0 %v2158
    %2202 = vmatprep.subr.mxu0 0.0
    %2203 = vmatpush1.msra.mxu0 %v2159
    %2204 = vmatprep.subr.mxu0 0.0
    %2205 = vmatpush1.msra.mxu0 %v2160
    %2206 = vmatprep.subr.mxu0 0.0
    %2207 = vmatpush1.msra.mxu0 0.0
    %2208 = vmatprep.subr.mxu0 0.0
    %2209 = vmatpush1.msra.mxu0 0.0
    %2210 = vmatprep.subr.mxu0 0.0
    %2211 = vmatpush1.msra.mxu0 0.0
    %2212 = vmatprep.subr.mxu0 0.0
    %2213 = vmatpush1.msra.mxu0 0.0
    %2214 = vmatprep.subr.mxu0 0.0
    %2215 = vmatpush1.msra.mxu0 0.0
    %2216 = vmatprep.subr.mxu0 0.0
    %2217 = vmatpush1.msra.mxu0 0.0
    %2218 = vmatprep.subr.mxu0 0.0
    %2219 = vmatpush1.msra.mxu0 0.0
    %2220 = vmatprep.subr.mxu0 0.0
    %2221 = vmatpush1.msra.mxu0 0.0
    %2222 = vmatprep.subr.mxu0 0.0
    %2223 = vmatpush1.msra.mxu0 0.0
    %2224 = vmatprep.subr.mxu0 0.0
    %2225 = vmatpush1.msra.mxu0 0.0
    %2226 = vmatprep.subr.mxu0 0.0
    %2227 = vmatpush1.msra.mxu0 0.0
    %2228 = vmatprep.subr.mxu0 0.0
    %2229 = vmatpush1.msra.mxu0 0.0
    %2230 = vmatprep.subr.mxu0 0.0
    %2231 = vmatpush1.msra.mxu0 0.0
    %2232 = vmatprep.subr.mxu0 0.0
    %2233 = vmatpush1.msra.mxu0 0.0
    %2234 = vmatprep.subr.mxu0 0.0
    %2235 = vmatpush1.msra.mxu0 0.0
    %2236 = vmatprep.subr.mxu0 0.0
    %2237 = vmatpush1.msra.mxu0 0.0
    %2238 = vmatprep.subr.mxu0 0.0
    %2239 = vmatpush1.msra.mxu0 0.0
    %2240 = vmatprep.subr.mxu0 0.0
    %2241 = vmatpush1.msra.mxu0 0.0
    %2242 = vmatprep.subr.mxu0 0.0
    %2243 = vmatpush1.msra.mxu0 0.0
    %2244 = vmatprep.subr.mxu0 0.0
    %2245 = vmatpush1.msra.mxu0 0.0
    %2246 = vmatprep.subr.mxu0 0.0
    %2247 = vmatpush1.msra.mxu0 0.0
    %2248 = vmatprep.subr.mxu0 0.0
    %2249 = vmatpush1.msra.mxu0 0.0
    %2250 = vmatprep.subr.mxu0 0.0
    %2251 = vmatpush1.msra.mxu0 0.0
    %2252 = vmatprep.subr.mxu0 0.0
    %2253 = vmatpush1.msra.mxu0 0.0
    %2254 = vmatprep.mubr.f32.mxu0 0.0
    %2255 = vmatmul.mubr.f32.gmra.mrb[0].mxu0 %v2167
    %v2256 = vpop.f32.mrb[0].mxu0
    %v2257 = vadd.f32 %v2165, %v2256
    %v2258 = vpop.f32.mrb[0].mxu0
    %2259 = vmatprep.mubr.f32.mxu0 0.0
    %2260 = vmatmul.mubr.f32.gmra.mrb[0].mxu0 %v2170
    %v2261 = vpop.f32.mrb[0].mxu0
    %v2262 = vadd.f32 %v2165, %v2261
    %v2263 = vpop.f32.mrb[0].mxu0
    %2264 = vmatprep.mubr.f32.mxu0 0.0
    %2265 = vmatmul.mubr.f32.gmra.mrb[0].mxu0 %v2173
    %v2266 = vpop.f32.mrb[0].mxu0
    %v2267 = vadd.f32 %v2165, %v2266
    %v2268 = vpop.f32.mrb[0].mxu0
    %2269 = vmatprep.mubr.f32.mxu0 0.0
    %2270 = vmatmul.mubr.f32.gmra.mrb[0].mxu0 %v2176
    %v2271 = vpop.f32.mrb[0].mxu0
    %v2272 = vadd.f32 %v2165, %v2271
    %v2273 = vpop.f32.mrb[0].mxu0
    %2274 = vmatprep.mubr.f32.mxu0 0.0
    %2275 = vmatmul.mubr.f32.gmra.mrb[0].mxu0 %v2179
    %v2276 = vpop.f32.mrb[0].mxu0
    %v2277 = vadd.f32 %v2165, %v2276
    %v2278 = vpop.f32.mrb[0].mxu0
    %2279 = vmatprep.mubr.f32.mxu0 0.0
    %2280 = vmatmul.mubr.f32.gmra.mrb[0].mxu0 %v2182
    %v2281 = vpop.f32.mrb[0].mxu0
    %v2282 = vadd.f32 %v2165, %v2281
    %v2283 = vpop.f32.mrb[0].mxu0
    %2284 = vmatprep.mubr.f32.mxu0 0.0
    %2285 = vmatmul.mubr.f32.gmra.mrb[0].mxu0 %v2185
    %v2286 = vpop.f32.mrb[0].mxu0
    %v2287 = vadd.f32 %v2165, %v2286
    %v2288 = vpop.f32.mrb[0].mxu0
    %2289 = vmatprep.mubr.f32.mxu0 0.0
    %2290 = vmatmul.mubr.f32.gmra.mrb[0].mxu0 %v2188
    %v2291 = vpop.f32.mrb[0].mxu0
    %v2292 = vadd.f32 %v2165, %v2291
    %v2293 = vpop.f32.mrb[0].mxu0
    %2294 = vdwg.mxu0
    %v2295 = vadd.f32 %v1999, %v2257
    %v2296 = vadd.f32 %v2000, %v2262
    %v2297 = vadd.f32 %v2001, %v2267
    %v2298 = vadd.f32 %v2002, %v2272
    %v2299 = vadd.f32 %v2003, %v2277
    %v2300 = vadd.f32 %v2004, %v2282
    %v2301 = vadd.f32 %v2005, %v2287
    %v2302 = vadd.f32 %v2006, %v2292
    %v2303 = vld [vmem:[#allocation2 + $0x378] sm:$0x1]
    %v2304 = vld [vmem:[#allocation2 + $0x380] sm:$0x1]
    %v2305 = vsel %vm265, %v2295, 0.0
    %2306 = vadd.xlane.f32.xlu0 %v2305
    %v2307 = vpop.xlane.xlu0 %2306
    %v2308 = vsel %vm265, %v2296, 0.0
    %2309 = vadd.xlane.f32.xlu0 %v2308
    %v2310 = vpop.xlane.xlu0 %2309
    %v2311 = vsel %vm265, %v2297, 0.0
    %2312 = vadd.xlane.f32.xlu0 %v2311
    %v2313 = vpop.xlane.xlu0 %2312
    %v2314 = vsel %vm265, %v2298, 0.0
    %2315 = vadd.xlane.f32.xlu0 %v2314
    %v2316 = vpop.xlane.xlu0 %2315
    %v2317 = vsel %vm265, %v2299, 0.0
    %2318 = vadd.xlane.f32.xlu0 %v2317
    %v2319 = vpop.xlane.xlu0 %2318
    %v2320 = vsel %vm265, %v2300, 0.0
    %2321 = vadd.xlane.f32.xlu0 %v2320
    %v2322 = vpop.xlane.xlu0 %2321
    %v2323 = vsel %vm265, %v2301, 0.0
    %2324 = vadd.xlane.f32.xlu0 %v2323
    %v2325 = vpop.xlane.xlu0 %2324
    %v2326 = vsel %vm265, %v2302, 0.0
    %2327 = vadd.xlane.f32.xlu0 %v2326
    %v2328 = vpop.xlane.xlu0 %2327
    %v2329 = vmul.f32 %v2307, %v1902
    %v2330 = vmul.f32 %v2310, %v1902
    %v2331 = vmul.f32 %v2313, %v1902
    %v2332 = vmul.f32 %v2316, %v1902
    %v2333 = vmul.f32 %v2319, %v1902
    %v2334 = vmul.f32 %v2322, %v1902
    %v2335 = vmul.f32 %v2325, %v1902
    %v2336 = vmul.f32 %v2328, %v1902
    %v2337 = vsub.f32 %v2295, %v2329
    %v2338 = vsub.f32 %v2296, %v2330
    %v2339 = vsub.f32 %v2297, %v2331
    %v2340 = vsub.f32 %v2298, %v2332
    %v2341 = vsub.f32 %v2299, %v2333
    %v2342 = vsub.f32 %v2300, %v2334
    %v2343 = vsub.f32 %v2301, %v2335
    %v2344 = vsub.f32 %v2302, %v2336
    %v2345 = vmul.f32 %v2337, %v2337
    %v2346 = vmul.f32 %v2338, %v2338
    %v2347 = vmul.f32 %v2339, %v2339
    %v2348 = vmul.f32 %v2340, %v2340
    %v2349 = vmul.f32 %v2341, %v2341
    %v2350 = vmul.f32 %v2342, %v2342
    %v2351 = vmul.f32 %v2343, %v2343
    %v2352 = vmul.f32 %v2344, %v2344
    %v2353 = vsel %vm265, %v2345, 0.0
    %2354 = vadd.xlane.f32.xlu0 %v2353
    %v2355 = vpop.xlane.xlu0 %2354
    %v2356 = vsel %vm265, %v2346, 0.0
    %2357 = vadd.xlane.f32.xlu0 %v2356
    %v2358 = vpop.xlane.xlu0 %2357
    %v2359 = vsel %vm265, %v2347, 0.0
    %2360 = vadd.xlane.f32.xlu0 %v2359
    %v2361 = vpop.xlane.xlu0 %2360
    %v2362 = vsel %vm265, %v2348, 0.0
    %2363 = vadd.xlane.f32.xlu0 %v2362
    %v2364 = vpop.xlane.xlu0 %2363
    %v2365 = vsel %vm265, %v2349, 0.0
    %2366 = vadd.xlane.f32.xlu0 %v2365
    %v2367 = vpop.xlane.xlu0 %2366
    %v2368 = vsel %vm265, %v2350, 0.0
    %2369 = vadd.xlane.f32.xlu0 %v2368
    %v2370 = vpop.xlane.xlu0 %2369
    %v2371 = vsel %vm265, %v2351, 0.0
    %2372 = vadd.xlane.f32.xlu0 %v2371
    %v2373 = vpop.xlane.xlu0 %2372
    %v2374 = vsel %vm265, %v2352, 0.0
    %2375 = vadd.xlane.f32.xlu0 %v2374
    %v2376 = vpop.xlane.xlu0 %2375
    %v2377 = vmul.f32 %v2355, %v1902
    %v2378 = vmul.f32 %v2358, %v1902
    %v2379 = vmul.f32 %v2361, %v1902
    %v2380 = vmul.f32 %v2364, %v1902
    %v2381 = vmul.f32 %v2367, %v1902
    %v2382 = vmul.f32 %v2370, %v1902
    %v2383 = vmul.f32 %v2373, %v1902
    %v2384 = vmul.f32 %v2376, %v1902
    %v2385 = vadd.f32 %v2377, 1e-05
    %v2386 = vadd.f32 %v2378, 1e-05
    %v2387 = vadd.f32 %v2379, 1e-05
    %v2388 = vadd.f32 %v2380, 1e-05
    %v2389 = vadd.f32 %v2381, 1e-05
    %v2390 = vadd.f32 %v2382, 1e-05
    %v2391 = vadd.f32 %v2383, 1e-05
    %v2392 = vadd.f32 %v2384, 1e-05
    %v2393 = vrsqrt.pop %v2385
    %v2394 = vrsqrt.pop %v2386
    %v2395 = vrsqrt.pop %v2387
    %v2396 = vrsqrt.pop %v2388
    %v2397 = vrsqrt.pop %v2389
    %v2398 = vrsqrt.pop %v2390
    %v2399 = vrsqrt.pop %v2391
    %v2400 = vrsqrt.pop %v2392
    %v2401 = vmul.f32 %v2337, %v2393
    %v2402 = vmul.f32 %v2338, %v2394
    %v2403 = vmul.f32 %v2339, %v2395
    %v2404 = vmul.f32 %v2340, %v2396
    %v2405 = vmul.f32 %v2341, %v2397
    %v2406 = vmul.f32 %v2342, %v2398
    %v2407 = vmul.f32 %v2343, %v2399
    %v2408 = vmul.f32 %v2344, %v2400
    %v2409 = vlaneseq
    %v2410 = vshrl.u32 %v2409, 7
    %v2411 = vsub.s32 0, %v2410
    %v2412 = vrot.slane %v2303, %v2411
    %v2413 = vmul.f32 %v2401, %v2412
    %v2414 = vmul.f32 %v2402, %v2412
    %v2415 = vmul.f32 %v2403, %v2412
    %v2416 = vmul.f32 %v2404, %v2412
    %v2417 = vmul.f32 %v2405, %v2412
    %v2418 = vmul.f32 %v2406, %v2412
    %v2419 = vmul.f32 %v2407, %v2412
    %v2420 = vmul.f32 %v2408, %v2412
    %v2421 = vlaneseq
    %v2422 = vshrl.u32 %v2421, 7
    %v2423 = vsub.s32 0, %v2422
    %v2424 = vrot.slane %v2304, %v2423
    %v2425 = vadd.f32 %v2413, %v2424
    %v2426 = vadd.f32 %v2414, %v2424
    %v2427 = vadd.f32 %v2415, %v2424
    %v2428 = vadd.f32 %v2416, %v2424
    %v2429 = vadd.f32 %v2417, %v2424
    %v2430 = vadd.f32 %v2418, %v2424
    %v2431 = vadd.f32 %v2419, %v2424
    %v2432 = vadd.f32 %v2420, %v2424
    %v2433 = vld [vmem:[#allocation2 + $0x388] sm:$0xff]
    %v2434 = vld [vmem:[#allocation2 + $0x390] sm:$0xff]
    %v2435 = vld [vmem:[#allocation2 + $0x398] sm:$0xff]
    %v2436 = vld [vmem:[#allocation2 + $0x3a0] sm:$0xff]
    %v2437 = vld [vmem:[#allocation2 + $0x3a8] sm:$0x1]
    %v2438 = vlaneseq
    %v2439 = vshrl.u32 %v2438, 7
    %v2440 = vsub.s32 0, %v2439
    %v2441 = vrot.slane %v2437, %v2440
    %v2443 = vsel %vm265, %v2425, 0
    %v2446 = vsel %vm265, %v2426, 0
    %v2449 = vsel %vm265, %v2427, 0
    %v2452 = vsel %vm265, %v2428, 0
    %v2455 = vsel %vm265, %v2429, 0
    %v2458 = vsel %vm265, %v2430, 0
    %v2461 = vsel %vm265, %v2431, 0
    %v2464 = vsel %vm265, %v2432, 0
    %2466 = vmatprep.subr.mxu0 0.0
    %2467 = vmatpush1.msra.mxu0 %v2433
    %2468 = vmatprep.subr.mxu0 0.0
    %2469 = vmatpush1.msra.mxu0 %v2434
    %2470 = vmatprep.subr.mxu0 0.0
    %2471 = vmatpush1.msra.mxu0 %v2435
    %2472 = vmatprep.subr.mxu0 0.0
    %2473 = vmatpush1.msra.mxu0 %v2436
    %2474 = vmatprep.subr.mxu0 0.0
    %2475 = vmatpush1.msra.mxu0 0.0
    %2476 = vmatprep.subr.mxu0 0.0
    %2477 = vmatpush1.msra.mxu0 0.0
    %2478 = vmatprep.subr.mxu0 0.0
    %2479 = vmatpush1.msra.mxu0 0.0
    %2480 = vmatprep.subr.mxu0 0.0
    %2481 = vmatpush1.msra.mxu0 0.0
    %2482 = vmatprep.subr.mxu0 0.0
    %2483 = vmatpush1.msra.mxu0 0.0
    %2484 = vmatprep.subr.mxu0 0.0
    %2485 = vmatpush1.msra.mxu0 0.0
    %2486 = vmatprep.subr.mxu0 0.0
    %2487 = vmatpush1.msra.mxu0 0.0
    %2488 = vmatprep.subr.mxu0 0.0
    %2489 = vmatpush1.msra.mxu0 0.0
    %2490 = vmatprep.subr.mxu0 0.0
    %2491 = vmatpush1.msra.mxu0 0.0
    %2492 = vmatprep.subr.mxu0 0.0
    %2493 = vmatpush1.msra.mxu0 0.0
    %2494 = vmatprep.subr.mxu0 0.0
    %2495 = vmatpush1.msra.mxu0 0.0
    %2496 = vmatprep.subr.mxu0 0.0
    %2497 = vmatpush1.msra.mxu0 0.0
    %2498 = vmatprep.subr.mxu0 0.0
    %2499 = vmatpush1.msra.mxu0 0.0
    %2500 = vmatprep.subr.mxu0 0.0
    %2501 = vmatpush1.msra.mxu0 0.0
    %2502 = vmatprep.subr.mxu0 0.0
    %2503 = vmatpush1.msra.mxu0 0.0
    %2504 = vmatprep.subr.mxu0 0.0
    %2505 = vmatpush1.msra.mxu0 0.0
    %2506 = vmatprep.subr.mxu0 0.0
    %2507 = vmatpush1.msra.mxu0 0.0
    %2508 = vmatprep.subr.mxu0 0.0
    %2509 = vmatpush1.msra.mxu0 0.0
    %2510 = vmatprep.subr.mxu0 0.0
    %2511 = vmatpush1.msra.mxu0 0.0
    %2512 = vmatprep.subr.mxu0 0.0
    %2513 = vmatpush1.msra.mxu0 0.0
    %2514 = vmatprep.subr.mxu0 0.0
    %2515 = vmatpush1.msra.mxu0 0.0
    %2516 = vmatprep.subr.mxu0 0.0
    %2517 = vmatpush1.msra.mxu0 0.0
    %2518 = vmatprep.subr.mxu0 0.0
    %2519 = vmatpush1.msra.mxu0 0.0
    %2520 = vmatprep.subr.mxu0 0.0
    %2521 = vmatpush1.msra.mxu0 0.0
    %2522 = vmatprep.subr.mxu0 0.0
    %2523 = vmatpush1.msra.mxu0 0.0
    %2524 = vmatprep.subr.mxu0 0.0
    %2525 = vmatpush1.msra.mxu0 0.0
    %2526 = vmatprep.subr.mxu0 0.0
    %2527 = vmatpush1.msra.mxu0 0.0
    %2528 = vmatprep.subr.mxu0 0.0
    %2529 = vmatpush1.msra.mxu0 0.0
    %2530 = vmatprep.mubr.f32.mxu0 0.0
    %2531 = vmatmul.mubr.f32.gmra.mrb[0].mxu0 %v2443
    %v2532 = vpop.f32.mrb[0].mxu0
    %v2533 = vadd.f32 %v2441, %v2532
    %v2534 = vpop.f32.mrb[0].mxu0
    %2535 = vmatprep.mubr.f32.mxu0 0.0
    %2536 = vmatmul.mubr.f32.gmra.mrb[0].mxu0 %v2446
    %v2537 = vpop.f32.mrb[0].mxu0
    %v2538 = vadd.f32 %v2441, %v2537
    %v2539 = vpop.f32.mrb[0].mxu0
    %2540 = vmatprep.mubr.f32.mxu0 0.0
    %2541 = vmatmul.mubr.f32.gmra.mrb[0].mxu0 %v2449
    %v2542 = vpop.f32.mrb[0].mxu0
    %v2543 = vadd.f32 %v2441, %v2542
    %v2544 = vpop.f32.mrb[0].mxu0
    %2545 = vmatprep.mubr.f32.mxu0 0.0
    %2546 = vmatmul.mubr.f32.gmra.mrb[0].mxu0 %v2452
    %v2547 = vpop.f32.mrb[0].mxu0
    %v2548 = vadd.f32 %v2441, %v2547
    %v2549 = vpop.f32.mrb[0].mxu0
    %2550 = vmatprep.mubr.f32.mxu0 0.0
    %2551 = vmatmul.mubr.f32.gmra.mrb[0].mxu0 %v2455
    %v2552 = vpop.f32.mrb[0].mxu0
    %v2553 = vadd.f32 %v2441, %v2552
    %v2554 = vpop.f32.mrb[0].mxu0
    %2555 = vmatprep.mubr.f32.mxu0 0.0
    %2556 = vmatmul.mubr.f32.gmra.mrb[0].mxu0 %v2458
    %v2557 = vpop.f32.mrb[0].mxu0
    %v2558 = vadd.f32 %v2441, %v2557
    %v2559 = vpop.f32.mrb[0].mxu0
    %2560 = vmatprep.mubr.f32.mxu0 0.0
    %2561 = vmatmul.mubr.f32.gmra.mrb[0].mxu0 %v2461
    %v2562 = vpop.f32.mrb[0].mxu0
    %v2563 = vadd.f32 %v2441, %v2562
    %v2564 = vpop.f32.mrb[0].mxu0
    %2565 = vmatprep.mubr.f32.mxu0 0.0
    %2566 = vmatmul.mubr.f32.gmra.mrb[0].mxu0 %v2464
    %v2567 = vpop.f32.mrb[0].mxu0
    %v2568 = vadd.f32 %v2441, %v2567
    %v2569 = vpop.f32.mrb[0].mxu0
    %2570 = vdwg.mxu0
    %v2571 = vld [vmem:[#allocation2 + $0x3b0] sm:$0xff]
    %v2572 = vld [vmem:[#allocation2 + $0x3b8] sm:$0xff]
    %v2573 = vld [vmem:[#allocation2 + $0x3c0] sm:$0xff]
    %v2574 = vld [vmem:[#allocation2 + $0x3c8] sm:$0xff]
    %v2575 = vld [vmem:[#allocation2 + $0x3d0] sm:$0x1]
    %v2576 = vlaneseq
    %v2577 = vshrl.u32 %v2576, 7
    %v2578 = vsub.s32 0, %v2577
    %v2579 = vrot.slane %v2575, %v2578
    %2580 = vmatprep.subr.mxu0 0.0
    %2581 = vmatpush1.msra.mxu0 %v2571
    %2582 = vmatprep.subr.mxu0 0.0
    %2583 = vmatpush1.msra.mxu0 %v2572
    %2584 = vmatprep.subr.mxu0 0.0
    %2585 = vmatpush1.msra.mxu0 %v2573
    %2586 = vmatprep.subr.mxu0 0.0
    %2587 = vmatpush1.msra.mxu0 %v2574
    %2588 = vmatprep.subr.mxu0 0.0
    %2589 = vmatpush1.msra.mxu0 0.0
    %2590 = vmatprep.subr.mxu0 0.0
    %2591 = vmatpush1.msra.mxu0 0.0
    %2592 = vmatprep.subr.mxu0 0.0
    %2593 = vmatpush1.msra.mxu0 0.0
    %2594 = vmatprep.subr.mxu0 0.0
    %2595 = vmatpush1.msra.mxu0 0.0
    %2596 = vmatprep.subr.mxu0 0.0
    %2597 = vmatpush1.msra.mxu0 0.0
    %2598 = vmatprep.subr.mxu0 0.0
    %2599 = vmatpush1.msra.mxu0 0.0
    %2600 = vmatprep.subr.mxu0 0.0
    %2601 = vmatpush1.msra.mxu0 0.0
    %2602 = vmatprep.subr.mxu0 0.0
    %2603 = vmatpush1.msra.mxu0 0.0
    %2604 = vmatprep.subr.mxu0 0.0
    %2605 = vmatpush1.msra.mxu0 0.0
    %2606 = vmatprep.subr.mxu0 0.0
    %2607 = vmatpush1.msra.mxu0 0.0
    %2608 = vmatprep.subr.mxu0 0.0
    %2609 = vmatpush1.msra.mxu0 0.0
    %2610 = vmatprep.subr.mxu0 0.0
    %2611 = vmatpush1.msra.mxu0 0.0
    %2612 = vmatprep.subr.mxu0 0.0
    %2613 = vmatpush1.msra.mxu0 0.0
    %2614 = vmatprep.subr.mxu0 0.0
    %2615 = vmatpush1.msra.mxu0 0.0
    %2616 = vmatprep.subr.mxu0 0.0
    %2617 = vmatpush1.msra.mxu0 0.0
    %2618 = vmatprep.subr.mxu0 0.0
    %2619 = vmatpush1.msra.mxu0 0.0
    %2620 = vmatprep.subr.mxu0 0.0
    %2621 = vmatpush1.msra.mxu0 0.0
    %2622 = vmatprep.subr.mxu0 0.0
    %2623 = vmatpush1.msra.mxu0 0.0
    %2624 = vmatprep.subr.mxu0 0.0
    %2625 = vmatpush1.msra.mxu0 0.0
    %2626 = vmatprep.subr.mxu0 0.0
    %2627 = vmatpush1.msra.mxu0 0.0
    %2628 = vmatprep.subr.mxu0 0.0
    %2629 = vmatpush1.msra.mxu0 0.0
    %2630 = vmatprep.subr.mxu0 0.0
    %2631 = vmatpush1.msra.mxu0 0.0
    %2632 = vmatprep.subr.mxu0 0.0
    %2633 = vmatpush1.msra.mxu0 0.0
    %2634 = vmatprep.subr.mxu0 0.0
    %2635 = vmatpush1.msra.mxu0 0.0
    %2636 = vmatprep.subr.mxu0 0.0
    %2637 = vmatpush1.msra.mxu0 0.0
    %2638 = vmatprep.subr.mxu0 0.0
    %2639 = vmatpush1.msra.mxu0 0.0
    %2640 = vmatprep.subr.mxu0 0.0
    %2641 = vmatpush1.msra.mxu0 0.0
    %2642 = vmatprep.subr.mxu0 0.0
    %2643 = vmatpush1.msra.mxu0 0.0
    %2644 = vmatprep.mubr.f32.mxu0 0.0
    %2645 = vmatmul.mubr.f32.gmra.mrb[0].mxu0 %v2443
    %v2646 = vpop.f32.mrb[0].mxu0
    %v2647 = vadd.f32 %v2579, %v2646
    %v2648 = vpop.f32.mrb[0].mxu0
    %2649 = vmatprep.mubr.f32.mxu0 0.0
    %2650 = vmatmul.mubr.f32.gmra.mrb[0].mxu0 %v2446
    %v2651 = vpop.f32.mrb[0].mxu0
    %v2652 = vadd.f32 %v2579, %v2651
    %v2653 = vpop.f32.mrb[0].mxu0
    %2654 = vmatprep.mubr.f32.mxu0 0.0
    %2655 = vmatmul.mubr.f32.gmra.mrb[0].mxu0 %v2449
    %v2656 = vpop.f32.mrb[0].mxu0
    %v2657 = vadd.f32 %v2579, %v2656
    %v2658 = vpop.f32.mrb[0].mxu0
    %2659 = vmatprep.mubr.f32.mxu0 0.0
    %2660 = vmatmul.mubr.f32.gmra.mrb[0].mxu0 %v2452
    %v2661 = vpop.f32.mrb[0].mxu0
    %v2662 = vadd.f32 %v2579, %v2661
    %v2663 = vpop.f32.mrb[0].mxu0
    %2664 = vmatprep.mubr.f32.mxu0 0.0
    %2665 = vmatmul.mubr.f32.gmra.mrb[0].mxu0 %v2455
    %v2666 = vpop.f32.mrb[0].mxu0
    %v2667 = vadd.f32 %v2579, %v2666
    %v2668 = vpop.f32.mrb[0].mxu0
    %2669 = vmatprep.mubr.f32.mxu0 0.0
    %2670 = vmatmul.mubr.f32.gmra.mrb[0].mxu0 %v2458
    %v2671 = vpop.f32.mrb[0].mxu0
    %v2672 = vadd.f32 %v2579, %v2671
    %v2673 = vpop.f32.mrb[0].mxu0
    %2674 = vmatprep.mubr.f32.mxu0 0.0
    %2675 = vmatmul.mubr.f32.gmra.mrb[0].mxu0 %v2461
    %v2676 = vpop.f32.mrb[0].mxu0
    %v2677 = vadd.f32 %v2579, %v2676
    %v2678 = vpop.f32.mrb[0].mxu0
    %2679 = vmatprep.mubr.f32.mxu0 0.0
    %2680 = vmatmul.mubr.f32.gmra.mrb[0].mxu0 %v2464
    %v2681 = vpop.f32.mrb[0].mxu0
    %v2682 = vadd.f32 %v2579, %v2681
    %v2683 = vpop.f32.mrb[0].mxu0
    %2684 = vdwg.mxu0
    %v2685 = vld [vmem:[#allocation2 + $0x3d8] sm:$0xff]
    %v2686 = vld [vmem:[#allocation2 + $0x3e0] sm:$0xff]
    %v2687 = vld [vmem:[#allocation2 + $0x3e8] sm:$0xff]
    %v2688 = vld [vmem:[#allocation2 + $0x3f0] sm:$0xff]
    %v2689 = vld [vmem:[#allocation2 + $0x3f8] sm:$0x1]
    %v2690 = vlaneseq
    %v2691 = vshrl.u32 %v2690, 7
    %v2692 = vsub.s32 0, %v2691
    %v2693 = vrot.slane %v2689, %v2692
    %2694 = vmatprep.subr.mxu0 0.0
    %2695 = vmatpush1.msra.mxu0 %v2685
    %2696 = vmatprep.subr.mxu0 0.0
    %2697 = vmatpush1.msra.mxu0 %v2686
    %2698 = vmatprep.subr.mxu0 0.0
    %2699 = vmatpush1.msra.mxu0 %v2687
    %2700 = vmatprep.subr.mxu0 0.0
    %2701 = vmatpush1.msra.mxu0 %v2688
    %2702 = vmatprep.subr.mxu0 0.0
    %2703 = vmatpush1.msra.mxu0 0.0
    %2704 = vmatprep.subr.mxu0 0.0
    %2705 = vmatpush1.msra.mxu0 0.0
    %2706 = vmatprep.subr.mxu0 0.0
    %2707 = vmatpush1.msra.mxu0 0.0
    %2708 = vmatprep.subr.mxu0 0.0
    %2709 = vmatpush1.msra.mxu0 0.0
    %2710 = vmatprep.subr.mxu0 0.0
    %2711 = vmatpush1.msra.mxu0 0.0
    %2712 = vmatprep.subr.mxu0 0.0
    %2713 = vmatpush1.msra.mxu0 0.0
    %2714 = vmatprep.subr.mxu0 0.0
    %2715 = vmatpush1.msra.mxu0 0.0
    %2716 = vmatprep.subr.mxu0 0.0
    %2717 = vmatpush1.msra.mxu0 0.0
    %2718 = vmatprep.subr.mxu0 0.0
    %2719 = vmatpush1.msra.mxu0 0.0
    %2720 = vmatprep.subr.mxu0 0.0
    %2721 = vmatpush1.msra.mxu0 0.0
    %2722 = vmatprep.subr.mxu0 0.0
    %2723 = vmatpush1.msra.mxu0 0.0
    %2724 = vmatprep.subr.mxu0 0.0
    %2725 = vmatpush1.msra.mxu0 0.0
    %2726 = vmatprep.subr.mxu0 0.0
    %2727 = vmatpush1.msra.mxu0 0.0
    %2728 = vmatprep.subr.mxu0 0.0
    %2729 = vmatpush1.msra.mxu0 0.0
    %2730 = vmatprep.subr.mxu0 0.0
    %2731 = vmatpush1.msra.mxu0 0.0
    %2732 = vmatprep.subr.mxu0 0.0
    %2733 = vmatpush1.msra.mxu0 0.0
    %2734 = vmatprep.subr.mxu0 0.0
    %2735 = vmatpush1.msra.mxu0 0.0
    %2736 = vmatprep.subr.mxu0 0.0
    %2737 = vmatpush1.msra.mxu0 0.0
    %2738 = vmatprep.subr.mxu0 0.0
    %2739 = vmatpush1.msra.mxu0 0.0
    %2740 = vmatprep.subr.mxu0 0.0
    %2741 = vmatpush1.msra.mxu0 0.0
    %2742 = vmatprep.subr.mxu0 0.0
    %2743 = vmatpush1.msra.mxu0 0.0
    %2744 = vmatprep.subr.mxu0 0.0
    %2745 = vmatpush1.msra.mxu0 0.0
    %2746 = vmatprep.subr.mxu0 0.0
    %2747 = vmatpush1.msra.mxu0 0.0
    %2748 = vmatprep.subr.mxu0 0.0
    %2749 = vmatpush1.msra.mxu0 0.0
    %2750 = vmatprep.subr.mxu0 0.0
    %2751 = vmatpush1.msra.mxu0 0.0
    %2752 = vmatprep.subr.mxu0 0.0
    %2753 = vmatpush1.msra.mxu0 0.0
    %2754 = vmatprep.subr.mxu0 0.0
    %2755 = vmatpush1.msra.mxu0 0.0
    %2756 = vmatprep.subr.mxu0 0.0
    %2757 = vmatpush1.msra.mxu0 0.0
    %2758 = vmatprep.mubr.f32.mxu0 0.0
    %2759 = vmatmul.mubr.f32.gmra.mrb[0].mxu0 %v2443
    %v2760 = vpop.f32.mrb[0].mxu0
    %v2761 = vadd.f32 %v2693, %v2760
    %v2762 = vpop.f32.mrb[0].mxu0
    %2763 = vmatprep.mubr.f32.mxu0 0.0
    %2764 = vmatmul.mubr.f32.gmra.mrb[0].mxu0 %v2446
    %v2765 = vpop.f32.mrb[0].mxu0
    %v2766 = vadd.f32 %v2693, %v2765
    %v2767 = vpop.f32.mrb[0].mxu0
    %2768 = vmatprep.mubr.f32.mxu0 0.0
    %2769 = vmatmul.mubr.f32.gmra.mrb[0].mxu0 %v2449
    %v2770 = vpop.f32.mrb[0].mxu0
    %v2771 = vadd.f32 %v2693, %v2770
    %v2772 = vpop.f32.mrb[0].mxu0
    %2773 = vmatprep.mubr.f32.mxu0 0.0
    %2774 = vmatmul.mubr.f32.gmra.mrb[0].mxu0 %v2452
    %v2775 = vpop.f32.mrb[0].mxu0
    %v2776 = vadd.f32 %v2693, %v2775
    %v2777 = vpop.f32.mrb[0].mxu0
    %2778 = vmatprep.mubr.f32.mxu0 0.0
    %2779 = vmatmul.mubr.f32.gmra.mrb[0].mxu0 %v2455
    %v2780 = vpop.f32.mrb[0].mxu0
    %v2781 = vadd.f32 %v2693, %v2780
    %v2782 = vpop.f32.mrb[0].mxu0
    %2783 = vmatprep.mubr.f32.mxu0 0.0
    %2784 = vmatmul.mubr.f32.gmra.mrb[0].mxu0 %v2458
    %v2785 = vpop.f32.mrb[0].mxu0
    %v2786 = vadd.f32 %v2693, %v2785
    %v2787 = vpop.f32.mrb[0].mxu0
    %2788 = vmatprep.mubr.f32.mxu0 0.0
    %2789 = vmatmul.mubr.f32.gmra.mrb[0].mxu0 %v2461
    %v2790 = vpop.f32.mrb[0].mxu0
    %v2791 = vadd.f32 %v2693, %v2790
    %v2792 = vpop.f32.mrb[0].mxu0
    %2793 = vmatprep.mubr.f32.mxu0 0.0
    %2794 = vmatmul.mubr.f32.gmra.mrb[0].mxu0 %v2464
    %v2795 = vpop.f32.mrb[0].mxu0
    %v2796 = vadd.f32 %v2693, %v2795
    %v2797 = vpop.f32.mrb[0].mxu0
    %2798 = vdwg.mxu0
    %v2799 = vmul.f32 %v2533, %v224
    %v2800 = vmul.f32 %v2538, %v225
    %v2801 = vmul.f32 %v2543, %v226
    %v2802 = vmul.f32 %v2548, %v227
    %v2803 = vmul.f32 %v2553, %v228
    %v2804 = vmul.f32 %v2558, %v229
    %v2805 = vmul.f32 %v2563, %v230
    %v2806 = vmul.f32 %v2568, %v231
    %v2807 = vmul.f32 %v2533, %v232
    %v2808 = vmul.f32 %v2538, %v233
    %v2809 = vmul.f32 %v2543, %v234
    %v2810 = vmul.f32 %v2548, %v235
    %v2811 = vmul.f32 %v2553, %v236
    %v2812 = vmul.f32 %v2558, %v237
    %v2813 = vmul.f32 %v2563, %v238
    %v2814 = vmul.f32 %v2568, %v239
    %v2815 = vmul.f32 %v2533, %v240
    %v2816 = vmul.f32 %v2538, %v241
    %v2817 = vmul.f32 %v2543, %v242
    %v2818 = vmul.f32 %v2548, %v243
    %v2819 = vmul.f32 %v2553, %v244
    %v2820 = vmul.f32 %v2558, %v245
    %v2821 = vmul.f32 %v2563, %v246
    %v2822 = vmul.f32 %v2568, %v247
    %v2823 = vmul.f32 %v2533, %v248
    %v2824 = vmul.f32 %v2538, %v249
    %v2825 = vmul.f32 %v2543, %v250
    %v2826 = vmul.f32 %v2548, %v251
    %v2827 = vmul.f32 %v2553, %v252
    %v2828 = vmul.f32 %v2558, %v253
    %v2829 = vmul.f32 %v2563, %v254
    %v2830 = vmul.f32 %v2568, %v255
    %v2832 = vsel %vm265, %v2799, 0
    %v2835 = vsel %vm265, %v2800, 0
    %v2838 = vsel %vm265, %v2801, 0
    %v2841 = vsel %vm265, %v2802, 0
    %v2844 = vsel %vm265, %v2803, 0
    %v2847 = vsel %vm265, %v2804, 0
    %v2850 = vsel %vm265, %v2805, 0
    %v2853 = vsel %vm265, %v2806, 0
    %v2856 = vsel %vm265, %v2807, 0
    %v2859 = vsel %vm265, %v2808, 0
    %v2862 = vsel %vm265, %v2809, 0
    %v2865 = vsel %vm265, %v2810, 0
    %v2868 = vsel %vm265, %v2811, 0
    %v2871 = vsel %vm265, %v2812, 0
    %v2874 = vsel %vm265, %v2813, 0
    %v2877 = vsel %vm265, %v2814, 0
    %v2880 = vsel %vm265, %v2815, 0
    %v2883 = vsel %vm265, %v2816, 0
    %v2886 = vsel %vm265, %v2817, 0
    %v2889 = vsel %vm265, %v2818, 0
    %v2892 = vsel %vm265, %v2819, 0
    %v2895 = vsel %vm265, %v2820, 0
    %v2898 = vsel %vm265, %v2821, 0
    %v2901 = vsel %vm265, %v2822, 0
    %v2904 = vsel %vm265, %v2823, 0
    %v2907 = vsel %vm265, %v2824, 0
    %v2910 = vsel %vm265, %v2825, 0
    %v2913 = vsel %vm265, %v2826, 0
    %v2916 = vsel %vm265, %v2827, 0
    %v2919 = vsel %vm265, %v2828, 0
    %v2922 = vsel %vm265, %v2829, 0
    %v2925 = vsel %vm265, %v2830, 0
    %v2928 = vsel %vm265, %v2647, 0
    %v2931 = vsel %vm265, %v2652, 0
    %v2934 = vsel %vm265, %v2657, 0
    %v2937 = vsel %vm265, %v2662, 0
    %v2940 = vsel %vm265, %v2667, 0
    %v2943 = vsel %vm265, %v2672, 0
    %v2946 = vsel %vm265, %v2677, 0
    %v2949 = vsel %vm265, %v2682, 0
    %2951 = vmatprep.subr.mxu0 0.0
    %2952 = vmatpush1.xpose.msra.mxu0 %v2928
    %2953 = vmatprep.subr.mxu0 0.0
    %2954 = vmatpush1.xpose.msra.mxu0 %v2931
    %2955 = vmatprep.subr.mxu0 0.0
    %2956 = vmatpush1.xpose.msra.mxu0 %v2934
    %2957 = vmatprep.subr.mxu0 0.0
    %2958 = vmatpush1.xpose.msra.mxu0 %v2937
    %2959 = vmatprep.subr.mxu0 0.0
    %2960 = vmatpush1.xpose.msra.mxu0 %v2940
    %2961 = vmatprep.subr.mxu0 0.0
    %2962 = vmatpush1.xpose.msra.mxu0 %v2943
    %2963 = vmatprep.subr.mxu0 0.0
    %2964 = vmatpush1.xpose.msra.mxu0 %v2946
    %2965 = vmatprep.subr.mxu0 0.0
    %2966 = vmatpush1.xpose.msra.mxu0 %v2949
    %2967 = vmatprep.subr.mxu0 0.0
    %2968 = vmatpush1.xpose.msra.mxu0 0.0
    %2969 = vmatprep.subr.mxu0 0.0
    %2970 = vmatpush1.xpose.msra.mxu0 0.0
    %2971 = vmatprep.subr.mxu0 0.0
    %2972 = vmatpush1.xpose.msra.mxu0 0.0
    %2973 = vmatprep.subr.mxu0 0.0
    %2974 = vmatpush1.xpose.msra.mxu0 0.0
    %2975 = vmatprep.subr.mxu0 0.0
    %2976 = vmatpush1.xpose.msra.mxu0 0.0
    %2977 = vmatprep.subr.mxu0 0.0
    %2978 = vmatpush1.xpose.msra.mxu0 0.0
    %2979 = vmatprep.subr.mxu0 0.0
    %2980 = vmatpush1.xpose.msra.mxu0 0.0
    %2981 = vmatprep.subr.mxu0 0.0
    %2982 = vmatpush1.xpose.msra.mxu0 0.0
    %2983 = vmatprep.subr.mxu0 0.0
    %2984 = vmatpush1.xpose.msra.mxu0 0.0
    %2985 = vmatprep.subr.mxu0 0.0
    %2986 = vmatpush1.xpose.msra.mxu0 0.0
    %2987 = vmatprep.subr.mxu0 0.0
    %2988 = vmatpush1.xpose.msra.mxu0 0.0
    %2989 = vmatprep.subr.mxu0 0.0
    %2990 = vmatpush1.xpose.msra.mxu0 0.0
    %2991 = vmatprep.subr.mxu0 0.0
    %2992 = vmatpush1.xpose.msra.mxu0 0.0
    %2993 = vmatprep.subr.mxu0 0.0
    %2994 = vmatpush1.xpose.msra.mxu0 0.0
    %2995 = vmatprep.subr.mxu0 0.0
    %2996 = vmatpush1.xpose.msra.mxu0 0.0
    %2997 = vmatprep.subr.mxu0 0.0
    %2998 = vmatpush1.xpose.msra.mxu0 0.0
    %2999 = vmatprep.subr.mxu0 0.0
    %3000 = vmatpush1.xpose.msra.mxu0 0.0
    %3001 = vmatprep.subr.mxu0 0.0
    %3002 = vmatpush1.xpose.msra.mxu0 0.0
    %3003 = vmatprep.subr.mxu0 0.0
    %3004 = vmatpush1.xpose.msra.mxu0 0.0
    %3005 = vmatprep.subr.mxu0 0.0
    %3006 = vmatpush1.xpose.msra.mxu0 0.0
    %3007 = vmatprep.subr.mxu0 0.0
    %3008 = vmatpush1.xpose.msra.mxu0 0.0
    %3009 = vmatprep.subr.mxu0 0.0
    %3010 = vmatpush1.xpose.msra.mxu0 0.0
    %3011 = vmatprep.subr.mxu0 0.0
    %3012 = vmatpush1.xpose.msra.mxu0 0.0
    %3013 = vmatprep.subr.mxu0 0.0
    %3014 = vmatpush1.xpose.msra.mxu0 0.0
    %3015 = vmatprep.mubr.f32.mxu0 0.0
    %3016 = vmatmul.mubr.f32.gmra.mrb[0].mxu0 %v2832
    %v3017 = vpop.f32.mrb[0].mxu0
    %v3018 = vadd.f32 %v192, %v3017
    %v3019 = vpop.f32.mrb[0].mxu0
    %3020 = vmatprep.mubr.f32.mxu0 0.0
    %3021 = vmatmul.mubr.f32.gmra.mrb[0].mxu0 %v2835
    %v3022 = vpop.f32.mrb[0].mxu0
    %v3023 = vadd.f32 %v193, %v3022
    %v3024 = vpop.f32.mrb[0].mxu0
    %3025 = vmatprep.mubr.f32.mxu0 0.0
    %3026 = vmatmul.mubr.f32.gmra.mrb[0].mxu0 %v2838
    %v3027 = vpop.f32.mrb[0].mxu0
    %v3028 = vadd.f32 %v194, %v3027
    %v3029 = vpop.f32.mrb[0].mxu0
    %3030 = vmatprep.mubr.f32.mxu0 0.0
    %3031 = vmatmul.mubr.f32.gmra.mrb[0].mxu0 %v2841
    %v3032 = vpop.f32.mrb[0].mxu0
    %v3033 = vadd.f32 %v195, %v3032
    %v3034 = vpop.f32.mrb[0].mxu0
    %3035 = vmatprep.mubr.f32.mxu0 0.0
    %3036 = vmatmul.mubr.f32.gmra.mrb[0].mxu0 %v2844
    %v3037 = vpop.f32.mrb[0].mxu0
    %v3038 = vadd.f32 %v196, %v3037
    %v3039 = vpop.f32.mrb[0].mxu0
    %3040 = vmatprep.mubr.f32.mxu0 0.0
    %3041 = vmatmul.mubr.f32.gmra.mrb[0].mxu0 %v2847
    %v3042 = vpop.f32.mrb[0].mxu0
    %v3043 = vadd.f32 %v197, %v3042
    %v3044 = vpop.f32.mrb[0].mxu0
    %3045 = vmatprep.mubr.f32.mxu0 0.0
    %3046 = vmatmul.mubr.f32.gmra.mrb[0].mxu0 %v2850
    %v3047 = vpop.f32.mrb[0].mxu0
    %v3048 = vadd.f32 %v198, %v3047
    %v3049 = vpop.f32.mrb[0].mxu0
    %3050 = vmatprep.mubr.f32.mxu0 0.0
    %3051 = vmatmul.mubr.f32.gmra.mrb[0].mxu0 %v2853
    %v3052 = vpop.f32.mrb[0].mxu0
    %v3053 = vadd.f32 %v199, %v3052
    %v3054 = vpop.f32.mrb[0].mxu0
    %3055 = vmatprep.mubr.f32.mxu0 0.0
    %3056 = vmatmul.mubr.f32.gmra.mrb[0].mxu0 %v2856
    %v3057 = vpop.f32.mrb[0].mxu0
    %v3058 = vadd.f32 %v200, %v3057
    %v3059 = vpop.f32.mrb[0].mxu0
    %3060 = vmatprep.mubr.f32.mxu0 0.0
    %3061 = vmatmul.mubr.f32.gmra.mrb[0].mxu0 %v2859
    %v3062 = vpop.f32.mrb[0].mxu0
    %v3063 = vadd.f32 %v201, %v3062
    %v3064 = vpop.f32.mrb[0].mxu0
    %3065 = vmatprep.mubr.f32.mxu0 0.0
    %3066 = vmatmul.mubr.f32.gmra.mrb[0].mxu0 %v2862
    %v3067 = vpop.f32.mrb[0].mxu0
    %v3068 = vadd.f32 %v202, %v3067
    %v3069 = vpop.f32.mrb[0].mxu0
    %3070 = vmatprep.mubr.f32.mxu0 0.0
    %3071 = vmatmul.mubr.f32.gmra.mrb[0].mxu0 %v2865
    %v3072 = vpop.f32.mrb[0].mxu0
    %v3073 = vadd.f32 %v203, %v3072
    %v3074 = vpop.f32.mrb[0].mxu0
    %3075 = vmatprep.mubr.f32.mxu0 0.0
    %3076 = vmatmul.mubr.f32.gmra.mrb[0].mxu0 %v2868
    %v3077 = vpop.f32.mrb[0].mxu0
    %v3078 = vadd.f32 %v204, %v3077
    %v3079 = vpop.f32.mrb[0].mxu0
    %3080 = vmatprep.mubr.f32.mxu0 0.0
    %3081 = vmatmul.mubr.f32.gmra.mrb[0].mxu0 %v2871
    %v3082 = vpop.f32.mrb[0].mxu0
    %v3083 = vadd.f32 %v205, %v3082
    %v3084 = vpop.f32.mrb[0].mxu0
    %3085 = vmatprep.mubr.f32.mxu0 0.0
    %3086 = vmatmul.mubr.f32.gmra.mrb[0].mxu0 %v2874
    %v3087 = vpop.f32.mrb[0].mxu0
    %v3088 = vadd.f32 %v206, %v3087
    %v3089 = vpop.f32.mrb[0].mxu0
    %3090 = vmatprep.mubr.f32.mxu0 0.0
    %3091 = vmatmul.mubr.f32.gmra.mrb[0].mxu0 %v2877
    %v3092 = vpop.f32.mrb[0].mxu0
    %v3093 = vadd.f32 %v207, %v3092
    %v3094 = vpop.f32.mrb[0].mxu0
    %3095 = vmatprep.mubr.f32.mxu0 0.0
    %3096 = vmatmul.mubr.f32.gmra.mrb[0].mxu0 %v2880
    %v3097 = vpop.f32.mrb[0].mxu0
    %v3098 = vadd.f32 %v208, %v3097
    %v3099 = vpop.f32.mrb[0].mxu0
    %3100 = vmatprep.mubr.f32.mxu0 0.0
    %3101 = vmatmul.mubr.f32.gmra.mrb[0].mxu0 %v2883
    %v3102 = vpop.f32.mrb[0].mxu0
    %v3103 = vadd.f32 %v209, %v3102
    %v3104 = vpop.f32.mrb[0].mxu0
    %3105 = vmatprep.mubr.f32.mxu0 0.0
    %3106 = vmatmul.mubr.f32.gmra.mrb[0].mxu0 %v2886
    %v3107 = vpop.f32.mrb[0].mxu0
    %v3108 = vadd.f32 %v210, %v3107
    %v3109 = vpop.f32.mrb[0].mxu0
    %3110 = vmatprep.mubr.f32.mxu0 0.0
    %3111 = vmatmul.mubr.f32.gmra.mrb[0].mxu0 %v2889
    %v3112 = vpop.f32.mrb[0].mxu0
    %v3113 = vadd.f32 %v211, %v3112
    %v3114 = vpop.f32.mrb[0].mxu0
    %3115 = vmatprep.mubr.f32.mxu0 0.0
    %3116 = vmatmul.mubr.f32.gmra.mrb[0].mxu0 %v2892
    %v3117 = vpop.f32.mrb[0].mxu0
    %v3118 = vadd.f32 %v212, %v3117
    %v3119 = vpop.f32.mrb[0].mxu0
    %3120 = vmatprep.mubr.f32.mxu0 0.0
    %3121 = vmatmul.mubr.f32.gmra.mrb[0].mxu0 %v2895
    %v3122 = vpop.f32.mrb[0].mxu0
    %v3123 = vadd.f32 %v213, %v3122
    %v3124 = vpop.f32.mrb[0].mxu0
    %3125 = vmatprep.mubr.f32.mxu0 0.0
    %3126 = vmatmul.mubr.f32.gmra.mrb[0].mxu0 %v2898
    %v3127 = vpop.f32.mrb[0].mxu0
    %v3128 = vadd.f32 %v214, %v3127
    %v3129 = vpop.f32.mrb[0].mxu0
    %3130 = vmatprep.mubr.f32.mxu0 0.0
    %3131 = vmatmul.mubr.f32.gmra.mrb[0].mxu0 %v2901
    %v3132 = vpop.f32.mrb[0].mxu0
    %v3133 = vadd.f32 %v215, %v3132
    %v3134 = vpop.f32.mrb[0].mxu0
    %3135 = vmatprep.mubr.f32.mxu0 0.0
    %3136 = vmatmul.mubr.f32.gmra.mrb[0].mxu0 %v2904
    %v3137 = vpop.f32.mrb[0].mxu0
    %v3138 = vadd.f32 %v216, %v3137
    %v3139 = vpop.f32.mrb[0].mxu0
    %3140 = vmatprep.mubr.f32.mxu0 0.0
    %3141 = vmatmul.mubr.f32.gmra.mrb[0].mxu0 %v2907
    %v3142 = vpop.f32.mrb[0].mxu0
    %v3143 = vadd.f32 %v217, %v3142
    %v3144 = vpop.f32.mrb[0].mxu0
    %3145 = vmatprep.mubr.f32.mxu0 0.0
    %3146 = vmatmul.mubr.f32.gmra.mrb[0].mxu0 %v2910
    %v3147 = vpop.f32.mrb[0].mxu0
    %v3148 = vadd.f32 %v218, %v3147
    %v3149 = vpop.f32.mrb[0].mxu0
    %3150 = vmatprep.mubr.f32.mxu0 0.0
    %3151 = vmatmul.mubr.f32.gmra.mrb[0].mxu0 %v2913
    %v3152 = vpop.f32.mrb[0].mxu0
    %v3153 = vadd.f32 %v219, %v3152
    %v3154 = vpop.f32.mrb[0].mxu0
    %3155 = vmatprep.mubr.f32.mxu0 0.0
    %3156 = vmatmul.mubr.f32.gmra.mrb[0].mxu0 %v2916
    %v3157 = vpop.f32.mrb[0].mxu0
    %v3158 = vadd.f32 %v220, %v3157
    %v3159 = vpop.f32.mrb[0].mxu0
    %3160 = vmatprep.mubr.f32.mxu0 0.0
    %3161 = vmatmul.mubr.f32.gmra.mrb[0].mxu0 %v2919
    %v3162 = vpop.f32.mrb[0].mxu0
    %v3163 = vadd.f32 %v221, %v3162
    %v3164 = vpop.f32.mrb[0].mxu0
    %3165 = vmatprep.mubr.f32.mxu0 0.0
    %3166 = vmatmul.mubr.f32.gmra.mrb[0].mxu0 %v2922
    %v3167 = vpop.f32.mrb[0].mxu0
    %v3168 = vadd.f32 %v222, %v3167
    %v3169 = vpop.f32.mrb[0].mxu0
    %3170 = vmatprep.mubr.f32.mxu0 0.0
    %3171 = vmatmul.mubr.f32.gmra.mrb[0].mxu0 %v2925
    %v3172 = vpop.f32.mrb[0].mxu0
    %v3173 = vadd.f32 %v223, %v3172
    %v3174 = vpop.f32.mrb[0].mxu0
    %3175 = vdwg.mxu0
    %v3176 = vsel %vm1000, %v3018, -inf
    %3177 = vmax.xlane.f32.xlu0 %v3176
    %v3178 = vpop.xlane.xlu0 %3177
    %v3179 = vsel %vm1000, %v3023, -inf
    %3180 = vmax.xlane.f32.xlu0 %v3179
    %v3181 = vpop.xlane.xlu0 %3180
    %v3182 = vsel %vm1000, %v3028, -inf
    %3183 = vmax.xlane.f32.xlu0 %v3182
    %v3184 = vpop.xlane.xlu0 %3183
    %v3185 = vsel %vm1000, %v3033, -inf
    %3186 = vmax.xlane.f32.xlu0 %v3185
    %v3187 = vpop.xlane.xlu0 %3186
    %v3188 = vsel %vm1000, %v3038, -inf
    %3189 = vmax.xlane.f32.xlu0 %v3188
    %v3190 = vpop.xlane.xlu0 %3189
    %v3191 = vsel %vm1000, %v3043, -inf
    %3192 = vmax.xlane.f32.xlu0 %v3191
    %v3193 = vpop.xlane.xlu0 %3192
    %v3194 = vsel %vm1000, %v3048, -inf
    %3195 = vmax.xlane.f32.xlu0 %v3194
    %v3196 = vpop.xlane.xlu0 %3195
    %v3197 = vsel %vm1000, %v3053, -inf
    %3198 = vmax.xlane.f32.xlu0 %v3197
    %v3199 = vpop.xlane.xlu0 %3198
    %v3200 = vsel %vm1000, %v3058, -inf
    %3201 = vmax.xlane.f32.xlu0 %v3200
    %v3202 = vpop.xlane.xlu0 %3201
    %v3203 = vsel %vm1000, %v3063, -inf
    %3204 = vmax.xlane.f32.xlu0 %v3203
    %v3205 = vpop.xlane.xlu0 %3204
    %v3206 = vsel %vm1000, %v3068, -inf
    %3207 = vmax.xlane.f32.xlu0 %v3206
    %v3208 = vpop.xlane.xlu0 %3207
    %v3209 = vsel %vm1000, %v3073, -inf
    %3210 = vmax.xlane.f32.xlu0 %v3209
    %v3211 = vpop.xlane.xlu0 %3210
    %v3212 = vsel %vm1000, %v3078, -inf
    %3213 = vmax.xlane.f32.xlu0 %v3212
    %v3214 = vpop.xlane.xlu0 %3213
    %v3215 = vsel %vm1000, %v3083, -inf
    %3216 = vmax.xlane.f32.xlu0 %v3215
    %v3217 = vpop.xlane.xlu0 %3216
    %v3218 = vsel %vm1000, %v3088, -inf
    %3219 = vmax.xlane.f32.xlu0 %v3218
    %v3220 = vpop.xlane.xlu0 %3219
    %v3221 = vsel %vm1000, %v3093, -inf
    %3222 = vmax.xlane.f32.xlu0 %v3221
    %v3223 = vpop.xlane.xlu0 %3222
    %v3224 = vsel %vm1000, %v3098, -inf
    %3225 = vmax.xlane.f32.xlu0 %v3224
    %v3226 = vpop.xlane.xlu0 %3225
    %v3227 = vsel %vm1000, %v3103, -inf
    %3228 = vmax.xlane.f32.xlu0 %v3227
    %v3229 = vpop.xlane.xlu0 %3228
    %v3230 = vsel %vm1000, %v3108, -inf
    %3231 = vmax.xlane.f32.xlu0 %v3230
    %v3232 = vpop.xlane.xlu0 %3231
    %v3233 = vsel %vm1000, %v3113, -inf
    %3234 = vmax.xlane.f32.xlu0 %v3233
    %v3235 = vpop.xlane.xlu0 %3234
    %v3236 = vsel %vm1000, %v3118, -inf
    %3237 = vmax.xlane.f32.xlu0 %v3236
    %v3238 = vpop.xlane.xlu0 %3237
    %v3239 = vsel %vm1000, %v3123, -inf
    %3240 = vmax.xlane.f32.xlu0 %v3239
    %v3241 = vpop.xlane.xlu0 %3240
    %v3242 = vsel %vm1000, %v3128, -inf
    %3243 = vmax.xlane.f32.xlu0 %v3242
    %v3244 = vpop.xlane.xlu0 %3243
    %v3245 = vsel %vm1000, %v3133, -inf
    %3246 = vmax.xlane.f32.xlu0 %v3245
    %v3247 = vpop.xlane.xlu0 %3246
    %v3248 = vsel %vm1000, %v3138, -inf
    %3249 = vmax.xlane.f32.xlu0 %v3248
    %v3250 = vpop.xlane.xlu0 %3249
    %v3251 = vsel %vm1000, %v3143, -inf
    %3252 = vmax.xlane.f32.xlu0 %v3251
    %v3253 = vpop.xlane.xlu0 %3252
    %v3254 = vsel %vm1000, %v3148, -inf
    %3255 = vmax.xlane.f32.xlu0 %v3254
    %v3256 = vpop.xlane.xlu0 %3255
    %v3257 = vsel %vm1000, %v3153, -inf
    %3258 = vmax.xlane.f32.xlu0 %v3257
    %v3259 = vpop.xlane.xlu0 %3258
    %v3260 = vsel %vm1000, %v3158, -inf
    %3261 = vmax.xlane.f32.xlu0 %v3260
    %v3262 = vpop.xlane.xlu0 %3261
    %v3263 = vsel %vm1000, %v3163, -inf
    %3264 = vmax.xlane.f32.xlu0 %v3263
    %v3265 = vpop.xlane.xlu0 %3264
    %v3266 = vsel %vm1000, %v3168, -inf
    %3267 = vmax.xlane.f32.xlu0 %v3266
    %v3268 = vpop.xlane.xlu0 %3267
    %v3269 = vsel %vm1000, %v3173, -inf
    %3270 = vmax.xlane.f32.xlu0 %v3269
    %v3271 = vpop.xlane.xlu0 %3270
    %v3272 = vsub.f32 %v3018, %v3178
    %v3273 = vsub.f32 %v3023, %v3181
    %v3274 = vsub.f32 %v3028, %v3184
    %v3275 = vsub.f32 %v3033, %v3187
    %v3276 = vsub.f32 %v3038, %v3190
    %v3277 = vsub.f32 %v3043, %v3193
    %v3278 = vsub.f32 %v3048, %v3196
    %v3279 = vsub.f32 %v3053, %v3199
    %v3280 = vsub.f32 %v3058, %v3202
    %v3281 = vsub.f32 %v3063, %v3205
    %v3282 = vsub.f32 %v3068, %v3208
    %v3283 = vsub.f32 %v3073, %v3211
    %v3284 = vsub.f32 %v3078, %v3214
    %v3285 = vsub.f32 %v3083, %v3217
    %v3286 = vsub.f32 %v3088, %v3220
    %v3287 = vsub.f32 %v3093, %v3223
    %v3288 = vsub.f32 %v3098, %v3226
    %v3289 = vsub.f32 %v3103, %v3229
    %v3290 = vsub.f32 %v3108, %v3232
    %v3291 = vsub.f32 %v3113, %v3235
    %v3292 = vsub.f32 %v3118, %v3238
    %v3293 = vsub.f32 %v3123, %v3241
    %v3294 = vsub.f32 %v3128, %v3244
    %v3295 = vsub.f32 %v3133, %v3247
    %v3296 = vsub.f32 %v3138, %v3250
    %v3297 = vsub.f32 %v3143, %v3253
    %v3298 = vsub.f32 %v3148, %v3256
    %v3299 = vsub.f32 %v3153, %v3259
    %v3300 = vsub.f32 %v3158, %v3262
    %v3301 = vsub.f32 %v3163, %v3265
    %v3302 = vsub.f32 %v3168, %v3268
    %v3303 = vsub.f32 %v3173, %v3271
    %v3304 = vmul.f32 %v3272, 1.442695
    %v3305 = vpow.pop %v3304
    %v3306 = vmul.f32 %v3273, 1.442695
    %v3307 = vpow.pop %v3306
    %v3308 = vmul.f32 %v3274, 1.442695
    %v3309 = vpow.pop %v3308
    %v3310 = vmul.f32 %v3275, 1.442695
    %v3311 = vpow.pop %v3310
    %v3312 = vmul.f32 %v3276, 1.442695
    %v3313 = vpow.pop %v3312
    %v3314 = vmul.f32 %v3277, 1.442695
    %v3315 = vpow.pop %v3314
    %v3316 = vmul.f32 %v3278, 1.442695
    %v3317 = vpow.pop %v3316
    %v3318 = vmul.f32 %v3279, 1.442695
    %v3319 = vpow.pop %v3318
    %v3320 = vmul.f32 %v3280, 1.442695
    %v3321 = vpow.pop %v3320
    %v3322 = vmul.f32 %v3281, 1.442695
    %v3323 = vpow.pop %v3322
    %v3324 = vmul.f32 %v3282, 1.442695
    %v3325 = vpow.pop %v3324
    %v3326 = vmul.f32 %v3283, 1.442695
    %v3327 = vpow.pop %v3326
    %v3328 = vmul.f32 %v3284, 1.442695
    %v3329 = vpow.pop %v3328
    %v3330 = vmul.f32 %v3285, 1.442695
    %v3331 = vpow.pop %v3330
    %v3332 = vmul.f32 %v3286, 1.442695
    %v3333 = vpow.pop %v3332
    %v3334 = vmul.f32 %v3287, 1.442695
    %v3335 = vpow.pop %v3334
    %v3336 = vmul.f32 %v3288, 1.442695
    %v3337 = vpow.pop %v3336
    %v3338 = vmul.f32 %v3289, 1.442695
    %v3339 = vpow.pop %v3338
    %v3340 = vmul.f32 %v3290, 1.442695
    %v3341 = vpow.pop %v3340
    %v3342 = vmul.f32 %v3291, 1.442695
    %v3343 = vpow.pop %v3342
    %v3344 = vmul.f32 %v3292, 1.442695
    %v3345 = vpow.pop %v3344
    %v3346 = vmul.f32 %v3293, 1.442695
    %v3347 = vpow.pop %v3346
    %v3348 = vmul.f32 %v3294, 1.442695
    %v3349 = vpow.pop %v3348
    %v3350 = vmul.f32 %v3295, 1.442695
    %v3351 = vpow.pop %v3350
    %v3352 = vmul.f32 %v3296, 1.442695
    %v3353 = vpow.pop %v3352
    %v3354 = vmul.f32 %v3297, 1.442695
    %v3355 = vpow.pop %v3354
    %v3356 = vmul.f32 %v3298, 1.442695
    %v3357 = vpow.pop %v3356
    %v3358 = vmul.f32 %v3299, 1.442695
    %v3359 = vpow.pop %v3358
    %v3360 = vmul.f32 %v3300, 1.442695
    %v3361 = vpow.pop %v3360
    %v3362 = vmul.f32 %v3301, 1.442695
    %v3363 = vpow.pop %v3362
    %v3364 = vmul.f32 %v3302, 1.442695
    %v3365 = vpow.pop %v3364
    %v3366 = vmul.f32 %v3303, 1.442695
    %v3367 = vpow.pop %v3366
    %v3368 = vsel %vm1000, %v3305, 0.0
    %3369 = vadd.xlane.f32.xlu0 %v3368
    %v3370 = vpop.xlane.xlu0 %3369
    %v3371 = vsel %vm1000, %v3307, 0.0
    %3372 = vadd.xlane.f32.xlu0 %v3371
    %v3373 = vpop.xlane.xlu0 %3372
    %v3374 = vsel %vm1000, %v3309, 0.0
    %3375 = vadd.xlane.f32.xlu0 %v3374
    %v3376 = vpop.xlane.xlu0 %3375
    %v3377 = vsel %vm1000, %v3311, 0.0
    %3378 = vadd.xlane.f32.xlu0 %v3377
    %v3379 = vpop.xlane.xlu0 %3378
    %v3380 = vsel %vm1000, %v3313, 0.0
    %3381 = vadd.xlane.f32.xlu0 %v3380
    %v3382 = vpop.xlane.xlu0 %3381
    %v3383 = vsel %vm1000, %v3315, 0.0
    %3384 = vadd.xlane.f32.xlu0 %v3383
    %v3385 = vpop.xlane.xlu0 %3384
    %v3386 = vsel %vm1000, %v3317, 0.0
    %3387 = vadd.xlane.f32.xlu0 %v3386
    %v3388 = vpop.xlane.xlu0 %3387
    %v3389 = vsel %vm1000, %v3319, 0.0
    %3390 = vadd.xlane.f32.xlu0 %v3389
    %v3391 = vpop.xlane.xlu0 %3390
    %v3392 = vsel %vm1000, %v3321, 0.0
    %3393 = vadd.xlane.f32.xlu0 %v3392
    %v3394 = vpop.xlane.xlu0 %3393
    %v3395 = vsel %vm1000, %v3323, 0.0
    %3396 = vadd.xlane.f32.xlu0 %v3395
    %v3397 = vpop.xlane.xlu0 %3396
    %v3398 = vsel %vm1000, %v3325, 0.0
    %3399 = vadd.xlane.f32.xlu0 %v3398
    %v3400 = vpop.xlane.xlu0 %3399
    %v3401 = vsel %vm1000, %v3327, 0.0
    %3402 = vadd.xlane.f32.xlu0 %v3401
    %v3403 = vpop.xlane.xlu0 %3402
    %v3404 = vsel %vm1000, %v3329, 0.0
    %3405 = vadd.xlane.f32.xlu0 %v3404
    %v3406 = vpop.xlane.xlu0 %3405
    %v3407 = vsel %vm1000, %v3331, 0.0
    %3408 = vadd.xlane.f32.xlu0 %v3407
    %v3409 = vpop.xlane.xlu0 %3408
    %v3410 = vsel %vm1000, %v3333, 0.0
    %3411 = vadd.xlane.f32.xlu0 %v3410
    %v3412 = vpop.xlane.xlu0 %3411
    %v3413 = vsel %vm1000, %v3335, 0.0
    %3414 = vadd.xlane.f32.xlu0 %v3413
    %v3415 = vpop.xlane.xlu0 %3414
    %v3416 = vsel %vm1000, %v3337, 0.0
    %3417 = vadd.xlane.f32.xlu0 %v3416
    %v3418 = vpop.xlane.xlu0 %3417
    %v3419 = vsel %vm1000, %v3339, 0.0
    %3420 = vadd.xlane.f32.xlu0 %v3419
    %v3421 = vpop.xlane.xlu0 %3420
    %v3422 = vsel %vm1000, %v3341, 0.0
    %3423 = vadd.xlane.f32.xlu0 %v3422
    %v3424 = vpop.xlane.xlu0 %3423
    %v3425 = vsel %vm1000, %v3343, 0.0
    %3426 = vadd.xlane.f32.xlu0 %v3425
    %v3427 = vpop.xlane.xlu0 %3426
    %v3428 = vsel %vm1000, %v3345, 0.0
    %3429 = vadd.xlane.f32.xlu0 %v3428
    %v3430 = vpop.xlane.xlu0 %3429
    %v3431 = vsel %vm1000, %v3347, 0.0
    %3432 = vadd.xlane.f32.xlu0 %v3431
    %v3433 = vpop.xlane.xlu0 %3432
    %v3434 = vsel %vm1000, %v3349, 0.0
    %3435 = vadd.xlane.f32.xlu0 %v3434
    %v3436 = vpop.xlane.xlu0 %3435
    %v3437 = vsel %vm1000, %v3351, 0.0
    %3438 = vadd.xlane.f32.xlu0 %v3437
    %v3439 = vpop.xlane.xlu0 %3438
    %v3440 = vsel %vm1000, %v3353, 0.0
    %3441 = vadd.xlane.f32.xlu0 %v3440
    %v3442 = vpop.xlane.xlu0 %3441
    %v3443 = vsel %vm1000, %v3355, 0.0
    %3444 = vadd.xlane.f32.xlu0 %v3443
    %v3445 = vpop.xlane.xlu0 %3444
    %v3446 = vsel %vm1000, %v3357, 0.0
    %3447 = vadd.xlane.f32.xlu0 %v3446
    %v3448 = vpop.xlane.xlu0 %3447
    %v3449 = vsel %vm1000, %v3359, 0.0
    %3450 = vadd.xlane.f32.xlu0 %v3449
    %v3451 = vpop.xlane.xlu0 %3450
    %v3452 = vsel %vm1000, %v3361, 0.0
    %3453 = vadd.xlane.f32.xlu0 %v3452
    %v3454 = vpop.xlane.xlu0 %3453
    %v3455 = vsel %vm1000, %v3363, 0.0
    %3456 = vadd.xlane.f32.xlu0 %v3455
    %v3457 = vpop.xlane.xlu0 %3456
    %v3458 = vsel %vm1000, %v3365, 0.0
    %3459 = vadd.xlane.f32.xlu0 %v3458
    %v3460 = vpop.xlane.xlu0 %3459
    %v3461 = vsel %vm1000, %v3367, 0.0
    %3462 = vadd.xlane.f32.xlu0 %v3461
    %v3463 = vpop.xlane.xlu0 %3462
    %v3464 = vrcp.pop %v3370
    %v3465 = vrcp.pop %v3373
    %v3466 = vrcp.pop %v3376
    %v3467 = vrcp.pop %v3379
    %v3468 = vrcp.pop %v3382
    %v3469 = vrcp.pop %v3385
    %v3470 = vrcp.pop %v3388
    %v3471 = vrcp.pop %v3391
    %v3472 = vrcp.pop %v3394
    %v3473 = vrcp.pop %v3397
    %v3474 = vrcp.pop %v3400
    %v3475 = vrcp.pop %v3403
    %v3476 = vrcp.pop %v3406
    %v3477 = vrcp.pop %v3409
    %v3478 = vrcp.pop %v3412
    %v3479 = vrcp.pop %v3415
    %v3480 = vrcp.pop %v3418
    %v3481 = vrcp.pop %v3421
    %v3482 = vrcp.pop %v3424
    %v3483 = vrcp.pop %v3427
    %v3484 = vrcp.pop %v3430
    %v3485 = vrcp.pop %v3433
    %v3486 = vrcp.pop %v3436
    %v3487 = vrcp.pop %v3439
    %v3488 = vrcp.pop %v3442
    %v3489 = vrcp.pop %v3445
    %v3490 = vrcp.pop %v3448
    %v3491 = vrcp.pop %v3451
    %v3492 = vrcp.pop %v3454
    %v3493 = vrcp.pop %v3457
    %v3494 = vrcp.pop %v3460
    %v3495 = vrcp.pop %v3463
    %v3497 = vsel %vm1000, %v3305, 0
    %v3500 = vsel %vm1000, %v3307, 0
    %v3503 = vsel %vm1000, %v3309, 0
    %v3506 = vsel %vm1000, %v3311, 0
    %v3509 = vsel %vm1000, %v3313, 0
    %v3512 = vsel %vm1000, %v3315, 0
    %v3515 = vsel %vm1000, %v3317, 0
    %v3518 = vsel %vm1000, %v3319, 0
    %v3521 = vsel %vm1000, %v3321, 0
    %v3524 = vsel %vm1000, %v3323, 0
    %v3527 = vsel %vm1000, %v3325, 0
    %v3530 = vsel %vm1000, %v3327, 0
    %v3533 = vsel %vm1000, %v3329, 0
    %v3536 = vsel %vm1000, %v3331, 0
    %v3539 = vsel %vm1000, %v3333, 0
    %v3542 = vsel %vm1000, %v3335, 0
    %v3545 = vsel %vm1000, %v3337, 0
    %v3548 = vsel %vm1000, %v3339, 0
    %v3551 = vsel %vm1000, %v3341, 0
    %v3554 = vsel %vm1000, %v3343, 0
    %v3557 = vsel %vm1000, %v3345, 0
    %v3560 = vsel %vm1000, %v3347, 0
    %v3563 = vsel %vm1000, %v3349, 0
    %v3566 = vsel %vm1000, %v3351, 0
    %v3569 = vsel %vm1000, %v3353, 0
    %v3572 = vsel %vm1000, %v3355, 0
    %v3575 = vsel %vm1000, %v3357, 0
    %v3578 = vsel %vm1000, %v3359, 0
    %v3581 = vsel %vm1000, %v3361, 0
    %v3584 = vsel %vm1000, %v3363, 0
    %v3587 = vsel %vm1000, %v3365, 0
    %v3590 = vsel %vm1000, %v3367, 0
    %3592 = vmatprep.subr.mxu0 0.0
    %3593 = vmatpush1.msra.mxu0 %v2761
    %3594 = vmatprep.subr.mxu0 0.0
    %3595 = vmatpush1.msra.mxu0 %v2766
    %3596 = vmatprep.subr.mxu0 0.0
    %3597 = vmatpush1.msra.mxu0 %v2771
    %3598 = vmatprep.subr.mxu0 0.0
    %3599 = vmatpush1.msra.mxu0 %v2776
    %3600 = vmatprep.subr.mxu0 0.0
    %3601 = vmatpush1.msra.mxu0 %v2781
    %3602 = vmatprep.subr.mxu0 0.0
    %3603 = vmatpush1.msra.mxu0 %v2786
    %3604 = vmatprep.subr.mxu0 0.0
    %3605 = vmatpush1.msra.mxu0 %v2791
    %3606 = vmatprep.subr.mxu0 0.0
    %3607 = vmatpush1.msra.mxu0 %v2796
    %3608 = vmatprep.subr.mxu0 0.0
    %3609 = vmatpush1.msra.mxu0 0.0
    %3610 = vmatprep.subr.mxu0 0.0
    %3611 = vmatpush1.msra.mxu0 0.0
    %3612 = vmatprep.subr.mxu0 0.0
    %3613 = vmatpush1.msra.mxu0 0.0
    %3614 = vmatprep.subr.mxu0 0.0
    %3615 = vmatpush1.msra.mxu0 0.0
    %3616 = vmatprep.subr.mxu0 0.0
    %3617 = vmatpush1.msra.mxu0 0.0
    %3618 = vmatprep.subr.mxu0 0.0
    %3619 = vmatpush1.msra.mxu0 0.0
    %3620 = vmatprep.subr.mxu0 0.0
    %3621 = vmatpush1.msra.mxu0 0.0
    %3622 = vmatprep.subr.mxu0 0.0
    %3623 = vmatpush1.msra.mxu0 0.0
    %3624 = vmatprep.subr.mxu0 0.0
    %3625 = vmatpush1.msra.mxu0 0.0
    %3626 = vmatprep.subr.mxu0 0.0
    %3627 = vmatpush1.msra.mxu0 0.0
    %3628 = vmatprep.subr.mxu0 0.0
    %3629 = vmatpush1.msra.mxu0 0.0
    %3630 = vmatprep.subr.mxu0 0.0
    %3631 = vmatpush1.msra.mxu0 0.0
    %3632 = vmatprep.subr.mxu0 0.0
    %3633 = vmatpush1.msra.mxu0 0.0
    %3634 = vmatprep.subr.mxu0 0.0
    %3635 = vmatpush1.msra.mxu0 0.0
    %3636 = vmatprep.subr.mxu0 0.0
    %3637 = vmatpush1.msra.mxu0 0.0
    %3638 = vmatprep.subr.mxu0 0.0
    %3639 = vmatpush1.msra.mxu0 0.0
    %3640 = vmatprep.subr.mxu0 0.0
    %3641 = vmatpush1.msra.mxu0 0.0
    %3642 = vmatprep.subr.mxu0 0.0
    %3643 = vmatpush1.msra.mxu0 0.0
    %3644 = vmatprep.subr.mxu0 0.0
    %3645 = vmatpush1.msra.mxu0 0.0
    %3646 = vmatprep.subr.mxu0 0.0
    %3647 = vmatpush1.msra.mxu0 0.0
    %3648 = vmatprep.subr.mxu0 0.0
    %3649 = vmatpush1.msra.mxu0 0.0
    %3650 = vmatprep.subr.mxu0 0.0
    %3651 = vmatpush1.msra.mxu0 0.0
    %3652 = vmatprep.subr.mxu0 0.0
    %3653 = vmatpush1.msra.mxu0 0.0
    %3654 = vmatprep.subr.mxu0 0.0
    %3655 = vmatpush1.msra.mxu0 0.0
    %3656 = vmatprep.mubr.f32.mxu0 0.0
    %3657 = vmatmul.mubr.f32.gmra.mrb[0].mxu0 %v3497
    %v3658 = vpop.f32.mrb[0].mxu0
    %v3659 = vadd.f32 0.0, %v3658
    %v3660 = vpop.f32.mrb[0].mxu0
    %3661 = vmatprep.mubr.f32.mxu0 0.0
    %3662 = vmatmul.mubr.f32.gmra.mrb[0].mxu0 %v3500
    %v3663 = vpop.f32.mrb[0].mxu0
    %v3664 = vadd.f32 0.0, %v3663
    %v3665 = vpop.f32.mrb[0].mxu0
    %3666 = vmatprep.mubr.f32.mxu0 0.0
    %3667 = vmatmul.mubr.f32.gmra.mrb[0].mxu0 %v3503
    %v3668 = vpop.f32.mrb[0].mxu0
    %v3669 = vadd.f32 0.0, %v3668
    %v3670 = vpop.f32.mrb[0].mxu0
    %3671 = vmatprep.mubr.f32.mxu0 0.0
    %3672 = vmatmul.mubr.f32.gmra.mrb[0].mxu0 %v3506
    %v3673 = vpop.f32.mrb[0].mxu0
    %v3674 = vadd.f32 0.0, %v3673
    %v3675 = vpop.f32.mrb[0].mxu0
    %3676 = vmatprep.mubr.f32.mxu0 0.0
    %3677 = vmatmul.mubr.f32.gmra.mrb[0].mxu0 %v3509
    %v3678 = vpop.f32.mrb[0].mxu0
    %v3679 = vadd.f32 0.0, %v3678
    %v3680 = vpop.f32.mrb[0].mxu0
    %3681 = vmatprep.mubr.f32.mxu0 0.0
    %3682 = vmatmul.mubr.f32.gmra.mrb[0].mxu0 %v3512
    %v3683 = vpop.f32.mrb[0].mxu0
    %v3684 = vadd.f32 0.0, %v3683
    %v3685 = vpop.f32.mrb[0].mxu0
    %3686 = vmatprep.mubr.f32.mxu0 0.0
    %3687 = vmatmul.mubr.f32.gmra.mrb[0].mxu0 %v3515
    %v3688 = vpop.f32.mrb[0].mxu0
    %v3689 = vadd.f32 0.0, %v3688
    %v3690 = vpop.f32.mrb[0].mxu0
    %3691 = vmatprep.mubr.f32.mxu0 0.0
    %3692 = vmatmul.mubr.f32.gmra.mrb[0].mxu0 %v3518
    %v3693 = vpop.f32.mrb[0].mxu0
    %v3694 = vadd.f32 0.0, %v3693
    %v3695 = vpop.f32.mrb[0].mxu0
    %3696 = vmatprep.mubr.f32.mxu0 0.0
    %3697 = vmatmul.mubr.f32.gmra.mrb[0].mxu0 %v3521
    %v3698 = vpop.f32.mrb[0].mxu0
    %v3699 = vadd.f32 0.0, %v3698
    %v3700 = vpop.f32.mrb[0].mxu0
    %3701 = vmatprep.mubr.f32.mxu0 0.0
    %3702 = vmatmul.mubr.f32.gmra.mrb[0].mxu0 %v3524
    %v3703 = vpop.f32.mrb[0].mxu0
    %v3704 = vadd.f32 0.0, %v3703
    %v3705 = vpop.f32.mrb[0].mxu0
    %3706 = vmatprep.mubr.f32.mxu0 0.0
    %3707 = vmatmul.mubr.f32.gmra.mrb[0].mxu0 %v3527
    %v3708 = vpop.f32.mrb[0].mxu0
    %v3709 = vadd.f32 0.0, %v3708
    %v3710 = vpop.f32.mrb[0].mxu0
    %3711 = vmatprep.mubr.f32.mxu0 0.0
    %3712 = vmatmul.mubr.f32.gmra.mrb[0].mxu0 %v3530
    %v3713 = vpop.f32.mrb[0].mxu0
    %v3714 = vadd.f32 0.0, %v3713
    %v3715 = vpop.f32.mrb[0].mxu0
    %3716 = vmatprep.mubr.f32.mxu0 0.0
    %3717 = vmatmul.mubr.f32.gmra.mrb[0].mxu0 %v3533
    %v3718 = vpop.f32.mrb[0].mxu0
    %v3719 = vadd.f32 0.0, %v3718
    %v3720 = vpop.f32.mrb[0].mxu0
    %3721 = vmatprep.mubr.f32.mxu0 0.0
    %3722 = vmatmul.mubr.f32.gmra.mrb[0].mxu0 %v3536
    %v3723 = vpop.f32.mrb[0].mxu0
    %v3724 = vadd.f32 0.0, %v3723
    %v3725 = vpop.f32.mrb[0].mxu0
    %3726 = vmatprep.mubr.f32.mxu0 0.0
    %3727 = vmatmul.mubr.f32.gmra.mrb[0].mxu0 %v3539
    %v3728 = vpop.f32.mrb[0].mxu0
    %v3729 = vadd.f32 0.0, %v3728
    %v3730 = vpop.f32.mrb[0].mxu0
    %3731 = vmatprep.mubr.f32.mxu0 0.0
    %3732 = vmatmul.mubr.f32.gmra.mrb[0].mxu0 %v3542
    %v3733 = vpop.f32.mrb[0].mxu0
    %v3734 = vadd.f32 0.0, %v3733
    %v3735 = vpop.f32.mrb[0].mxu0
    %3736 = vmatprep.mubr.f32.mxu0 0.0
    %3737 = vmatmul.mubr.f32.gmra.mrb[0].mxu0 %v3545
    %v3738 = vpop.f32.mrb[0].mxu0
    %v3739 = vadd.f32 0.0, %v3738
    %v3740 = vpop.f32.mrb[0].mxu0
    %3741 = vmatprep.mubr.f32.mxu0 0.0
    %3742 = vmatmul.mubr.f32.gmra.mrb[0].mxu0 %v3548
    %v3743 = vpop.f32.mrb[0].mxu0
    %v3744 = vadd.f32 0.0, %v3743
    %v3745 = vpop.f32.mrb[0].mxu0
    %3746 = vmatprep.mubr.f32.mxu0 0.0
    %3747 = vmatmul.mubr.f32.gmra.mrb[0].mxu0 %v3551
    %v3748 = vpop.f32.mrb[0].mxu0
    %v3749 = vadd.f32 0.0, %v3748
    %v3750 = vpop.f32.mrb[0].mxu0
    %3751 = vmatprep.mubr.f32.mxu0 0.0
    %3752 = vmatmul.mubr.f32.gmra.mrb[0].mxu0 %v3554
    %v3753 = vpop.f32.mrb[0].mxu0
    %v3754 = vadd.f32 0.0, %v3753
    %v3755 = vpop.f32.mrb[0].mxu0
    %3756 = vmatprep.mubr.f32.mxu0 0.0
    %3757 = vmatmul.mubr.f32.gmra.mrb[0].mxu0 %v3557
    %v3758 = vpop.f32.mrb[0].mxu0
    %v3759 = vadd.f32 0.0, %v3758
    %v3760 = vpop.f32.mrb[0].mxu0
    %3761 = vmatprep.mubr.f32.mxu0 0.0
    %3762 = vmatmul.mubr.f32.gmra.mrb[0].mxu0 %v3560
    %v3763 = vpop.f32.mrb[0].mxu0
    %v3764 = vadd.f32 0.0, %v3763
    %v3765 = vpop.f32.mrb[0].mxu0
    %3766 = vmatprep.mubr.f32.mxu0 0.0
    %3767 = vmatmul.mubr.f32.gmra.mrb[0].mxu0 %v3563
    %v3768 = vpop.f32.mrb[0].mxu0
    %v3769 = vadd.f32 0.0, %v3768
    %v3770 = vpop.f32.mrb[0].mxu0
    %3771 = vmatprep.mubr.f32.mxu0 0.0
    %3772 = vmatmul.mubr.f32.gmra.mrb[0].mxu0 %v3566
    %v3773 = vpop.f32.mrb[0].mxu0
    %v3774 = vadd.f32 0.0, %v3773
    %v3775 = vpop.f32.mrb[0].mxu0
    %3776 = vmatprep.mubr.f32.mxu0 0.0
    %3777 = vmatmul.mubr.f32.gmra.mrb[0].mxu0 %v3569
    %v3778 = vpop.f32.mrb[0].mxu0
    %v3779 = vadd.f32 0.0, %v3778
    %v3780 = vpop.f32.mrb[0].mxu0
    %3781 = vmatprep.mubr.f32.mxu0 0.0
    %3782 = vmatmul.mubr.f32.gmra.mrb[0].mxu0 %v3572
    %v3783 = vpop.f32.mrb[0].mxu0
    %v3784 = vadd.f32 0.0, %v3783
    %v3785 = vpop.f32.mrb[0].mxu0
    %3786 = vmatprep.mubr.f32.mxu0 0.0
    %3787 = vmatmul.mubr.f32.gmra.mrb[0].mxu0 %v3575
    %v3788 = vpop.f32.mrb[0].mxu0
    %v3789 = vadd.f32 0.0, %v3788
    %v3790 = vpop.f32.mrb[0].mxu0
    %3791 = vmatprep.mubr.f32.mxu0 0.0
    %3792 = vmatmul.mubr.f32.gmra.mrb[0].mxu0 %v3578
    %v3793 = vpop.f32.mrb[0].mxu0
    %v3794 = vadd.f32 0.0, %v3793
    %v3795 = vpop.f32.mrb[0].mxu0
    %3796 = vmatprep.mubr.f32.mxu0 0.0
    %3797 = vmatmul.mubr.f32.gmra.mrb[0].mxu0 %v3581
    %v3798 = vpop.f32.mrb[0].mxu0
    %v3799 = vadd.f32 0.0, %v3798
    %v3800 = vpop.f32.mrb[0].mxu0
    %3801 = vmatprep.mubr.f32.mxu0 0.0
    %3802 = vmatmul.mubr.f32.gmra.mrb[0].mxu0 %v3584
    %v3803 = vpop.f32.mrb[0].mxu0
    %v3804 = vadd.f32 0.0, %v3803
    %v3805 = vpop.f32.mrb[0].mxu0
    %3806 = vmatprep.mubr.f32.mxu0 0.0
    %3807 = vmatmul.mubr.f32.gmra.mrb[0].mxu0 %v3587
    %v3808 = vpop.f32.mrb[0].mxu0
    %v3809 = vadd.f32 0.0, %v3808
    %v3810 = vpop.f32.mrb[0].mxu0
    %3811 = vmatprep.mubr.f32.mxu0 0.0
    %3812 = vmatmul.mubr.f32.gmra.mrb[0].mxu0 %v3590
    %v3813 = vpop.f32.mrb[0].mxu0
    %v3814 = vadd.f32 0.0, %v3813
    %v3815 = vpop.f32.mrb[0].mxu0
    %3816 = vdwg.mxu0
    %v3817 = vmul.f32 %v3659, %v3464
    %v3818 = vmul.f32 %v3664, %v3465
    %v3819 = vmul.f32 %v3669, %v3466
    %v3820 = vmul.f32 %v3674, %v3467
    %v3821 = vmul.f32 %v3679, %v3468
    %v3822 = vmul.f32 %v3684, %v3469
    %v3823 = vmul.f32 %v3689, %v3470
    %v3824 = vmul.f32 %v3694, %v3471
    %v3825 = vmul.f32 %v3699, %v3472
    %v3826 = vmul.f32 %v3704, %v3473
    %v3827 = vmul.f32 %v3709, %v3474
    %v3828 = vmul.f32 %v3714, %v3475
    %v3829 = vmul.f32 %v3719, %v3476
    %v3830 = vmul.f32 %v3724, %v3477
    %v3831 = vmul.f32 %v3729, %v3478
    %v3832 = vmul.f32 %v3734, %v3479
    %v3833 = vmul.f32 %v3739, %v3480
    %v3834 = vmul.f32 %v3744, %v3481
    %v3835 = vmul.f32 %v3749, %v3482
    %v3836 = vmul.f32 %v3754, %v3483
    %v3837 = vmul.f32 %v3759, %v3484
    %v3838 = vmul.f32 %v3764, %v3485
    %v3839 = vmul.f32 %v3769, %v3486
    %v3840 = vmul.f32 %v3774, %v3487
    %v3841 = vmul.f32 %v3779, %v3488
    %v3842 = vmul.f32 %v3784, %v3489
    %v3843 = vmul.f32 %v3789, %v3490
    %v3844 = vmul.f32 %v3794, %v3491
    %v3845 = vmul.f32 %v3799, %v3492
    %v3846 = vmul.f32 %v3804, %v3493
    %v3847 = vmul.f32 %v3809, %v3494
    %v3848 = vmul.f32 %v3814, %v3495
    %v3849 = vmul.f32 %v3817, %v224
    %v3850 = vmul.f32 %v3818, %v225
    %v3851 = vmul.f32 %v3819, %v226
    %v3852 = vmul.f32 %v3820, %v227
    %v3853 = vmul.f32 %v3821, %v228
    %v3854 = vmul.f32 %v3822, %v229
    %v3855 = vmul.f32 %v3823, %v230
    %v3856 = vmul.f32 %v3824, %v231
    %v3857 = vmul.f32 %v3825, %v232
    %v3858 = vmul.f32 %v3826, %v233
    %v3859 = vmul.f32 %v3827, %v234
    %v3860 = vmul.f32 %v3828, %v235
    %v3861 = vmul.f32 %v3829, %v236
    %v3862 = vmul.f32 %v3830, %v237
    %v3863 = vmul.f32 %v3831, %v238
    %v3864 = vmul.f32 %v3832, %v239
    %v3865 = vmul.f32 %v3833, %v240
    %v3866 = vmul.f32 %v3834, %v241
    %v3867 = vmul.f32 %v3835, %v242
    %v3868 = vmul.f32 %v3836, %v243
    %v3869 = vmul.f32 %v3837, %v244
    %v3870 = vmul.f32 %v3838, %v245
    %v3871 = vmul.f32 %v3839, %v246
    %v3872 = vmul.f32 %v3840, %v247
    %v3873 = vmul.f32 %v3841, %v248
    %v3874 = vmul.f32 %v3842, %v249
    %v3875 = vmul.f32 %v3843, %v250
    %v3876 = vmul.f32 %v3844, %v251
    %v3877 = vmul.f32 %v3845, %v252
    %v3878 = vmul.f32 %v3846, %v253
    %v3879 = vmul.f32 %v3847, %v254
    %v3880 = vmul.f32 %v3848, %v255
    %v3881 = vadd.f32 %v3849, %v3857
    %v3882 = vadd.f32 %v3850, %v3858
    %v3883 = vadd.f32 %v3851, %v3859
    %v3884 = vadd.f32 %v3852, %v3860
    %v3885 = vadd.f32 %v3853, %v3861
    %v3886 = vadd.f32 %v3854, %v3862
    %v3887 = vadd.f32 %v3855, %v3863
    %v3888 = vadd.f32 %v3856, %v3864
    %v3889 = vadd.f32 %v3881, %v3865
    %v3890 = vadd.f32 %v3882, %v3866
    %v3891 = vadd.f32 %v3883, %v3867
    %v3892 = vadd.f32 %v3884, %v3868
    %v3893 = vadd.f32 %v3885, %v3869
    %v3894 = vadd.f32 %v3886, %v3870
    %v3895 = vadd.f32 %v3887, %v3871
    %v3896 = vadd.f32 %v3888, %v3872
    %v3897 = vadd.f32 %v3889, %v3873
    %v3898 = vadd.f32 %v3890, %v3874
    %v3899 = vadd.f32 %v3891, %v3875
    %v3900 = vadd.f32 %v3892, %v3876
    %v3901 = vadd.f32 %v3893, %v3877
    %v3902 = vadd.f32 %v3894, %v3878
    %v3903 = vadd.f32 %v3895, %v3879
    %v3904 = vadd.f32 %v3896, %v3880
    %v3905 = vld [vmem:[#allocation2 + $0x400] sm:$0xff]
    %v3906 = vld [vmem:[#allocation2 + $0x408] sm:$0xff]
    %v3907 = vld [vmem:[#allocation2 + $0x410] sm:$0xff]
    %v3908 = vld [vmem:[#allocation2 + $0x418] sm:$0xff]
    %v3909 = vld [vmem:[#allocation2 + $0x420] sm:$0x1]
    %v3910 = vlaneseq
    %v3911 = vshrl.u32 %v3910, 7
    %v3912 = vsub.s32 0, %v3911
    %v3913 = vrot.slane %v3909, %v3912
    %v3915 = vsel %vm265, %v3897, 0
    %v3918 = vsel %vm265, %v3898, 0
    %v3921 = vsel %vm265, %v3899, 0
    %v3924 = vsel %vm265, %v3900, 0
    %v3927 = vsel %vm265, %v3901, 0
    %v3930 = vsel %vm265, %v3902, 0
    %v3933 = vsel %vm265, %v3903, 0
    %v3936 = vsel %vm265, %v3904, 0
    %3938 = vmatprep.subr.mxu0 0.0
    %3939 = vmatpush1.msra.mxu0 %v3905
    %3940 = vmatprep.subr.mxu0 0.0
    %3941 = vmatpush1.msra.mxu0 %v3906
    %3942 = vmatprep.subr.mxu0 0.0
    %3943 = vmatpush1.msra.mxu0 %v3907
    %3944 = vmatprep.subr.mxu0 0.0
    %3945 = vmatpush1.msra.mxu0 %v3908
    %3946 = vmatprep.subr.mxu0 0.0
    %3947 = vmatpush1.msra.mxu0 0.0
    %3948 = vmatprep.subr.mxu0 0.0
    %3949 = vmatpush1.msra.mxu0 0.0
    %3950 = vmatprep.subr.mxu0 0.0
    %3951 = vmatpush1.msra.mxu0 0.0
    %3952 = vmatprep.subr.mxu0 0.0
    %3953 = vmatpush1.msra.mxu0 0.0
    %3954 = vmatprep.subr.mxu0 0.0
    %3955 = vmatpush1.msra.mxu0 0.0
    %3956 = vmatprep.subr.mxu0 0.0
    %3957 = vmatpush1.msra.mxu0 0.0
    %3958 = vmatprep.subr.mxu0 0.0
    %3959 = vmatpush1.msra.mxu0 0.0
    %3960 = vmatprep.subr.mxu0 0.0
    %3961 = vmatpush1.msra.mxu0 0.0
    %3962 = vmatprep.subr.mxu0 0.0
    %3963 = vmatpush1.msra.mxu0 0.0
    %3964 = vmatprep.subr.mxu0 0.0
    %3965 = vmatpush1.msra.mxu0 0.0
    %3966 = vmatprep.subr.mxu0 0.0
    %3967 = vmatpush1.msra.mxu0 0.0
    %3968 = vmatprep.subr.mxu0 0.0
    %3969 = vmatpush1.msra.mxu0 0.0
    %3970 = vmatprep.subr.mxu0 0.0
    %3971 = vmatpush1.msra.mxu0 0.0
    %3972 = vmatprep.subr.mxu0 0.0
    %3973 = vmatpush1.msra.mxu0 0.0
    %3974 = vmatprep.subr.mxu0 0.0
    %3975 = vmatpush1.msra.mxu0 0.0
    %3976 = vmatprep.subr.mxu0 0.0
    %3977 = vmatpush1.msra.mxu0 0.0
    %3978 = vmatprep.subr.mxu0 0.0
    %3979 = vmatpush1.msra.mxu0 0.0
    %3980 = vmatprep.subr.mxu0 0.0
    %3981 = vmatpush1.msra.mxu0 0.0
    %3982 = vmatprep.subr.mxu0 0.0
    %3983 = vmatpush1.msra.mxu0 0.0
    %3984 = vmatprep.subr.mxu0 0.0
    %3985 = vmatpush1.msra.mxu0 0.0
    %3986 = vmatprep.subr.mxu0 0.0
    %3987 = vmatpush1.msra.mxu0 0.0
    %3988 = vmatprep.subr.mxu0 0.0
    %3989 = vmatpush1.msra.mxu0 0.0
    %3990 = vmatprep.subr.mxu0 0.0
    %3991 = vmatpush1.msra.mxu0 0.0
    %3992 = vmatprep.subr.mxu0 0.0
    %3993 = vmatpush1.msra.mxu0 0.0
    %3994 = vmatprep.subr.mxu0 0.0
    %3995 = vmatpush1.msra.mxu0 0.0
    %3996 = vmatprep.subr.mxu0 0.0
    %3997 = vmatpush1.msra.mxu0 0.0
    %3998 = vmatprep.subr.mxu0 0.0
    %3999 = vmatpush1.msra.mxu0 0.0
    %4000 = vmatprep.subr.mxu0 0.0
    %4001 = vmatpush1.msra.mxu0 0.0
    %4002 = vmatprep.mubr.f32.mxu0 0.0
    %4003 = vmatmul.mubr.f32.gmra.mrb[0].mxu0 %v3915
    %v4004 = vpop.f32.mrb[0].mxu0
    %v4005 = vadd.f32 %v3913, %v4004
    %v4006 = vpop.f32.mrb[0].mxu0
    %4007 = vmatprep.mubr.f32.mxu0 0.0
    %4008 = vmatmul.mubr.f32.gmra.mrb[0].mxu0 %v3918
    %v4009 = vpop.f32.mrb[0].mxu0
    %v4010 = vadd.f32 %v3913, %v4009
    %v4011 = vpop.f32.mrb[0].mxu0
    %4012 = vmatprep.mubr.f32.mxu0 0.0
    %4013 = vmatmul.mubr.f32.gmra.mrb[0].mxu0 %v3921
    %v4014 = vpop.f32.mrb[0].mxu0
    %v4015 = vadd.f32 %v3913, %v4014
    %v4016 = vpop.f32.mrb[0].mxu0
    %4017 = vmatprep.mubr.f32.mxu0 0.0
    %4018 = vmatmul.mubr.f32.gmra.mrb[0].mxu0 %v3924
    %v4019 = vpop.f32.mrb[0].mxu0
    %v4020 = vadd.f32 %v3913, %v4019
    %v4021 = vpop.f32.mrb[0].mxu0
    %4022 = vmatprep.mubr.f32.mxu0 0.0
    %4023 = vmatmul.mubr.f32.gmra.mrb[0].mxu0 %v3927
    %v4024 = vpop.f32.mrb[0].mxu0
    %v4025 = vadd.f32 %v3913, %v4024
    %v4026 = vpop.f32.mrb[0].mxu0
    %4027 = vmatprep.mubr.f32.mxu0 0.0
    %4028 = vmatmul.mubr.f32.gmra.mrb[0].mxu0 %v3930
    %v4029 = vpop.f32.mrb[0].mxu0
    %v4030 = vadd.f32 %v3913, %v4029
    %v4031 = vpop.f32.mrb[0].mxu0
    %4032 = vmatprep.mubr.f32.mxu0 0.0
    %4033 = vmatmul.mubr.f32.gmra.mrb[0].mxu0 %v3933
    %v4034 = vpop.f32.mrb[0].mxu0
    %v4035 = vadd.f32 %v3913, %v4034
    %v4036 = vpop.f32.mrb[0].mxu0
    %4037 = vmatprep.mubr.f32.mxu0 0.0
    %4038 = vmatmul.mubr.f32.gmra.mrb[0].mxu0 %v3936
    %v4039 = vpop.f32.mrb[0].mxu0
    %v4040 = vadd.f32 %v3913, %v4039
    %v4041 = vpop.f32.mrb[0].mxu0
    %4042 = vdwg.mxu0
    %v4043 = vadd.f32 %v2425, %v4005
    %v4044 = vadd.f32 %v2426, %v4010
    %v4045 = vadd.f32 %v2427, %v4015
    %v4046 = vadd.f32 %v2428, %v4020
    %v4047 = vadd.f32 %v2429, %v4025
    %v4048 = vadd.f32 %v2430, %v4030
    %v4049 = vadd.f32 %v2431, %v4035
    %v4050 = vadd.f32 %v2432, %v4040
    %v4051 = vld [vmem:[#allocation2 + $0x428] sm:$0x1]
    %v4052 = vld [vmem:[#allocation2 + $0x430] sm:$0x1]
    %v4053 = vsel %vm265, %v4043, 0.0
    %4054 = vadd.xlane.f32.xlu0 %v4053
    %v4055 = vpop.xlane.xlu0 %4054
    %v4056 = vsel %vm265, %v4044, 0.0
    %4057 = vadd.xlane.f32.xlu0 %v4056
    %v4058 = vpop.xlane.xlu0 %4057
    %v4059 = vsel %vm265, %v4045, 0.0
    %4060 = vadd.xlane.f32.xlu0 %v4059
    %v4061 = vpop.xlane.xlu0 %4060
    %v4062 = vsel %vm265, %v4046, 0.0
    %4063 = vadd.xlane.f32.xlu0 %v4062
    %v4064 = vpop.xlane.xlu0 %4063
    %v4065 = vsel %vm265, %v4047, 0.0
    %4066 = vadd.xlane.f32.xlu0 %v4065
    %v4067 = vpop.xlane.xlu0 %4066
    %v4068 = vsel %vm265, %v4048, 0.0
    %4069 = vadd.xlane.f32.xlu0 %v4068
    %v4070 = vpop.xlane.xlu0 %4069
    %v4071 = vsel %vm265, %v4049, 0.0
    %4072 = vadd.xlane.f32.xlu0 %v4071
    %v4073 = vpop.xlane.xlu0 %4072
    %v4074 = vsel %vm265, %v4050, 0.0
    %4075 = vadd.xlane.f32.xlu0 %v4074
    %v4076 = vpop.xlane.xlu0 %4075
    %v4077 = vmul.f32 %v4055, %v1902
    %v4078 = vmul.f32 %v4058, %v1902
    %v4079 = vmul.f32 %v4061, %v1902
    %v4080 = vmul.f32 %v4064, %v1902
    %v4081 = vmul.f32 %v4067, %v1902
    %v4082 = vmul.f32 %v4070, %v1902
    %v4083 = vmul.f32 %v4073, %v1902
    %v4084 = vmul.f32 %v4076, %v1902
    %v4085 = vsub.f32 %v4043, %v4077
    %v4086 = vsub.f32 %v4044, %v4078
    %v4087 = vsub.f32 %v4045, %v4079
    %v4088 = vsub.f32 %v4046, %v4080
    %v4089 = vsub.f32 %v4047, %v4081
    %v4090 = vsub.f32 %v4048, %v4082
    %v4091 = vsub.f32 %v4049, %v4083
    %v4092 = vsub.f32 %v4050, %v4084
    %v4093 = vmul.f32 %v4085, %v4085
    %v4094 = vmul.f32 %v4086, %v4086
    %v4095 = vmul.f32 %v4087, %v4087
    %v4096 = vmul.f32 %v4088, %v4088
    %v4097 = vmul.f32 %v4089, %v4089
    %v4098 = vmul.f32 %v4090, %v4090
    %v4099 = vmul.f32 %v4091, %v4091
    %v4100 = vmul.f32 %v4092, %v4092
    %v4101 = vsel %vm265, %v4093, 0.0
    %4102 = vadd.xlane.f32.xlu0 %v4101
    %v4103 = vpop.xlane.xlu0 %4102
    %v4104 = vsel %vm265, %v4094, 0.0
    %4105 = vadd.xlane.f32.xlu0 %v4104
    %v4106 = vpop.xlane.xlu0 %4105
    %v4107 = vsel %vm265, %v4095, 0.0
    %4108 = vadd.xlane.f32.xlu0 %v4107
    %v4109 = vpop.xlane.xlu0 %4108
    %v4110 = vsel %vm265, %v4096, 0.0
    %4111 = vadd.xlane.f32.xlu0 %v4110
    %v4112 = vpop.xlane.xlu0 %4111
    %v4113 = vsel %vm265, %v4097, 0.0
    %4114 = vadd.xlane.f32.xlu0 %v4113
    %v4115 = vpop.xlane.xlu0 %4114
    %v4116 = vsel %vm265, %v4098, 0.0
    %4117 = vadd.xlane.f32.xlu0 %v4116
    %v4118 = vpop.xlane.xlu0 %4117
    %v4119 = vsel %vm265, %v4099, 0.0
    %4120 = vadd.xlane.f32.xlu0 %v4119
    %v4121 = vpop.xlane.xlu0 %4120
    %v4122 = vsel %vm265, %v4100, 0.0
    %4123 = vadd.xlane.f32.xlu0 %v4122
    %v4124 = vpop.xlane.xlu0 %4123
    %v4125 = vmul.f32 %v4103, %v1902
    %v4126 = vmul.f32 %v4106, %v1902
    %v4127 = vmul.f32 %v4109, %v1902
    %v4128 = vmul.f32 %v4112, %v1902
    %v4129 = vmul.f32 %v4115, %v1902
    %v4130 = vmul.f32 %v4118, %v1902
    %v4131 = vmul.f32 %v4121, %v1902
    %v4132 = vmul.f32 %v4124, %v1902
    %v4133 = vadd.f32 %v4125, 1e-05
    %v4134 = vadd.f32 %v4126, 1e-05
    %v4135 = vadd.f32 %v4127, 1e-05
    %v4136 = vadd.f32 %v4128, 1e-05
    %v4137 = vadd.f32 %v4129, 1e-05
    %v4138 = vadd.f32 %v4130, 1e-05
    %v4139 = vadd.f32 %v4131, 1e-05
    %v4140 = vadd.f32 %v4132, 1e-05
    %v4141 = vrsqrt.pop %v4133
    %v4142 = vrsqrt.pop %v4134
    %v4143 = vrsqrt.pop %v4135
    %v4144 = vrsqrt.pop %v4136
    %v4145 = vrsqrt.pop %v4137
    %v4146 = vrsqrt.pop %v4138
    %v4147 = vrsqrt.pop %v4139
    %v4148 = vrsqrt.pop %v4140
    %v4149 = vmul.f32 %v4085, %v4141
    %v4150 = vmul.f32 %v4086, %v4142
    %v4151 = vmul.f32 %v4087, %v4143
    %v4152 = vmul.f32 %v4088, %v4144
    %v4153 = vmul.f32 %v4089, %v4145
    %v4154 = vmul.f32 %v4090, %v4146
    %v4155 = vmul.f32 %v4091, %v4147
    %v4156 = vmul.f32 %v4092, %v4148
    %v4157 = vlaneseq
    %v4158 = vshrl.u32 %v4157, 7
    %v4159 = vsub.s32 0, %v4158
    %v4160 = vrot.slane %v4051, %v4159
    %v4161 = vmul.f32 %v4149, %v4160
    %v4162 = vmul.f32 %v4150, %v4160
    %v4163 = vmul.f32 %v4151, %v4160
    %v4164 = vmul.f32 %v4152, %v4160
    %v4165 = vmul.f32 %v4153, %v4160
    %v4166 = vmul.f32 %v4154, %v4160
    %v4167 = vmul.f32 %v4155, %v4160
    %v4168 = vmul.f32 %v4156, %v4160
    %v4169 = vlaneseq
    %v4170 = vshrl.u32 %v4169, 7
    %v4171 = vsub.s32 0, %v4170
    %v4172 = vrot.slane %v4052, %v4171
    %v4173 = vadd.f32 %v4161, %v4172
    %v4174 = vadd.f32 %v4162, %v4172
    %v4175 = vadd.f32 %v4163, %v4172
    %v4176 = vadd.f32 %v4164, %v4172
    %v4177 = vadd.f32 %v4165, %v4172
    %v4178 = vadd.f32 %v4166, %v4172
    %v4179 = vadd.f32 %v4167, %v4172
    %v4180 = vadd.f32 %v4168, %v4172
    %v4181 = vld [vmem:[#allocation2 + $0x438] sm:$0xff]
    %v4182 = vld [vmem:[#allocation2 + $0x440] sm:$0xff]
    %v4183 = vld [vmem:[#allocation2 + $0x448] sm:$0xff]
    %v4184 = vld [vmem:[#allocation2 + $0x450] sm:$0xff]
    %v4185 = vld [vmem:[#allocation2 + $0x458] sm:$0x1]
    %v4186 = vlaneseq
    %v4187 = vshrl.u32 %v4186, 7
    %v4188 = vsub.s32 0, %v4187
    %v4189 = vrot.slane %v4185, %v4188
    %v4191 = vsel %vm265, %v4173, 0
    %v4194 = vsel %vm265, %v4174, 0
    %v4197 = vsel %vm265, %v4175, 0
    %v4200 = vsel %vm265, %v4176, 0
    %v4203 = vsel %vm265, %v4177, 0
    %v4206 = vsel %vm265, %v4178, 0
    %v4209 = vsel %vm265, %v4179, 0
    %v4212 = vsel %vm265, %v4180, 0
    %4214 = vmatprep.subr.mxu0 0.0
    %4215 = vmatpush1.msra.mxu0 %v4181
    %4216 = vmatprep.subr.mxu0 0.0
    %4217 = vmatpush1.msra.mxu0 %v4182
    %4218 = vmatprep.subr.mxu0 0.0
    %4219 = vmatpush1.msra.mxu0 %v4183
    %4220 = vmatprep.subr.mxu0 0.0
    %4221 = vmatpush1.msra.mxu0 %v4184
    %4222 = vmatprep.subr.mxu0 0.0
    %4223 = vmatpush1.msra.mxu0 0.0
    %4224 = vmatprep.subr.mxu0 0.0
    %4225 = vmatpush1.msra.mxu0 0.0
    %4226 = vmatprep.subr.mxu0 0.0
    %4227 = vmatpush1.msra.mxu0 0.0
    %4228 = vmatprep.subr.mxu0 0.0
    %4229 = vmatpush1.msra.mxu0 0.0
    %4230 = vmatprep.subr.mxu0 0.0
    %4231 = vmatpush1.msra.mxu0 0.0
    %4232 = vmatprep.subr.mxu0 0.0
    %4233 = vmatpush1.msra.mxu0 0.0
    %4234 = vmatprep.subr.mxu0 0.0
    %4235 = vmatpush1.msra.mxu0 0.0
    %4236 = vmatprep.subr.mxu0 0.0
    %4237 = vmatpush1.msra.mxu0 0.0
    %4238 = vmatprep.subr.mxu0 0.0
    %4239 = vmatpush1.msra.mxu0 0.0
    %4240 = vmatprep.subr.mxu0 0.0
    %4241 = vmatpush1.msra.mxu0 0.0
    %4242 = vmatprep.subr.mxu0 0.0
    %4243 = vmatpush1.msra.mxu0 0.0
    %4244 = vmatprep.subr.mxu0 0.0
    %4245 = vmatpush1.msra.mxu0 0.0
    %4246 = vmatprep.subr.mxu0 0.0
    %4247 = vmatpush1.msra.mxu0 0.0
    %4248 = vmatprep.subr.mxu0 0.0
    %4249 = vmatpush1.msra.mxu0 0.0
    %4250 = vmatprep.subr.mxu0 0.0
    %4251 = vmatpush1.msra.mxu0 0.0
    %4252 = vmatprep.subr.mxu0 0.0
    %4253 = vmatpush1.msra.mxu0 0.0
    %4254 = vmatprep.subr.mxu0 0.0
    %4255 = vmatpush1.msra.mxu0 0.0
    %4256 = vmatprep.subr.mxu0 0.0
    %4257 = vmatpush1.msra.mxu0 0.0
    %4258 = vmatprep.subr.mxu0 0.0
    %4259 = vmatpush1.msra.mxu0 0.0
    %4260 = vmatprep.subr.mxu0 0.0
    %4261 = vmatpush1.msra.mxu0 0.0
    %4262 = vmatprep.subr.mxu0 0.0
    %4263 = vmatpush1.msra.mxu0 0.0
    %4264 = vmatprep.subr.mxu0 0.0
    %4265 = vmatpush1.msra.mxu0 0.0
    %4266 = vmatprep.subr.mxu0 0.0
    %4267 = vmatpush1.msra.mxu0 0.0
    %4268 = vmatprep.subr.mxu0 0.0
    %4269 = vmatpush1.msra.mxu0 0.0
    %4270 = vmatprep.subr.mxu0 0.0
    %4271 = vmatpush1.msra.mxu0 0.0
    %4272 = vmatprep.subr.mxu0 0.0
    %4273 = vmatpush1.msra.mxu0 0.0
    %4274 = vmatprep.subr.mxu0 0.0
    %4275 = vmatpush1.msra.mxu0 0.0
    %4276 = vmatprep.subr.mxu0 0.0
    %4277 = vmatpush1.msra.mxu0 0.0
    %4278 = vmatprep.mubr.f32.mxu0 0.0
    %4279 = vmatmul.mubr.f32.gmra.mrb[0].mxu0 %v4191
    %v4280 = vpop.f32.mrb[0].mxu0
    %v4281 = vadd.f32 %v4189, %v4280
    %v4282 = vpop.f32.mrb[0].mxu0
    %4283 = vmatprep.mubr.f32.mxu0 0.0
    %4284 = vmatmul.mubr.f32.gmra.mrb[0].mxu0 %v4194
    %v4285 = vpop.f32.mrb[0].mxu0
    %v4286 = vadd.f32 %v4189, %v4285
    %v4287 = vpop.f32.mrb[0].mxu0
    %4288 = vmatprep.mubr.f32.mxu0 0.0
    %4289 = vmatmul.mubr.f32.gmra.mrb[0].mxu0 %v4197
    %v4290 = vpop.f32.mrb[0].mxu0
    %v4291 = vadd.f32 %v4189, %v4290
    %v4292 = vpop.f32.mrb[0].mxu0
    %4293 = vmatprep.mubr.f32.mxu0 0.0
    %4294 = vmatmul.mubr.f32.gmra.mrb[0].mxu0 %v4200
    %v4295 = vpop.f32.mrb[0].mxu0
    %v4296 = vadd.f32 %v4189, %v4295
    %v4297 = vpop.f32.mrb[0].mxu0
    %4298 = vmatprep.mubr.f32.mxu0 0.0
    %4299 = vmatmul.mubr.f32.gmra.mrb[0].mxu0 %v4203
    %v4300 = vpop.f32.mrb[0].mxu0
    %v4301 = vadd.f32 %v4189, %v4300
    %v4302 = vpop.f32.mrb[0].mxu0
    %4303 = vmatprep.mubr.f32.mxu0 0.0
    %4304 = vmatmul.mubr.f32.gmra.mrb[0].mxu0 %v4206
    %v4305 = vpop.f32.mrb[0].mxu0
    %v4306 = vadd.f32 %v4189, %v4305
    %v4307 = vpop.f32.mrb[0].mxu0
    %4308 = vmatprep.mubr.f32.mxu0 0.0
    %4309 = vmatmul.mubr.f32.gmra.mrb[0].mxu0 %v4209
    %v4310 = vpop.f32.mrb[0].mxu0
    %v4311 = vadd.f32 %v4189, %v4310
    %v4312 = vpop.f32.mrb[0].mxu0
    %4313 = vmatprep.mubr.f32.mxu0 0.0
    %4314 = vmatmul.mubr.f32.gmra.mrb[0].mxu0 %v4212
    %v4315 = vpop.f32.mrb[0].mxu0
    %v4316 = vadd.f32 %v4189, %v4315
    %v4317 = vpop.f32.mrb[0].mxu0
    %4318 = vdwg.mxu0
    %v4319 = vmax.f32 %v4281, 0.0
    %v4320 = vmax.f32 %v4286, 0.0
    %v4321 = vmax.f32 %v4291, 0.0
    %v4322 = vmax.f32 %v4296, 0.0
    %v4323 = vmax.f32 %v4301, 0.0
    %v4324 = vmax.f32 %v4306, 0.0
    %v4325 = vmax.f32 %v4311, 0.0
    %v4326 = vmax.f32 %v4316, 0.0
    %v4327 = vld [vmem:[#allocation2 + $0x460] sm:$0xff]
    %v4328 = vld [vmem:[#allocation2 + $0x468] sm:$0xff]
    %v4329 = vld [vmem:[#allocation2 + $0x470] sm:$0xff]
    %v4330 = vld [vmem:[#allocation2 + $0x478] sm:$0xff]
    %v4331 = vld [vmem:[#allocation2 + $0x480] sm:$0xff]
    %v4332 = vld [vmem:[#allocation2 + $0x488] sm:$0xff]
    %v4333 = vld [vmem:[#allocation2 + $0x490] sm:$0xff]
    %v4334 = vld [vmem:[#allocation2 + $0x498] sm:$0xff]
    %v4335 = vld [vmem:[#allocation2 + $0x4a0] sm:$0x1]
    %v4336 = vlaneseq
    %v4337 = vshrl.u32 %v4336, 7
    %v4338 = vsub.s32 0, %v4337
    %v4339 = vrot.slane %v4335, %v4338
    %v4341 = vsel %vm1000, %v4319, 0
    %v4344 = vsel %vm1000, %v4320, 0
    %v4347 = vsel %vm1000, %v4321, 0
    %v4350 = vsel %vm1000, %v4322, 0
    %v4353 = vsel %vm1000, %v4323, 0
    %v4356 = vsel %vm1000, %v4324, 0
    %v4359 = vsel %vm1000, %v4325, 0
    %v4362 = vsel %vm1000, %v4326, 0
    %4364 = vmatprep.subr.mxu0 0.0
    %4365 = vmatpush1.msra.mxu0 %v4327
    %4366 = vmatprep.subr.mxu0 0.0
    %4367 = vmatpush1.msra.mxu0 %v4328
    %4368 = vmatprep.subr.mxu0 0.0
    %4369 = vmatpush1.msra.mxu0 %v4329
    %4370 = vmatprep.subr.mxu0 0.0
    %4371 = vmatpush1.msra.mxu0 %v4330
    %4372 = vmatprep.subr.mxu0 0.0
    %4373 = vmatpush1.msra.mxu0 %v4331
    %4374 = vmatprep.subr.mxu0 0.0
    %4375 = vmatpush1.msra.mxu0 %v4332
    %4376 = vmatprep.subr.mxu0 0.0
    %4377 = vmatpush1.msra.mxu0 %v4333
    %4378 = vmatprep.subr.mxu0 0.0
    %4379 = vmatpush1.msra.mxu0 %v4334
    %4380 = vmatprep.subr.mxu0 0.0
    %4381 = vmatpush1.msra.mxu0 0.0
    %4382 = vmatprep.subr.mxu0 0.0
    %4383 = vmatpush1.msra.mxu0 0.0
    %4384 = vmatprep.subr.mxu0 0.0
    %4385 = vmatpush1.msra.mxu0 0.0
    %4386 = vmatprep.subr.mxu0 0.0
    %4387 = vmatpush1.msra.mxu0 0.0
    %4388 = vmatprep.subr.mxu0 0.0
    %4389 = vmatpush1.msra.mxu0 0.0
    %4390 = vmatprep.subr.mxu0 0.0
    %4391 = vmatpush1.msra.mxu0 0.0
    %4392 = vmatprep.subr.mxu0 0.0
    %4393 = vmatpush1.msra.mxu0 0.0
    %4394 = vmatprep.subr.mxu0 0.0
    %4395 = vmatpush1.msra.mxu0 0.0
    %4396 = vmatprep.subr.mxu0 0.0
    %4397 = vmatpush1.msra.mxu0 0.0
    %4398 = vmatprep.subr.mxu0 0.0
    %4399 = vmatpush1.msra.mxu0 0.0
    %4400 = vmatprep.subr.mxu0 0.0
    %4401 = vmatpush1.msra.mxu0 0.0
    %4402 = vmatprep.subr.mxu0 0.0
    %4403 = vmatpush1.msra.mxu0 0.0
    %4404 = vmatprep.subr.mxu0 0.0
    %4405 = vmatpush1.msra.mxu0 0.0
    %4406 = vmatprep.subr.mxu0 0.0
    %4407 = vmatpush1.msra.mxu0 0.0
    %4408 = vmatprep.subr.mxu0 0.0
    %4409 = vmatpush1.msra.mxu0 0.0
    %4410 = vmatprep.subr.mxu0 0.0
    %4411 = vmatpush1.msra.mxu0 0.0
    %4412 = vmatprep.subr.mxu0 0.0
    %4413 = vmatpush1.msra.mxu0 0.0
    %4414 = vmatprep.subr.mxu0 0.0
    %4415 = vmatpush1.msra.mxu0 0.0
    %4416 = vmatprep.subr.mxu0 0.0
    %4417 = vmatpush1.msra.mxu0 0.0
    %4418 = vmatprep.subr.mxu0 0.0
    %4419 = vmatpush1.msra.mxu0 0.0
    %4420 = vmatprep.subr.mxu0 0.0
    %4421 = vmatpush1.msra.mxu0 0.0
    %4422 = vmatprep.subr.mxu0 0.0
    %4423 = vmatpush1.msra.mxu0 0.0
    %4424 = vmatprep.subr.mxu0 0.0
    %4425 = vmatpush1.msra.mxu0 0.0
    %4426 = vmatprep.subr.mxu0 0.0
    %4427 = vmatpush1.msra.mxu0 0.0
    %4428 = vmatprep.mubr.f32.mxu0 0.0
    %4429 = vmatmul.mubr.f32.gmra.mrb[0].mxu0 %v4341
    %v4430 = vpop.f32.mrb[0].mxu0
    %v4431 = vadd.f32 %v4339, %v4430
    %v4432 = vpop.f32.mrb[0].mxu0
    %4433 = vmatprep.mubr.f32.mxu0 0.0
    %4434 = vmatmul.mubr.f32.gmra.mrb[0].mxu0 %v4344
    %v4435 = vpop.f32.mrb[0].mxu0
    %v4436 = vadd.f32 %v4339, %v4435
    %v4437 = vpop.f32.mrb[0].mxu0
    %4438 = vmatprep.mubr.f32.mxu0 0.0
    %4439 = vmatmul.mubr.f32.gmra.mrb[0].mxu0 %v4347
    %v4440 = vpop.f32.mrb[0].mxu0
    %v4441 = vadd.f32 %v4339, %v4440
    %v4442 = vpop.f32.mrb[0].mxu0
    %4443 = vmatprep.mubr.f32.mxu0 0.0
    %4444 = vmatmul.mubr.f32.gmra.mrb[0].mxu0 %v4350
    %v4445 = vpop.f32.mrb[0].mxu0
    %v4446 = vadd.f32 %v4339, %v4445
    %v4447 = vpop.f32.mrb[0].mxu0
    %4448 = vmatprep.mubr.f32.mxu0 0.0
    %4449 = vmatmul.mubr.f32.gmra.mrb[0].mxu0 %v4353
    %v4450 = vpop.f32.mrb[0].mxu0
    %v4451 = vadd.f32 %v4339, %v4450
    %v4452 = vpop.f32.mrb[0].mxu0
    %4453 = vmatprep.mubr.f32.mxu0 0.0
    %4454 = vmatmul.mubr.f32.gmra.mrb[0].mxu0 %v4356
    %v4455 = vpop.f32.mrb[0].mxu0
    %v4456 = vadd.f32 %v4339, %v4455
    %v4457 = vpop.f32.mrb[0].mxu0
    %4458 = vmatprep.mubr.f32.mxu0 0.0
    %4459 = vmatmul.mubr.f32.gmra.mrb[0].mxu0 %v4359
    %v4460 = vpop.f32.mrb[0].mxu0
    %v4461 = vadd.f32 %v4339, %v4460
    %v4462 = vpop.f32.mrb[0].mxu0
    %4463 = vmatprep.mubr.f32.mxu0 0.0
    %4464 = vmatmul.mubr.f32.gmra.mrb[0].mxu0 %v4362
    %v4465 = vpop.f32.mrb[0].mxu0
    %v4466 = vadd.f32 %v4339, %v4465
    %v4467 = vpop.f32.mrb[0].mxu0
    %4468 = vdwg.mxu0
    %v4469 = vadd.f32 %v4173, %v4431
    %v4470 = vadd.f32 %v4174, %v4436
    %v4471 = vadd.f32 %v4175, %v4441
    %v4472 = vadd.f32 %v4176, %v4446
    %v4473 = vadd.f32 %v4177, %v4451
    %v4474 = vadd.f32 %v4178, %v4456
    %v4475 = vadd.f32 %v4179, %v4461
    %v4476 = vadd.f32 %v4180, %v4466
    %v4477 = vld [vmem:[#allocation2 + $0x4a8] sm:$0x1]
    %v4478 = vld [vmem:[#allocation2 + $0x4b0] sm:$0x1]
    %v4479 = vsel %vm265, %v4469, 0.0
    %4480 = vadd.xlane.f32.xlu0 %v4479
    %v4481 = vpop.xlane.xlu0 %4480
    %v4482 = vsel %vm265, %v4470, 0.0
    %4483 = vadd.xlane.f32.xlu0 %v4482
    %v4484 = vpop.xlane.xlu0 %4483
    %v4485 = vsel %vm265, %v4471, 0.0
    %4486 = vadd.xlane.f32.xlu0 %v4485
    %v4487 = vpop.xlane.xlu0 %4486
    %v4488 = vsel %vm265, %v4472, 0.0
    %4489 = vadd.xlane.f32.xlu0 %v4488
    %v4490 = vpop.xlane.xlu0 %4489
    %v4491 = vsel %vm265, %v4473, 0.0
    %4492 = vadd.xlane.f32.xlu0 %v4491
    %v4493 = vpop.xlane.xlu0 %4492
    %v4494 = vsel %vm265, %v4474, 0.0
    %4495 = vadd.xlane.f32.xlu0 %v4494
    %v4496 = vpop.xlane.xlu0 %4495
    %v4497 = vsel %vm265, %v4475, 0.0
    %4498 = vadd.xlane.f32.xlu0 %v4497
    %v4499 = vpop.xlane.xlu0 %4498
    %v4500 = vsel %vm265, %v4476, 0.0
    %4501 = vadd.xlane.f32.xlu0 %v4500
    %v4502 = vpop.xlane.xlu0 %4501
    %v4503 = vmul.f32 %v4481, %v1902
    %v4504 = vmul.f32 %v4484, %v1902
    %v4505 = vmul.f32 %v4487, %v1902
    %v4506 = vmul.f32 %v4490, %v1902
    %v4507 = vmul.f32 %v4493, %v1902
    %v4508 = vmul.f32 %v4496, %v1902
    %v4509 = vmul.f32 %v4499, %v1902
    %v4510 = vmul.f32 %v4502, %v1902
    %v4511 = vsub.f32 %v4469, %v4503
    %v4512 = vsub.f32 %v4470, %v4504
    %v4513 = vsub.f32 %v4471, %v4505
    %v4514 = vsub.f32 %v4472, %v4506
    %v4515 = vsub.f32 %v4473, %v4507
    %v4516 = vsub.f32 %v4474, %v4508
    %v4517 = vsub.f32 %v4475, %v4509
    %v4518 = vsub.f32 %v4476, %v4510
    %v4519 = vmul.f32 %v4511, %v4511
    %v4520 = vmul.f32 %v4512, %v4512
    %v4521 = vmul.f32 %v4513, %v4513
    %v4522 = vmul.f32 %v4514, %v4514
    %v4523 = vmul.f32 %v4515, %v4515
    %v4524 = vmul.f32 %v4516, %v4516
    %v4525 = vmul.f32 %v4517, %v4517
    %v4526 = vmul.f32 %v4518, %v4518
    %v4527 = vsel %vm265, %v4519, 0.0
    %4528 = vadd.xlane.f32.xlu0 %v4527
    %v4529 = vpop.xlane.xlu0 %4528
    %v4530 = vsel %vm265, %v4520, 0.0
    %4531 = vadd.xlane.f32.xlu0 %v4530
    %v4532 = vpop.xlane.xlu0 %4531
    %v4533 = vsel %vm265, %v4521, 0.0
    %4534 = vadd.xlane.f32.xlu0 %v4533
    %v4535 = vpop.xlane.xlu0 %4534
    %v4536 = vsel %vm265, %v4522, 0.0
    %4537 = vadd.xlane.f32.xlu0 %v4536
    %v4538 = vpop.xlane.xlu0 %4537
    %v4539 = vsel %vm265, %v4523, 0.0
    %4540 = vadd.xlane.f32.xlu0 %v4539
    %v4541 = vpop.xlane.xlu0 %4540
    %v4542 = vsel %vm265, %v4524, 0.0
    %4543 = vadd.xlane.f32.xlu0 %v4542
    %v4544 = vpop.xlane.xlu0 %4543
    %v4545 = vsel %vm265, %v4525, 0.0
    %4546 = vadd.xlane.f32.xlu0 %v4545
    %v4547 = vpop.xlane.xlu0 %4546
    %v4548 = vsel %vm265, %v4526, 0.0
    %4549 = vadd.xlane.f32.xlu0 %v4548
    %v4550 = vpop.xlane.xlu0 %4549
    %v4551 = vmul.f32 %v4529, %v1902
    %v4552 = vmul.f32 %v4532, %v1902
    %v4553 = vmul.f32 %v4535, %v1902
    %v4554 = vmul.f32 %v4538, %v1902
    %v4555 = vmul.f32 %v4541, %v1902
    %v4556 = vmul.f32 %v4544, %v1902
    %v4557 = vmul.f32 %v4547, %v1902
    %v4558 = vmul.f32 %v4550, %v1902
    %v4559 = vadd.f32 %v4551, 1e-05
    %v4560 = vadd.f32 %v4552, 1e-05
    %v4561 = vadd.f32 %v4553, 1e-05
    %v4562 = vadd.f32 %v4554, 1e-05
    %v4563 = vadd.f32 %v4555, 1e-05
    %v4564 = vadd.f32 %v4556, 1e-05
    %v4565 = vadd.f32 %v4557, 1e-05
    %v4566 = vadd.f32 %v4558, 1e-05
    %v4567 = vrsqrt.pop %v4559
    %v4568 = vrsqrt.pop %v4560
    %v4569 = vrsqrt.pop %v4561
    %v4570 = vrsqrt.pop %v4562
    %v4571 = vrsqrt.pop %v4563
    %v4572 = vrsqrt.pop %v4564
    %v4573 = vrsqrt.pop %v4565
    %v4574 = vrsqrt.pop %v4566
    %v4575 = vmul.f32 %v4511, %v4567
    %v4576 = vmul.f32 %v4512, %v4568
    %v4577 = vmul.f32 %v4513, %v4569
    %v4578 = vmul.f32 %v4514, %v4570
    %v4579 = vmul.f32 %v4515, %v4571
    %v4580 = vmul.f32 %v4516, %v4572
    %v4581 = vmul.f32 %v4517, %v4573
    %v4582 = vmul.f32 %v4518, %v4574
    %v4583 = vlaneseq
    %v4584 = vshrl.u32 %v4583, 7
    %v4585 = vsub.s32 0, %v4584
    %v4586 = vrot.slane %v4477, %v4585
    %v4587 = vmul.f32 %v4575, %v4586
    %v4588 = vmul.f32 %v4576, %v4586
    %v4589 = vmul.f32 %v4577, %v4586
    %v4590 = vmul.f32 %v4578, %v4586
    %v4591 = vmul.f32 %v4579, %v4586
    %v4592 = vmul.f32 %v4580, %v4586
    %v4593 = vmul.f32 %v4581, %v4586
    %v4594 = vmul.f32 %v4582, %v4586
    %v4595 = vlaneseq
    %v4596 = vshrl.u32 %v4595, 7
    %v4597 = vsub.s32 0, %v4596
    %v4598 = vrot.slane %v4478, %v4597
    %v4599 = vadd.f32 %v4587, %v4598
    %v4600 = vadd.f32 %v4588, %v4598
    %v4601 = vadd.f32 %v4589, %v4598
    %v4602 = vadd.f32 %v4590, %v4598
    %v4603 = vadd.f32 %v4591, %v4598
    %v4604 = vadd.f32 %v4592, %v4598
    %v4605 = vadd.f32 %v4593, %v4598
    %v4606 = vadd.f32 %v4594, %v4598
    %v4607 = vadd.f32 %v4599, %v176
    %v4608 = vadd.f32 %v4600, %v177
    %v4609 = vadd.f32 %v4601, %v178
    %v4610 = vadd.f32 %v4602, %v179
    %v4611 = vadd.f32 %v4603, %v180
    %v4612 = vadd.f32 %v4604, %v181
    %v4613 = vadd.f32 %v4605, %v182
    %v4614 = vadd.f32 %v4606, %v183
    %v4615 = vld [vmem:[#allocation2 + $0x250] sm:$0xff]
    %v4616 = vld [vmem:[%s1] sm:$0xff]
    %v4617 = vld [vmem:[#allocation2 + $0x4b8] sm:$0x3]
    %vm4618 = vcmask 15360
    %v4620 = vsel %vm4618, %v4616, 0
    %vm4622 = vcmask 1041408
    %v4624 = vsel %vm4622, %v4617, 0
    %4626 = vmatprep.subr.mxu0 0.0
    %4627 = vmatpush1.msra.mxu0 %v4624
    %4628 = vmatprep.subr.mxu0 0.0
    %4629 = vmatpush1.msra.mxu0 0.0
    %4630 = vmatprep.subr.mxu0 0.0
    %4631 = vmatpush1.msra.mxu0 0.0
    %4632 = vmatprep.subr.mxu0 0.0
    %4633 = vmatpush1.msra.mxu0 0.0
    %4634 = vmatprep.subr.mxu0 0.0
    %4635 = vmatpush1.msra.mxu0 0.0
    %4636 = vmatprep.subr.mxu0 0.0
    %4637 = vmatpush1.msra.mxu0 0.0
    %4638 = vmatprep.subr.mxu0 0.0
    %4639 = vmatpush1.msra.mxu0 0.0
    %4640 = vmatprep.subr.mxu0 0.0
    %4641 = vmatpush1.msra.mxu0 0.0
    %4642 = vmatprep.subr.mxu0 0.0
    %4643 = vmatpush1.msra.mxu0 0.0
    %4644 = vmatprep.subr.mxu0 0.0
    %4645 = vmatpush1.msra.mxu0 0.0
    %4646 = vmatprep.subr.mxu0 0.0
    %4647 = vmatpush1.msra.mxu0 0.0
    %4648 = vmatprep.subr.mxu0 0.0
    %4649 = vmatpush1.msra.mxu0 0.0
    %4650 = vmatprep.subr.mxu0 0.0
    %4651 = vmatpush1.msra.mxu0 0.0
    %4652 = vmatprep.subr.mxu0 0.0
    %4653 = vmatpush1.msra.mxu0 0.0
    %4654 = vmatprep.subr.mxu0 0.0
    %4655 = vmatpush1.msra.mxu0 0.0
    %4656 = vmatprep.subr.mxu0 0.0
    %4657 = vmatpush1.msra.mxu0 0.0
    %4658 = vmatprep.subr.mxu0 0.0
    %4659 = vmatpush1.msra.mxu0 0.0
    %4660 = vmatprep.subr.mxu0 0.0
    %4661 = vmatpush1.msra.mxu0 0.0
    %4662 = vmatprep.subr.mxu0 0.0
    %4663 = vmatpush1.msra.mxu0 0.0
    %4664 = vmatprep.subr.mxu0 0.0
    %4665 = vmatpush1.msra.mxu0 0.0
    %4666 = vmatprep.subr.mxu0 0.0
    %4667 = vmatpush1.msra.mxu0 0.0
    %4668 = vmatprep.subr.mxu0 0.0
    %4669 = vmatpush1.msra.mxu0 0.0
    %4670 = vmatprep.subr.mxu0 0.0
    %4671 = vmatpush1.msra.mxu0 0.0
    %4672 = vmatprep.subr.mxu0 0.0
    %4673 = vmatpush1.msra.mxu0 0.0
    %4674 = vmatprep.subr.mxu0 0.0
    %4675 = vmatpush1.msra.mxu0 0.0
    %4676 = vmatprep.subr.mxu0 0.0
    %4677 = vmatpush1.msra.mxu0 0.0
    %4678 = vmatprep.subr.mxu0 0.0
    %4679 = vmatpush1.msra.mxu0 0.0
    %4680 = vmatprep.subr.mxu0 0.0
    %4681 = vmatpush1.msra.mxu0 0.0
    %4682 = vmatprep.subr.mxu0 0.0
    %4683 = vmatpush1.msra.mxu0 0.0
    %4684 = vmatprep.subr.mxu0 0.0
    %4685 = vmatpush1.msra.mxu0 0.0
    %4686 = vmatprep.subr.mxu0 0.0
    %4687 = vmatpush1.msra.mxu0 0.0
    %4688 = vmatprep.subr.mxu0 0.0
    %4689 = vmatpush1.msra.mxu0 0.0
    %4690 = vmatprep.mubr.f32.mxu0 0.0
    %4691 = vmatmul.mubr.f32.gmra.mrb[0].mxu0 %v4620
    %v4692 = vpop.f32.mrb[0].mxu0
    %v4693 = vadd.f32 0.0, %v4692
    %v4694 = vpop.f32.mrb[0].mxu0
    %4695 = vdwg.mxu0
    %v4697 = vsel %vm1000, %v4615, 0
    %4699 = vmatprep.subr.mxu0 0.0
    %4700 = vmatpush1.msra.mxu0 %v4607
    %4701 = vmatprep.subr.mxu0 0.0
    %4702 = vmatpush1.msra.mxu0 %v4608
    %4703 = vmatprep.subr.mxu0 0.0
    %4704 = vmatpush1.msra.mxu0 %v4609
    %4705 = vmatprep.subr.mxu0 0.0
    %4706 = vmatpush1.msra.mxu0 %v4610
    %4707 = vmatprep.subr.mxu0 0.0
    %4708 = vmatpush1.msra.mxu0 %v4611
    %4709 = vmatprep.subr.mxu0 0.0
    %4710 = vmatpush1.msra.mxu0 %v4612
    %4711 = vmatprep.subr.mxu0 0.0
    %4712 = vmatpush1.msra.mxu0 %v4613
    %4713 = vmatprep.subr.mxu0 0.0
    %4714 = vmatpush1.msra.mxu0 %v4614
    %4715 = vmatprep.subr.mxu0 0.0
    %4716 = vmatpush1.msra.mxu0 0.0
    %4717 = vmatprep.subr.mxu0 0.0
    %4718 = vmatpush1.msra.mxu0 0.0
    %4719 = vmatprep.subr.mxu0 0.0
    %4720 = vmatpush1.msra.mxu0 0.0
    %4721 = vmatprep.subr.mxu0 0.0
    %4722 = vmatpush1.msra.mxu0 0.0
    %4723 = vmatprep.subr.mxu0 0.0
    %4724 = vmatpush1.msra.mxu0 0.0
    %4725 = vmatprep.subr.mxu0 0.0
    %4726 = vmatpush1.msra.mxu0 0.0
    %4727 = vmatprep.subr.mxu0 0.0
    %4728 = vmatpush1.msra.mxu0 0.0
    %4729 = vmatprep.subr.mxu0 0.0
    %4730 = vmatpush1.msra.mxu0 0.0
    %4731 = vmatprep.subr.mxu0 0.0
    %4732 = vmatpush1.msra.mxu0 0.0
    %4733 = vmatprep.subr.mxu0 0.0
    %4734 = vmatpush1.msra.mxu0 0.0
    %4735 = vmatprep.subr.mxu0 0.0
    %4736 = vmatpush1.msra.mxu0 0.0
    %4737 = vmatprep.subr.mxu0 0.0
    %4738 = vmatpush1.msra.mxu0 0.0
    %4739 = vmatprep.subr.mxu0 0.0
    %4740 = vmatpush1.msra.mxu0 0.0
    %4741 = vmatprep.subr.mxu0 0.0
    %4742 = vmatpush1.msra.mxu0 0.0
    %4743 = vmatprep.subr.mxu0 0.0
    %4744 = vmatpush1.msra.mxu0 0.0
    %4745 = vmatprep.subr.mxu0 0.0
    %4746 = vmatpush1.msra.mxu0 0.0
    %4747 = vmatprep.subr.mxu0 0.0
    %4748 = vmatpush1.msra.mxu0 0.0
    %4749 = vmatprep.subr.mxu0 0.0
    %4750 = vmatpush1.msra.mxu0 0.0
    %4751 = vmatprep.subr.mxu0 0.0
    %4752 = vmatpush1.msra.mxu0 0.0
    %4753 = vmatprep.subr.mxu0 0.0
    %4754 = vmatpush1.msra.mxu0 0.0
    %4755 = vmatprep.subr.mxu0 0.0
    %4756 = vmatpush1.msra.mxu0 0.0
    %4757 = vmatprep.subr.mxu0 0.0
    %4758 = vmatpush1.msra.mxu0 0.0
    %4759 = vmatprep.subr.mxu0 0.0
    %4760 = vmatpush1.msra.mxu0 0.0
    %4761 = vmatprep.subr.mxu0 0.0
    %4762 = vmatpush1.msra.mxu0 0.0
    %4763 = vmatprep.mubr.f32.mxu0 0.0
    %4764 = vmatmul.mubr.f32.gmra.mrb[0].mxu0 %v4697
    %v4765 = vpop.f32.mrb[0].mxu0
    %v4766 = vadd.f32 %v4693, %v4765
    %v4767 = vpop.f32.mrb[0].mxu0
    %4768 = vdwg.mxu0
    %v4769 = vld [vmem:[#allocation2 + $0x4c0] sm:$0x1]
    %v4770 = vlaneseq
    %v4771 = vshrl.u32 %v4770, 7
    %v4772 = vsub.s32 0, %v4771
    %v4773 = vrot.slane %v4769, %v4772
    %v4774 = vadd.f32 %v4766, %v4773
    %v4775 = vld [vmem:[#allocation2 + $0x4c8] sm:$0xff]
    %v4776 = vadd.f32 %v4774, %v4775
    %v4777 = vld [vmem:[#allocation2 + $0x4d0] sm:$0xff]
    %v4778 = vld [vmem:[#allocation2 + $0x4d8] sm:$0xff]
    %v4779 = vld [vmem:[#allocation2 + $0x4e0] sm:$0xff]
    %v4780 = vld [vmem:[#allocation2 + $0x4e8] sm:$0xff]
    %v4781 = vld [vmem:[#allocation2 + $0x4f0] sm:$0xff]
    %v4782 = vld [vmem:[#allocation2 + $0x4f8] sm:$0xff]
    %v4783 = vld [vmem:[#allocation2 + $0x500] sm:$0xff]
    %v4784 = vld [vmem:[#allocation2 + $0x508] sm:$0xff]
    %v4785 = vld [vmem:[#allocation2 + $0x510] sm:$0xff]
    %v4786 = vld [vmem:[#allocation2 + $0x518] sm:$0xff]
    %v4787 = vld [vmem:[#allocation2 + $0x520] sm:$0xff]
    %v4788 = vld [vmem:[#allocation2 + $0x528] sm:$0xff]
    %v4789 = vld [vmem:[#allocation2 + $0x530] sm:$0x1]
    %v4790 = vlaneseq
    %v4791 = vshrl.u32 %v4790, 7
    %v4792 = vsub.s32 0, %v4791
    %v4793 = vrot.slane %v4789, %v4792
    %v4795 = vsel %vm265, %v4776, 0
    %4797 = vmatprep.subr.mxu0 0.0
    %4798 = vmatpush1.msra.mxu0 %v4785
    %4799 = vmatprep.subr.mxu0 0.0
    %4800 = vmatpush1.msra.mxu0 %v4786
    %4801 = vmatprep.subr.mxu0 0.0
    %4802 = vmatpush1.msra.mxu0 %v4787
    %4803 = vmatprep.subr.mxu0 0.0
    %4804 = vmatpush1.msra.mxu0 %v4788
    %4805 = vmatprep.subr.mxu0 0.0
    %4806 = vmatpush1.msra.mxu0 0.0
    %4807 = vmatprep.subr.mxu0 0.0
    %4808 = vmatpush1.msra.mxu0 0.0
    %4809 = vmatprep.subr.mxu0 0.0
    %4810 = vmatpush1.msra.mxu0 0.0
    %4811 = vmatprep.subr.mxu0 0.0
    %4812 = vmatpush1.msra.mxu0 0.0
    %4813 = vmatprep.subr.mxu0 0.0
    %4814 = vmatpush1.msra.mxu0 0.0
    %4815 = vmatprep.subr.mxu0 0.0
    %4816 = vmatpush1.msra.mxu0 0.0
    %4817 = vmatprep.subr.mxu0 0.0
    %4818 = vmatpush1.msra.mxu0 0.0
    %4819 = vmatprep.subr.mxu0 0.0
    %4820 = vmatpush1.msra.mxu0 0.0
    %4821 = vmatprep.subr.mxu0 0.0
    %4822 = vmatpush1.msra.mxu0 0.0
    %4823 = vmatprep.subr.mxu0 0.0
    %4824 = vmatpush1.msra.mxu0 0.0
    %4825 = vmatprep.subr.mxu0 0.0
    %4826 = vmatpush1.msra.mxu0 0.0
    %4827 = vmatprep.subr.mxu0 0.0
    %4828 = vmatpush1.msra.mxu0 0.0
    %4829 = vmatprep.subr.mxu0 0.0
    %4830 = vmatpush1.msra.mxu0 0.0
    %4831 = vmatprep.subr.mxu0 0.0
    %4832 = vmatpush1.msra.mxu0 0.0
    %4833 = vmatprep.subr.mxu0 0.0
    %4834 = vmatpush1.msra.mxu0 0.0
    %4835 = vmatprep.subr.mxu0 0.0
    %4836 = vmatpush1.msra.mxu0 0.0
    %4837 = vmatprep.subr.mxu0 0.0
    %4838 = vmatpush1.msra.mxu0 0.0
    %4839 = vmatprep.subr.mxu0 0.0
    %4840 = vmatpush1.msra.mxu0 0.0
    %4841 = vmatprep.subr.mxu0 0.0
    %4842 = vmatpush1.msra.mxu0 0.0
    %4843 = vmatprep.subr.mxu0 0.0
    %4844 = vmatpush1.msra.mxu0 0.0
    %4845 = vmatprep.subr.mxu0 0.0
    %4846 = vmatpush1.msra.mxu0 0.0
    %4847 = vmatprep.subr.mxu0 0.0
    %4848 = vmatpush1.msra.mxu0 0.0
    %4849 = vmatprep.subr.mxu0 0.0
    %4850 = vmatpush1.msra.mxu0 0.0
    %4851 = vmatprep.subr.mxu0 0.0
    %4852 = vmatpush1.msra.mxu0 0.0
    %4853 = vmatprep.subr.mxu0 0.0
    %4854 = vmatpush1.msra.mxu0 0.0
    %4855 = vmatprep.subr.mxu0 0.0
    %4856 = vmatpush1.msra.mxu0 0.0
    %4857 = vmatprep.subr.mxu0 0.0
    %4858 = vmatpush1.msra.mxu0 0.0
    %4859 = vmatprep.subr.mxu0 0.0
    %4860 = vmatpush1.msra.mxu0 0.0
    %4861 = vmatprep.mubr.f32.mxu0 0.0
    %4862 = vmatmul.mubr.f32.gmra.mrb[0].mxu0 %v4795
    %v4863 = vpop.f32.mrb[0].mxu0
    %v4864 = vadd.f32 %v4793, %v4863
    %v4865 = vpop.f32.mrb[0].mxu0
    %4866 = vdwg.mxu0
    %v4867 = vld [vmem:[#allocation2 + $0x538] sm:$0xff]
    %v4868 = vld [vmem:[#allocation2 + $0x540] sm:$0xff]
    %v4869 = vld [vmem:[#allocation2 + $0x548] sm:$0xff]
    %v4870 = vld [vmem:[#allocation2 + $0x550] sm:$0xff]
    %v4871 = vld [vmem:[#allocation2 + $0x558] sm:$0x1]
    %v4872 = vlaneseq
    %v4873 = vshrl.u32 %v4872, 7
    %v4874 = vsub.s32 0, %v4873
    %v4875 = vrot.slane %v4871, %v4874
    %4876 = vmatprep.subr.mxu0 0.0
    %4877 = vmatpush1.msra.mxu0 %v4867
    %4878 = vmatprep.subr.mxu0 0.0
    %4879 = vmatpush1.msra.mxu0 %v4868
    %4880 = vmatprep.subr.mxu0 0.0
    %4881 = vmatpush1.msra.mxu0 %v4869
    %4882 = vmatprep.subr.mxu0 0.0
    %4883 = vmatpush1.msra.mxu0 %v4870
    %4884 = vmatprep.subr.mxu0 0.0
    %4885 = vmatpush1.msra.mxu0 0.0
    %4886 = vmatprep.subr.mxu0 0.0
    %4887 = vmatpush1.msra.mxu0 0.0
    %4888 = vmatprep.subr.mxu0 0.0
    %4889 = vmatpush1.msra.mxu0 0.0
    %4890 = vmatprep.subr.mxu0 0.0
    %4891 = vmatpush1.msra.mxu0 0.0
    %4892 = vmatprep.subr.mxu0 0.0
    %4893 = vmatpush1.msra.mxu0 0.0
    %4894 = vmatprep.subr.mxu0 0.0
    %4895 = vmatpush1.msra.mxu0 0.0
    %4896 = vmatprep.subr.mxu0 0.0
    %4897 = vmatpush1.msra.mxu0 0.0
    %4898 = vmatprep.subr.mxu0 0.0
    %4899 = vmatpush1.msra.mxu0 0.0
    %4900 = vmatprep.subr.mxu0 0.0
    %4901 = vmatpush1.msra.mxu0 0.0
    %4902 = vmatprep.subr.mxu0 0.0
    %4903 = vmatpush1.msra.mxu0 0.0
    %4904 = vmatprep.subr.mxu0 0.0
    %4905 = vmatpush1.msra.mxu0 0.0
    %4906 = vmatprep.subr.mxu0 0.0
    %4907 = vmatpush1.msra.mxu0 0.0
    %4908 = vmatprep.subr.mxu0 0.0
    %4909 = vmatpush1.msra.mxu0 0.0
    %4910 = vmatprep.subr.mxu0 0.0
    %4911 = vmatpush1.msra.mxu0 0.0
    %4912 = vmatprep.subr.mxu0 0.0
    %4913 = vmatpush1.msra.mxu0 0.0
    %4914 = vmatprep.subr.mxu0 0.0
    %4915 = vmatpush1.msra.mxu0 0.0
    %4916 = vmatprep.subr.mxu0 0.0
    %4917 = vmatpush1.msra.mxu0 0.0
    %4918 = vmatprep.subr.mxu0 0.0
    %4919 = vmatpush1.msra.mxu0 0.0
    %4920 = vmatprep.subr.mxu0 0.0
    %4921 = vmatpush1.msra.mxu0 0.0
    %4922 = vmatprep.subr.mxu0 0.0
    %4923 = vmatpush1.msra.mxu0 0.0
    %4924 = vmatprep.subr.mxu0 0.0
    %4925 = vmatpush1.msra.mxu0 0.0
    %4926 = vmatprep.subr.mxu0 0.0
    %4927 = vmatpush1.msra.mxu0 0.0
    %4928 = vmatprep.subr.mxu0 0.0
    %4929 = vmatpush1.msra.mxu0 0.0
    %4930 = vmatprep.subr.mxu0 0.0
    %4931 = vmatpush1.msra.mxu0 0.0
    %4932 = vmatprep.subr.mxu0 0.0
    %4933 = vmatpush1.msra.mxu0 0.0
    %4934 = vmatprep.subr.mxu0 0.0
    %4935 = vmatpush1.msra.mxu0 0.0
    %4936 = vmatprep.subr.mxu0 0.0
    %4937 = vmatpush1.msra.mxu0 0.0
    %4938 = vmatprep.subr.mxu0 0.0
    %4939 = vmatpush1.msra.mxu0 0.0
    %4940 = vmatprep.mubr.f32.mxu0 0.0
    %4941 = vmatmul.mubr.f32.gmra.mrb[0].mxu0 %v4795
    %v4942 = vpop.f32.mrb[0].mxu0
    %v4943 = vadd.f32 %v4875, %v4942
    %v4944 = vpop.f32.mrb[0].mxu0
    %4945 = vdwg.mxu0
    %v4946 = vld [vmem:[#allocation2 + $0x560] sm:$0xff]
    %v4947 = vld [vmem:[#allocation2 + $0x568] sm:$0xff]
    %v4948 = vld [vmem:[#allocation2 + $0x570] sm:$0xff]
    %v4949 = vld [vmem:[#allocation2 + $0x578] sm:$0xff]
    %v4950 = vld [vmem:[#allocation2 + $0x580] sm:$0x1]
    %v4951 = vlaneseq
    %v4952 = vshrl.u32 %v4951, 7
    %v4953 = vsub.s32 0, %v4952
    %v4954 = vrot.slane %v4950, %v4953
    %4955 = vmatprep.subr.mxu0 0.0
    %4956 = vmatpush1.msra.mxu0 %v4946
    %4957 = vmatprep.subr.mxu0 0.0
    %4958 = vmatpush1.msra.mxu0 %v4947
    %4959 = vmatprep.subr.mxu0 0.0
    %4960 = vmatpush1.msra.mxu0 %v4948
    %4961 = vmatprep.subr.mxu0 0.0
    %4962 = vmatpush1.msra.mxu0 %v4949
    %4963 = vmatprep.subr.mxu0 0.0
    %4964 = vmatpush1.msra.mxu0 0.0
    %4965 = vmatprep.subr.mxu0 0.0
    %4966 = vmatpush1.msra.mxu0 0.0
    %4967 = vmatprep.subr.mxu0 0.0
    %4968 = vmatpush1.msra.mxu0 0.0
    %4969 = vmatprep.subr.mxu0 0.0
    %4970 = vmatpush1.msra.mxu0 0.0
    %4971 = vmatprep.subr.mxu0 0.0
    %4972 = vmatpush1.msra.mxu0 0.0
    %4973 = vmatprep.subr.mxu0 0.0
    %4974 = vmatpush1.msra.mxu0 0.0
    %4975 = vmatprep.subr.mxu0 0.0
    %4976 = vmatpush1.msra.mxu0 0.0
    %4977 = vmatprep.subr.mxu0 0.0
    %4978 = vmatpush1.msra.mxu0 0.0
    %4979 = vmatprep.subr.mxu0 0.0
    %4980 = vmatpush1.msra.mxu0 0.0
    %4981 = vmatprep.subr.mxu0 0.0
    %4982 = vmatpush1.msra.mxu0 0.0
    %4983 = vmatprep.subr.mxu0 0.0
    %4984 = vmatpush1.msra.mxu0 0.0
    %4985 = vmatprep.subr.mxu0 0.0
    %4986 = vmatpush1.msra.mxu0 0.0
    %4987 = vmatprep.subr.mxu0 0.0
    %4988 = vmatpush1.msra.mxu0 0.0
    %4989 = vmatprep.subr.mxu0 0.0
    %4990 = vmatpush1.msra.mxu0 0.0
    %4991 = vmatprep.subr.mxu0 0.0
    %4992 = vmatpush1.msra.mxu0 0.0
    %4993 = vmatprep.subr.mxu0 0.0
    %4994 = vmatpush1.msra.mxu0 0.0
    %4995 = vmatprep.subr.mxu0 0.0
    %4996 = vmatpush1.msra.mxu0 0.0
    %4997 = vmatprep.subr.mxu0 0.0
    %4998 = vmatpush1.msra.mxu0 0.0
    %4999 = vmatprep.subr.mxu0 0.0
    %5000 = vmatpush1.msra.mxu0 0.0
    %5001 = vmatprep.subr.mxu0 0.0
    %5002 = vmatpush1.msra.mxu0 0.0
    %5003 = vmatprep.subr.mxu0 0.0
    %5004 = vmatpush1.msra.mxu0 0.0
    %5005 = vmatprep.subr.mxu0 0.0
    %5006 = vmatpush1.msra.mxu0 0.0
    %5007 = vmatprep.subr.mxu0 0.0
    %5008 = vmatpush1.msra.mxu0 0.0
    %5009 = vmatprep.subr.mxu0 0.0
    %5010 = vmatpush1.msra.mxu0 0.0
    %5011 = vmatprep.subr.mxu0 0.0
    %5012 = vmatpush1.msra.mxu0 0.0
    %5013 = vmatprep.subr.mxu0 0.0
    %5014 = vmatpush1.msra.mxu0 0.0
    %5015 = vmatprep.subr.mxu0 0.0
    %5016 = vmatpush1.msra.mxu0 0.0
    %5017 = vmatprep.subr.mxu0 0.0
    %5018 = vmatpush1.msra.mxu0 0.0
    %5019 = vmatprep.mubr.f32.mxu0 0.0
    %5020 = vmatmul.mubr.f32.gmra.mrb[0].mxu0 %v4795
    %v5021 = vpop.f32.mrb[0].mxu0
    %v5022 = vadd.f32 %v4954, %v5021
    %v5023 = vpop.f32.mrb[0].mxu0
    %5024 = vdwg.mxu0
    %v5025 = vmul.f32 %v4864, %v4781
    %v5026 = vmul.f32 %v4864, %v4782
    %v5027 = vmul.f32 %v4864, %v4783
    %v5028 = vmul.f32 %v4864, %v4784
    %v5030 = vsel %vm265, %v5025, 0
    %v5033 = vsel %vm265, %v5026, 0
    %v5036 = vsel %vm265, %v5027, 0
    %v5039 = vsel %vm265, %v5028, 0
    %v5042 = vsel %vm265, %v4943, 0
    %5044 = vmatprep.subr.mxu0 0.0
    %5045 = vmatpush1.xpose.msra.mxu0 %v5042
    %5046 = vmatprep.subr.mxu0 0.0
    %5047 = vmatpush1.xpose.msra.mxu0 0.0
    %5048 = vmatprep.subr.mxu0 0.0
    %5049 = vmatpush1.xpose.msra.mxu0 0.0
    %5050 = vmatprep.subr.mxu0 0.0
    %5051 = vmatpush1.xpose.msra.mxu0 0.0
    %5052 = vmatprep.subr.mxu0 0.0
    %5053 = vmatpush1.xpose.msra.mxu0 0.0
    %5054 = vmatprep.subr.mxu0 0.0
    %5055 = vmatpush1.xpose.msra.mxu0 0.0
    %5056 = vmatprep.subr.mxu0 0.0
    %5057 = vmatpush1.xpose.msra.mxu0 0.0
    %5058 = vmatprep.subr.mxu0 0.0
    %5059 = vmatpush1.xpose.msra.mxu0 0.0
    %5060 = vmatprep.subr.mxu0 0.0
    %5061 = vmatpush1.xpose.msra.mxu0 0.0
    %5062 = vmatprep.subr.mxu0 0.0
    %5063 = vmatpush1.xpose.msra.mxu0 0.0
    %5064 = vmatprep.subr.mxu0 0.0
    %5065 = vmatpush1.xpose.msra.mxu0 0.0
    %5066 = vmatprep.subr.mxu0 0.0
    %5067 = vmatpush1.xpose.msra.mxu0 0.0
    %5068 = vmatprep.subr.mxu0 0.0
    %5069 = vmatpush1.xpose.msra.mxu0 0.0
    %5070 = vmatprep.subr.mxu0 0.0
    %5071 = vmatpush1.xpose.msra.mxu0 0.0
    %5072 = vmatprep.subr.mxu0 0.0
    %5073 = vmatpush1.xpose.msra.mxu0 0.0
    %5074 = vmatprep.subr.mxu0 0.0
    %5075 = vmatpush1.xpose.msra.mxu0 0.0
    %5076 = vmatprep.subr.mxu0 0.0
    %5077 = vmatpush1.xpose.msra.mxu0 0.0
    %5078 = vmatprep.subr.mxu0 0.0
    %5079 = vmatpush1.xpose.msra.mxu0 0.0
    %5080 = vmatprep.subr.mxu0 0.0
    %5081 = vmatpush1.xpose.msra.mxu0 0.0
    %5082 = vmatprep.subr.mxu0 0.0
    %5083 = vmatpush1.xpose.msra.mxu0 0.0
    %5084 = vmatprep.subr.mxu0 0.0
    %5085 = vmatpush1.xpose.msra.mxu0 0.0
    %5086 = vmatprep.subr.mxu0 0.0
    %5087 = vmatpush1.xpose.msra.mxu0 0.0
    %5088 = vmatprep.subr.mxu0 0.0
    %5089 = vmatpush1.xpose.msra.mxu0 0.0
    %5090 = vmatprep.subr.mxu0 0.0
    %5091 = vmatpush1.xpose.msra.mxu0 0.0
    %5092 = vmatprep.subr.mxu0 0.0
    %5093 = vmatpush1.xpose.msra.mxu0 0.0
    %5094 = vmatprep.subr.mxu0 0.0
    %5095 = vmatpush1.xpose.msra.mxu0 0.0
    %5096 = vmatprep.subr.mxu0 0.0
    %5097 = vmatpush1.xpose.msra.mxu0 0.0
    %5098 = vmatprep.subr.mxu0 0.0
    %5099 = vmatpush1.xpose.msra.mxu0 0.0
    %5100 = vmatprep.subr.mxu0 0.0
    %5101 = vmatpush1.xpose.msra.mxu0 0.0
    %5102 = vmatprep.subr.mxu0 0.0
    %5103 = vmatpush1.xpose.msra.mxu0 0.0
    %5104 = vmatprep.subr.mxu0 0.0
    %5105 = vmatpush1.xpose.msra.mxu0 0.0
    %5106 = vmatprep.subr.mxu0 0.0
    %5107 = vmatpush1.xpose.msra.mxu0 0.0
    %5108 = vmatprep.mubr.f32.mxu0 0.0
    %5109 = vmatmul.mubr.f32.gmra.mrb[0].mxu0 %v5030
    %v5110 = vpop.f32.mrb[0].mxu0
    %v5111 = vadd.f32 %v4777, %v5110
    %v5112 = vpop.f32.mrb[0].mxu0
    %5113 = vmatprep.mubr.f32.mxu0 0.0
    %5114 = vmatmul.mubr.f32.gmra.mrb[0].mxu0 %v5033
    %v5115 = vpop.f32.mrb[0].mxu0
    %v5116 = vadd.f32 %v4778, %v5115
    %v5117 = vpop.f32.mrb[0].mxu0
    %5118 = vmatprep.mubr.f32.mxu0 0.0
    %5119 = vmatmul.mubr.f32.gmra.mrb[0].mxu0 %v5036
    %v5120 = vpop.f32.mrb[0].mxu0
    %v5121 = vadd.f32 %v4779, %v5120
    %v5122 = vpop.f32.mrb[0].mxu0
    %5123 = vmatprep.mubr.f32.mxu0 0.0
    %5124 = vmatmul.mubr.f32.gmra.mrb[0].mxu0 %v5039
    %v5125 = vpop.f32.mrb[0].mxu0
    %v5126 = vadd.f32 %v4780, %v5125
    %v5127 = vpop.f32.mrb[0].mxu0
    %5128 = vdwg.mxu0
    %vm5129 = vcmask 64512
    %v5130 = vsel %vm5129, %v5111, -inf
    %5131 = vmax.xlane.f32.xlu0 %v5130
    %v5132 = vpop.xlane.xlu0 %5131
    %v5133 = vsel %vm5129, %v5116, -inf
    %5134 = vmax.xlane.f32.xlu0 %v5133
    %v5135 = vpop.xlane.xlu0 %5134
    %v5136 = vsel %vm5129, %v5121, -inf
    %5137 = vmax.xlane.f32.xlu0 %v5136
    %v5138 = vpop.xlane.xlu0 %5137
    %v5139 = vsel %vm5129, %v5126, -inf
    %5140 = vmax.xlane.f32.xlu0 %v5139
    %v5141 = vpop.xlane.xlu0 %5140
    %v5142 = vsub.f32 %v5111, %v5132
    %v5143 = vsub.f32 %v5116, %v5135
    %v5144 = vsub.f32 %v5121, %v5138
    %v5145 = vsub.f32 %v5126, %v5141
    %v5146 = vmul.f32 %v5142, 1.442695
    %v5147 = vpow.pop %v5146
    %v5148 = vmul.f32 %v5143, 1.442695
    %v5149 = vpow.pop %v5148
    %v5150 = vmul.f32 %v5144, 1.442695
    %v5151 = vpow.pop %v5150
    %v5152 = vmul.f32 %v5145, 1.442695
    %v5153 = vpow.pop %v5152
    %v5154 = vsel %vm5129, %v5147, 0.0
    %5155 = vadd.xlane.f32.xlu0 %v5154
    %v5156 = vpop.xlane.xlu0 %5155
    %v5157 = vsel %vm5129, %v5149, 0.0
    %5158 = vadd.xlane.f32.xlu0 %v5157
    %v5159 = vpop.xlane.xlu0 %5158
    %v5160 = vsel %vm5129, %v5151, 0.0
    %5161 = vadd.xlane.f32.xlu0 %v5160
    %v5162 = vpop.xlane.xlu0 %5161
    %v5163 = vsel %vm5129, %v5153, 0.0
    %5164 = vadd.xlane.f32.xlu0 %v5163
    %v5165 = vpop.xlane.xlu0 %5164
    %v5166 = vrcp.pop %v5156
    %v5167 = vrcp.pop %v5159
    %v5168 = vrcp.pop %v5162
    %v5169 = vrcp.pop %v5165
    %v5171 = vsel %vm5129, %v5147, 0
    %v5174 = vsel %vm5129, %v5149, 0
    %v5177 = vsel %vm5129, %v5151, 0
    %v5180 = vsel %vm5129, %v5153, 0
    %5182 = vmatprep.subr.mxu0 0.0
    %5183 = vmatpush1.msra.mxu0 %v5022
    %5184 = vmatprep.subr.mxu0 0.0
    %5185 = vmatpush1.msra.mxu0 0.0
    %5186 = vmatprep.subr.mxu0 0.0
    %5187 = vmatpush1.msra.mxu0 0.0
    %5188 = vmatprep.subr.mxu0 0.0
    %5189 = vmatpush1.msra.mxu0 0.0
    %5190 = vmatprep.subr.mxu0 0.0
    %5191 = vmatpush1.msra.mxu0 0.0
    %5192 = vmatprep.subr.mxu0 0.0
    %5193 = vmatpush1.msra.mxu0 0.0
    %5194 = vmatprep.subr.mxu0 0.0
    %5195 = vmatpush1.msra.mxu0 0.0
    %5196 = vmatprep.subr.mxu0 0.0
    %5197 = vmatpush1.msra.mxu0 0.0
    %5198 = vmatprep.subr.mxu0 0.0
    %5199 = vmatpush1.msra.mxu0 0.0
    %5200 = vmatprep.subr.mxu0 0.0
    %5201 = vmatpush1.msra.mxu0 0.0
    %5202 = vmatprep.subr.mxu0 0.0
    %5203 = vmatpush1.msra.mxu0 0.0
    %5204 = vmatprep.subr.mxu0 0.0
    %5205 = vmatpush1.msra.mxu0 0.0
    %5206 = vmatprep.subr.mxu0 0.0
    %5207 = vmatpush1.msra.mxu0 0.0
    %5208 = vmatprep.subr.mxu0 0.0
    %5209 = vmatpush1.msra.mxu0 0.0
    %5210 = vmatprep.subr.mxu0 0.0
    %5211 = vmatpush1.msra.mxu0 0.0
    %5212 = vmatprep.subr.mxu0 0.0
    %5213 = vmatpush1.msra.mxu0 0.0
    %5214 = vmatprep.subr.mxu0 0.0
    %5215 = vmatpush1.msra.mxu0 0.0
    %5216 = vmatprep.subr.mxu0 0.0
    %5217 = vmatpush1.msra.mxu0 0.0
    %5218 = vmatprep.subr.mxu0 0.0
    %5219 = vmatpush1.msra.mxu0 0.0
    %5220 = vmatprep.subr.mxu0 0.0
    %5221 = vmatpush1.msra.mxu0 0.0
    %5222 = vmatprep.subr.mxu0 0.0
    %5223 = vmatpush1.msra.mxu0 0.0
    %5224 = vmatprep.subr.mxu0 0.0
    %5225 = vmatpush1.msra.mxu0 0.0
    %5226 = vmatprep.subr.mxu0 0.0
    %5227 = vmatpush1.msra.mxu0 0.0
    %5228 = vmatprep.subr.mxu0 0.0
    %5229 = vmatpush1.msra.mxu0 0.0
    %5230 = vmatprep.subr.mxu0 0.0
    %5231 = vmatpush1.msra.mxu0 0.0
    %5232 = vmatprep.subr.mxu0 0.0
    %5233 = vmatpush1.msra.mxu0 0.0
    %5234 = vmatprep.subr.mxu0 0.0
    %5235 = vmatpush1.msra.mxu0 0.0
    %5236 = vmatprep.subr.mxu0 0.0
    %5237 = vmatpush1.msra.mxu0 0.0
    %5238 = vmatprep.subr.mxu0 0.0
    %5239 = vmatpush1.msra.mxu0 0.0
    %5240 = vmatprep.subr.mxu0 0.0
    %5241 = vmatpush1.msra.mxu0 0.0
    %5242 = vmatprep.subr.mxu0 0.0
    %5243 = vmatpush1.msra.mxu0 0.0
    %5244 = vmatprep.subr.mxu0 0.0
    %5245 = vmatpush1.msra.mxu0 0.0
    %5246 = vmatprep.mubr.f32.mxu0 0.0
    %5247 = vmatmul.mubr.f32.gmra.mrb[0].mxu0 %v5171
    %v5248 = vpop.f32.mrb[0].mxu0
    %v5249 = vadd.f32 0.0, %v5248
    %v5250 = vpop.f32.mrb[0].mxu0
    %5251 = vmatprep.mubr.f32.mxu0 0.0
    %5252 = vmatmul.mubr.f32.gmra.mrb[0].mxu0 %v5174
    %v5253 = vpop.f32.mrb[0].mxu0
    %v5254 = vadd.f32 0.0, %v5253
    %v5255 = vpop.f32.mrb[0].mxu0
    %5256 = vmatprep.mubr.f32.mxu0 0.0
    %5257 = vmatmul.mubr.f32.gmra.mrb[0].mxu0 %v5177
    %v5258 = vpop.f32.mrb[0].mxu0
    %v5259 = vadd.f32 0.0, %v5258
    %v5260 = vpop.f32.mrb[0].mxu0
    %5261 = vmatprep.mubr.f32.mxu0 0.0
    %5262 = vmatmul.mubr.f32.gmra.mrb[0].mxu0 %v5180
    %v5263 = vpop.f32.mrb[0].mxu0
    %v5264 = vadd.f32 0.0, %v5263
    %v5265 = vpop.f32.mrb[0].mxu0
    %5266 = vdwg.mxu0
    %v5267 = vmul.f32 %v5249, %v5166
    %v5268 = vmul.f32 %v5254, %v5167
    %v5269 = vmul.f32 %v5259, %v5168
    %v5270 = vmul.f32 %v5264, %v5169
    %v5271 = vmul.f32 %v5267, %v4781
    %v5272 = vmul.f32 %v5268, %v4782
    %v5273 = vmul.f32 %v5269, %v4783
    %v5274 = vmul.f32 %v5270, %v4784
    %v5275 = vadd.f32 %v5271, %v5272
    %v5276 = vadd.f32 %v5275, %v5273
    %v5277 = vadd.f32 %v5276, %v5274
    %v5278 = vld [vmem:[#allocation2 + $0x588] sm:$0xff]
    %v5279 = vld [vmem:[#allocation2 + $0x590] sm:$0xff]
    %v5280 = vld [vmem:[#allocation2 + $0x598] sm:$0xff]
    %v5281 = vld [vmem:[#allocation2 + $0x5a0] sm:$0xff]
    %v5282 = vld [vmem:[#allocation2 + $0x5a8] sm:$0x1]
    %v5283 = vlaneseq
    %v5284 = vshrl.u32 %v5283, 7
    %v5285 = vsub.s32 0, %v5284
    %v5286 = vrot.slane %v5282, %v5285
    %v5288 = vsel %vm265, %v5277, 0
    %5290 = vmatprep.subr.mxu0 0.0
    %5291 = vmatpush1.msra.mxu0 %v5278
    %5292 = vmatprep.subr.mxu0 0.0
    %5293 = vmatpush1.msra.mxu0 %v5279
    %5294 = vmatprep.subr.mxu0 0.0
    %5295 = vmatpush1.msra.mxu0 %v5280
    %5296 = vmatprep.subr.mxu0 0.0
    %5297 = vmatpush1.msra.mxu0 %v5281
    %5298 = vmatprep.subr.mxu0 0.0
    %5299 = vmatpush1.msra.mxu0 0.0
    %5300 = vmatprep.subr.mxu0 0.0
    %5301 = vmatpush1.msra.mxu0 0.0
    %5302 = vmatprep.subr.mxu0 0.0
    %5303 = vmatpush1.msra.mxu0 0.0
    %5304 = vmatprep.subr.mxu0 0.0
    %5305 = vmatpush1.msra.mxu0 0.0
    %5306 = vmatprep.subr.mxu0 0.0
    %5307 = vmatpush1.msra.mxu0 0.0
    %5308 = vmatprep.subr.mxu0 0.0
    %5309 = vmatpush1.msra.mxu0 0.0
    %5310 = vmatprep.subr.mxu0 0.0
    %5311 = vmatpush1.msra.mxu0 0.0
    %5312 = vmatprep.subr.mxu0 0.0
    %5313 = vmatpush1.msra.mxu0 0.0
    %5314 = vmatprep.subr.mxu0 0.0
    %5315 = vmatpush1.msra.mxu0 0.0
    %5316 = vmatprep.subr.mxu0 0.0
    %5317 = vmatpush1.msra.mxu0 0.0
    %5318 = vmatprep.subr.mxu0 0.0
    %5319 = vmatpush1.msra.mxu0 0.0
    %5320 = vmatprep.subr.mxu0 0.0
    %5321 = vmatpush1.msra.mxu0 0.0
    %5322 = vmatprep.subr.mxu0 0.0
    %5323 = vmatpush1.msra.mxu0 0.0
    %5324 = vmatprep.subr.mxu0 0.0
    %5325 = vmatpush1.msra.mxu0 0.0
    %5326 = vmatprep.subr.mxu0 0.0
    %5327 = vmatpush1.msra.mxu0 0.0
    %5328 = vmatprep.subr.mxu0 0.0
    %5329 = vmatpush1.msra.mxu0 0.0
    %5330 = vmatprep.subr.mxu0 0.0
    %5331 = vmatpush1.msra.mxu0 0.0
    %5332 = vmatprep.subr.mxu0 0.0
    %5333 = vmatpush1.msra.mxu0 0.0
    %5334 = vmatprep.subr.mxu0 0.0
    %5335 = vmatpush1.msra.mxu0 0.0
    %5336 = vmatprep.subr.mxu0 0.0
    %5337 = vmatpush1.msra.mxu0 0.0
    %5338 = vmatprep.subr.mxu0 0.0
    %5339 = vmatpush1.msra.mxu0 0.0
    %5340 = vmatprep.subr.mxu0 0.0
    %5341 = vmatpush1.msra.mxu0 0.0
    %5342 = vmatprep.subr.mxu0 0.0
    %5343 = vmatpush1.msra.mxu0 0.0
    %5344 = vmatprep.subr.mxu0 0.0
    %5345 = vmatpush1.msra.mxu0 0.0
    %5346 = vmatprep.subr.mxu0 0.0
    %5347 = vmatpush1.msra.mxu0 0.0
    %5348 = vmatprep.subr.mxu0 0.0
    %5349 = vmatpush1.msra.mxu0 0.0
    %5350 = vmatprep.subr.mxu0 0.0
    %5351 = vmatpush1.msra.mxu0 0.0
    %5352 = vmatprep.subr.mxu0 0.0
    %5353 = vmatpush1.msra.mxu0 0.0
    %5354 = vmatprep.mubr.f32.mxu0 0.0
    %5355 = vmatmul.mubr.f32.gmra.mrb[0].mxu0 %v5288
    %v5356 = vpop.f32.mrb[0].mxu0
    %v5357 = vadd.f32 %v5286, %v5356
    %v5358 = vpop.f32.mrb[0].mxu0
    %5359 = vdwg.mxu0
    %v5360 = vadd.f32 %v4776, %v5357
    %v5361 = vld [vmem:[#allocation2 + $0x5b0] sm:$0x1]
    %v5362 = vld [vmem:[#allocation2 + $0x5b8] sm:$0x1]
    %v5363 = vsel %vm265, %v5360, 0.0
    %5364 = vadd.xlane.f32.xlu0 %v5363
    %v5365 = vpop.xlane.xlu0 %5364
    %v5366 = vmul.f32 %v5365, %v1902
    %v5367 = vsub.f32 %v5360, %v5366
    %v5368 = vmul.f32 %v5367, %v5367
    %v5369 = vsel %vm265, %v5368, 0.0
    %5370 = vadd.xlane.f32.xlu0 %v5369
    %v5371 = vpop.xlane.xlu0 %5370
    %v5372 = vmul.f32 %v5371, %v1902
    %v5373 = vadd.f32 %v5372, 1e-05
    %v5374 = vrsqrt.pop %v5373
    %v5375 = vmul.f32 %v5367, %v5374
    %v5376 = vlaneseq
    %v5377 = vshrl.u32 %v5376, 7
    %v5378 = vsub.s32 0, %v5377
    %v5379 = vrot.slane %v5361, %v5378
    %v5380 = vmul.f32 %v5375, %v5379
    %v5381 = vlaneseq
    %v5382 = vshrl.u32 %v5381, 7
    %v5383 = vsub.s32 0, %v5382
    %v5384 = vrot.slane %v5362, %v5383
    %v5385 = vadd.f32 %v5380, %v5384
    %v5386 = vld [vmem:[#allocation2 + $0x5c0] sm:$0xff]
    %v5387 = vld [vmem:[#allocation2 + $0x5c8] sm:$0xff]
    %v5388 = vld [vmem:[#allocation2 + $0x5d0] sm:$0xff]
    %v5389 = vld [vmem:[#allocation2 + $0x5d8] sm:$0xff]
    %v5390 = vld [vmem:[#allocation2 + $0x5e0] sm:$0x1]
    %v5391 = vlaneseq
    %v5392 = vshrl.u32 %v5391, 7
    %v5393 = vsub.s32 0, %v5392
    %v5394 = vrot.slane %v5390, %v5393
    %v5396 = vsel %vm265, %v5385, 0
    %5398 = vmatprep.subr.mxu0 0.0
    %5399 = vmatpush1.msra.mxu0 %v5386
    %5400 = vmatprep.subr.mxu0 0.0
    %5401 = vmatpush1.msra.mxu0 %v5387
    %5402 = vmatprep.subr.mxu0 0.0
    %5403 = vmatpush1.msra.mxu0 %v5388
    %5404 = vmatprep.subr.mxu0 0.0
    %5405 = vmatpush1.msra.mxu0 %v5389
    %5406 = vmatprep.subr.mxu0 0.0
    %5407 = vmatpush1.msra.mxu0 0.0
    %5408 = vmatprep.subr.mxu0 0.0
    %5409 = vmatpush1.msra.mxu0 0.0
    %5410 = vmatprep.subr.mxu0 0.0
    %5411 = vmatpush1.msra.mxu0 0.0
    %5412 = vmatprep.subr.mxu0 0.0
    %5413 = vmatpush1.msra.mxu0 0.0
    %5414 = vmatprep.subr.mxu0 0.0
    %5415 = vmatpush1.msra.mxu0 0.0
    %5416 = vmatprep.subr.mxu0 0.0
    %5417 = vmatpush1.msra.mxu0 0.0
    %5418 = vmatprep.subr.mxu0 0.0
    %5419 = vmatpush1.msra.mxu0 0.0
    %5420 = vmatprep.subr.mxu0 0.0
    %5421 = vmatpush1.msra.mxu0 0.0
    %5422 = vmatprep.subr.mxu0 0.0
    %5423 = vmatpush1.msra.mxu0 0.0
    %5424 = vmatprep.subr.mxu0 0.0
    %5425 = vmatpush1.msra.mxu0 0.0
    %5426 = vmatprep.subr.mxu0 0.0
    %5427 = vmatpush1.msra.mxu0 0.0
    %5428 = vmatprep.subr.mxu0 0.0
    %5429 = vmatpush1.msra.mxu0 0.0
    %5430 = vmatprep.subr.mxu0 0.0
    %5431 = vmatpush1.msra.mxu0 0.0
    %5432 = vmatprep.subr.mxu0 0.0
    %5433 = vmatpush1.msra.mxu0 0.0
    %5434 = vmatprep.subr.mxu0 0.0
    %5435 = vmatpush1.msra.mxu0 0.0
    %5436 = vmatprep.subr.mxu0 0.0
    %5437 = vmatpush1.msra.mxu0 0.0
    %5438 = vmatprep.subr.mxu0 0.0
    %5439 = vmatpush1.msra.mxu0 0.0
    %5440 = vmatprep.subr.mxu0 0.0
    %5441 = vmatpush1.msra.mxu0 0.0
    %5442 = vmatprep.subr.mxu0 0.0
    %5443 = vmatpush1.msra.mxu0 0.0
    %5444 = vmatprep.subr.mxu0 0.0
    %5445 = vmatpush1.msra.mxu0 0.0
    %5446 = vmatprep.subr.mxu0 0.0
    %5447 = vmatpush1.msra.mxu0 0.0
    %5448 = vmatprep.subr.mxu0 0.0
    %5449 = vmatpush1.msra.mxu0 0.0
    %5450 = vmatprep.subr.mxu0 0.0
    %5451 = vmatpush1.msra.mxu0 0.0
    %5452 = vmatprep.subr.mxu0 0.0
    %5453 = vmatpush1.msra.mxu0 0.0
    %5454 = vmatprep.subr.mxu0 0.0
    %5455 = vmatpush1.msra.mxu0 0.0
    %5456 = vmatprep.subr.mxu0 0.0
    %5457 = vmatpush1.msra.mxu0 0.0
    %5458 = vmatprep.subr.mxu0 0.0
    %5459 = vmatpush1.msra.mxu0 0.0
    %5460 = vmatprep.subr.mxu0 0.0
    %5461 = vmatpush1.msra.mxu0 0.0
    %5462 = vmatprep.mubr.f32.mxu0 0.0
    %5463 = vmatmul.mubr.f32.gmra.mrb[0].mxu0 %v5396
    %v5464 = vpop.f32.mrb[0].mxu0
    %v5465 = vadd.f32 %v5394, %v5464
    %v5466 = vpop.f32.mrb[0].mxu0
    %5467 = vdwg.mxu0
    %v5468 = vmax.f32 %v5465, 0.0
    %v5469 = vld [vmem:[#allocation2 + $0x5e8] sm:$0xff]
    %v5470 = vld [vmem:[#allocation2 + $0x5f0] sm:$0xff]
    %v5471 = vld [vmem:[#allocation2 + $0x5f8] sm:$0xff]
    %v5472 = vld [vmem:[#allocation2 + $0x600] sm:$0xff]
    %v5473 = vld [vmem:[#allocation2 + $0x608] sm:$0xff]
    %v5474 = vld [vmem:[#allocation2 + $0x610] sm:$0xff]
    %v5475 = vld [vmem:[#allocation2 + $0x618] sm:$0xff]
    %v5476 = vld [vmem:[#allocation2 + $0x620] sm:$0xff]
    %v5477 = vld [vmem:[#allocation2 + $0x628] sm:$0x1]
    %v5478 = vlaneseq
    %v5479 = vshrl.u32 %v5478, 7
    %v5480 = vsub.s32 0, %v5479
    %v5481 = vrot.slane %v5477, %v5480
    %v5483 = vsel %vm1000, %v5468, 0
    %5485 = vmatprep.subr.mxu0 0.0
    %5486 = vmatpush1.msra.mxu0 %v5469
    %5487 = vmatprep.subr.mxu0 0.0
    %5488 = vmatpush1.msra.mxu0 %v5470
    %5489 = vmatprep.subr.mxu0 0.0
    %5490 = vmatpush1.msra.mxu0 %v5471
    %5491 = vmatprep.subr.mxu0 0.0
    %5492 = vmatpush1.msra.mxu0 %v5472
    %5493 = vmatprep.subr.mxu0 0.0
    %5494 = vmatpush1.msra.mxu0 %v5473
    %5495 = vmatprep.subr.mxu0 0.0
    %5496 = vmatpush1.msra.mxu0 %v5474
    %5497 = vmatprep.subr.mxu0 0.0
    %5498 = vmatpush1.msra.mxu0 %v5475
    %5499 = vmatprep.subr.mxu0 0.0
    %5500 = vmatpush1.msra.mxu0 %v5476
    %5501 = vmatprep.subr.mxu0 0.0
    %5502 = vmatpush1.msra.mxu0 0.0
    %5503 = vmatprep.subr.mxu0 0.0
    %5504 = vmatpush1.msra.mxu0 0.0
    %5505 = vmatprep.subr.mxu0 0.0
    %5506 = vmatpush1.msra.mxu0 0.0
    %5507 = vmatprep.subr.mxu0 0.0
    %5508 = vmatpush1.msra.mxu0 0.0
    %5509 = vmatprep.subr.mxu0 0.0
    %5510 = vmatpush1.msra.mxu0 0.0
    %5511 = vmatprep.subr.mxu0 0.0
    %5512 = vmatpush1.msra.mxu0 0.0
    %5513 = vmatprep.subr.mxu0 0.0
    %5514 = vmatpush1.msra.mxu0 0.0
    %5515 = vmatprep.subr.mxu0 0.0
    %5516 = vmatpush1.msra.mxu0 0.0
    %5517 = vmatprep.subr.mxu0 0.0
    %5518 = vmatpush1.msra.mxu0 0.0
    %5519 = vmatprep.subr.mxu0 0.0
    %5520 = vmatpush1.msra.mxu0 0.0
    %5521 = vmatprep.subr.mxu0 0.0
    %5522 = vmatpush1.msra.mxu0 0.0
    %5523 = vmatprep.subr.mxu0 0.0
    %5524 = vmatpush1.msra.mxu0 0.0
    %5525 = vmatprep.subr.mxu0 0.0
    %5526 = vmatpush1.msra.mxu0 0.0
    %5527 = vmatprep.subr.mxu0 0.0
    %5528 = vmatpush1.msra.mxu0 0.0
    %5529 = vmatprep.subr.mxu0 0.0
    %5530 = vmatpush1.msra.mxu0 0.0
    %5531 = vmatprep.subr.mxu0 0.0
    %5532 = vmatpush1.msra.mxu0 0.0
    %5533 = vmatprep.subr.mxu0 0.0
    %5534 = vmatpush1.msra.mxu0 0.0
    %5535 = vmatprep.subr.mxu0 0.0
    %5536 = vmatpush1.msra.mxu0 0.0
    %5537 = vmatprep.subr.mxu0 0.0
    %5538 = vmatpush1.msra.mxu0 0.0
    %5539 = vmatprep.subr.mxu0 0.0
    %5540 = vmatpush1.msra.mxu0 0.0
    %5541 = vmatprep.subr.mxu0 0.0
    %5542 = vmatpush1.msra.mxu0 0.0
    %5543 = vmatprep.subr.mxu0 0.0
    %5544 = vmatpush1.msra.mxu0 0.0
    %5545 = vmatprep.subr.mxu0 0.0
    %5546 = vmatpush1.msra.mxu0 0.0
    %5547 = vmatprep.subr.mxu0 0.0
    %5548 = vmatpush1.msra.mxu0 0.0
    %5549 = vmatprep.mubr.f32.mxu0 0.0
    %5550 = vmatmul.mubr.f32.gmra.mrb[0].mxu0 %v5483
    %v5551 = vpop.f32.mrb[0].mxu0
    %v5552 = vadd.f32 %v5481, %v5551
    %v5553 = vpop.f32.mrb[0].mxu0
    %5554 = vdwg.mxu0
    %v5555 = vadd.f32 %v5385, %v5552
    %v5556 = vld [vmem:[#allocation2 + $0x630] sm:$0x1]
    %v5557 = vld [vmem:[#allocation2 + $0x638] sm:$0x1]
    %v5558 = vsel %vm265, %v5555, 0.0
    %5559 = vadd.xlane.f32.xlu0 %v5558
    %v5560 = vpop.xlane.xlu0 %5559
    %v5561 = vmul.f32 %v5560, %v1902
    %v5562 = vsub.f32 %v5555, %v5561
    %v5563 = vmul.f32 %v5562, %v5562
    %v5564 = vsel %vm265, %v5563, 0.0
    %5565 = vadd.xlane.f32.xlu0 %v5564
    %v5566 = vpop.xlane.xlu0 %5565
    %v5567 = vmul.f32 %v5566, %v1902
    %v5568 = vadd.f32 %v5567, 1e-05
    %v5569 = vrsqrt.pop %v5568
    %v5570 = vmul.f32 %v5562, %v5569
    %v5571 = vlaneseq
    %v5572 = vshrl.u32 %v5571, 7
    %v5573 = vsub.s32 0, %v5572
    %v5574 = vrot.slane %v5556, %v5573
    %v5575 = vmul.f32 %v5570, %v5574
    %v5576 = vlaneseq
    %v5577 = vshrl.u32 %v5576, 7
    %v5578 = vsub.s32 0, %v5577
    %v5579 = vrot.slane %v5557, %v5578
    %v5580 = vadd.f32 %v5575, %v5579
    %v5581 = vld [vmem:[#allocation2 + $0x640] sm:$0xff]
    %v5582 = vld [vmem:[#allocation2 + $0x648] sm:$0xff]
    %v5583 = vld [vmem:[#allocation2 + $0x650] sm:$0xff]
    %v5584 = vld [vmem:[#allocation2 + $0x658] sm:$0xff]
    %v5585 = vld [vmem:[#allocation2 + $0x660] sm:$0x1]
    %v5586 = vlaneseq
    %v5587 = vshrl.u32 %v5586, 7
    %v5588 = vsub.s32 0, %v5587
    %v5589 = vrot.slane %v5585, %v5588
    %v5591 = vsel %vm265, %v5580, 0
    %5593 = vmatprep.subr.mxu0 0.0
    %5594 = vmatpush1.msra.mxu0 %v5581
    %5595 = vmatprep.subr.mxu0 0.0
    %5596 = vmatpush1.msra.mxu0 %v5582
    %5597 = vmatprep.subr.mxu0 0.0
    %5598 = vmatpush1.msra.mxu0 %v5583
    %5599 = vmatprep.subr.mxu0 0.0
    %5600 = vmatpush1.msra.mxu0 %v5584
    %5601 = vmatprep.subr.mxu0 0.0
    %5602 = vmatpush1.msra.mxu0 0.0
    %5603 = vmatprep.subr.mxu0 0.0
    %5604 = vmatpush1.msra.mxu0 0.0
    %5605 = vmatprep.subr.mxu0 0.0
    %5606 = vmatpush1.msra.mxu0 0.0
    %5607 = vmatprep.subr.mxu0 0.0
    %5608 = vmatpush1.msra.mxu0 0.0
    %5609 = vmatprep.subr.mxu0 0.0
    %5610 = vmatpush1.msra.mxu0 0.0
    %5611 = vmatprep.subr.mxu0 0.0
    %5612 = vmatpush1.msra.mxu0 0.0
    %5613 = vmatprep.subr.mxu0 0.0
    %5614 = vmatpush1.msra.mxu0 0.0
    %5615 = vmatprep.subr.mxu0 0.0
    %5616 = vmatpush1.msra.mxu0 0.0
    %5617 = vmatprep.subr.mxu0 0.0
    %5618 = vmatpush1.msra.mxu0 0.0
    %5619 = vmatprep.subr.mxu0 0.0
    %5620 = vmatpush1.msra.mxu0 0.0
    %5621 = vmatprep.subr.mxu0 0.0
    %5622 = vmatpush1.msra.mxu0 0.0
    %5623 = vmatprep.subr.mxu0 0.0
    %5624 = vmatpush1.msra.mxu0 0.0
    %5625 = vmatprep.subr.mxu0 0.0
    %5626 = vmatpush1.msra.mxu0 0.0
    %5627 = vmatprep.subr.mxu0 0.0
    %5628 = vmatpush1.msra.mxu0 0.0
    %5629 = vmatprep.subr.mxu0 0.0
    %5630 = vmatpush1.msra.mxu0 0.0
    %5631 = vmatprep.subr.mxu0 0.0
    %5632 = vmatpush1.msra.mxu0 0.0
    %5633 = vmatprep.subr.mxu0 0.0
    %5634 = vmatpush1.msra.mxu0 0.0
    %5635 = vmatprep.subr.mxu0 0.0
    %5636 = vmatpush1.msra.mxu0 0.0
    %5637 = vmatprep.subr.mxu0 0.0
    %5638 = vmatpush1.msra.mxu0 0.0
    %5639 = vmatprep.subr.mxu0 0.0
    %5640 = vmatpush1.msra.mxu0 0.0
    %5641 = vmatprep.subr.mxu0 0.0
    %5642 = vmatpush1.msra.mxu0 0.0
    %5643 = vmatprep.subr.mxu0 0.0
    %5644 = vmatpush1.msra.mxu0 0.0
    %5645 = vmatprep.subr.mxu0 0.0
    %5646 = vmatpush1.msra.mxu0 0.0
    %5647 = vmatprep.subr.mxu0 0.0
    %5648 = vmatpush1.msra.mxu0 0.0
    %5649 = vmatprep.subr.mxu0 0.0
    %5650 = vmatpush1.msra.mxu0 0.0
    %5651 = vmatprep.subr.mxu0 0.0
    %5652 = vmatpush1.msra.mxu0 0.0
    %5653 = vmatprep.subr.mxu0 0.0
    %5654 = vmatpush1.msra.mxu0 0.0
    %5655 = vmatprep.subr.mxu0 0.0
    %5656 = vmatpush1.msra.mxu0 0.0
    %5657 = vmatprep.mubr.f32.mxu0 0.0
    %5658 = vmatmul.mubr.f32.gmra.mrb[0].mxu0 %v5591
    %v5659 = vpop.f32.mrb[0].mxu0
    %v5660 = vadd.f32 %v5589, %v5659
    %v5661 = vpop.f32.mrb[0].mxu0
    %5662 = vdwg.mxu0
    %v5663 = vld [vmem:[#allocation2 + $0x668] sm:$0xff]
    %v5664 = vld [vmem:[#allocation2 + $0x670] sm:$0xff]
    %v5665 = vld [vmem:[#allocation2 + $0x678] sm:$0xff]
    %v5666 = vld [vmem:[#allocation2 + $0x680] sm:$0xff]
    %v5667 = vld [vmem:[#allocation2 + $0x688] sm:$0x1]
    %v5668 = vlaneseq
    %v5669 = vshrl.u32 %v5668, 7
    %v5670 = vsub.s32 0, %v5669
    %v5671 = vrot.slane %v5667, %v5670
    %5672 = vmatprep.subr.mxu0 0.0
    %5673 = vmatpush1.msra.mxu0 %v5663
    %5674 = vmatprep.subr.mxu0 0.0
    %5675 = vmatpush1.msra.mxu0 %v5664
    %5676 = vmatprep.subr.mxu0 0.0
    %5677 = vmatpush1.msra.mxu0 %v5665
    %5678 = vmatprep.subr.mxu0 0.0
    %5679 = vmatpush1.msra.mxu0 %v5666
    %5680 = vmatprep.subr.mxu0 0.0
    %5681 = vmatpush1.msra.mxu0 0.0
    %5682 = vmatprep.subr.mxu0 0.0
    %5683 = vmatpush1.msra.mxu0 0.0
    %5684 = vmatprep.subr.mxu0 0.0
    %5685 = vmatpush1.msra.mxu0 0.0
    %5686 = vmatprep.subr.mxu0 0.0
    %5687 = vmatpush1.msra.mxu0 0.0
    %5688 = vmatprep.subr.mxu0 0.0
    %5689 = vmatpush1.msra.mxu0 0.0
    %5690 = vmatprep.subr.mxu0 0.0
    %5691 = vmatpush1.msra.mxu0 0.0
    %5692 = vmatprep.subr.mxu0 0.0
    %5693 = vmatpush1.msra.mxu0 0.0
    %5694 = vmatprep.subr.mxu0 0.0
    %5695 = vmatpush1.msra.mxu0 0.0
    %5696 = vmatprep.subr.mxu0 0.0
    %5697 = vmatpush1.msra.mxu0 0.0
    %5698 = vmatprep.subr.mxu0 0.0
    %5699 = vmatpush1.msra.mxu0 0.0
    %5700 = vmatprep.subr.mxu0 0.0
    %5701 = vmatpush1.msra.mxu0 0.0
    %5702 = vmatprep.subr.mxu0 0.0
    %5703 = vmatpush1.msra.mxu0 0.0
    %5704 = vmatprep.subr.mxu0 0.0
    %5705 = vmatpush1.msra.mxu0 0.0
    %5706 = vmatprep.subr.mxu0 0.0
    %5707 = vmatpush1.msra.mxu0 0.0
    %5708 = vmatprep.subr.mxu0 0.0
    %5709 = vmatpush1.msra.mxu0 0.0
    %5710 = vmatprep.subr.mxu0 0.0
    %5711 = vmatpush1.msra.mxu0 0.0
    %5712 = vmatprep.subr.mxu0 0.0
    %5713 = vmatpush1.msra.mxu0 0.0
    %5714 = vmatprep.subr.mxu0 0.0
    %5715 = vmatpush1.msra.mxu0 0.0
    %5716 = vmatprep.subr.mxu0 0.0
    %5717 = vmatpush1.msra.mxu0 0.0
    %5718 = vmatprep.subr.mxu0 0.0
    %5719 = vmatpush1.msra.mxu0 0.0
    %5720 = vmatprep.subr.mxu0 0.0
    %5721 = vmatpush1.msra.mxu0 0.0
    %5722 = vmatprep.subr.mxu0 0.0
    %5723 = vmatpush1.msra.mxu0 0.0
    %5724 = vmatprep.subr.mxu0 0.0
    %5725 = vmatpush1.msra.mxu0 0.0
    %5726 = vmatprep.subr.mxu0 0.0
    %5727 = vmatpush1.msra.mxu0 0.0
    %5728 = vmatprep.subr.mxu0 0.0
    %5729 = vmatpush1.msra.mxu0 0.0
    %5730 = vmatprep.subr.mxu0 0.0
    %5731 = vmatpush1.msra.mxu0 0.0
    %5732 = vmatprep.subr.mxu0 0.0
    %5733 = vmatpush1.msra.mxu0 0.0
    %5734 = vmatprep.subr.mxu0 0.0
    %5735 = vmatpush1.msra.mxu0 0.0
    %5736 = vmatprep.mubr.f32.mxu0 0.0
    %5737 = vmatmul.mubr.f32.gmra.mrb[0].mxu0 %v5591
    %v5738 = vpop.f32.mrb[0].mxu0
    %v5739 = vadd.f32 %v5671, %v5738
    %v5740 = vpop.f32.mrb[0].mxu0
    %5741 = vdwg.mxu0
    %v5742 = vld [vmem:[#allocation2 + $0x690] sm:$0xff]
    %v5743 = vld [vmem:[#allocation2 + $0x698] sm:$0xff]
    %v5744 = vld [vmem:[#allocation2 + $0x6a0] sm:$0xff]
    %v5745 = vld [vmem:[#allocation2 + $0x6a8] sm:$0xff]
    %v5746 = vld [vmem:[#allocation2 + $0x6b0] sm:$0x1]
    %v5747 = vlaneseq
    %v5748 = vshrl.u32 %v5747, 7
    %v5749 = vsub.s32 0, %v5748
    %v5750 = vrot.slane %v5746, %v5749
    %5751 = vmatprep.subr.mxu0 0.0
    %5752 = vmatpush1.msra.mxu0 %v5742
    %5753 = vmatprep.subr.mxu0 0.0
    %5754 = vmatpush1.msra.mxu0 %v5743
    %5755 = vmatprep.subr.mxu0 0.0
    %5756 = vmatpush1.msra.mxu0 %v5744
    %5757 = vmatprep.subr.mxu0 0.0
    %5758 = vmatpush1.msra.mxu0 %v5745
    %5759 = vmatprep.subr.mxu0 0.0
    %5760 = vmatpush1.msra.mxu0 0.0
    %5761 = vmatprep.subr.mxu0 0.0
    %5762 = vmatpush1.msra.mxu0 0.0
    %5763 = vmatprep.subr.mxu0 0.0
    %5764 = vmatpush1.msra.mxu0 0.0
    %5765 = vmatprep.subr.mxu0 0.0
    %5766 = vmatpush1.msra.mxu0 0.0
    %5767 = vmatprep.subr.mxu0 0.0
    %5768 = vmatpush1.msra.mxu0 0.0
    %5769 = vmatprep.subr.mxu0 0.0
    %5770 = vmatpush1.msra.mxu0 0.0
    %5771 = vmatprep.subr.mxu0 0.0
    %5772 = vmatpush1.msra.mxu0 0.0
    %5773 = vmatprep.subr.mxu0 0.0
    %5774 = vmatpush1.msra.mxu0 0.0
    %5775 = vmatprep.subr.mxu0 0.0
    %5776 = vmatpush1.msra.mxu0 0.0
    %5777 = vmatprep.subr.mxu0 0.0
    %5778 = vmatpush1.msra.mxu0 0.0
    %5779 = vmatprep.subr.mxu0 0.0
    %5780 = vmatpush1.msra.mxu0 0.0
    %5781 = vmatprep.subr.mxu0 0.0
    %5782 = vmatpush1.msra.mxu0 0.0
    %5783 = vmatprep.subr.mxu0 0.0
    %5784 = vmatpush1.msra.mxu0 0.0
    %5785 = vmatprep.subr.mxu0 0.0
    %5786 = vmatpush1.msra.mxu0 0.0
    %5787 = vmatprep.subr.mxu0 0.0
    %5788 = vmatpush1.msra.mxu0 0.0
    %5789 = vmatprep.subr.mxu0 0.0
    %5790 = vmatpush1.msra.mxu0 0.0
    %5791 = vmatprep.subr.mxu0 0.0
    %5792 = vmatpush1.msra.mxu0 0.0
    %5793 = vmatprep.subr.mxu0 0.0
    %5794 = vmatpush1.msra.mxu0 0.0
    %5795 = vmatprep.subr.mxu0 0.0
    %5796 = vmatpush1.msra.mxu0 0.0
    %5797 = vmatprep.subr.mxu0 0.0
    %5798 = vmatpush1.msra.mxu0 0.0
    %5799 = vmatprep.subr.mxu0 0.0
    %5800 = vmatpush1.msra.mxu0 0.0
    %5801 = vmatprep.subr.mxu0 0.0
    %5802 = vmatpush1.msra.mxu0 0.0
    %5803 = vmatprep.subr.mxu0 0.0
    %5804 = vmatpush1.msra.mxu0 0.0
    %5805 = vmatprep.subr.mxu0 0.0
    %5806 = vmatpush1.msra.mxu0 0.0
    %5807 = vmatprep.subr.mxu0 0.0
    %5808 = vmatpush1.msra.mxu0 0.0
    %5809 = vmatprep.subr.mxu0 0.0
    %5810 = vmatpush1.msra.mxu0 0.0
    %5811 = vmatprep.subr.mxu0 0.0
    %5812 = vmatpush1.msra.mxu0 0.0
    %5813 = vmatprep.subr.mxu0 0.0
    %5814 = vmatpush1.msra.mxu0 0.0
    %5815 = vmatprep.mubr.f32.mxu0 0.0
    %5816 = vmatmul.mubr.f32.gmra.mrb[0].mxu0 %v5591
    %v5817 = vpop.f32.mrb[0].mxu0
    %v5818 = vadd.f32 %v5750, %v5817
    %v5819 = vpop.f32.mrb[0].mxu0
    %5820 = vdwg.mxu0
    %v5821 = vmul.f32 %v5660, %v4781
    %v5822 = vmul.f32 %v5660, %v4782
    %v5823 = vmul.f32 %v5660, %v4783
    %v5824 = vmul.f32 %v5660, %v4784
    %v5826 = vsel %vm265, %v5821, 0
    %v5829 = vsel %vm265, %v5822, 0
    %v5832 = vsel %vm265, %v5823, 0
    %v5835 = vsel %vm265, %v5824, 0
    %v5838 = vsel %vm265, %v5739, 0
    %5840 = vmatprep.subr.mxu0 0.0
    %5841 = vmatpush1.xpose.msra.mxu0 %v5838
    %5842 = vmatprep.subr.mxu0 0.0
    %5843 = vmatpush1.xpose.msra.mxu0 0.0
    %5844 = vmatprep.subr.mxu0 0.0
    %5845 = vmatpush1.xpose.msra.mxu0 0.0
    %5846 = vmatprep.subr.mxu0 0.0
    %5847 = vmatpush1.xpose.msra.mxu0 0.0
    %5848 = vmatprep.subr.mxu0 0.0
    %5849 = vmatpush1.xpose.msra.mxu0 0.0
    %5850 = vmatprep.subr.mxu0 0.0
    %5851 = vmatpush1.xpose.msra.mxu0 0.0
    %5852 = vmatprep.subr.mxu0 0.0
    %5853 = vmatpush1.xpose.msra.mxu0 0.0
    %5854 = vmatprep.subr.mxu0 0.0
    %5855 = vmatpush1.xpose.msra.mxu0 0.0
    %5856 = vmatprep.subr.mxu0 0.0
    %5857 = vmatpush1.xpose.msra.mxu0 0.0
    %5858 = vmatprep.subr.mxu0 0.0
    %5859 = vmatpush1.xpose.msra.mxu0 0.0
    %5860 = vmatprep.subr.mxu0 0.0
    %5861 = vmatpush1.xpose.msra.mxu0 0.0
    %5862 = vmatprep.subr.mxu0 0.0
    %5863 = vmatpush1.xpose.msra.mxu0 0.0
    %5864 = vmatprep.subr.mxu0 0.0
    %5865 = vmatpush1.xpose.msra.mxu0 0.0
    %5866 = vmatprep.subr.mxu0 0.0
    %5867 = vmatpush1.xpose.msra.mxu0 0.0
    %5868 = vmatprep.subr.mxu0 0.0
    %5869 = vmatpush1.xpose.msra.mxu0 0.0
    %5870 = vmatprep.subr.mxu0 0.0
    %5871 = vmatpush1.xpose.msra.mxu0 0.0
    %5872 = vmatprep.subr.mxu0 0.0
    %5873 = vmatpush1.xpose.msra.mxu0 0.0
    %5874 = vmatprep.subr.mxu0 0.0
    %5875 = vmatpush1.xpose.msra.mxu0 0.0
    %5876 = vmatprep.subr.mxu0 0.0
    %5877 = vmatpush1.xpose.msra.mxu0 0.0
    %5878 = vmatprep.subr.mxu0 0.0
    %5879 = vmatpush1.xpose.msra.mxu0 0.0
    %5880 = vmatprep.subr.mxu0 0.0
    %5881 = vmatpush1.xpose.msra.mxu0 0.0
    %5882 = vmatprep.subr.mxu0 0.0
    %5883 = vmatpush1.xpose.msra.mxu0 0.0
    %5884 = vmatprep.subr.mxu0 0.0
    %5885 = vmatpush1.xpose.msra.mxu0 0.0
    %5886 = vmatprep.subr.mxu0 0.0
    %5887 = vmatpush1.xpose.msra.mxu0 0.0
    %5888 = vmatprep.subr.mxu0 0.0
    %5889 = vmatpush1.xpose.msra.mxu0 0.0
    %5890 = vmatprep.subr.mxu0 0.0
    %5891 = vmatpush1.xpose.msra.mxu0 0.0
    %5892 = vmatprep.subr.mxu0 0.0
    %5893 = vmatpush1.xpose.msra.mxu0 0.0
    %5894 = vmatprep.subr.mxu0 0.0
    %5895 = vmatpush1.xpose.msra.mxu0 0.0
    %5896 = vmatprep.subr.mxu0 0.0
    %5897 = vmatpush1.xpose.msra.mxu0 0.0
    %5898 = vmatprep.subr.mxu0 0.0
    %5899 = vmatpush1.xpose.msra.mxu0 0.0
    %5900 = vmatprep.subr.mxu0 0.0
    %5901 = vmatpush1.xpose.msra.mxu0 0.0
    %5902 = vmatprep.subr.mxu0 0.0
    %5903 = vmatpush1.xpose.msra.mxu0 0.0
    %5904 = vmatprep.mubr.f32.mxu0 0.0
    %5905 = vmatmul.mubr.f32.gmra.mrb[0].mxu0 %v5826
    %v5906 = vpop.f32.mrb[0].mxu0
    %v5907 = vadd.f32 %v4777, %v5906
    %v5908 = vpop.f32.mrb[0].mxu0
    %5909 = vmatprep.mubr.f32.mxu0 0.0
    %5910 = vmatmul.mubr.f32.gmra.mrb[0].mxu0 %v5829
    %v5911 = vpop.f32.mrb[0].mxu0
    %v5912 = vadd.f32 %v4778, %v5911
    %v5913 = vpop.f32.mrb[0].mxu0
    %5914 = vmatprep.mubr.f32.mxu0 0.0
    %5915 = vmatmul.mubr.f32.gmra.mrb[0].mxu0 %v5832
    %v5916 = vpop.f32.mrb[0].mxu0
    %v5917 = vadd.f32 %v4779, %v5916
    %v5918 = vpop.f32.mrb[0].mxu0
    %5919 = vmatprep.mubr.f32.mxu0 0.0
    %5920 = vmatmul.mubr.f32.gmra.mrb[0].mxu0 %v5835
    %v5921 = vpop.f32.mrb[0].mxu0
    %v5922 = vadd.f32 %v4780, %v5921
    %v5923 = vpop.f32.mrb[0].mxu0
    %5924 = vdwg.mxu0
    %v5925 = vsel %vm5129, %v5907, -inf
    %5926 = vmax.xlane.f32.xlu0 %v5925
    %v5927 = vpop.xlane.xlu0 %5926
    %v5928 = vsel %vm5129, %v5912, -inf
    %5929 = vmax.xlane.f32.xlu0 %v5928
    %v5930 = vpop.xlane.xlu0 %5929
    %v5931 = vsel %vm5129, %v5917, -inf
    %5932 = vmax.xlane.f32.xlu0 %v5931
    %v5933 = vpop.xlane.xlu0 %5932
    %v5934 = vsel %vm5129, %v5922, -inf
    %5935 = vmax.xlane.f32.xlu0 %v5934
    %v5936 = vpop.xlane.xlu0 %5935
    %v5937 = vsub.f32 %v5907, %v5927
    %v5938 = vsub.f32 %v5912, %v5930
    %v5939 = vsub.f32 %v5917, %v5933
    %v5940 = vsub.f32 %v5922, %v5936
    %v5941 = vmul.f32 %v5937, 1.442695
    %v5942 = vpow.pop %v5941
    %v5943 = vmul.f32 %v5938, 1.442695
    %v5944 = vpow.pop %v5943
    %v5945 = vmul.f32 %v5939, 1.442695
    %v5946 = vpow.pop %v5945
    %v5947 = vmul.f32 %v5940, 1.442695
    %v5948 = vpow.pop %v5947
    %v5949 = vsel %vm5129, %v5942, 0.0
    %5950 = vadd.xlane.f32.xlu0 %v5949
    %v5951 = vpop.xlane.xlu0 %5950
    %v5952 = vsel %vm5129, %v5944, 0.0
    %5953 = vadd.xlane.f32.xlu0 %v5952
    %v5954 = vpop.xlane.xlu0 %5953
    %v5955 = vsel %vm5129, %v5946, 0.0
    %5956 = vadd.xlane.f32.xlu0 %v5955
    %v5957 = vpop.xlane.xlu0 %5956
    %v5958 = vsel %vm5129, %v5948, 0.0
    %5959 = vadd.xlane.f32.xlu0 %v5958
    %v5960 = vpop.xlane.xlu0 %5959
    %v5961 = vrcp.pop %v5951
    %v5962 = vrcp.pop %v5954
    %v5963 = vrcp.pop %v5957
    %v5964 = vrcp.pop %v5960
    %v5966 = vsel %vm5129, %v5942, 0
    %v5969 = vsel %vm5129, %v5944, 0
    %v5972 = vsel %vm5129, %v5946, 0
    %v5975 = vsel %vm5129, %v5948, 0
    %5977 = vmatprep.subr.mxu0 0.0
    %5978 = vmatpush1.msra.mxu0 %v5818
    %5979 = vmatprep.subr.mxu0 0.0
    %5980 = vmatpush1.msra.mxu0 0.0
    %5981 = vmatprep.subr.mxu0 0.0
    %5982 = vmatpush1.msra.mxu0 0.0
    %5983 = vmatprep.subr.mxu0 0.0
    %5984 = vmatpush1.msra.mxu0 0.0
    %5985 = vmatprep.subr.mxu0 0.0
    %5986 = vmatpush1.msra.mxu0 0.0
    %5987 = vmatprep.subr.mxu0 0.0
    %5988 = vmatpush1.msra.mxu0 0.0
    %5989 = vmatprep.subr.mxu0 0.0
    %5990 = vmatpush1.msra.mxu0 0.0
    %5991 = vmatprep.subr.mxu0 0.0
    %5992 = vmatpush1.msra.mxu0 0.0
    %5993 = vmatprep.subr.mxu0 0.0
    %5994 = vmatpush1.msra.mxu0 0.0
    %5995 = vmatprep.subr.mxu0 0.0
    %5996 = vmatpush1.msra.mxu0 0.0
    %5997 = vmatprep.subr.mxu0 0.0
    %5998 = vmatpush1.msra.mxu0 0.0
    %5999 = vmatprep.subr.mxu0 0.0
    %6000 = vmatpush1.msra.mxu0 0.0
    %6001 = vmatprep.subr.mxu0 0.0
    %6002 = vmatpush1.msra.mxu0 0.0
    %6003 = vmatprep.subr.mxu0 0.0
    %6004 = vmatpush1.msra.mxu0 0.0
    %6005 = vmatprep.subr.mxu0 0.0
    %6006 = vmatpush1.msra.mxu0 0.0
    %6007 = vmatprep.subr.mxu0 0.0
    %6008 = vmatpush1.msra.mxu0 0.0
    %6009 = vmatprep.subr.mxu0 0.0
    %6010 = vmatpush1.msra.mxu0 0.0
    %6011 = vmatprep.subr.mxu0 0.0
    %6012 = vmatpush1.msra.mxu0 0.0
    %6013 = vmatprep.subr.mxu0 0.0
    %6014 = vmatpush1.msra.mxu0 0.0
    %6015 = vmatprep.subr.mxu0 0.0
    %6016 = vmatpush1.msra.mxu0 0.0
    %6017 = vmatprep.subr.mxu0 0.0
    %6018 = vmatpush1.msra.mxu0 0.0
    %6019 = vmatprep.subr.mxu0 0.0
    %6020 = vmatpush1.msra.mxu0 0.0
    %6021 = vmatprep.subr.mxu0 0.0
    %6022 = vmatpush1.msra.mxu0 0.0
    %6023 = vmatprep.subr.mxu0 0.0
    %6024 = vmatpush1.msra.mxu0 0.0
    %6025 = vmatprep.subr.mxu0 0.0
    %6026 = vmatpush1.msra.mxu0 0.0
    %6027 = vmatprep.subr.mxu0 0.0
    %6028 = vmatpush1.msra.mxu0 0.0
    %6029 = vmatprep.subr.mxu0 0.0
    %6030 = vmatpush1.msra.mxu0 0.0
    %6031 = vmatprep.subr.mxu0 0.0
    %6032 = vmatpush1.msra.mxu0 0.0
    %6033 = vmatprep.subr.mxu0 0.0
    %6034 = vmatpush1.msra.mxu0 0.0
    %6035 = vmatprep.subr.mxu0 0.0
    %6036 = vmatpush1.msra.mxu0 0.0
    %6037 = vmatprep.subr.mxu0 0.0
    %6038 = vmatpush1.msra.mxu0 0.0
    %6039 = vmatprep.subr.mxu0 0.0
    %6040 = vmatpush1.msra.mxu0 0.0
    %6041 = vmatprep.mubr.f32.mxu0 0.0
    %6042 = vmatmul.mubr.f32.gmra.mrb[0].mxu0 %v5966
    %v6043 = vpop.f32.mrb[0].mxu0
    %v6044 = vadd.f32 0.0, %v6043
    %v6045 = vpop.f32.mrb[0].mxu0
    %6046 = vmatprep.mubr.f32.mxu0 0.0
    %6047 = vmatmul.mubr.f32.gmra.mrb[0].mxu0 %v5969
    %v6048 = vpop.f32.mrb[0].mxu0
    %v6049 = vadd.f32 0.0, %v6048
    %v6050 = vpop.f32.mrb[0].mxu0
    %6051 = vmatprep.mubr.f32.mxu0 0.0
    %6052 = vmatmul.mubr.f32.gmra.mrb[0].mxu0 %v5972
    %v6053 = vpop.f32.mrb[0].mxu0
    %v6054 = vadd.f32 0.0, %v6053
    %v6055 = vpop.f32.mrb[0].mxu0
    %6056 = vmatprep.mubr.f32.mxu0 0.0
    %6057 = vmatmul.mubr.f32.gmra.mrb[0].mxu0 %v5975
    %v6058 = vpop.f32.mrb[0].mxu0
    %v6059 = vadd.f32 0.0, %v6058
    %v6060 = vpop.f32.mrb[0].mxu0
    %6061 = vdwg.mxu0
    %v6062 = vmul.f32 %v6044, %v5961
    %v6063 = vmul.f32 %v6049, %v5962
    %v6064 = vmul.f32 %v6054, %v5963
    %v6065 = vmul.f32 %v6059, %v5964
    %v6066 = vmul.f32 %v6062, %v4781
    %v6067 = vmul.f32 %v6063, %v4782
    %v6068 = vmul.f32 %v6064, %v4783
    %v6069 = vmul.f32 %v6065, %v4784
    %v6070 = vadd.f32 %v6066, %v6067
    %v6071 = vadd.f32 %v6070, %v6068
    %v6072 = vadd.f32 %v6071, %v6069
    %v6073 = vld [vmem:[#allocation2 + $0x6b8] sm:$0xff]
    %v6074 = vld [vmem:[#allocation2 + $0x6c0] sm:$0xff]
    %v6075 = vld [vmem:[#allocation2 + $0x6c8] sm:$0xff]
    %v6076 = vld [vmem:[#allocation2 + $0x6d0] sm:$0xff]
    %v6077 = vld [vmem:[#allocation2 + $0x6d8] sm:$0x1]
    %v6078 = vlaneseq
    %v6079 = vshrl.u32 %v6078, 7
    %v6080 = vsub.s32 0, %v6079
    %v6081 = vrot.slane %v6077, %v6080
    %v6083 = vsel %vm265, %v6072, 0
    %6085 = vmatprep.subr.mxu0 0.0
    %6086 = vmatpush1.msra.mxu0 %v6073
    %6087 = vmatprep.subr.mxu0 0.0
    %6088 = vmatpush1.msra.mxu0 %v6074
    %6089 = vmatprep.subr.mxu0 0.0
    %6090 = vmatpush1.msra.mxu0 %v6075
    %6091 = vmatprep.subr.mxu0 0.0
    %6092 = vmatpush1.msra.mxu0 %v6076
    %6093 = vmatprep.subr.mxu0 0.0
    %6094 = vmatpush1.msra.mxu0 0.0
    %6095 = vmatprep.subr.mxu0 0.0
    %6096 = vmatpush1.msra.mxu0 0.0
    %6097 = vmatprep.subr.mxu0 0.0
    %6098 = vmatpush1.msra.mxu0 0.0
    %6099 = vmatprep.subr.mxu0 0.0
    %6100 = vmatpush1.msra.mxu0 0.0
    %6101 = vmatprep.subr.mxu0 0.0
    %6102 = vmatpush1.msra.mxu0 0.0
    %6103 = vmatprep.subr.mxu0 0.0
    %6104 = vmatpush1.msra.mxu0 0.0
    %6105 = vmatprep.subr.mxu0 0.0
    %6106 = vmatpush1.msra.mxu0 0.0
    %6107 = vmatprep.subr.mxu0 0.0
    %6108 = vmatpush1.msra.mxu0 0.0
    %6109 = vmatprep.subr.mxu0 0.0
    %6110 = vmatpush1.msra.mxu0 0.0
    %6111 = vmatprep.subr.mxu0 0.0
    %6112 = vmatpush1.msra.mxu0 0.0
    %6113 = vmatprep.subr.mxu0 0.0
    %6114 = vmatpush1.msra.mxu0 0.0
    %6115 = vmatprep.subr.mxu0 0.0
    %6116 = vmatpush1.msra.mxu0 0.0
    %6117 = vmatprep.subr.mxu0 0.0
    %6118 = vmatpush1.msra.mxu0 0.0
    %6119 = vmatprep.subr.mxu0 0.0
    %6120 = vmatpush1.msra.mxu0 0.0
    %6121 = vmatprep.subr.mxu0 0.0
    %6122 = vmatpush1.msra.mxu0 0.0
    %6123 = vmatprep.subr.mxu0 0.0
    %6124 = vmatpush1.msra.mxu0 0.0
    %6125 = vmatprep.subr.mxu0 0.0
    %6126 = vmatpush1.msra.mxu0 0.0
    %6127 = vmatprep.subr.mxu0 0.0
    %6128 = vmatpush1.msra.mxu0 0.0
    %6129 = vmatprep.subr.mxu0 0.0
    %6130 = vmatpush1.msra.mxu0 0.0
    %6131 = vmatprep.subr.mxu0 0.0
    %6132 = vmatpush1.msra.mxu0 0.0
    %6133 = vmatprep.subr.mxu0 0.0
    %6134 = vmatpush1.msra.mxu0 0.0
    %6135 = vmatprep.subr.mxu0 0.0
    %6136 = vmatpush1.msra.mxu0 0.0
    %6137 = vmatprep.subr.mxu0 0.0
    %6138 = vmatpush1.msra.mxu0 0.0
    %6139 = vmatprep.subr.mxu0 0.0
    %6140 = vmatpush1.msra.mxu0 0.0
    %6141 = vmatprep.subr.mxu0 0.0
    %6142 = vmatpush1.msra.mxu0 0.0
    %6143 = vmatprep.subr.mxu0 0.0
    %6144 = vmatpush1.msra.mxu0 0.0
    %6145 = vmatprep.subr.mxu0 0.0
    %6146 = vmatpush1.msra.mxu0 0.0
    %6147 = vmatprep.subr.mxu0 0.0
    %6148 = vmatpush1.msra.mxu0 0.0
    %6149 = vmatprep.mubr.f32.mxu0 0.0
    %6150 = vmatmul.mubr.f32.gmra.mrb[0].mxu0 %v6083
    %v6151 = vpop.f32.mrb[0].mxu0
    %v6152 = vadd.f32 %v6081, %v6151
    %v6153 = vpop.f32.mrb[0].mxu0
    %6154 = vdwg.mxu0
    %v6155 = vadd.f32 %v5580, %v6152
    %v6156 = vld [vmem:[#allocation2 + $0x6e0] sm:$0x1]
    %v6157 = vld [vmem:[#allocation2 + $0x6e8] sm:$0x1]
    %v6158 = vsel %vm265, %v6155, 0.0
    %6159 = vadd.xlane.f32.xlu0 %v6158
    %v6160 = vpop.xlane.xlu0 %6159
    %v6161 = vmul.f32 %v6160, %v1902
    %v6162 = vsub.f32 %v6155, %v6161
    %v6163 = vmul.f32 %v6162, %v6162
    %v6164 = vsel %vm265, %v6163, 0.0
    %6165 = vadd.xlane.f32.xlu0 %v6164
    %v6166 = vpop.xlane.xlu0 %6165
    %v6167 = vmul.f32 %v6166, %v1902
    %v6168 = vadd.f32 %v6167, 1e-05
    %v6169 = vrsqrt.pop %v6168
    %v6170 = vmul.f32 %v6162, %v6169
    %v6171 = vlaneseq
    %v6172 = vshrl.u32 %v6171, 7
    %v6173 = vsub.s32 0, %v6172
    %v6174 = vrot.slane %v6156, %v6173
    %v6175 = vmul.f32 %v6170, %v6174
    %v6176 = vlaneseq
    %v6177 = vshrl.u32 %v6176, 7
    %v6178 = vsub.s32 0, %v6177
    %v6179 = vrot.slane %v6157, %v6178
    %v6180 = vadd.f32 %v6175, %v6179
    %v6181 = vld [vmem:[#allocation2 + $0x6f0] sm:$0xff]
    %v6182 = vld [vmem:[#allocation2 + $0x6f8] sm:$0xff]
    %v6183 = vld [vmem:[#allocation2 + $0x700] sm:$0xff]
    %v6184 = vld [vmem:[#allocation2 + $0x708] sm:$0xff]
    %v6185 = vld [vmem:[#allocation2 + $0x710] sm:$0x1]
    %v6186 = vlaneseq
    %v6187 = vshrl.u32 %v6186, 7
    %v6188 = vsub.s32 0, %v6187
    %v6189 = vrot.slane %v6185, %v6188
    %v6191 = vsel %vm265, %v6180, 0
    %6193 = vmatprep.subr.mxu0 0.0
    %6194 = vmatpush1.msra.mxu0 %v6181
    %6195 = vmatprep.subr.mxu0 0.0
    %6196 = vmatpush1.msra.mxu0 %v6182
    %6197 = vmatprep.subr.mxu0 0.0
    %6198 = vmatpush1.msra.mxu0 %v6183
    %6199 = vmatprep.subr.mxu0 0.0
    %6200 = vmatpush1.msra.mxu0 %v6184
    %6201 = vmatprep.subr.mxu0 0.0
    %6202 = vmatpush1.msra.mxu0 0.0
    %6203 = vmatprep.subr.mxu0 0.0
    %6204 = vmatpush1.msra.mxu0 0.0
    %6205 = vmatprep.subr.mxu0 0.0
    %6206 = vmatpush1.msra.mxu0 0.0
    %6207 = vmatprep.subr.mxu0 0.0
    %6208 = vmatpush1.msra.mxu0 0.0
    %6209 = vmatprep.subr.mxu0 0.0
    %6210 = vmatpush1.msra.mxu0 0.0
    %6211 = vmatprep.subr.mxu0 0.0
    %6212 = vmatpush1.msra.mxu0 0.0
    %6213 = vmatprep.subr.mxu0 0.0
    %6214 = vmatpush1.msra.mxu0 0.0
    %6215 = vmatprep.subr.mxu0 0.0
    %6216 = vmatpush1.msra.mxu0 0.0
    %6217 = vmatprep.subr.mxu0 0.0
    %6218 = vmatpush1.msra.mxu0 0.0
    %6219 = vmatprep.subr.mxu0 0.0
    %6220 = vmatpush1.msra.mxu0 0.0
    %6221 = vmatprep.subr.mxu0 0.0
    %6222 = vmatpush1.msra.mxu0 0.0
    %6223 = vmatprep.subr.mxu0 0.0
    %6224 = vmatpush1.msra.mxu0 0.0
    %6225 = vmatprep.subr.mxu0 0.0
    %6226 = vmatpush1.msra.mxu0 0.0
    %6227 = vmatprep.subr.mxu0 0.0
    %6228 = vmatpush1.msra.mxu0 0.0
    %6229 = vmatprep.subr.mxu0 0.0
    %6230 = vmatpush1.msra.mxu0 0.0
    %6231 = vmatprep.subr.mxu0 0.0
    %6232 = vmatpush1.msra.mxu0 0.0
    %6233 = vmatprep.subr.mxu0 0.0
    %6234 = vmatpush1.msra.mxu0 0.0
    %6235 = vmatprep.subr.mxu0 0.0
    %6236 = vmatpush1.msra.mxu0 0.0
    %6237 = vmatprep.subr.mxu0 0.0
    %6238 = vmatpush1.msra.mxu0 0.0
    %6239 = vmatprep.subr.mxu0 0.0
    %6240 = vmatpush1.msra.mxu0 0.0
    %6241 = vmatprep.subr.mxu0 0.0
    %6242 = vmatpush1.msra.mxu0 0.0
    %6243 = vmatprep.subr.mxu0 0.0
    %6244 = vmatpush1.msra.mxu0 0.0
    %6245 = vmatprep.subr.mxu0 0.0
    %6246 = vmatpush1.msra.mxu0 0.0
    %6247 = vmatprep.subr.mxu0 0.0
    %6248 = vmatpush1.msra.mxu0 0.0
    %6249 = vmatprep.subr.mxu0 0.0
    %6250 = vmatpush1.msra.mxu0 0.0
    %6251 = vmatprep.subr.mxu0 0.0
    %6252 = vmatpush1.msra.mxu0 0.0
    %6253 = vmatprep.subr.mxu0 0.0
    %6254 = vmatpush1.msra.mxu0 0.0
    %6255 = vmatprep.subr.mxu0 0.0
    %6256 = vmatpush1.msra.mxu0 0.0
    %6257 = vmatprep.mubr.f32.mxu0 0.0
    %6258 = vmatmul.mubr.f32.gmra.mrb[0].mxu0 %v6191
    %v6259 = vpop.f32.mrb[0].mxu0
    %v6260 = vadd.f32 %v6189, %v6259
    %v6261 = vpop.f32.mrb[0].mxu0
    %6262 = vdwg.mxu0
    %v6263 = vmax.f32 %v6260, 0.0
    %v6264 = vld [vmem:[#allocation2 + $0x718] sm:$0xff]
    %v6265 = vld [vmem:[#allocation2 + $0x720] sm:$0xff]
    %v6266 = vld [vmem:[#allocation2 + $0x728] sm:$0xff]
    %v6267 = vld [vmem:[#allocation2 + $0x730] sm:$0xff]
    %v6268 = vld [vmem:[#allocation2 + $0x738] sm:$0xff]
    %v6269 = vld [vmem:[#allocation2 + $0x740] sm:$0xff]
    %v6270 = vld [vmem:[#allocation2 + $0x748] sm:$0xff]
    %v6271 = vld [vmem:[#allocation2 + $0x750] sm:$0xff]
    %v6272 = vld [vmem:[#allocation2 + $0x758] sm:$0x1]
    %v6273 = vlaneseq
    %v6274 = vshrl.u32 %v6273, 7
    %v6275 = vsub.s32 0, %v6274
    %v6276 = vrot.slane %v6272, %v6275
    %v6278 = vsel %vm1000, %v6263, 0
    %6280 = vmatprep.subr.mxu0 0.0
    %6281 = vmatpush1.msra.mxu0 %v6264
    %6282 = vmatprep.subr.mxu0 0.0
    %6283 = vmatpush1.msra.mxu0 %v6265
    %6284 = vmatprep.subr.mxu0 0.0
    %6285 = vmatpush1.msra.mxu0 %v6266
    %6286 = vmatprep.subr.mxu0 0.0
    %6287 = vmatpush1.msra.mxu0 %v6267
    %6288 = vmatprep.subr.mxu0 0.0
    %6289 = vmatpush1.msra.mxu0 %v6268
    %6290 = vmatprep.subr.mxu0 0.0
    %6291 = vmatpush1.msra.mxu0 %v6269
    %6292 = vmatprep.subr.mxu0 0.0
    %6293 = vmatpush1.msra.mxu0 %v6270
    %6294 = vmatprep.subr.mxu0 0.0
    %6295 = vmatpush1.msra.mxu0 %v6271
    %6296 = vmatprep.subr.mxu0 0.0
    %6297 = vmatpush1.msra.mxu0 0.0
    %6298 = vmatprep.subr.mxu0 0.0
    %6299 = vmatpush1.msra.mxu0 0.0
    %6300 = vmatprep.subr.mxu0 0.0
    %6301 = vmatpush1.msra.mxu0 0.0
    %6302 = vmatprep.subr.mxu0 0.0
    %6303 = vmatpush1.msra.mxu0 0.0
    %6304 = vmatprep.subr.mxu0 0.0
    %6305 = vmatpush1.msra.mxu0 0.0
    %6306 = vmatprep.subr.mxu0 0.0
    %6307 = vmatpush1.msra.mxu0 0.0
    %6308 = vmatprep.subr.mxu0 0.0
    %6309 = vmatpush1.msra.mxu0 0.0
    %6310 = vmatprep.subr.mxu0 0.0
    %6311 = vmatpush1.msra.mxu0 0.0
    %6312 = vmatprep.subr.mxu0 0.0
    %6313 = vmatpush1.msra.mxu0 0.0
    %6314 = vmatprep.subr.mxu0 0.0
    %6315 = vmatpush1.msra.mxu0 0.0
    %6316 = vmatprep.subr.mxu0 0.0
    %6317 = vmatpush1.msra.mxu0 0.0
    %6318 = vmatprep.subr.mxu0 0.0
    %6319 = vmatpush1.msra.mxu0 0.0
    %6320 = vmatprep.subr.mxu0 0.0
    %6321 = vmatpush1.msra.mxu0 0.0
    %6322 = vmatprep.subr.mxu0 0.0
    %6323 = vmatpush1.msra.mxu0 0.0
    %6324 = vmatprep.subr.mxu0 0.0
    %6325 = vmatpush1.msra.mxu0 0.0
    %6326 = vmatprep.subr.mxu0 0.0
    %6327 = vmatpush1.msra.mxu0 0.0
    %6328 = vmatprep.subr.mxu0 0.0
    %6329 = vmatpush1.msra.mxu0 0.0
    %6330 = vmatprep.subr.mxu0 0.0
    %6331 = vmatpush1.msra.mxu0 0.0
    %6332 = vmatprep.subr.mxu0 0.0
    %6333 = vmatpush1.msra.mxu0 0.0
    %6334 = vmatprep.subr.mxu0 0.0
    %6335 = vmatpush1.msra.mxu0 0.0
    %6336 = vmatprep.subr.mxu0 0.0
    %6337 = vmatpush1.msra.mxu0 0.0
    %6338 = vmatprep.subr.mxu0 0.0
    %6339 = vmatpush1.msra.mxu0 0.0
    %6340 = vmatprep.subr.mxu0 0.0
    %6341 = vmatpush1.msra.mxu0 0.0
    %6342 = vmatprep.subr.mxu0 0.0
    %6343 = vmatpush1.msra.mxu0 0.0
    %6344 = vmatprep.mubr.f32.mxu0 0.0
    %6345 = vmatmul.mubr.f32.gmra.mrb[0].mxu0 %v6278
    %v6346 = vpop.f32.mrb[0].mxu0
    %v6347 = vadd.f32 %v6276, %v6346
    %v6348 = vpop.f32.mrb[0].mxu0
    %6349 = vdwg.mxu0
    %v6350 = vadd.f32 %v6180, %v6347
    %v6351 = vld [vmem:[#allocation2 + $0x760] sm:$0x1]
    %v6352 = vld [vmem:[#allocation2 + $0x768] sm:$0x1]
    %v6353 = vsel %vm265, %v6350, 0.0
    %6354 = vadd.xlane.f32.xlu0 %v6353
    %v6355 = vpop.xlane.xlu0 %6354
    %v6356 = vmul.f32 %v6355, %v1902
    %v6357 = vsub.f32 %v6350, %v6356
    %v6358 = vmul.f32 %v6357, %v6357
    %v6359 = vsel %vm265, %v6358, 0.0
    %6360 = vadd.xlane.f32.xlu0 %v6359
    %v6361 = vpop.xlane.xlu0 %6360
    %v6362 = vmul.f32 %v6361, %v1902
    %v6363 = vadd.f32 %v6362, 1e-05
    %v6364 = vrsqrt.pop %v6363
    %v6365 = vmul.f32 %v6357, %v6364
    %v6366 = vlaneseq
    %v6367 = vshrl.u32 %v6366, 7
    %v6368 = vsub.s32 0, %v6367
    %v6369 = vrot.slane %v6351, %v6368
    %v6370 = vmul.f32 %v6365, %v6369
    %v6371 = vlaneseq
    %v6372 = vshrl.u32 %v6371, 7
    %v6373 = vsub.s32 0, %v6372
    %v6374 = vrot.slane %v6352, %v6373
    %v6375 = vadd.f32 %v6370, %v6374
    %v6376 = vld [vmem:[#allocation2 + $0x770] sm:$0x3]
    %v6378 = vsel %vm5129, %v6376, 0
    %6380 = vmatprep.subr.mxu0 0.0
    %6381 = vmatpush1.msra.mxu0 %v6375
    %6382 = vmatprep.subr.mxu0 0.0
    %6383 = vmatpush1.msra.mxu0 0.0
    %6384 = vmatprep.subr.mxu0 0.0
    %6385 = vmatpush1.msra.mxu0 0.0
    %6386 = vmatprep.subr.mxu0 0.0
    %6387 = vmatpush1.msra.mxu0 0.0
    %6388 = vmatprep.subr.mxu0 0.0
    %6389 = vmatpush1.msra.mxu0 0.0
    %6390 = vmatprep.subr.mxu0 0.0
    %6391 = vmatpush1.msra.mxu0 0.0
    %6392 = vmatprep.subr.mxu0 0.0
    %6393 = vmatpush1.msra.mxu0 0.0
    %6394 = vmatprep.subr.mxu0 0.0
    %6395 = vmatpush1.msra.mxu0 0.0
    %6396 = vmatprep.subr.mxu0 0.0
    %6397 = vmatpush1.msra.mxu0 0.0
    %6398 = vmatprep.subr.mxu0 0.0
    %6399 = vmatpush1.msra.mxu0 0.0
    %6400 = vmatprep.subr.mxu0 0.0
    %6401 = vmatpush1.msra.mxu0 0.0
    %6402 = vmatprep.subr.mxu0 0.0
    %6403 = vmatpush1.msra.mxu0 0.0
    %6404 = vmatprep.subr.mxu0 0.0
    %6405 = vmatpush1.msra.mxu0 0.0
    %6406 = vmatprep.subr.mxu0 0.0
    %6407 = vmatpush1.msra.mxu0 0.0
    %6408 = vmatprep.subr.mxu0 0.0
    %6409 = vmatpush1.msra.mxu0 0.0
    %6410 = vmatprep.subr.mxu0 0.0
    %6411 = vmatpush1.msra.mxu0 0.0
    %6412 = vmatprep.subr.mxu0 0.0
    %6413 = vmatpush1.msra.mxu0 0.0
    %6414 = vmatprep.subr.mxu0 0.0
    %6415 = vmatpush1.msra.mxu0 0.0
    %6416 = vmatprep.subr.mxu0 0.0
    %6417 = vmatpush1.msra.mxu0 0.0
    %6418 = vmatprep.subr.mxu0 0.0
    %6419 = vmatpush1.msra.mxu0 0.0
    %6420 = vmatprep.subr.mxu0 0.0
    %6421 = vmatpush1.msra.mxu0 0.0
    %6422 = vmatprep.subr.mxu0 0.0
    %6423 = vmatpush1.msra.mxu0 0.0
    %6424 = vmatprep.subr.mxu0 0.0
    %6425 = vmatpush1.msra.mxu0 0.0
    %6426 = vmatprep.subr.mxu0 0.0
    %6427 = vmatpush1.msra.mxu0 0.0
    %6428 = vmatprep.subr.mxu0 0.0
    %6429 = vmatpush1.msra.mxu0 0.0
    %6430 = vmatprep.subr.mxu0 0.0
    %6431 = vmatpush1.msra.mxu0 0.0
    %6432 = vmatprep.subr.mxu0 0.0
    %6433 = vmatpush1.msra.mxu0 0.0
    %6434 = vmatprep.subr.mxu0 0.0
    %6435 = vmatpush1.msra.mxu0 0.0
    %6436 = vmatprep.subr.mxu0 0.0
    %6437 = vmatpush1.msra.mxu0 0.0
    %6438 = vmatprep.subr.mxu0 0.0
    %6439 = vmatpush1.msra.mxu0 0.0
    %6440 = vmatprep.subr.mxu0 0.0
    %6441 = vmatpush1.msra.mxu0 0.0
    %6442 = vmatprep.subr.mxu0 0.0
    %6443 = vmatpush1.msra.mxu0 0.0
    %6444 = vmatprep.mubr.f32.mxu0 0.0
    %6445 = vmatmul.mubr.f32.gmra.mrb[0].mxu0 %v6378
    %v6446 = vpop.f32.mrb[0].mxu0
    %v6447 = vadd.f32 0.0, %v6446
    %v6448 = vpop.f32.mrb[0].mxu0
    %6449 = vdwg.mxu0
    %v6450 = vld [vmem:[#allocation2 + $0x778] sm:$0xff]
    %v6451 = vld [vmem:[#allocation2 + $0x780] sm:$0xff]
    %v6452 = vld [vmem:[#allocation2 + $0x788] sm:$0xff]
    %v6453 = vld [vmem:[#allocation2 + $0x790] sm:$0xff]
    %v6454 = vld [vmem:[#allocation2 + $0x798] sm:$0x1]
    %v6455 = vlaneseq
    %v6456 = vshrl.u32 %v6455, 7
    %v6457 = vsub.s32 0, %v6456
    %v6458 = vrot.slane %v6454, %v6457
    %v6460 = vsel %vm265, %v6447, 0
    %6462 = vmatprep.subr.mxu0 0.0
    %6463 = vmatpush1.msra.mxu0 %v6450
    %6464 = vmatprep.subr.mxu0 0.0
    %6465 = vmatpush1.msra.mxu0 %v6451
    %6466 = vmatprep.subr.mxu0 0.0
    %6467 = vmatpush1.msra.mxu0 %v6452
    %6468 = vmatprep.subr.mxu0 0.0
    %6469 = vmatpush1.msra.mxu0 %v6453
    %6470 = vmatprep.subr.mxu0 0.0
    %6471 = vmatpush1.msra.mxu0 0.0
    %6472 = vmatprep.subr.mxu0 0.0
    %6473 = vmatpush1.msra.mxu0 0.0
    %6474 = vmatprep.subr.mxu0 0.0
    %6475 = vmatpush1.msra.mxu0 0.0
    %6476 = vmatprep.subr.mxu0 0.0
    %6477 = vmatpush1.msra.mxu0 0.0
    %6478 = vmatprep.subr.mxu0 0.0
    %6479 = vmatpush1.msra.mxu0 0.0
    %6480 = vmatprep.subr.mxu0 0.0
    %6481 = vmatpush1.msra.mxu0 0.0
    %6482 = vmatprep.subr.mxu0 0.0
    %6483 = vmatpush1.msra.mxu0 0.0
    %6484 = vmatprep.subr.mxu0 0.0
    %6485 = vmatpush1.msra.mxu0 0.0
    %6486 = vmatprep.subr.mxu0 0.0
    %6487 = vmatpush1.msra.mxu0 0.0
    %6488 = vmatprep.subr.mxu0 0.0
    %6489 = vmatpush1.msra.mxu0 0.0
    %6490 = vmatprep.subr.mxu0 0.0
    %6491 = vmatpush1.msra.mxu0 0.0
    %6492 = vmatprep.subr.mxu0 0.0
    %6493 = vmatpush1.msra.mxu0 0.0
    %6494 = vmatprep.subr.mxu0 0.0
    %6495 = vmatpush1.msra.mxu0 0.0
    %6496 = vmatprep.subr.mxu0 0.0
    %6497 = vmatpush1.msra.mxu0 0.0
    %6498 = vmatprep.subr.mxu0 0.0
    %6499 = vmatpush1.msra.mxu0 0.0
    %6500 = vmatprep.subr.mxu0 0.0
    %6501 = vmatpush1.msra.mxu0 0.0
    %6502 = vmatprep.subr.mxu0 0.0
    %6503 = vmatpush1.msra.mxu0 0.0
    %6504 = vmatprep.subr.mxu0 0.0
    %6505 = vmatpush1.msra.mxu0 0.0
    %6506 = vmatprep.subr.mxu0 0.0
    %6507 = vmatpush1.msra.mxu0 0.0
    %6508 = vmatprep.subr.mxu0 0.0
    %6509 = vmatpush1.msra.mxu0 0.0
    %6510 = vmatprep.subr.mxu0 0.0
    %6511 = vmatpush1.msra.mxu0 0.0
    %6512 = vmatprep.subr.mxu0 0.0
    %6513 = vmatpush1.msra.mxu0 0.0
    %6514 = vmatprep.subr.mxu0 0.0
    %6515 = vmatpush1.msra.mxu0 0.0
    %6516 = vmatprep.subr.mxu0 0.0
    %6517 = vmatpush1.msra.mxu0 0.0
    %6518 = vmatprep.subr.mxu0 0.0
    %6519 = vmatpush1.msra.mxu0 0.0
    %6520 = vmatprep.subr.mxu0 0.0
    %6521 = vmatpush1.msra.mxu0 0.0
    %6522 = vmatprep.subr.mxu0 0.0
    %6523 = vmatpush1.msra.mxu0 0.0
    %6524 = vmatprep.subr.mxu0 0.0
    %6525 = vmatpush1.msra.mxu0 0.0
    %6526 = vmatprep.mubr.f32.mxu0 0.0
    %6527 = vmatmul.mubr.f32.gmra.mrb[0].mxu0 %v6460
    %v6528 = vpop.f32.mrb[0].mxu0
    %v6529 = vadd.f32 %v6458, %v6528
    %v6530 = vpop.f32.mrb[0].mxu0
    %6531 = vdwg.mxu0
    %vm6532 = vcmask 1024
    %6533 = vst.msk [vmem:[%s3] sm:$0x3] %vm6532, %v6529
    // Predicated region
    $region18: #{fwd.1} parent=1 // pred_check
      _
    $region19: #{fwd.1} parent=1 // pred_check_branch
      %6535 = sbr.rel (0) target = $region21
    $region20: #{fwd.1} parent=1 // pred_region
      _
    $region21: #{fwd.1} parent=1 // pred_fallthru
      _
    // Predicated region
    $region22: #{fwd.1} parent=1 // pred_check
      _
    $region23: #{fwd.1} parent=1 // pred_check_branch
      %6537 = sbr.rel (0) target = $region25
    $region24: #{fwd.1} parent=1 // pred_region
      _
    $region25: #{fwd.1} parent=1 // pred_fallthru
      _
    %6538 = vsyncpa [#allocation3], 1

</llo_original>
